<compile_context>
chip_gen: v7x
topology: tpu7x:2x2x1
jax: 0.10.0
libtpu: 0.0.40
codegen_flags: <defaults>
</compile_context>

<pallas_src>
import functools

import jax
import jax.numpy as jnp
from jax.experimental import pallas as pl
from jax.experimental.pallas import tpu as pltpu


# ----------------------------------------------------------------------------- kernel
def _textenc_kernel(tok_ref, emb_ref, w1_ref, b1_ref, w2_ref, b2_ref,
                    hw3_w_ref, hw3_b_ref, hw1_w_ref, hw1_b_ref, out_ref,
                    *, T, C, V, dilations, n_hc1):
    """One grid step == one batch element: activations are a (T, C) slab."""
    f32, bf16 = jnp.float32, jnp.bfloat16

    # ---- embedding lookup as a one-hot matmul (exact selection, runs on MXU) ----
    tok = tok_ref[0]                                                 # (T, 1) int32
    vocab_ids = jax.lax.broadcasted_iota(jnp.int32, (T, V), 1)
    onehot = jnp.where(vocab_ids == tok, 1.0, 0.0).astype(bf16)      # (T, V)
    x = jnp.dot(onehot, emb_ref[...], preferred_element_type=f32)    # (T, E) f32

    # ---- Conv1st: k=1, E -> C, ReLU ---------------------------------------------
    x = jnp.dot(x.astype(bf16), w1_ref[...], preferred_element_type=f32) + b1_ref[...]
    x = jnp.maximum(x, 0.0)
    # ---- Conv2nd: k=1, C -> C, linear ---------------------------------------------
    x = jnp.dot(x.astype(bf16), w2_ref[...], preferred_element_type=f32) + b2_ref[...]

    # per-row time index; SAME-padding masks hoisted once per unique dilation
    t_ids = jax.lax.broadcasted_iota(jnp.int32, (T, C), 0)
    pad_masks = {d: (t_ids >= d, t_ids < T - d) for d in sorted(set(dilations))}

    def highway_gate(L, x):
        # sigmoid(z) == 0.5*(tanh(0.5*z)+1); out = g*H2 + (1-g)*x == x + g*(H2-x)
        g = 0.5 * (jnp.tanh(0.5 * L[:, :C]) + 1.0)
        return x + g * (L[:, C:] - x)

    # ---- k=3 dilated highway convs: one (T, 3C) x (3C, 2C) MXU matmul each -------
    # Combined weight layout: rows = [tap t-d | tap t | tap t+d] (C each),
    #                         cols = [H1 gate | H2]             (C each).
    for i, d in enumerate(dilations):
        m_prev, m_next = pad_masks[d]
        # Shifted taps built in-register (XLU roll) + SAME zero padding via masks.
        x_prev = jnp.where(m_prev, pltpu.roll(x, shift=d, axis=0), 0.0)
        x_next = jnp.where(m_next, pltpu.roll(x, shift=T - d, axis=0), 0.0)
        taps = jnp.concatenate([x_prev, x, x_next], axis=-1)         # (T, 3C) f32
        L = (jnp.dot(taps.astype(bf16), hw3_w_ref[i], preferred_element_type=f32)
             + hw3_b_ref[i])
        x = highway_gate(L, x)

    # ---- k=1 highway convs ---------------------------------------------------------
    for i in range(n_hc1):
        L = (jnp.dot(x.astype(bf16), hw1_w_ref[i], preferred_element_type=f32)
             + hw1_b_ref[i])
        x = highway_gate(L, x)

    # lane-dense (1, T, C) output slab; channel-first transpose + K/V chunk happen
    # in the wrapper (cheap, on the single HBM result).
    out_ref[...] = x[None, :, :].astype(out_ref.dtype)


# ----------------------------------------------------------------------------- wrapper
def _weight_spec(shape):
    """Constant-index BlockSpec: the weight block is DMA'd once and reused."""
    zeros = (0,) * len(shape)
    return pl.BlockSpec(shape, lambda b, z=zeros: z)


def textenc_forward(params, tokens):
    """tokens: (B, T) int32 -> (K, V), each (B, dSize, T), matching the PyTorch module."""
    B, T = tokens.shape
    C = params["w2"].shape[0]            # C = 2 * dSize
    d_size = C // 2
    Vp, _E = params["emb"].shape
    dilations = params["dilations"]
    n_hc1 = params["hw1_w"].shape[0]
    assert max(dilations) < T, "roll-based SAME padding requires dilation < T"

    kernel = functools.partial(
        _textenc_kernel, T=T, C=C, V=Vp, dilations=dilations, n_hc1=n_hc1)

    tok3 = tokens.reshape(B, T, 1).astype(jnp.int32)
    weights = (
        params["emb"], params["w1"], params["b1"], params["w2"], params["b2"],
        params["hw3_w"], params["hw3_b"], params["hw1_w"], params["hw1_b"],
    )

    in_specs = [pl.BlockSpec((1, T, 1), lambda b: (b, 0, 0))]          # tokens: per-batch block
    in_specs += [_weight_spec(w.shape) for w in weights]               # weights: resident

    out_btc = pl.pallas_call(
        kernel,
        out_shape=jax.ShapeDtypeStruct((B, T, C), jnp.float32),
        grid=(B,),
        in_specs=in_specs,
        out_specs=pl.BlockSpec((1, T, C), lambda b: (b, 0, 0)),
        compiler_params=pltpu.CompilerParams(
            dimension_semantics=("parallel",),          # v7x: shard batch over both TCs
            vmem_limit_bytes=32 * 1024 * 1024),
    )(tok3, *weights)

    x_bct = jnp.transpose(out_btc, (0, 2, 1))            # (B, 2d, T) channel-first
    return x_bct[:, :d_size, :], x_bct[:, d_size:, :]     # K, V


# ----------------------------------------------------------------------------- params
def build_params(key, vocab_size, emb_size, d_size, dilations, n_hc1=2):
    """Deterministic synthetic parameters mirroring TextEnc.__init__'s layer sequence."""
    C = 2 * d_size
    n_hc3 = len(dilations)
    Vp = ((vocab_size + 127) // 128) * 128               # pad vocab to full lanes
    keys = iter(jax.random.split(key, 16 + 2 * (n_hc3 + n_hc1)))
    nk = lambda: next(keys)
    s = 0.05

    emb = jnp.zeros((Vp, emb_size), jnp.float32).at[:vocab_size].set(
        s * jax.random.normal(nk(), (vocab_size, emb_size), jnp.float32))

    return dict(
        dilations=tuple(dilations),
        emb=emb.astype(jnp.bfloat16),
        # Conv1st (E -> C, ReLU) and Conv2nd (C -> C, linear), k=1
        w1=(s * jax.random.normal(nk(), (emb_size, C), jnp.float32)).astype(jnp.bfloat16),
        b1=s * jax.random.normal(nk(), (1, C), jnp.float32),
        w2=(s * jax.random.normal(nk(), (C, C), jnp.float32)).astype(jnp.bfloat16),
        b2=s * jax.random.normal(nk(), (1, C), jnp.float32),
        # k=3 highway convs: combined (3C -> 2C) weight per layer,
        # rows = [t-d | t | t+d], cols = [H1 gate | H2]
        hw3_w=(s * jax.random.normal(nk(), (n_hc3, 3 * C, 2 * C), jnp.float32)).astype(jnp.bfloat16),
        hw3_b=s * jax.random.normal(nk(), (n_hc3, 1, 2 * C), jnp.float32),
        # k=1 highway convs: (C -> 2C)
        hw1_w=(s * jax.random.normal(nk(), (n_hc1, C, 2 * C), jnp.float32)).astype(jnp.bfloat16),
        hw1_b=s * jax.random.normal(nk(), (n_hc1, 1, 2 * C), jnp.float32),
    )


# ----------------------------------------------------------------------------- main
if __name__ == "__main__":
    key = jax.random.PRNGKey(0)
    k_tok, k_par = jax.random.split(key)

    # small shapes consistent with TextEnc; C = 2*dSize = 128 keeps lanes dense,
    # T = 64 > max dilation (27) so every dilated tap is in range.
    B, T = 2, 64
    vocab_size, emb_size, d_size = 32, 128, 64
    # layer sequence from __init__: 2x [dil = 3**d for d in 0..3], 2x dil=1 (k=3),
    # then 2x k=1 highway convs (handled via n_hc1 in build_params/forward).
    dilations = tuple(3 ** d for d in range(4)) * 2 + (1, 1)

    tokens = jax.random.randint(k_tok, (B, T), 0, vocab_size, dtype=jnp.int32)
    params = build_params(k_par, vocab_size, emb_size, d_size, dilations)

    K, V = jax.block_until_ready(textenc_forward(params, tokens))
    assert K.shape == (B, d_size, T), K.shape
    assert V.shape == (B, d_size, T), V.shape
    assert bool(jnp.all(jnp.isfinite(K))) and bool(jnp.all(jnp.isfinite(V)))
    print("KERNEL_OK")
</pallas_src>

<mosaic_0001>
module attributes {stable_mosaic.version = 11 : i64} {
  func.func @_textenc_kernel(%arg0: i32, %arg1: memref<1x64x1xi32, #tpu.memory_space<vmem>>, %arg2: memref<128x128xbf16, #tpu.memory_space<vmem>>, %arg3: memref<128x128xbf16, #tpu.memory_space<vmem>>, %arg4: memref<1x128xf32, #tpu.memory_space<vmem>>, %arg5: memref<128x128xbf16, #tpu.memory_space<vmem>>, %arg6: memref<1x128xf32, #tpu.memory_space<vmem>>, %arg7: memref<10x384x256xbf16, #tpu.memory_space<vmem>>, %arg8: memref<10x1x256xf32, #tpu.memory_space<vmem>>, %arg9: memref<2x128x256xbf16, #tpu.memory_space<vmem>>, %arg10: memref<2x1x256xf32, #tpu.memory_space<vmem>>, %arg11: memref<1x64x128xf32, #tpu.memory_space<vmem>>) attributes {dimension_semantics = [#tpu.dimension_semantics<parallel>], iteration_bounds = array<i64: 2>, scalar_prefetch = 0 : i64, scratch_operands = 0 : i64, tpu.core_type = #tpu.core_type<tc>, window_params = [{transform_indices = @transform_0, window_bounds = array<i64: 1, 64, 1>}, {pipeline_mode = #tpu.pipeline_mode<synchronous>, transform_indices = @transform_1, window_bounds = array<i64: 128, 128>}, {pipeline_mode = #tpu.pipeline_mode<synchronous>, transform_indices = @transform_2, window_bounds = array<i64: 128, 128>}, {pipeline_mode = #tpu.pipeline_mode<synchronous>, transform_indices = @transform_3, window_bounds = array<i64: 1, 128>}, {pipeline_mode = #tpu.pipeline_mode<synchronous>, transform_indices = @transform_4, window_bounds = array<i64: 128, 128>}, {pipeline_mode = #tpu.pipeline_mode<synchronous>, transform_indices = @transform_5, window_bounds = array<i64: 1, 128>}, {pipeline_mode = #tpu.pipeline_mode<synchronous>, transform_indices = @transform_6, window_bounds = array<i64: 10, 384, 256>}, {pipeline_mode = #tpu.pipeline_mode<synchronous>, transform_indices = @transform_7, window_bounds = array<i64: 10, 1, 256>}, {pipeline_mode = #tpu.pipeline_mode<synchronous>, transform_indices = @transform_8, window_bounds = array<i64: 2, 128, 256>}, {pipeline_mode = #tpu.pipeline_mode<synchronous>, transform_indices = @transform_9, window_bounds = array<i64: 2, 1, 256>}, {transform_indices = @transform_10, window_bounds = array<i64: 1, 64, 128>}]} {
    %c0 = arith.constant 0 : index
    %c0_0 = arith.constant 0 : index
    %c0_1 = arith.constant 0 : index
    %0 = vector.load %arg1[%c0, %c0_0, %c0_1] : memref<1x64x1xi32, #tpu.memory_space<vmem>>, vector<1x64x1xi32>
    %1 = vector.shape_cast %0 : vector<1x64x1xi32> to vector<64x1xi32>
    %2 = tpu.iota {dimensions = array<i32: 1>} : vector<64x128xi32>
    %3 = vector.broadcast %1 : vector<64x1xi32> to vector<64x128xi32>
    %4 = arith.cmpi eq, %2, %3 : vector<64x128xi32>
    %cst = arith.constant 1.000000e+00 : f32
    %cst_2 = arith.constant 0.000000e+00 : f32
    %5 = vector.broadcast %cst : f32 to vector<64x128xf32>
    %6 = vector.broadcast %cst_2 : f32 to vector<64x128xf32>
    %7 = arith.select %4, %5, %6 : vector<64x128xi1>, vector<64x128xf32>
    %8 = arith.truncf %7 : vector<64x128xf32> to vector<64x128xbf16>
    %c0_3 = arith.constant 0 : index
    %c0_4 = arith.constant 0 : index
    %9 = vector.load %arg2[%c0_3, %c0_4] : memref<128x128xbf16, #tpu.memory_space<vmem>>, vector<128x128xbf16>
    %cst_5 = arith.constant dense<0.000000e+00> : vector<64x128xf32>
    %10 = tpu.matmul %8, %9, %cst_5 {dimension_numbers = #tpu.dot_dimension_numbers<[1], [0], [0], [1], [0, 0, 1, 1], [], []>} : vector<64x128xbf16>, vector<128x128xbf16>, vector<64x128xf32> -> vector<64x128xf32>
    %11 = arith.truncf %10 : vector<64x128xf32> to vector<64x128xbf16>
    %c0_6 = arith.constant 0 : index
    %c0_7 = arith.constant 0 : index
    %12 = vector.load %arg3[%c0_6, %c0_7] : memref<128x128xbf16, #tpu.memory_space<vmem>>, vector<128x128xbf16>
    %cst_8 = arith.constant dense<0.000000e+00> : vector<64x128xf32>
    %13 = tpu.matmul %11, %12, %cst_8 {dimension_numbers = #tpu.dot_dimension_numbers<[1], [0], [0], [1], [0, 0, 1, 1], [], []>} : vector<64x128xbf16>, vector<128x128xbf16>, vector<64x128xf32> -> vector<64x128xf32>
    %c0_9 = arith.constant 0 : index
    %c0_10 = arith.constant 0 : index
    %14 = vector.load %arg4[%c0_9, %c0_10] : memref<1x128xf32, #tpu.memory_space<vmem>>, vector<1x128xf32>
    %15 = vector.broadcast %14 : vector<1x128xf32> to vector<64x128xf32>
    %16 = arith.addf %13, %15 : vector<64x128xf32>
    %cst_11 = arith.constant 0.000000e+00 : f32
    %17 = vector.broadcast %cst_11 : f32 to vector<64x128xf32>
    %18 = arith.maximumf %16, %17 : vector<64x128xf32>
    %19 = arith.truncf %18 : vector<64x128xf32> to vector<64x128xbf16>
    %c0_12 = arith.constant 0 : index
    %c0_13 = arith.constant 0 : index
    %20 = vector.load %arg5[%c0_12, %c0_13] : memref<128x128xbf16, #tpu.memory_space<vmem>>, vector<128x128xbf16>
    %cst_14 = arith.constant dense<0.000000e+00> : vector<64x128xf32>
    %21 = tpu.matmul %19, %20, %cst_14 {dimension_numbers = #tpu.dot_dimension_numbers<[1], [0], [0], [1], [0, 0, 1, 1], [], []>} : vector<64x128xbf16>, vector<128x128xbf16>, vector<64x128xf32> -> vector<64x128xf32>
    %c0_15 = arith.constant 0 : index
    %c0_16 = arith.constant 0 : index
    %22 = vector.load %arg6[%c0_15, %c0_16] : memref<1x128xf32, #tpu.memory_space<vmem>>, vector<1x128xf32>
    %23 = vector.broadcast %22 : vector<1x128xf32> to vector<64x128xf32>
    %24 = arith.addf %21, %23 : vector<64x128xf32>
    %25 = tpu.iota {dimensions = array<i32: 0>} : vector<64x128xi32>
    %c1_i32 = arith.constant 1 : i32
    %26 = vector.broadcast %c1_i32 : i32 to vector<64x128xi32>
    %27 = arith.cmpi sge, %25, %26 : vector<64x128xi32>
    %c63_i32 = arith.constant 63 : i32
    %28 = vector.broadcast %c63_i32 : i32 to vector<64x128xi32>
    %29 = arith.cmpi slt, %25, %28 : vector<64x128xi32>
    %c3_i32 = arith.constant 3 : i32
    %30 = vector.broadcast %c3_i32 : i32 to vector<64x128xi32>
    %31 = arith.cmpi sge, %25, %30 : vector<64x128xi32>
    %c61_i32 = arith.constant 61 : i32
    %32 = vector.broadcast %c61_i32 : i32 to vector<64x128xi32>
    %33 = arith.cmpi slt, %25, %32 : vector<64x128xi32>
    %c9_i32 = arith.constant 9 : i32
    %34 = vector.broadcast %c9_i32 : i32 to vector<64x128xi32>
    %35 = arith.cmpi sge, %25, %34 : vector<64x128xi32>
    %c55_i32 = arith.constant 55 : i32
    %36 = vector.broadcast %c55_i32 : i32 to vector<64x128xi32>
    %37 = arith.cmpi slt, %25, %36 : vector<64x128xi32>
    %c27_i32 = arith.constant 27 : i32
    %38 = vector.broadcast %c27_i32 : i32 to vector<64x128xi32>
    %39 = arith.cmpi sge, %25, %38 : vector<64x128xi32>
    %c37_i32 = arith.constant 37 : i32
    %40 = vector.broadcast %c37_i32 : i32 to vector<64x128xi32>
    %41 = arith.cmpi slt, %25, %40 : vector<64x128xi32>
    %c1_i32_17 = arith.constant 1 : i32
    %42 = tpu.dynamic_rotate %24 by %c1_i32_17 dim 0 : vector<64x128xf32>, i32 -> vector<64x128xf32>
    %cst_18 = arith.constant 0.000000e+00 : f32
    %43 = vector.broadcast %cst_18 : f32 to vector<64x128xf32>
    %44 = arith.select %27, %42, %43 : vector<64x128xi1>, vector<64x128xf32>
    %c63_i32_19 = arith.constant 63 : i32
    %45 = tpu.dynamic_rotate %24 by %c63_i32_19 dim 0 : vector<64x128xf32>, i32 -> vector<64x128xf32>
    %cst_20 = arith.constant 0.000000e+00 : f32
    %46 = vector.broadcast %cst_20 : f32 to vector<64x128xf32>
    %47 = arith.select %29, %45, %46 : vector<64x128xi1>, vector<64x128xf32>
    %48 = tpu.concatenate %44, %24, %47 in 1 : vector<64x128xf32>, vector<64x128xf32>, vector<64x128xf32> -> vector<64x384xf32>
    %49 = arith.truncf %48 : vector<64x384xf32> to vector<64x384xbf16>
    %c0_21 = arith.constant 0 : index
    %c0_22 = arith.constant 0 : index
    %c0_23 = arith.constant 0 : index
    %50 = vector.load %arg7[%c0_21, %c0_22, %c0_23] : memref<10x384x256xbf16, #tpu.memory_space<vmem>>, vector<1x384x256xbf16>
    %51 = vector.shape_cast %50 : vector<1x384x256xbf16> to vector<384x256xbf16>
    %cst_24 = arith.constant dense<0.000000e+00> : vector<64x256xf32>
    %52 = tpu.matmul %49, %51, %cst_24 {dimension_numbers = #tpu.dot_dimension_numbers<[1], [0], [0], [1], [0, 0, 1, 1], [], []>} : vector<64x384xbf16>, vector<384x256xbf16>, vector<64x256xf32> -> vector<64x256xf32>
    %c0_25 = arith.constant 0 : index
    %c0_26 = arith.constant 0 : index
    %c0_27 = arith.constant 0 : index
    %53 = vector.load %arg8[%c0_25, %c0_26, %c0_27] : memref<10x1x256xf32, #tpu.memory_space<vmem>>, vector<1x1x256xf32>
    %54 = vector.shape_cast %53 : vector<1x1x256xf32> to vector<1x256xf32>
    %55 = vector.broadcast %54 : vector<1x256xf32> to vector<64x256xf32>
    %56 = arith.addf %52, %55 : vector<64x256xf32>
    %57 = vector.extract_strided_slice %56 {offsets = [0, 0], sizes = [64, 128], strides = [1, 1]} : vector<64x256xf32> to vector<64x128xf32>
    %cst_28 = arith.constant 5.000000e-01 : f32
    %58 = vector.broadcast %cst_28 : f32 to vector<64x128xf32>
    %59 = arith.mulf %58, %57 : vector<64x128xf32>
    %60 = math.tanh %59 : vector<64x128xf32>
    %cst_29 = arith.constant 1.000000e+00 : f32
    %61 = vector.broadcast %cst_29 : f32 to vector<64x128xf32>
    %62 = arith.addf %60, %61 : vector<64x128xf32>
    %cst_30 = arith.constant 5.000000e-01 : f32
    %63 = vector.broadcast %cst_30 : f32 to vector<64x128xf32>
    %64 = arith.mulf %63, %62 : vector<64x128xf32>
    %65 = vector.extract_strided_slice %56 {offsets = [0, 128], sizes = [64, 128], strides = [1, 1]} : vector<64x256xf32> to vector<64x128xf32>
    %66 = arith.subf %65, %24 : vector<64x128xf32>
    %67 = arith.mulf %64, %66 : vector<64x128xf32>
    %68 = arith.addf %24, %67 : vector<64x128xf32>
    %c3_i32_31 = arith.constant 3 : i32
    %69 = tpu.dynamic_rotate %68 by %c3_i32_31 dim 0 : vector<64x128xf32>, i32 -> vector<64x128xf32>
    %cst_32 = arith.constant 0.000000e+00 : f32
    %70 = vector.broadcast %cst_32 : f32 to vector<64x128xf32>
    %71 = arith.select %31, %69, %70 : vector<64x128xi1>, vector<64x128xf32>
    %c61_i32_33 = arith.constant 61 : i32
    %72 = tpu.dynamic_rotate %68 by %c61_i32_33 dim 0 : vector<64x128xf32>, i32 -> vector<64x128xf32>
    %cst_34 = arith.constant 0.000000e+00 : f32
    %73 = vector.broadcast %cst_34 : f32 to vector<64x128xf32>
    %74 = arith.select %33, %72, %73 : vector<64x128xi1>, vector<64x128xf32>
    %75 = tpu.concatenate %71, %68, %74 in 1 : vector<64x128xf32>, vector<64x128xf32>, vector<64x128xf32> -> vector<64x384xf32>
    %76 = arith.truncf %75 : vector<64x384xf32> to vector<64x384xbf16>
    %c1 = arith.constant 1 : index
    %c0_35 = arith.constant 0 : index
    %c0_36 = arith.constant 0 : index
    %77 = vector.load %arg7[%c1, %c0_35, %c0_36] : memref<10x384x256xbf16, #tpu.memory_space<vmem>>, vector<1x384x256xbf16>
    %78 = vector.shape_cast %77 : vector<1x384x256xbf16> to vector<384x256xbf16>
    %cst_37 = arith.constant dense<0.000000e+00> : vector<64x256xf32>
    %79 = tpu.matmul %76, %78, %cst_37 {dimension_numbers = #tpu.dot_dimension_numbers<[1], [0], [0], [1], [0, 0, 1, 1], [], []>} : vector<64x384xbf16>, vector<384x256xbf16>, vector<64x256xf32> -> vector<64x256xf32>
    %c1_38 = arith.constant 1 : index
    %c0_39 = arith.constant 0 : index
    %c0_40 = arith.constant 0 : index
    %80 = vector.load %arg8[%c1_38, %c0_39, %c0_40] : memref<10x1x256xf32, #tpu.memory_space<vmem>>, vector<1x1x256xf32>
    %81 = vector.shape_cast %80 : vector<1x1x256xf32> to vector<1x256xf32>
    %82 = vector.broadcast %81 : vector<1x256xf32> to vector<64x256xf32>
    %83 = arith.addf %79, %82 : vector<64x256xf32>
    %84 = vector.extract_strided_slice %83 {offsets = [0, 0], sizes = [64, 128], strides = [1, 1]} : vector<64x256xf32> to vector<64x128xf32>
    %cst_41 = arith.constant 5.000000e-01 : f32
    %85 = vector.broadcast %cst_41 : f32 to vector<64x128xf32>
    %86 = arith.mulf %85, %84 : vector<64x128xf32>
    %87 = math.tanh %86 : vector<64x128xf32>
    %cst_42 = arith.constant 1.000000e+00 : f32
    %88 = vector.broadcast %cst_42 : f32 to vector<64x128xf32>
    %89 = arith.addf %87, %88 : vector<64x128xf32>
    %cst_43 = arith.constant 5.000000e-01 : f32
    %90 = vector.broadcast %cst_43 : f32 to vector<64x128xf32>
    %91 = arith.mulf %90, %89 : vector<64x128xf32>
    %92 = vector.extract_strided_slice %83 {offsets = [0, 128], sizes = [64, 128], strides = [1, 1]} : vector<64x256xf32> to vector<64x128xf32>
    %93 = arith.subf %92, %68 : vector<64x128xf32>
    %94 = arith.mulf %91, %93 : vector<64x128xf32>
    %95 = arith.addf %68, %94 : vector<64x128xf32>
    %c9_i32_44 = arith.constant 9 : i32
    %96 = tpu.dynamic_rotate %95 by %c9_i32_44 dim 0 : vector<64x128xf32>, i32 -> vector<64x128xf32>
    %cst_45 = arith.constant 0.000000e+00 : f32
    %97 = vector.broadcast %cst_45 : f32 to vector<64x128xf32>
    %98 = arith.select %35, %96, %97 : vector<64x128xi1>, vector<64x128xf32>
    %c55_i32_46 = arith.constant 55 : i32
    %99 = tpu.dynamic_rotate %95 by %c55_i32_46 dim 0 : vector<64x128xf32>, i32 -> vector<64x128xf32>
    %cst_47 = arith.constant 0.000000e+00 : f32
    %100 = vector.broadcast %cst_47 : f32 to vector<64x128xf32>
    %101 = arith.select %37, %99, %100 : vector<64x128xi1>, vector<64x128xf32>
    %102 = tpu.concatenate %98, %95, %101 in 1 : vector<64x128xf32>, vector<64x128xf32>, vector<64x128xf32> -> vector<64x384xf32>
    %103 = arith.truncf %102 : vector<64x384xf32> to vector<64x384xbf16>
    %c2 = arith.constant 2 : index
    %c0_48 = arith.constant 0 : index
    %c0_49 = arith.constant 0 : index
    %104 = vector.load %arg7[%c2, %c0_48, %c0_49] : memref<10x384x256xbf16, #tpu.memory_space<vmem>>, vector<1x384x256xbf16>
    %105 = vector.shape_cast %104 : vector<1x384x256xbf16> to vector<384x256xbf16>
    %cst_50 = arith.constant dense<0.000000e+00> : vector<64x256xf32>
    %106 = tpu.matmul %103, %105, %cst_50 {dimension_numbers = #tpu.dot_dimension_numbers<[1], [0], [0], [1], [0, 0, 1, 1], [], []>} : vector<64x384xbf16>, vector<384x256xbf16>, vector<64x256xf32> -> vector<64x256xf32>
    %c2_51 = arith.constant 2 : index
    %c0_52 = arith.constant 0 : index
    %c0_53 = arith.constant 0 : index
    %107 = vector.load %arg8[%c2_51, %c0_52, %c0_53] : memref<10x1x256xf32, #tpu.memory_space<vmem>>, vector<1x1x256xf32>
    %108 = vector.shape_cast %107 : vector<1x1x256xf32> to vector<1x256xf32>
    %109 = vector.broadcast %108 : vector<1x256xf32> to vector<64x256xf32>
    %110 = arith.addf %106, %109 : vector<64x256xf32>
    %111 = vector.extract_strided_slice %110 {offsets = [0, 0], sizes = [64, 128], strides = [1, 1]} : vector<64x256xf32> to vector<64x128xf32>
    %cst_54 = arith.constant 5.000000e-01 : f32
    %112 = vector.broadcast %cst_54 : f32 to vector<64x128xf32>
    %113 = arith.mulf %112, %111 : vector<64x128xf32>
    %114 = math.tanh %113 : vector<64x128xf32>
    %cst_55 = arith.constant 1.000000e+00 : f32
    %115 = vector.broadcast %cst_55 : f32 to vector<64x128xf32>
    %116 = arith.addf %114, %115 : vector<64x128xf32>
    %cst_56 = arith.constant 5.000000e-01 : f32
    %117 = vector.broadcast %cst_56 : f32 to vector<64x128xf32>
    %118 = arith.mulf %117, %116 : vector<64x128xf32>
    %119 = vector.extract_strided_slice %110 {offsets = [0, 128], sizes = [64, 128], strides = [1, 1]} : vector<64x256xf32> to vector<64x128xf32>
    %120 = arith.subf %119, %95 : vector<64x128xf32>
    %121 = arith.mulf %118, %120 : vector<64x128xf32>
    %122 = arith.addf %95, %121 : vector<64x128xf32>
    %c27_i32_57 = arith.constant 27 : i32
    %123 = tpu.dynamic_rotate %122 by %c27_i32_57 dim 0 : vector<64x128xf32>, i32 -> vector<64x128xf32>
    %cst_58 = arith.constant 0.000000e+00 : f32
    %124 = vector.broadcast %cst_58 : f32 to vector<64x128xf32>
    %125 = arith.select %39, %123, %124 : vector<64x128xi1>, vector<64x128xf32>
    %c37_i32_59 = arith.constant 37 : i32
    %126 = tpu.dynamic_rotate %122 by %c37_i32_59 dim 0 : vector<64x128xf32>, i32 -> vector<64x128xf32>
    %cst_60 = arith.constant 0.000000e+00 : f32
    %127 = vector.broadcast %cst_60 : f32 to vector<64x128xf32>
    %128 = arith.select %41, %126, %127 : vector<64x128xi1>, vector<64x128xf32>
    %129 = tpu.concatenate %125, %122, %128 in 1 : vector<64x128xf32>, vector<64x128xf32>, vector<64x128xf32> -> vector<64x384xf32>
    %130 = arith.truncf %129 : vector<64x384xf32> to vector<64x384xbf16>
    %c3 = arith.constant 3 : index
    %c0_61 = arith.constant 0 : index
    %c0_62 = arith.constant 0 : index
    %131 = vector.load %arg7[%c3, %c0_61, %c0_62] : memref<10x384x256xbf16, #tpu.memory_space<vmem>>, vector<1x384x256xbf16>
    %132 = vector.shape_cast %131 : vector<1x384x256xbf16> to vector<384x256xbf16>
    %cst_63 = arith.constant dense<0.000000e+00> : vector<64x256xf32>
    %133 = tpu.matmul %130, %132, %cst_63 {dimension_numbers = #tpu.dot_dimension_numbers<[1], [0], [0], [1], [0, 0, 1, 1], [], []>} : vector<64x384xbf16>, vector<384x256xbf16>, vector<64x256xf32> -> vector<64x256xf32>
    %c3_64 = arith.constant 3 : index
    %c0_65 = arith.constant 0 : index
    %c0_66 = arith.constant 0 : index
    %134 = vector.load %arg8[%c3_64, %c0_65, %c0_66] : memref<10x1x256xf32, #tpu.memory_space<vmem>>, vector<1x1x256xf32>
    %135 = vector.shape_cast %134 : vector<1x1x256xf32> to vector<1x256xf32>
    %136 = vector.broadcast %135 : vector<1x256xf32> to vector<64x256xf32>
    %137 = arith.addf %133, %136 : vector<64x256xf32>
    %138 = vector.extract_strided_slice %137 {offsets = [0, 0], sizes = [64, 128], strides = [1, 1]} : vector<64x256xf32> to vector<64x128xf32>
    %cst_67 = arith.constant 5.000000e-01 : f32
    %139 = vector.broadcast %cst_67 : f32 to vector<64x128xf32>
    %140 = arith.mulf %139, %138 : vector<64x128xf32>
    %141 = math.tanh %140 : vector<64x128xf32>
    %cst_68 = arith.constant 1.000000e+00 : f32
    %142 = vector.broadcast %cst_68 : f32 to vector<64x128xf32>
    %143 = arith.addf %141, %142 : vector<64x128xf32>
    %cst_69 = arith.constant 5.000000e-01 : f32
    %144 = vector.broadcast %cst_69 : f32 to vector<64x128xf32>
    %145 = arith.mulf %144, %143 : vector<64x128xf32>
    %146 = vector.extract_strided_slice %137 {offsets = [0, 128], sizes = [64, 128], strides = [1, 1]} : vector<64x256xf32> to vector<64x128xf32>
    %147 = arith.subf %146, %122 : vector<64x128xf32>
    %148 = arith.mulf %145, %147 : vector<64x128xf32>
    %149 = arith.addf %122, %148 : vector<64x128xf32>
    %c1_i32_70 = arith.constant 1 : i32
    %150 = tpu.dynamic_rotate %149 by %c1_i32_70 dim 0 : vector<64x128xf32>, i32 -> vector<64x128xf32>
    %cst_71 = arith.constant 0.000000e+00 : f32
    %151 = vector.broadcast %cst_71 : f32 to vector<64x128xf32>
    %152 = arith.select %27, %150, %151 : vector<64x128xi1>, vector<64x128xf32>
    %c63_i32_72 = arith.constant 63 : i32
    %153 = tpu.dynamic_rotate %149 by %c63_i32_72 dim 0 : vector<64x128xf32>, i32 -> vector<64x128xf32>
    %cst_73 = arith.constant 0.000000e+00 : f32
    %154 = vector.broadcast %cst_73 : f32 to vector<64x128xf32>
    %155 = arith.select %29, %153, %154 : vector<64x128xi1>, vector<64x128xf32>
    %156 = tpu.concatenate %152, %149, %155 in 1 : vector<64x128xf32>, vector<64x128xf32>, vector<64x128xf32> -> vector<64x384xf32>
    %157 = arith.truncf %156 : vector<64x384xf32> to vector<64x384xbf16>
    %c4 = arith.constant 4 : index
    %c0_74 = arith.constant 0 : index
    %c0_75 = arith.constant 0 : index
    %158 = vector.load %arg7[%c4, %c0_74, %c0_75] : memref<10x384x256xbf16, #tpu.memory_space<vmem>>, vector<1x384x256xbf16>
    %159 = vector.shape_cast %158 : vector<1x384x256xbf16> to vector<384x256xbf16>
    %cst_76 = arith.constant dense<0.000000e+00> : vector<64x256xf32>
    %160 = tpu.matmul %157, %159, %cst_76 {dimension_numbers = #tpu.dot_dimension_numbers<[1], [0], [0], [1], [0, 0, 1, 1], [], []>} : vector<64x384xbf16>, vector<384x256xbf16>, vector<64x256xf32> -> vector<64x256xf32>
    %c4_77 = arith.constant 4 : index
    %c0_78 = arith.constant 0 : index
    %c0_79 = arith.constant 0 : index
    %161 = vector.load %arg8[%c4_77, %c0_78, %c0_79] : memref<10x1x256xf32, #tpu.memory_space<vmem>>, vector<1x1x256xf32>
    %162 = vector.shape_cast %161 : vector<1x1x256xf32> to vector<1x256xf32>
    %163 = vector.broadcast %162 : vector<1x256xf32> to vector<64x256xf32>
    %164 = arith.addf %160, %163 : vector<64x256xf32>
    %165 = vector.extract_strided_slice %164 {offsets = [0, 0], sizes = [64, 128], strides = [1, 1]} : vector<64x256xf32> to vector<64x128xf32>
    %cst_80 = arith.constant 5.000000e-01 : f32
    %166 = vector.broadcast %cst_80 : f32 to vector<64x128xf32>
    %167 = arith.mulf %166, %165 : vector<64x128xf32>
    %168 = math.tanh %167 : vector<64x128xf32>
    %cst_81 = arith.constant 1.000000e+00 : f32
    %169 = vector.broadcast %cst_81 : f32 to vector<64x128xf32>
    %170 = arith.addf %168, %169 : vector<64x128xf32>
    %cst_82 = arith.constant 5.000000e-01 : f32
    %171 = vector.broadcast %cst_82 : f32 to vector<64x128xf32>
    %172 = arith.mulf %171, %170 : vector<64x128xf32>
    %173 = vector.extract_strided_slice %164 {offsets = [0, 128], sizes = [64, 128], strides = [1, 1]} : vector<64x256xf32> to vector<64x128xf32>
    %174 = arith.subf %173, %149 : vector<64x128xf32>
    %175 = arith.mulf %172, %174 : vector<64x128xf32>
    %176 = arith.addf %149, %175 : vector<64x128xf32>
    %c3_i32_83 = arith.constant 3 : i32
    %177 = tpu.dynamic_rotate %176 by %c3_i32_83 dim 0 : vector<64x128xf32>, i32 -> vector<64x128xf32>
    %cst_84 = arith.constant 0.000000e+00 : f32
    %178 = vector.broadcast %cst_84 : f32 to vector<64x128xf32>
    %179 = arith.select %31, %177, %178 : vector<64x128xi1>, vector<64x128xf32>
    %c61_i32_85 = arith.constant 61 : i32
    %180 = tpu.dynamic_rotate %176 by %c61_i32_85 dim 0 : vector<64x128xf32>, i32 -> vector<64x128xf32>
    %cst_86 = arith.constant 0.000000e+00 : f32
    %181 = vector.broadcast %cst_86 : f32 to vector<64x128xf32>
    %182 = arith.select %33, %180, %181 : vector<64x128xi1>, vector<64x128xf32>
    %183 = tpu.concatenate %179, %176, %182 in 1 : vector<64x128xf32>, vector<64x128xf32>, vector<64x128xf32> -> vector<64x384xf32>
    %184 = arith.truncf %183 : vector<64x384xf32> to vector<64x384xbf16>
    %c5 = arith.constant 5 : index
    %c0_87 = arith.constant 0 : index
    %c0_88 = arith.constant 0 : index
    %185 = vector.load %arg7[%c5, %c0_87, %c0_88] : memref<10x384x256xbf16, #tpu.memory_space<vmem>>, vector<1x384x256xbf16>
    %186 = vector.shape_cast %185 : vector<1x384x256xbf16> to vector<384x256xbf16>
    %cst_89 = arith.constant dense<0.000000e+00> : vector<64x256xf32>
    %187 = tpu.matmul %184, %186, %cst_89 {dimension_numbers = #tpu.dot_dimension_numbers<[1], [0], [0], [1], [0, 0, 1, 1], [], []>} : vector<64x384xbf16>, vector<384x256xbf16>, vector<64x256xf32> -> vector<64x256xf32>
    %c5_90 = arith.constant 5 : index
    %c0_91 = arith.constant 0 : index
    %c0_92 = arith.constant 0 : index
    %188 = vector.load %arg8[%c5_90, %c0_91, %c0_92] : memref<10x1x256xf32, #tpu.memory_space<vmem>>, vector<1x1x256xf32>
    %189 = vector.shape_cast %188 : vector<1x1x256xf32> to vector<1x256xf32>
    %190 = vector.broadcast %189 : vector<1x256xf32> to vector<64x256xf32>
    %191 = arith.addf %187, %190 : vector<64x256xf32>
    %192 = vector.extract_strided_slice %191 {offsets = [0, 0], sizes = [64, 128], strides = [1, 1]} : vector<64x256xf32> to vector<64x128xf32>
    %cst_93 = arith.constant 5.000000e-01 : f32
    %193 = vector.broadcast %cst_93 : f32 to vector<64x128xf32>
    %194 = arith.mulf %193, %192 : vector<64x128xf32>
    %195 = math.tanh %194 : vector<64x128xf32>
    %cst_94 = arith.constant 1.000000e+00 : f32
    %196 = vector.broadcast %cst_94 : f32 to vector<64x128xf32>
    %197 = arith.addf %195, %196 : vector<64x128xf32>
    %cst_95 = arith.constant 5.000000e-01 : f32
    %198 = vector.broadcast %cst_95 : f32 to vector<64x128xf32>
    %199 = arith.mulf %198, %197 : vector<64x128xf32>
    %200 = vector.extract_strided_slice %191 {offsets = [0, 128], sizes = [64, 128], strides = [1, 1]} : vector<64x256xf32> to vector<64x128xf32>
    %201 = arith.subf %200, %176 : vector<64x128xf32>
    %202 = arith.mulf %199, %201 : vector<64x128xf32>
    %203 = arith.addf %176, %202 : vector<64x128xf32>
    %c9_i32_96 = arith.constant 9 : i32
    %204 = tpu.dynamic_rotate %203 by %c9_i32_96 dim 0 : vector<64x128xf32>, i32 -> vector<64x128xf32>
    %cst_97 = arith.constant 0.000000e+00 : f32
    %205 = vector.broadcast %cst_97 : f32 to vector<64x128xf32>
    %206 = arith.select %35, %204, %205 : vector<64x128xi1>, vector<64x128xf32>
    %c55_i32_98 = arith.constant 55 : i32
    %207 = tpu.dynamic_rotate %203 by %c55_i32_98 dim 0 : vector<64x128xf32>, i32 -> vector<64x128xf32>
    %cst_99 = arith.constant 0.000000e+00 : f32
    %208 = vector.broadcast %cst_99 : f32 to vector<64x128xf32>
    %209 = arith.select %37, %207, %208 : vector<64x128xi1>, vector<64x128xf32>
    %210 = tpu.concatenate %206, %203, %209 in 1 : vector<64x128xf32>, vector<64x128xf32>, vector<64x128xf32> -> vector<64x384xf32>
    %211 = arith.truncf %210 : vector<64x384xf32> to vector<64x384xbf16>
    %c6 = arith.constant 6 : index
    %c0_100 = arith.constant 0 : index
    %c0_101 = arith.constant 0 : index
    %212 = vector.load %arg7[%c6, %c0_100, %c0_101] : memref<10x384x256xbf16, #tpu.memory_space<vmem>>, vector<1x384x256xbf16>
    %213 = vector.shape_cast %212 : vector<1x384x256xbf16> to vector<384x256xbf16>
    %cst_102 = arith.constant dense<0.000000e+00> : vector<64x256xf32>
    %214 = tpu.matmul %211, %213, %cst_102 {dimension_numbers = #tpu.dot_dimension_numbers<[1], [0], [0], [1], [0, 0, 1, 1], [], []>} : vector<64x384xbf16>, vector<384x256xbf16>, vector<64x256xf32> -> vector<64x256xf32>
    %c6_103 = arith.constant 6 : index
    %c0_104 = arith.constant 0 : index
    %c0_105 = arith.constant 0 : index
    %215 = vector.load %arg8[%c6_103, %c0_104, %c0_105] : memref<10x1x256xf32, #tpu.memory_space<vmem>>, vector<1x1x256xf32>
    %216 = vector.shape_cast %215 : vector<1x1x256xf32> to vector<1x256xf32>
    %217 = vector.broadcast %216 : vector<1x256xf32> to vector<64x256xf32>
    %218 = arith.addf %214, %217 : vector<64x256xf32>
    %219 = vector.extract_strided_slice %218 {offsets = [0, 0], sizes = [64, 128], strides = [1, 1]} : vector<64x256xf32> to vector<64x128xf32>
    %cst_106 = arith.constant 5.000000e-01 : f32
    %220 = vector.broadcast %cst_106 : f32 to vector<64x128xf32>
    %221 = arith.mulf %220, %219 : vector<64x128xf32>
    %222 = math.tanh %221 : vector<64x128xf32>
    %cst_107 = arith.constant 1.000000e+00 : f32
    %223 = vector.broadcast %cst_107 : f32 to vector<64x128xf32>
    %224 = arith.addf %222, %223 : vector<64x128xf32>
    %cst_108 = arith.constant 5.000000e-01 : f32
    %225 = vector.broadcast %cst_108 : f32 to vector<64x128xf32>
    %226 = arith.mulf %225, %224 : vector<64x128xf32>
    %227 = vector.extract_strided_slice %218 {offsets = [0, 128], sizes = [64, 128], strides = [1, 1]} : vector<64x256xf32> to vector<64x128xf32>
    %228 = arith.subf %227, %203 : vector<64x128xf32>
    %229 = arith.mulf %226, %228 : vector<64x128xf32>
    %230 = arith.addf %203, %229 : vector<64x128xf32>
    %c27_i32_109 = arith.constant 27 : i32
    %231 = tpu.dynamic_rotate %230 by %c27_i32_109 dim 0 : vector<64x128xf32>, i32 -> vector<64x128xf32>
    %cst_110 = arith.constant 0.000000e+00 : f32
    %232 = vector.broadcast %cst_110 : f32 to vector<64x128xf32>
    %233 = arith.select %39, %231, %232 : vector<64x128xi1>, vector<64x128xf32>
    %c37_i32_111 = arith.constant 37 : i32
    %234 = tpu.dynamic_rotate %230 by %c37_i32_111 dim 0 : vector<64x128xf32>, i32 -> vector<64x128xf32>
    %cst_112 = arith.constant 0.000000e+00 : f32
    %235 = vector.broadcast %cst_112 : f32 to vector<64x128xf32>
    %236 = arith.select %41, %234, %235 : vector<64x128xi1>, vector<64x128xf32>
    %237 = tpu.concatenate %233, %230, %236 in 1 : vector<64x128xf32>, vector<64x128xf32>, vector<64x128xf32> -> vector<64x384xf32>
    %238 = arith.truncf %237 : vector<64x384xf32> to vector<64x384xbf16>
    %c7 = arith.constant 7 : index
    %c0_113 = arith.constant 0 : index
    %c0_114 = arith.constant 0 : index
    %239 = vector.load %arg7[%c7, %c0_113, %c0_114] : memref<10x384x256xbf16, #tpu.memory_space<vmem>>, vector<1x384x256xbf16>
    %240 = vector.shape_cast %239 : vector<1x384x256xbf16> to vector<384x256xbf16>
    %cst_115 = arith.constant dense<0.000000e+00> : vector<64x256xf32>
    %241 = tpu.matmul %238, %240, %cst_115 {dimension_numbers = #tpu.dot_dimension_numbers<[1], [0], [0], [1], [0, 0, 1, 1], [], []>} : vector<64x384xbf16>, vector<384x256xbf16>, vector<64x256xf32> -> vector<64x256xf32>
    %c7_116 = arith.constant 7 : index
    %c0_117 = arith.constant 0 : index
    %c0_118 = arith.constant 0 : index
    %242 = vector.load %arg8[%c7_116, %c0_117, %c0_118] : memref<10x1x256xf32, #tpu.memory_space<vmem>>, vector<1x1x256xf32>
    %243 = vector.shape_cast %242 : vector<1x1x256xf32> to vector<1x256xf32>
    %244 = vector.broadcast %243 : vector<1x256xf32> to vector<64x256xf32>
    %245 = arith.addf %241, %244 : vector<64x256xf32>
    %246 = vector.extract_strided_slice %245 {offsets = [0, 0], sizes = [64, 128], strides = [1, 1]} : vector<64x256xf32> to vector<64x128xf32>
    %cst_119 = arith.constant 5.000000e-01 : f32
    %247 = vector.broadcast %cst_119 : f32 to vector<64x128xf32>
    %248 = arith.mulf %247, %246 : vector<64x128xf32>
    %249 = math.tanh %248 : vector<64x128xf32>
    %cst_120 = arith.constant 1.000000e+00 : f32
    %250 = vector.broadcast %cst_120 : f32 to vector<64x128xf32>
    %251 = arith.addf %249, %250 : vector<64x128xf32>
    %cst_121 = arith.constant 5.000000e-01 : f32
    %252 = vector.broadcast %cst_121 : f32 to vector<64x128xf32>
    %253 = arith.mulf %252, %251 : vector<64x128xf32>
    %254 = vector.extract_strided_slice %245 {offsets = [0, 128], sizes = [64, 128], strides = [1, 1]} : vector<64x256xf32> to vector<64x128xf32>
    %255 = arith.subf %254, %230 : vector<64x128xf32>
    %256 = arith.mulf %253, %255 : vector<64x128xf32>
    %257 = arith.addf %230, %256 : vector<64x128xf32>
    %c1_i32_122 = arith.constant 1 : i32
    %258 = tpu.dynamic_rotate %257 by %c1_i32_122 dim 0 : vector<64x128xf32>, i32 -> vector<64x128xf32>
    %cst_123 = arith.constant 0.000000e+00 : f32
    %259 = vector.broadcast %cst_123 : f32 to vector<64x128xf32>
    %260 = arith.select %27, %258, %259 : vector<64x128xi1>, vector<64x128xf32>
    %c63_i32_124 = arith.constant 63 : i32
    %261 = tpu.dynamic_rotate %257 by %c63_i32_124 dim 0 : vector<64x128xf32>, i32 -> vector<64x128xf32>
    %cst_125 = arith.constant 0.000000e+00 : f32
    %262 = vector.broadcast %cst_125 : f32 to vector<64x128xf32>
    %263 = arith.select %29, %261, %262 : vector<64x128xi1>, vector<64x128xf32>
    %264 = tpu.concatenate %260, %257, %263 in 1 : vector<64x128xf32>, vector<64x128xf32>, vector<64x128xf32> -> vector<64x384xf32>
    %265 = arith.truncf %264 : vector<64x384xf32> to vector<64x384xbf16>
    %c8 = arith.constant 8 : index
    %c0_126 = arith.constant 0 : index
    %c0_127 = arith.constant 0 : index
    %266 = vector.load %arg7[%c8, %c0_126, %c0_127] : memref<10x384x256xbf16, #tpu.memory_space<vmem>>, vector<1x384x256xbf16>
    %267 = vector.shape_cast %266 : vector<1x384x256xbf16> to vector<384x256xbf16>
    %cst_128 = arith.constant dense<0.000000e+00> : vector<64x256xf32>
    %268 = tpu.matmul %265, %267, %cst_128 {dimension_numbers = #tpu.dot_dimension_numbers<[1], [0], [0], [1], [0, 0, 1, 1], [], []>} : vector<64x384xbf16>, vector<384x256xbf16>, vector<64x256xf32> -> vector<64x256xf32>
    %c8_129 = arith.constant 8 : index
    %c0_130 = arith.constant 0 : index
    %c0_131 = arith.constant 0 : index
    %269 = vector.load %arg8[%c8_129, %c0_130, %c0_131] : memref<10x1x256xf32, #tpu.memory_space<vmem>>, vector<1x1x256xf32>
    %270 = vector.shape_cast %269 : vector<1x1x256xf32> to vector<1x256xf32>
    %271 = vector.broadcast %270 : vector<1x256xf32> to vector<64x256xf32>
    %272 = arith.addf %268, %271 : vector<64x256xf32>
    %273 = vector.extract_strided_slice %272 {offsets = [0, 0], sizes = [64, 128], strides = [1, 1]} : vector<64x256xf32> to vector<64x128xf32>
    %cst_132 = arith.constant 5.000000e-01 : f32
    %274 = vector.broadcast %cst_132 : f32 to vector<64x128xf32>
    %275 = arith.mulf %274, %273 : vector<64x128xf32>
    %276 = math.tanh %275 : vector<64x128xf32>
    %cst_133 = arith.constant 1.000000e+00 : f32
    %277 = vector.broadcast %cst_133 : f32 to vector<64x128xf32>
    %278 = arith.addf %276, %277 : vector<64x128xf32>
    %cst_134 = arith.constant 5.000000e-01 : f32
    %279 = vector.broadcast %cst_134 : f32 to vector<64x128xf32>
    %280 = arith.mulf %279, %278 : vector<64x128xf32>
    %281 = vector.extract_strided_slice %272 {offsets = [0, 128], sizes = [64, 128], strides = [1, 1]} : vector<64x256xf32> to vector<64x128xf32>
    %282 = arith.subf %281, %257 : vector<64x128xf32>
    %283 = arith.mulf %280, %282 : vector<64x128xf32>
    %284 = arith.addf %257, %283 : vector<64x128xf32>
    %c1_i32_135 = arith.constant 1 : i32
    %285 = tpu.dynamic_rotate %284 by %c1_i32_135 dim 0 : vector<64x128xf32>, i32 -> vector<64x128xf32>
    %cst_136 = arith.constant 0.000000e+00 : f32
    %286 = vector.broadcast %cst_136 : f32 to vector<64x128xf32>
    %287 = arith.select %27, %285, %286 : vector<64x128xi1>, vector<64x128xf32>
    %c63_i32_137 = arith.constant 63 : i32
    %288 = tpu.dynamic_rotate %284 by %c63_i32_137 dim 0 : vector<64x128xf32>, i32 -> vector<64x128xf32>
    %cst_138 = arith.constant 0.000000e+00 : f32
    %289 = vector.broadcast %cst_138 : f32 to vector<64x128xf32>
    %290 = arith.select %29, %288, %289 : vector<64x128xi1>, vector<64x128xf32>
    %291 = tpu.concatenate %287, %284, %290 in 1 : vector<64x128xf32>, vector<64x128xf32>, vector<64x128xf32> -> vector<64x384xf32>
    %292 = arith.truncf %291 : vector<64x384xf32> to vector<64x384xbf16>
    %c9 = arith.constant 9 : index
    %c0_139 = arith.constant 0 : index
    %c0_140 = arith.constant 0 : index
    %293 = vector.load %arg7[%c9, %c0_139, %c0_140] : memref<10x384x256xbf16, #tpu.memory_space<vmem>>, vector<1x384x256xbf16>
    %294 = vector.shape_cast %293 : vector<1x384x256xbf16> to vector<384x256xbf16>
    %cst_141 = arith.constant dense<0.000000e+00> : vector<64x256xf32>
    %295 = tpu.matmul %292, %294, %cst_141 {dimension_numbers = #tpu.dot_dimension_numbers<[1], [0], [0], [1], [0, 0, 1, 1], [], []>} : vector<64x384xbf16>, vector<384x256xbf16>, vector<64x256xf32> -> vector<64x256xf32>
    %c9_142 = arith.constant 9 : index
    %c0_143 = arith.constant 0 : index
    %c0_144 = arith.constant 0 : index
    %296 = vector.load %arg8[%c9_142, %c0_143, %c0_144] : memref<10x1x256xf32, #tpu.memory_space<vmem>>, vector<1x1x256xf32>
    %297 = vector.shape_cast %296 : vector<1x1x256xf32> to vector<1x256xf32>
    %298 = vector.broadcast %297 : vector<1x256xf32> to vector<64x256xf32>
    %299 = arith.addf %295, %298 : vector<64x256xf32>
    %300 = vector.extract_strided_slice %299 {offsets = [0, 0], sizes = [64, 128], strides = [1, 1]} : vector<64x256xf32> to vector<64x128xf32>
    %cst_145 = arith.constant 5.000000e-01 : f32
    %301 = vector.broadcast %cst_145 : f32 to vector<64x128xf32>
    %302 = arith.mulf %301, %300 : vector<64x128xf32>
    %303 = math.tanh %302 : vector<64x128xf32>
    %cst_146 = arith.constant 1.000000e+00 : f32
    %304 = vector.broadcast %cst_146 : f32 to vector<64x128xf32>
    %305 = arith.addf %303, %304 : vector<64x128xf32>
    %cst_147 = arith.constant 5.000000e-01 : f32
    %306 = vector.broadcast %cst_147 : f32 to vector<64x128xf32>
    %307 = arith.mulf %306, %305 : vector<64x128xf32>
    %308 = vector.extract_strided_slice %299 {offsets = [0, 128], sizes = [64, 128], strides = [1, 1]} : vector<64x256xf32> to vector<64x128xf32>
    %309 = arith.subf %308, %284 : vector<64x128xf32>
    %310 = arith.mulf %307, %309 : vector<64x128xf32>
    %311 = arith.addf %284, %310 : vector<64x128xf32>
    %312 = arith.truncf %311 : vector<64x128xf32> to vector<64x128xbf16>
    %c0_148 = arith.constant 0 : index
    %c0_149 = arith.constant 0 : index
    %c0_150 = arith.constant 0 : index
    %313 = vector.load %arg9[%c0_148, %c0_149, %c0_150] : memref<2x128x256xbf16, #tpu.memory_space<vmem>>, vector<1x128x256xbf16>
    %314 = vector.shape_cast %313 : vector<1x128x256xbf16> to vector<128x256xbf16>
    %cst_151 = arith.constant dense<0.000000e+00> : vector<64x256xf32>
    %315 = tpu.matmul %312, %314, %cst_151 {dimension_numbers = #tpu.dot_dimension_numbers<[1], [0], [0], [1], [0, 0, 1, 1], [], []>} : vector<64x128xbf16>, vector<128x256xbf16>, vector<64x256xf32> -> vector<64x256xf32>
    %c0_152 = arith.constant 0 : index
    %c0_153 = arith.constant 0 : index
    %c0_154 = arith.constant 0 : index
    %316 = vector.load %arg10[%c0_152, %c0_153, %c0_154] : memref<2x1x256xf32, #tpu.memory_space<vmem>>, vector<1x1x256xf32>
    %317 = vector.shape_cast %316 : vector<1x1x256xf32> to vector<1x256xf32>
    %318 = vector.broadcast %317 : vector<1x256xf32> to vector<64x256xf32>
    %319 = arith.addf %315, %318 : vector<64x256xf32>
    %320 = vector.extract_strided_slice %319 {offsets = [0, 0], sizes = [64, 128], strides = [1, 1]} : vector<64x256xf32> to vector<64x128xf32>
    %cst_155 = arith.constant 5.000000e-01 : f32
    %321 = vector.broadcast %cst_155 : f32 to vector<64x128xf32>
    %322 = arith.mulf %321, %320 : vector<64x128xf32>
    %323 = math.tanh %322 : vector<64x128xf32>
    %cst_156 = arith.constant 1.000000e+00 : f32
    %324 = vector.broadcast %cst_156 : f32 to vector<64x128xf32>
    %325 = arith.addf %323, %324 : vector<64x128xf32>
    %cst_157 = arith.constant 5.000000e-01 : f32
    %326 = vector.broadcast %cst_157 : f32 to vector<64x128xf32>
    %327 = arith.mulf %326, %325 : vector<64x128xf32>
    %328 = vector.extract_strided_slice %319 {offsets = [0, 128], sizes = [64, 128], strides = [1, 1]} : vector<64x256xf32> to vector<64x128xf32>
    %329 = arith.subf %328, %311 : vector<64x128xf32>
    %330 = arith.mulf %327, %329 : vector<64x128xf32>
    %331 = arith.addf %311, %330 : vector<64x128xf32>
    %332 = arith.truncf %331 : vector<64x128xf32> to vector<64x128xbf16>
    %c1_158 = arith.constant 1 : index
    %c0_159 = arith.constant 0 : index
    %c0_160 = arith.constant 0 : index
    %333 = vector.load %arg9[%c1_158, %c0_159, %c0_160] : memref<2x128x256xbf16, #tpu.memory_space<vmem>>, vector<1x128x256xbf16>
    %334 = vector.shape_cast %333 : vector<1x128x256xbf16> to vector<128x256xbf16>
    %cst_161 = arith.constant dense<0.000000e+00> : vector<64x256xf32>
    %335 = tpu.matmul %332, %334, %cst_161 {dimension_numbers = #tpu.dot_dimension_numbers<[1], [0], [0], [1], [0, 0, 1, 1], [], []>} : vector<64x128xbf16>, vector<128x256xbf16>, vector<64x256xf32> -> vector<64x256xf32>
    %c1_162 = arith.constant 1 : index
    %c0_163 = arith.constant 0 : index
    %c0_164 = arith.constant 0 : index
    %336 = vector.load %arg10[%c1_162, %c0_163, %c0_164] : memref<2x1x256xf32, #tpu.memory_space<vmem>>, vector<1x1x256xf32>
    %337 = vector.shape_cast %336 : vector<1x1x256xf32> to vector<1x256xf32>
    %338 = vector.broadcast %337 : vector<1x256xf32> to vector<64x256xf32>
    %339 = arith.addf %335, %338 : vector<64x256xf32>
    %340 = vector.extract_strided_slice %339 {offsets = [0, 0], sizes = [64, 128], strides = [1, 1]} : vector<64x256xf32> to vector<64x128xf32>
    %cst_165 = arith.constant 5.000000e-01 : f32
    %341 = vector.broadcast %cst_165 : f32 to vector<64x128xf32>
    %342 = arith.mulf %341, %340 : vector<64x128xf32>
    %343 = math.tanh %342 : vector<64x128xf32>
    %cst_166 = arith.constant 1.000000e+00 : f32
    %344 = vector.broadcast %cst_166 : f32 to vector<64x128xf32>
    %345 = arith.addf %343, %344 : vector<64x128xf32>
    %cst_167 = arith.constant 5.000000e-01 : f32
    %346 = vector.broadcast %cst_167 : f32 to vector<64x128xf32>
    %347 = arith.mulf %346, %345 : vector<64x128xf32>
    %348 = vector.extract_strided_slice %339 {offsets = [0, 128], sizes = [64, 128], strides = [1, 1]} : vector<64x256xf32> to vector<64x128xf32>
    %349 = arith.subf %348, %331 : vector<64x128xf32>
    %350 = arith.mulf %347, %349 : vector<64x128xf32>
    %351 = arith.addf %331, %350 : vector<64x128xf32>
    %352 = vector.shape_cast %351 : vector<64x128xf32> to vector<1x64x128xf32>
    %c0_168 = arith.constant 0 : index
    %c0_169 = arith.constant 0 : index
    %c0_170 = arith.constant 0 : index
    %353 = vector.load %arg11[%c0_168, %c0_169, %c0_170] : memref<1x64x128xf32, #tpu.memory_space<vmem>>, vector<1x64x128xf32>
    tpu.vector_store %arg11[%c0_168, %c0_169, %c0_170], %352 {strides = array<i32>} : memref<1x64x128xf32, #tpu.memory_space<vmem>>, vector<1x64x128xf32>,
    return
  }
  func.func @transform_0(%arg0: i32) -> (i32, i32, i32) {
    %c0_i32 = arith.constant 0 : i32
    %c0_i32_0 = arith.constant 0 : i32
    %c0_i32_1 = arith.constant 0 : i32
    return %arg0, %c0_i32, %c0_i32_0 : i32, i32, i32
  }
  func.func @transform_1(%arg0: i32) -> (i32, i32) {
    %c0_i32 = arith.constant 0 : i32
    %c0_i32_0 = arith.constant 0 : i32
    %c0_i32_1 = arith.constant 0 : i32
    return %c0_i32, %c0_i32_0 : i32, i32
  }
  func.func @transform_2(%arg0: i32) -> (i32, i32) {
    %c0_i32 = arith.constant 0 : i32
    %c0_i32_0 = arith.constant 0 : i32
    %c0_i32_1 = arith.constant 0 : i32
    return %c0_i32, %c0_i32_0 : i32, i32
  }
  func.func @transform_3(%arg0: i32) -> (i32, i32) {
    %c0_i32 = arith.constant 0 : i32
    %c0_i32_0 = arith.constant 0 : i32
    %c0_i32_1 = arith.constant 0 : i32
    return %c0_i32, %c0_i32_0 : i32, i32
  }
  func.func @transform_4(%arg0: i32) -> (i32, i32) {
    %c0_i32 = arith.constant 0 : i32
    %c0_i32_0 = arith.constant 0 : i32
    %c0_i32_1 = arith.constant 0 : i32
    return %c0_i32, %c0_i32_0 : i32, i32
  }
  func.func @transform_5(%arg0: i32) -> (i32, i32) {
    %c0_i32 = arith.constant 0 : i32
    %c0_i32_0 = arith.constant 0 : i32
    %c0_i32_1 = arith.constant 0 : i32
    return %c0_i32, %c0_i32_0 : i32, i32
  }
  func.func @transform_6(%arg0: i32) -> (i32, i32, i32) {
    %c0_i32 = arith.constant 0 : i32
    %c0_i32_0 = arith.constant 0 : i32
    %c0_i32_1 = arith.constant 0 : i32
    %c0_i32_2 = arith.constant 0 : i32
    return %c0_i32, %c0_i32_0, %c0_i32_1 : i32, i32, i32
  }
  func.func @transform_7(%arg0: i32) -> (i32, i32, i32) {
    %c0_i32 = arith.constant 0 : i32
    %c0_i32_0 = arith.constant 0 : i32
    %c0_i32_1 = arith.constant 0 : i32
    %c0_i32_2 = arith.constant 0 : i32
    return %c0_i32, %c0_i32_0, %c0_i32_1 : i32, i32, i32
  }
  func.func @transform_8(%arg0: i32) -> (i32, i32, i32) {
    %c0_i32 = arith.constant 0 : i32
    %c0_i32_0 = arith.constant 0 : i32
    %c0_i32_1 = arith.constant 0 : i32
    %c0_i32_2 = arith.constant 0 : i32
    return %c0_i32, %c0_i32_0, %c0_i32_1 : i32, i32, i32
  }
  func.func @transform_9(%arg0: i32) -> (i32, i32, i32) {
    %c0_i32 = arith.constant 0 : i32
    %c0_i32_0 = arith.constant 0 : i32
    %c0_i32_1 = arith.constant 0 : i32
    %c0_i32_2 = arith.constant 0 : i32
    return %c0_i32, %c0_i32_0, %c0_i32_1 : i32, i32, i32
  }
  func.func @transform_10(%arg0: i32) -> (i32, i32, i32) {
    %c0_i32 = arith.constant 0 : i32
    %c0_i32_0 = arith.constant 0 : i32
    %c0_i32_1 = arith.constant 0 : i32
    return %arg0, %c0_i32, %c0_i32_0 : i32, i32, i32
  }
}

</mosaic_0001>

<llo_original>
// kernel: tpu_custom_call.1
$region0: #{tpu_custom_call.1}
  #allocation0 [shape = 'u32[]', space=smem, size = 0x4, offset = 0x4, fixed_abs, tag = 'smem constant byte address 0x4 - core index']
  #allocation1 [shape = 'u32[144,128]{1,0:T(1,128)}', space=vmem, size = 0x12000, scoped, tag = 'internal scratch']
  %s0 = inlined_call_operand.vmem [shape: s32[2,64,1], index: 0, kind: input, shape index: {}]
  %s1 = inlined_call_operand.hbm [shape: bf16[128,128], index: 1, kind: input, shape index: {}]
  %s2 = inlined_call_operand.hbm [shape: bf16[128,128], index: 2, kind: input, shape index: {}]
  %s3 = inlined_call_operand.hbm [shape: f32[1,128], index: 3, kind: input, shape index: {}]
  %s4 = inlined_call_operand.hbm [shape: bf16[128,128], index: 4, kind: input, shape index: {}]
  %s5 = inlined_call_operand.hbm [shape: f32[1,128], index: 5, kind: input, shape index: {}]
  %s6 = inlined_call_operand.hbm [shape: bf16[10,384,256], index: 6, kind: input, shape index: {}]
  %s7 = inlined_call_operand.hbm [shape: f32[10,1,256], index: 7, kind: input, shape index: {}]
  %s8 = inlined_call_operand.hbm [shape: bf16[2,128,256], index: 8, kind: input, shape index: {}]
  %s9 = inlined_call_operand.hbm [shape: f32[2,1,256], index: 9, kind: input, shape index: {}]
  %s10 = inlined_call_operand.hbm [shape: f32[2,64,128], index: 10, kind: output, shape index: {}]
  %s11 = sld [smem:[#allocation0]]
  $region109: #{tpu_custom_call.1} parent=0
    _
  %s13 = ssub.s32 1, %s11
  %s14 = scalar_select 0, %s13, %s11
  $region1: #{tpu_custom_call.1} parent=0
    #allocation2 [shape = 'u8[32768]{0}', space=vmem, size = 0x8000, scoped, tag = 'input window, operand 1, single buffered']
    #allocation3 [shape = 's32[2]{0}', space=sflag, size = 0x8, scoped, tag = 'scoped memory for tpu_custom_call.1']
    #allocation4 [shape = 's32[2]{0}', space=sflag, size = 0x8, scoped, tag = 'scoped memory for tpu_custom_call.1']
    #allocation5 [shape = 'u8[32768]{0}', space=vmem, size = 0x8000, scoped, tag = 'input window, operand 2, single buffered']
    #allocation6 [shape = 's32[1]{0}', space=sflag, size = 0x4, scoped, tag = 'scoped memory for tpu_custom_call.1']
    #allocation7 [shape = 'u8[512]{0}', space=vmem, size = 0x400, scoped, tag = 'input window, operand 3, single buffered']
    #allocation8 [shape = 'u8[32768]{0}', space=vmem, size = 0x8000, scoped, tag = 'input window, operand 4, single buffered']
    #allocation9 [shape = 's32[1]{0}', space=sflag, size = 0x4, scoped, tag = 'scoped memory for tpu_custom_call.1']
    #allocation10 [shape = 'u8[512]{0}', space=vmem, size = 0x400, scoped, tag = 'input window, operand 5, single buffered']
    #allocation11 [shape = 'u8[1966080]{0}', space=vmem, size = 0x1e0000, scoped, tag = 'input window, operand 6, single buffered']
    #allocation12 [shape = 's32[1]{0}', space=sflag, size = 0x4, scoped, tag = 'scoped memory for tpu_custom_call.1']
    #allocation13 [shape = 'u8[10240]{0}', space=vmem, size = 0x2800, scoped, tag = 'input window, operand 7, single buffered']
    #allocation14 [shape = 'u8[131072]{0}', space=vmem, size = 0x20000, scoped, tag = 'input window, operand 8, single buffered']
    #allocation15 [shape = 's32[1]{0}', space=sflag, size = 0x4, scoped, tag = 'scoped memory for tpu_custom_call.1']
    #allocation16 [shape = 'u8[2048]{0}', space=vmem, size = 0x800, scoped, tag = 'input window, operand 9, single buffered']
    #allocation17 [shape = 'u8[65536]{0}', space=vmem, size = 0x10000, scoped, tag = 'output window, operand 0']
    %15 = vsyncpa [#allocation3], 0
    %16 = vsyncpa [#allocation6], 0
    %17 = vsyncpa [#allocation9], 0
    %18 = vsyncpa [#allocation12], 0
    %19 = vsyncpa [#allocation15], 0
    %20 = vsyncpa [#allocation4], 0
    %s21 = scalar_lea.sflag [#allocation4], 1
    %22 = vsyncpa %s21, 0
    loop: start=0, step=1, limit=4
    $region2: #{tpu_custom_call.1} parent=1 // loop_pre_header
      _
    $region3: #{tpu_custom_call.1} parent=1 // loop_header
      %s24 = sphi 0, %s28
      %p25 = scmp.ge.s32.totalorder %s24, 4
      %s34 = sphi 0, %s36
      %s37 = sphi 0, %s34
      %s38 = sphi 0, %s37
      %s54 = sphi 0, %s38
      %s58 = sphi 0, %s58
      %s60 = sphi 0, %s58
      %s61 = sphi 0, %s60
      %s75 = sphi 0, %s61
      %s79 = sphi 0, %s79
      %s81 = sphi 0, %s79
      %s82 = sphi 0, %s81
      %s96 = sphi 0, %s82
      %s100 = sphi 0, %s100
      %s102 = sphi 0, %s100
      %s103 = sphi 0, %s102
      %s117 = sphi 0, %s103
      %s121 = sphi 0, %s121
      %s123 = sphi 0, %s121
      %s124 = sphi 0, %s123
      %s138 = sphi 0, %s124
      %s142 = sphi 0, %s142
      %s144 = sphi 0, %s142
      %s145 = sphi 0, %s144
      %s159 = sphi 0, %s145
      %s163 = sphi 0, %s163
      %s165 = sphi 0, %s163
      %s166 = sphi 0, %s165
      %s180 = sphi 0, %s166
      %s184 = sphi 0, %s184
      %s186 = sphi 0, %s184
      %s187 = sphi 0, %s186
      %s201 = sphi 0, %s187
      %s205 = sphi 0, %s205
      %s207 = sphi 0, %s205
      %s208 = sphi 0, %s207
      %s222 = sphi 0, %s208
      %s226 = sphi 0, %s226
      %s228 = sphi 0, %s226
      %s229 = sphi 0, %s228
      %s243 = sphi 0, %s229
      %s249 = sphi 0, %s251
      %s252 = sphi 0, %s249
      %s253 = sphi 0, %s252
      %s269 = sphi 0, %s253
    $region4: #{tpu_custom_call.1} parent=1 // loop_header_branch
      %27 = sbr.rel (%p25) target = $region8
    $region5: #{tpu_custom_call.1} parent=1 // loop_body
      %s29 = ssub.s32 %s24, 1
      %s30 = ssub.s32 %s24, 2
      %s31 = sadd.s32 %s24, 1
      %s32 = ssub.s32 %s24, %s31
      %p33 = scmp.eq.s32.totalorder %s32, 0
      %s35 = sadd.s32 %s34, 1
      %s36 = scalar_select %p33, %s34, %s35
      %p39 = pneg %p33
      %p40 = scmp.eq.s32.totalorder %s24, 1
      %p41 = por %p39, %p40
      %p42 = scmp.ne.s32.totalorder %s34, %s37
      %p43 = scmp.eq.s32.totalorder %s24, 0
      %p44 = por %p42, %p43
      %p45 = scmp.ne.s32.totalorder %s34, %s37
      %p46 = scmp.eq.s32.totalorder %s29, 1
      %p47 = por %p45, %p46
      %p48 = scmp.ne.s32.totalorder %s37, %s38
      %p49 = scmp.eq.s32.totalorder %s29, 0
      %p50 = por %p48, %p49
      %p51 = scmp.ne.s32.totalorder %s37, %s38
      %p52 = scmp.eq.s32.totalorder %s30, 1
      %p53 = por %p51, %p52
      %p55 = scmp.ne.s32.totalorder %s38, %s54
      %p56 = scmp.eq.s32.totalorder %s30, 0
      %p57 = por %p55, %p56
      %s59 = sadd.s32 %s58, 1
      %p62 = scmp.eq.s32.totalorder %s24, 1
      %p63 = scmp.ne.s32.totalorder %s58, %s60
      %p64 = scmp.eq.s32.totalorder %s24, 0
      %p65 = por %p63, %p64
      %p66 = scmp.ne.s32.totalorder %s58, %s60
      %p67 = scmp.eq.s32.totalorder %s29, 1
      %p68 = por %p66, %p67
      %p69 = scmp.ne.s32.totalorder %s60, %s61
      %p70 = scmp.eq.s32.totalorder %s29, 0
      %p71 = por %p69, %p70
      %p72 = scmp.ne.s32.totalorder %s60, %s61
      %p73 = scmp.eq.s32.totalorder %s30, 1
      %p74 = por %p72, %p73
      %p76 = scmp.ne.s32.totalorder %s61, %s75
      %p77 = scmp.eq.s32.totalorder %s30, 0
      %p78 = por %p76, %p77
      %s80 = sadd.s32 %s79, 1
      %p83 = scmp.eq.s32.totalorder %s24, 1
      %p84 = scmp.ne.s32.totalorder %s79, %s81
      %p85 = scmp.eq.s32.totalorder %s24, 0
      %p86 = por %p84, %p85
      %p87 = scmp.ne.s32.totalorder %s79, %s81
      %p88 = scmp.eq.s32.totalorder %s29, 1
      %p89 = por %p87, %p88
      %p90 = scmp.ne.s32.totalorder %s81, %s82
      %p91 = scmp.eq.s32.totalorder %s29, 0
      %p92 = por %p90, %p91
      %p93 = scmp.ne.s32.totalorder %s81, %s82
      %p94 = scmp.eq.s32.totalorder %s30, 1
      %p95 = por %p93, %p94
      %p97 = scmp.ne.s32.totalorder %s82, %s96
      %p98 = scmp.eq.s32.totalorder %s30, 0
      %p99 = por %p97, %p98
      %s101 = sadd.s32 %s100, 1
      %p104 = scmp.eq.s32.totalorder %s24, 1
      %p105 = scmp.ne.s32.totalorder %s100, %s102
      %p106 = scmp.eq.s32.totalorder %s24, 0
      %p107 = por %p105, %p106
      %p108 = scmp.ne.s32.totalorder %s100, %s102
      %p109 = scmp.eq.s32.totalorder %s29, 1
      %p110 = por %p108, %p109
      %p111 = scmp.ne.s32.totalorder %s102, %s103
      %p112 = scmp.eq.s32.totalorder %s29, 0
      %p113 = por %p111, %p112
      %p114 = scmp.ne.s32.totalorder %s102, %s103
      %p115 = scmp.eq.s32.totalorder %s30, 1
      %p116 = por %p114, %p115
      %p118 = scmp.ne.s32.totalorder %s103, %s117
      %p119 = scmp.eq.s32.totalorder %s30, 0
      %p120 = por %p118, %p119
      %s122 = sadd.s32 %s121, 1
      %p125 = scmp.eq.s32.totalorder %s24, 1
      %p126 = scmp.ne.s32.totalorder %s121, %s123
      %p127 = scmp.eq.s32.totalorder %s24, 0
      %p128 = por %p126, %p127
      %p129 = scmp.ne.s32.totalorder %s121, %s123
      %p130 = scmp.eq.s32.totalorder %s29, 1
      %p131 = por %p129, %p130
      %p132 = scmp.ne.s32.totalorder %s123, %s124
      %p133 = scmp.eq.s32.totalorder %s29, 0
      %p134 = por %p132, %p133
      %p135 = scmp.ne.s32.totalorder %s123, %s124
      %p136 = scmp.eq.s32.totalorder %s30, 1
      %p137 = por %p135, %p136
      %p139 = scmp.ne.s32.totalorder %s124, %s138
      %p140 = scmp.eq.s32.totalorder %s30, 0
      %p141 = por %p139, %p140
      %s143 = sadd.s32 %s142, 1
      %p146 = scmp.eq.s32.totalorder %s24, 1
      %p147 = scmp.ne.s32.totalorder %s142, %s144
      %p148 = scmp.eq.s32.totalorder %s24, 0
      %p149 = por %p147, %p148
      %p150 = scmp.ne.s32.totalorder %s142, %s144
      %p151 = scmp.eq.s32.totalorder %s29, 1
      %p152 = por %p150, %p151
      %p153 = scmp.ne.s32.totalorder %s144, %s145
      %p154 = scmp.eq.s32.totalorder %s29, 0
      %p155 = por %p153, %p154
      %p156 = scmp.ne.s32.totalorder %s144, %s145
      %p157 = scmp.eq.s32.totalorder %s30, 1
      %p158 = por %p156, %p157
      %p160 = scmp.ne.s32.totalorder %s145, %s159
      %p161 = scmp.eq.s32.totalorder %s30, 0
      %p162 = por %p160, %p161
      %s164 = sadd.s32 %s163, 1
      %p167 = scmp.eq.s32.totalorder %s24, 1
      %p168 = scmp.ne.s32.totalorder %s163, %s165
      %p169 = scmp.eq.s32.totalorder %s24, 0
      %p170 = por %p168, %p169
      %p171 = scmp.ne.s32.totalorder %s163, %s165
      %p172 = scmp.eq.s32.totalorder %s29, 1
      %p173 = por %p171, %p172
      %p174 = scmp.ne.s32.totalorder %s165, %s166
      %p175 = scmp.eq.s32.totalorder %s29, 0
      %p176 = por %p174, %p175
      %p177 = scmp.ne.s32.totalorder %s165, %s166
      %p178 = scmp.eq.s32.totalorder %s30, 1
      %p179 = por %p177, %p178
      %p181 = scmp.ne.s32.totalorder %s166, %s180
      %p182 = scmp.eq.s32.totalorder %s30, 0
      %p183 = por %p181, %p182
      %s185 = sadd.s32 %s184, 1
      %p188 = scmp.eq.s32.totalorder %s24, 1
      %p189 = scmp.ne.s32.totalorder %s184, %s186
      %p190 = scmp.eq.s32.totalorder %s24, 0
      %p191 = por %p189, %p190
      %p192 = scmp.ne.s32.totalorder %s184, %s186
      %p193 = scmp.eq.s32.totalorder %s29, 1
      %p194 = por %p192, %p193
      %p195 = scmp.ne.s32.totalorder %s186, %s187
      %p196 = scmp.eq.s32.totalorder %s29, 0
      %p197 = por %p195, %p196
      %p198 = scmp.ne.s32.totalorder %s186, %s187
      %p199 = scmp.eq.s32.totalorder %s30, 1
      %p200 = por %p198, %p199
      %p202 = scmp.ne.s32.totalorder %s187, %s201
      %p203 = scmp.eq.s32.totalorder %s30, 0
      %p204 = por %p202, %p203
      %s206 = sadd.s32 %s205, 1
      %p209 = scmp.eq.s32.totalorder %s24, 1
      %p210 = scmp.ne.s32.totalorder %s205, %s207
      %p211 = scmp.eq.s32.totalorder %s24, 0
      %p212 = por %p210, %p211
      %p213 = scmp.ne.s32.totalorder %s205, %s207
      %p214 = scmp.eq.s32.totalorder %s29, 1
      %p215 = por %p213, %p214
      %p216 = scmp.ne.s32.totalorder %s207, %s208
      %p217 = scmp.eq.s32.totalorder %s29, 0
      %p218 = por %p216, %p217
      %p219 = scmp.ne.s32.totalorder %s207, %s208
      %p220 = scmp.eq.s32.totalorder %s30, 1
      %p221 = por %p219, %p220
      %p223 = scmp.ne.s32.totalorder %s208, %s222
      %p224 = scmp.eq.s32.totalorder %s30, 0
      %p225 = por %p223, %p224
      %s227 = sadd.s32 %s226, 1
      %p230 = scmp.eq.s32.totalorder %s24, 1
      %p231 = scmp.ne.s32.totalorder %s226, %s228
      %p232 = scmp.eq.s32.totalorder %s24, 0
      %p233 = por %p231, %p232
      %p234 = scmp.ne.s32.totalorder %s226, %s228
      %p235 = scmp.eq.s32.totalorder %s29, 1
      %p236 = por %p234, %p235
      %p237 = scmp.ne.s32.totalorder %s228, %s229
      %p238 = scmp.eq.s32.totalorder %s29, 0
      %p239 = por %p237, %p238
      %p240 = scmp.ne.s32.totalorder %s228, %s229
      %p241 = scmp.eq.s32.totalorder %s30, 1
      %p242 = por %p240, %p241
      %p244 = scmp.ne.s32.totalorder %s229, %s243
      %p245 = scmp.eq.s32.totalorder %s30, 0
      %p246 = por %p244, %p245
      %s247 = ssub.s32 %s24, %s31
      %p248 = scmp.eq.s32.totalorder %s247, 0
      %s250 = sadd.s32 %s249, 1
      %s251 = scalar_select %p248, %s249, %s250
      %p254 = pneg %p248
      %p255 = scmp.eq.s32.totalorder %s24, 1
      %p256 = por %p254, %p255
      %p257 = scmp.ne.s32.totalorder %s249, %s252
      %p258 = scmp.eq.s32.totalorder %s24, 0
      %p259 = por %p257, %p258
      %p260 = scmp.ne.s32.totalorder %s249, %s252
      %p261 = scmp.eq.s32.totalorder %s29, 1
      %p262 = por %p260, %p261
      %p263 = scmp.ne.s32.totalorder %s252, %s253
      %p264 = scmp.eq.s32.totalorder %s29, 0
      %p265 = por %p263, %p264
      %p266 = scmp.ne.s32.totalorder %s252, %s253
      %p267 = scmp.eq.s32.totalorder %s30, 1
      %p268 = por %p266, %p267
      %p270 = scmp.ne.s32.totalorder %s253, %s269
      %p271 = scmp.eq.s32.totalorder %s30, 0
      %p272 = por %p270, %p271
      %p273 = scmp.le.s32.totalorder 1, %s24
      %p274 = scmp.lt.s32.totalorder %s24, 3
      %p275 = pnand %p273, %p274
      %p276 = pneg %p275
      // Predicated region
      $region9: #{tpu_custom_call.1} parent=5 // pred_check
        _
      $region10: #{tpu_custom_call.1} parent=5 // pred_check_branch
        %278 = sbr.rel (%p275) target = $region12
      $region11: #{tpu_custom_call.1} parent=5 // pred_region
        %s279 = ssub.s32 %s24, 1
        // Predicated region
        $region13: #{tpu_custom_call.1} parent=11 // pred_check
          %p280 = pneg %p71
        $region14: #{tpu_custom_call.1} parent=11 // pred_check_branch
          %282 = sbr.rel (%p280) target = $region16
        $region15: #{tpu_custom_call.1} parent=11 // pred_region
          %s284 = ssub.s32 1024, 1024
          %285 = vsyncadd [#allocation3], %s284
          %s286 = sshll.u32 [#allocation2], 4
          %s287 = int_to_ptr.vmem [resolvable:$true] %s286
          %292 = dma.hbm_to_vmem [thread:$0]  %s1, 1024, %s287, [#allocation3], 64, 64, 4
        $region16: #{tpu_custom_call.1} parent=11 // pred_fallthru
          _
        // Predicated region
        $region17: #{tpu_custom_call.1} parent=11 // pred_check
          %p293 = pneg %p92
        $region18: #{tpu_custom_call.1} parent=11 // pred_check_branch
          %295 = sbr.rel (%p293) target = $region20
        $region19: #{tpu_custom_call.1} parent=11 // pred_region
          %s297 = ssub.s32 1024, 1024
          %298 = vsyncadd [#allocation6], %s297
          %s299 = sshll.u32 [#allocation5], 4
          %s300 = int_to_ptr.vmem [resolvable:$true] %s299
          %305 = dma.hbm_to_vmem [thread:$0]  %s2, 1024, %s300, [#allocation6], 64, 64, 4
        $region20: #{tpu_custom_call.1} parent=11 // pred_fallthru
          _
        // Predicated region
        $region21: #{tpu_custom_call.1} parent=11 // pred_check
          %p306 = pneg %p113
        $region22: #{tpu_custom_call.1} parent=11 // pred_check_branch
          %308 = sbr.rel (%p306) target = $region24
        $region23: #{tpu_custom_call.1} parent=11 // pred_region
          %s310 = ssub.s32 16, 16
          %311 = vsyncadd [#allocation6], %s310
          %s313 = sshll.u32 [#allocation7], 4
          %s314 = int_to_ptr.vmem [resolvable:$true] %s313
          %316 = dma.hbm_to_vmem [thread:$0]  %s3, 16, %s314, [#allocation6]
        $region24: #{tpu_custom_call.1} parent=11 // pred_fallthru
          _
        // Predicated region
        $region25: #{tpu_custom_call.1} parent=11 // pred_check
          %p317 = pneg %p134
        $region26: #{tpu_custom_call.1} parent=11 // pred_check_branch
          %319 = sbr.rel (%p317) target = $region28
        $region27: #{tpu_custom_call.1} parent=11 // pred_region
          %s321 = ssub.s32 1024, 1024
          %322 = vsyncadd [#allocation9], %s321
          %s323 = sshll.u32 [#allocation8], 4
          %s324 = int_to_ptr.vmem [resolvable:$true] %s323
          %329 = dma.hbm_to_vmem [thread:$0]  %s4, 1024, %s324, [#allocation9], 64, 64, 4
        $region28: #{tpu_custom_call.1} parent=11 // pred_fallthru
          _
        // Predicated region
        $region29: #{tpu_custom_call.1} parent=11 // pred_check
          %p330 = pneg %p155
        $region30: #{tpu_custom_call.1} parent=11 // pred_check_branch
          %332 = sbr.rel (%p330) target = $region32
        $region31: #{tpu_custom_call.1} parent=11 // pred_region
          %s334 = ssub.s32 16, 16
          %335 = vsyncadd [#allocation9], %s334
          %s337 = sshll.u32 [#allocation10], 4
          %s338 = int_to_ptr.vmem [resolvable:$true] %s337
          %340 = dma.hbm_to_vmem [thread:$0]  %s5, 16, %s338, [#allocation9]
        $region32: #{tpu_custom_call.1} parent=11 // pred_fallthru
          _
        // Predicated region
        $region33: #{tpu_custom_call.1} parent=11 // pred_check
          %p341 = pneg %p176
        $region34: #{tpu_custom_call.1} parent=11 // pred_check_branch
          %343 = sbr.rel (%p341) target = $region36
        $region35: #{tpu_custom_call.1} parent=11 // pred_region
          %s345 = ssub.s32 61440, 61440
          %346 = vsyncadd [#allocation12], %s345
          %s347 = sshll.u32 [#allocation11], 4
          %s348 = int_to_ptr.vmem [resolvable:$true] %s347
          %353 = dma.hbm_to_vmem [thread:$0]  %s6, 61440, %s348, [#allocation12], 128, 128, 8
        $region36: #{tpu_custom_call.1} parent=11 // pred_fallthru
          _
        // Predicated region
        $region37: #{tpu_custom_call.1} parent=11 // pred_check
          %p354 = pneg %p197
        $region38: #{tpu_custom_call.1} parent=11 // pred_check_branch
          %356 = sbr.rel (%p354) target = $region40
        $region39: #{tpu_custom_call.1} parent=11 // pred_region
          %s358 = ssub.s32 320, 320
          %359 = vsyncadd [#allocation12], %s358
          %s360 = sshll.u32 [#allocation13], 4
          %s361 = int_to_ptr.vmem [resolvable:$true] %s360
          %366 = dma.hbm_to_vmem [thread:$0]  %s7, 320, %s361, [#allocation12], 32, 32, 2
        $region40: #{tpu_custom_call.1} parent=11 // pred_fallthru
          _
        // Predicated region
        $region41: #{tpu_custom_call.1} parent=11 // pred_check
          %p367 = pneg %p218
        $region42: #{tpu_custom_call.1} parent=11 // pred_check_branch
          %369 = sbr.rel (%p367) target = $region44
        $region43: #{tpu_custom_call.1} parent=11 // pred_region
          %s371 = ssub.s32 4096, 4096
          %372 = vsyncadd [#allocation15], %s371
          %s373 = sshll.u32 [#allocation14], 4
          %s374 = int_to_ptr.vmem [resolvable:$true] %s373
          %379 = dma.hbm_to_vmem [thread:$0]  %s8, 4096, %s374, [#allocation15], 128, 128, 8
        $region44: #{tpu_custom_call.1} parent=11 // pred_fallthru
          _
        // Predicated region
        $region45: #{tpu_custom_call.1} parent=11 // pred_check
          %p380 = pneg %p239
        $region46: #{tpu_custom_call.1} parent=11 // pred_check_branch
          %382 = sbr.rel (%p380) target = $region48
        $region47: #{tpu_custom_call.1} parent=11 // pred_region
          %s384 = ssub.s32 64, 64
          %385 = vsyncadd [#allocation15], %s384
          %s386 = sshll.u32 [#allocation16], 4
          %s387 = int_to_ptr.vmem [resolvable:$true] %s386
          %392 = dma.hbm_to_vmem [thread:$0]  %s9, 64, %s387, [#allocation15], 32, 32, 2
        $region48: #{tpu_custom_call.1} parent=11 // pred_fallthru
          _
      $region12: #{tpu_custom_call.1} parent=5 // pred_fallthru
        _
      %p393 = scmp.lt.s32.totalorder %s24, 2
      // Predicated region
      $region49: #{tpu_custom_call.1} parent=5 // pred_check
        %p394 = pneg %p393
      $region50: #{tpu_custom_call.1} parent=5 // pred_check_branch
        %396 = sbr.rel (%p394) target = $region52
      $region51: #{tpu_custom_call.1} parent=5 // pred_region
        // Predicated region
        $region53: #{tpu_custom_call.1} parent=51 // pred_check
          %p397 = pneg %p44
        $region54: #{tpu_custom_call.1} parent=51 // pred_check_branch
          %399 = sbr.rel (%p397) target = $region56
        $region55: #{tpu_custom_call.1} parent=51 // pred_region
          %p400 = scmp.lt.s32.totalorder %s24, 1
          %s401 = scalar_select %p400, %s24, 1
          %s402 = smul.addr %s401, 8
          %s403 = smul.addr %s402, 8
          %s404 = scalar_lea.vmem %s0, %s403
        $region56: #{tpu_custom_call.1} parent=51 // pred_fallthru
          _
      $region52: #{tpu_custom_call.1} parent=5 // pred_fallthru
        _
      %p405 = scmp.le.s32.totalorder 1, %s24
      %p406 = scmp.lt.s32.totalorder %s24, 3
      %p407 = pnand %p405, %p406
      %p408 = pneg %p407
      // Predicated region
      $region57: #{tpu_custom_call.1} parent=5 // pred_check
        _
      $region58: #{tpu_custom_call.1} parent=5 // pred_check_branch
        %410 = sbr.rel (%p407) target = $region60
      $region59: #{tpu_custom_call.1} parent=5 // pred_region
        %s411 = ssub.s32 %s24, 1
        // Predicated region
        $region61: #{tpu_custom_call.1} parent=59 // pred_check
          %p412 = pneg %p71
        $region62: #{tpu_custom_call.1} parent=59 // pred_check_branch
          %414 = sbr.rel (%p412) target = $region64
        $region63: #{tpu_custom_call.1} parent=59 // pred_region
          %415 = dma.done [#allocation3], 1024
        $region64: #{tpu_custom_call.1} parent=59 // pred_fallthru
          _
        // Predicated region
        $region65: #{tpu_custom_call.1} parent=59 // pred_check
          %p416 = pneg %p92
        $region66: #{tpu_custom_call.1} parent=59 // pred_check_branch
          %418 = sbr.rel (%p416) target = $region68
        $region67: #{tpu_custom_call.1} parent=59 // pred_region
          %419 = dma.done [#allocation6], 1024
        $region68: #{tpu_custom_call.1} parent=59 // pred_fallthru
          _
        // Predicated region
        $region69: #{tpu_custom_call.1} parent=59 // pred_check
          %p420 = pneg %p113
        $region70: #{tpu_custom_call.1} parent=59 // pred_check_branch
          %422 = sbr.rel (%p420) target = $region72
        $region71: #{tpu_custom_call.1} parent=59 // pred_region
          %423 = dma.done [#allocation6], 16
        $region72: #{tpu_custom_call.1} parent=59 // pred_fallthru
          _
        // Predicated region
        $region73: #{tpu_custom_call.1} parent=59 // pred_check
          %p424 = pneg %p134
        $region74: #{tpu_custom_call.1} parent=59 // pred_check_branch
          %426 = sbr.rel (%p424) target = $region76
        $region75: #{tpu_custom_call.1} parent=59 // pred_region
          %427 = dma.done [#allocation9], 1024
        $region76: #{tpu_custom_call.1} parent=59 // pred_fallthru
          _
        // Predicated region
        $region77: #{tpu_custom_call.1} parent=59 // pred_check
          %p428 = pneg %p155
        $region78: #{tpu_custom_call.1} parent=59 // pred_check_branch
          %430 = sbr.rel (%p428) target = $region80
        $region79: #{tpu_custom_call.1} parent=59 // pred_region
          %431 = dma.done [#allocation9], 16
        $region80: #{tpu_custom_call.1} parent=59 // pred_fallthru
          _
        // Predicated region
        $region81: #{tpu_custom_call.1} parent=59 // pred_check
          %p432 = pneg %p176
        $region82: #{tpu_custom_call.1} parent=59 // pred_check_branch
          %434 = sbr.rel (%p432) target = $region84
        $region83: #{tpu_custom_call.1} parent=59 // pred_region
          %435 = dma.done [#allocation12], 61440
        $region84: #{tpu_custom_call.1} parent=59 // pred_fallthru
          _
        // Predicated region
        $region85: #{tpu_custom_call.1} parent=59 // pred_check
          %p436 = pneg %p197
        $region86: #{tpu_custom_call.1} parent=59 // pred_check_branch
          %438 = sbr.rel (%p436) target = $region88
        $region87: #{tpu_custom_call.1} parent=59 // pred_region
          %439 = dma.done [#allocation12], 320
        $region88: #{tpu_custom_call.1} parent=59 // pred_fallthru
          _
        // Predicated region
        $region89: #{tpu_custom_call.1} parent=59 // pred_check
          %p440 = pneg %p218
        $region90: #{tpu_custom_call.1} parent=59 // pred_check_branch
          %442 = sbr.rel (%p440) target = $region92
        $region91: #{tpu_custom_call.1} parent=59 // pred_region
          %443 = dma.done [#allocation15], 4096
        $region92: #{tpu_custom_call.1} parent=59 // pred_fallthru
          _
        // Predicated region
        $region93: #{tpu_custom_call.1} parent=59 // pred_check
          %p444 = pneg %p239
        $region94: #{tpu_custom_call.1} parent=59 // pred_check_branch
          %446 = sbr.rel (%p444) target = $region96
        $region95: #{tpu_custom_call.1} parent=59 // pred_region
          %447 = dma.done [#allocation15], 64
        $region96: #{tpu_custom_call.1} parent=59 // pred_fallthru
          _
        %p448 = scmp.lt.s32.totalorder %s29, 1
        %s449 = scalar_select %p448, %s29, 1
        %s450 = smul.addr %s449, 8
        %s451 = smul.addr %s450, 8
        %s452 = scalar_lea.vmem %s0, %s451
        %p453 = pneg %p50
        %p454 = pneg %p47
        %p455 = pneg %p71
        %p456 = pneg %p68
        %p457 = pneg %p92
        %p458 = pneg %p89
        %p459 = pneg %p113
        %p460 = pneg %p110
        %p461 = pneg %p134
        %p462 = pneg %p131
        %p463 = pneg %p155
        %p464 = pneg %p152
        %p465 = pneg %p176
        %p466 = pneg %p173
        %p467 = pneg %p197
        %p468 = pneg %p194
        %p469 = pneg %p218
        %p470 = pneg %p215
        %p471 = pneg %p239
        %p472 = pneg %p236
        %p473 = pneg %p265
        %p474 = pneg %p262
        %s475 = sand.u32 %s252, 1
        %s476 = scalar_lea.sflag [#allocation4], %s475
        %s477 = sand.u32 %s252, 1
        %s478 = smul.addr %s477, 64
        %s479 = scalar_lea.vmem [#allocation17], %s478
        %p480 = scmp.lt.s32.totalorder %s29, 1
        %s481 = scalar_select %p480, %s29, 1
        %s482 = smul.addr %s481, 8
        %s483 = smul.addr %s482, 8
        %s484 = scalar_lea.vmem %s0, %s483
        %v486 = vld [vmem:[%s484] sm:$0xff]
        %v487 = vld [vmem:[%s484 + $0x8] sm:$0xff]
        %v488 = vld [vmem:[%s484 + $0x10] sm:$0xff]
        %v489 = vld [vmem:[%s484 + $0x18] sm:$0xff]
        %v490 = vld [vmem:[%s484 + $0x20] sm:$0xff]
        %v491 = vld [vmem:[%s484 + $0x28] sm:$0xff]
        %v492 = vld [vmem:[%s484 + $0x30] sm:$0xff]
        %v493 = vld [vmem:[%s484 + $0x38] sm:$0xff]
        %v494 = vlaneseq
        %v495 = vand.u32 %v494, 127
        %496 = vset.pattern.permute.xlu0 0
        %497 = vperm.xlu0 %496, %v486
        %v498 = vpop.permute.xlu0 %497
        %499 = vset.pattern.permute.xlu0 0
        %500 = vperm.xlu0 %499, %v487
        %v501 = vpop.permute.xlu0 %500
        %502 = vset.pattern.permute.xlu0 0
        %503 = vperm.xlu0 %502, %v488
        %v504 = vpop.permute.xlu0 %503
        %505 = vset.pattern.permute.xlu0 0
        %506 = vperm.xlu0 %505, %v489
        %v507 = vpop.permute.xlu0 %506
        %508 = vset.pattern.permute.xlu0 0
        %509 = vperm.xlu0 %508, %v490
        %v510 = vpop.permute.xlu0 %509
        %511 = vset.pattern.permute.xlu0 0
        %512 = vperm.xlu0 %511, %v491
        %v513 = vpop.permute.xlu0 %512
        %514 = vset.pattern.permute.xlu0 0
        %515 = vperm.xlu0 %514, %v492
        %v516 = vpop.permute.xlu0 %515
        %517 = vset.pattern.permute.xlu0 0
        %518 = vperm.xlu0 %517, %v493
        %v519 = vpop.permute.xlu0 %518
        %vm520 = vcmp.eq.s32.totalorder %v495, %v498
        %vm521 = vcmp.eq.s32.totalorder %v495, %v501
        %vm522 = vcmp.eq.s32.totalorder %v495, %v504
        %vm523 = vcmp.eq.s32.totalorder %v495, %v507
        %vm524 = vcmp.eq.s32.totalorder %v495, %v510
        %vm525 = vcmp.eq.s32.totalorder %v495, %v513
        %vm526 = vcmp.eq.s32.totalorder %v495, %v516
        %vm527 = vcmp.eq.s32.totalorder %v495, %v519
        %v528 = vsel %vm520, 1.0, 0.0
        %v529 = vsel %vm521, 1.0, 0.0
        %v530 = vsel %vm522, 1.0, 0.0
        %v531 = vsel %vm523, 1.0, 0.0
        %v532 = vsel %vm524, 1.0, 0.0
        %v533 = vsel %vm525, 1.0, 0.0
        %v534 = vsel %vm526, 1.0, 0.0
        %v535 = vsel %vm527, 1.0, 0.0
        %v536 = vpack.c.bf16 %v529, %v528
        %v537 = vpack.c.bf16 %v531, %v530
        %v538 = vpack.c.bf16 %v533, %v532
        %v539 = vpack.c.bf16 %v535, %v534
        %v540 = vld [vmem:[#allocation2] sm:$0xf]
        %v541 = vld [vmem:[#allocation2 + $0x4] sm:$0xf]
        %v542 = vld [vmem:[#allocation2 + $0x8] sm:$0xf]
        %v543 = vld [vmem:[#allocation2 + $0xc] sm:$0xf]
        %v544 = vld [vmem:[#allocation2 + $0x10] sm:$0xf]
        %v545 = vld [vmem:[#allocation2 + $0x14] sm:$0xf]
        %v546 = vld [vmem:[#allocation2 + $0x18] sm:$0xf]
        %v547 = vld [vmem:[#allocation2 + $0x1c] sm:$0xf]
        %v548 = vld [vmem:[#allocation2 + $0x20] sm:$0xf]
        %v549 = vld [vmem:[#allocation2 + $0x24] sm:$0xf]
        %v550 = vld [vmem:[#allocation2 + $0x28] sm:$0xf]
        %v551 = vld [vmem:[#allocation2 + $0x2c] sm:$0xf]
        %v552 = vld [vmem:[#allocation2 + $0x30] sm:$0xf]
        %v553 = vld [vmem:[#allocation2 + $0x34] sm:$0xf]
        %v554 = vld [vmem:[#allocation2 + $0x38] sm:$0xf]
        %v555 = vld [vmem:[#allocation2 + $0x3c] sm:$0xf]
        %v572 = vunpack.c.l.b16 %v540
        %v573 = vunpack.c.l.b16 %v541
        %v574 = vunpack.c.l.b16 %v542
        %v575 = vunpack.c.l.b16 %v543
        %v576 = vunpack.c.l.b16 %v544
        %v577 = vunpack.c.l.b16 %v545
        %v578 = vunpack.c.l.b16 %v546
        %v579 = vunpack.c.l.b16 %v547
        %v580 = vunpack.c.l.b16 %v548
        %v581 = vunpack.c.l.b16 %v549
        %v582 = vunpack.c.l.b16 %v550
        %v583 = vunpack.c.l.b16 %v551
        %v584 = vunpack.c.l.b16 %v552
        %v585 = vunpack.c.l.b16 %v553
        %v586 = vunpack.c.l.b16 %v554
        %v587 = vunpack.c.l.b16 %v555
        %v588 = vpack.c.b16 %v573, %v572
        %v589 = vpack.c.b16 %v575, %v574
        %v590 = vpack.c.b16 %v577, %v576
        %v591 = vpack.c.b16 %v579, %v578
        %v592 = vpack.c.b16 %v581, %v580
        %v593 = vpack.c.b16 %v583, %v582
        %v594 = vpack.c.b16 %v585, %v584
        %v595 = vpack.c.b16 %v587, %v586
        %604 = vmatprep.subr.bf16.mxu0 0
        %605 = vmatpush1.bf16.msra.mxu0 %v588
        %606 = vmatprep.subr.bf16.mxu0 0
        %607 = vmatpush1.bf16.msra.mxu0 %v589
        %608 = vmatprep.subr.bf16.mxu0 0
        %609 = vmatpush1.bf16.msra.mxu0 %v590
        %610 = vmatprep.subr.bf16.mxu0 0
        %611 = vmatpush1.bf16.msra.mxu0 %v591
        %612 = vmatprep.subr.bf16.mxu0 0
        %613 = vmatpush1.bf16.msra.mxu0 %v592
        %614 = vmatprep.subr.bf16.mxu0 0
        %615 = vmatpush1.bf16.msra.mxu0 %v593
        %616 = vmatprep.subr.bf16.mxu0 0
        %617 = vmatpush1.bf16.msra.mxu0 %v594
        %618 = vmatprep.subr.bf16.mxu0 0
        %619 = vmatpush1.bf16.msra.mxu0 %v595
        %620 = vmatprep.subr.bf16.mxu0 0
        %621 = vmatpush1.bf16.msra.mxu0 0
        %622 = vmatprep.subr.bf16.mxu0 0
        %623 = vmatpush1.bf16.msra.mxu0 0
        %624 = vmatprep.subr.bf16.mxu0 0
        %625 = vmatpush1.bf16.msra.mxu0 0
        %626 = vmatprep.subr.bf16.mxu0 0
        %627 = vmatpush1.bf16.msra.mxu0 0
        %628 = vmatprep.subr.bf16.mxu0 0
        %629 = vmatpush1.bf16.msra.mxu0 0
        %630 = vmatprep.subr.bf16.mxu0 0
        %631 = vmatpush1.bf16.msra.mxu0 0
        %632 = vmatprep.subr.bf16.mxu0 0
        %633 = vmatpush1.bf16.msra.mxu0 0
        %634 = vmatprep.subr.bf16.mxu0 0
        %635 = vmatpush1.bf16.msra.mxu0 0
        %636 = vmatprep.mubr.bf16.mxu0 0
        %637 = vmatmul.mubr.bf16.gmra.mrb[0].mxu0 %v536
        %v638 = vpop.f32.mrb[0].mxu0
        %v639 = vadd.f32 0.0, %v638
        %v640 = vpop.f32.mrb[0].mxu0
        %v641 = vpop.f32.mrb[0].mxu0
        %v642 = vadd.f32 0.0, %v641
        %v643 = vpop.f32.mrb[0].mxu0
        %644 = vmatprep.mubr.bf16.mxu0 0
        %645 = vmatmul.mubr.bf16.gmra.mrb[0].mxu0 %v537
        %v646 = vpop.f32.mrb[0].mxu0
        %v647 = vadd.f32 0.0, %v646
        %v648 = vpop.f32.mrb[0].mxu0
        %v649 = vpop.f32.mrb[0].mxu0
        %v650 = vadd.f32 0.0, %v649
        %v651 = vpop.f32.mrb[0].mxu0
        %652 = vmatprep.mubr.bf16.mxu0 0
        %653 = vmatmul.mubr.bf16.gmra.mrb[0].mxu0 %v538
        %v654 = vpop.f32.mrb[0].mxu0
        %v655 = vadd.f32 0.0, %v654
        %v656 = vpop.f32.mrb[0].mxu0
        %v657 = vpop.f32.mrb[0].mxu0
        %v658 = vadd.f32 0.0, %v657
        %v659 = vpop.f32.mrb[0].mxu0
        %660 = vmatprep.mubr.bf16.mxu0 0
        %661 = vmatmul.mubr.bf16.gmra.mrb[0].mxu0 %v539
        %v662 = vpop.f32.mrb[0].mxu0
        %v663 = vadd.f32 0.0, %v662
        %v664 = vpop.f32.mrb[0].mxu0
        %v665 = vpop.f32.mrb[0].mxu0
        %v666 = vadd.f32 0.0, %v665
        %v667 = vpop.f32.mrb[0].mxu0
        %668 = vdwg.mxu0
        %v669 = vpack.c.bf16 %v642, %v639
        %v670 = vpack.c.bf16 %v650, %v647
        %v671 = vpack.c.bf16 %v658, %v655
        %v672 = vpack.c.bf16 %v666, %v663
        %v673 = vld [vmem:[#allocation5] sm:$0xf]
        %v674 = vld [vmem:[#allocation5 + $0x4] sm:$0xf]
        %v675 = vld [vmem:[#allocation5 + $0x8] sm:$0xf]
        %v676 = vld [vmem:[#allocation5 + $0xc] sm:$0xf]
        %v677 = vld [vmem:[#allocation5 + $0x10] sm:$0xf]
        %v678 = vld [vmem:[#allocation5 + $0x14] sm:$0xf]
        %v679 = vld [vmem:[#allocation5 + $0x18] sm:$0xf]
        %v680 = vld [vmem:[#allocation5 + $0x1c] sm:$0xf]
        %v681 = vld [vmem:[#allocation5 + $0x20] sm:$0xf]
        %v682 = vld [vmem:[#allocation5 + $0x24] sm:$0xf]
        %v683 = vld [vmem:[#allocation5 + $0x28] sm:$0xf]
        %v684 = vld [vmem:[#allocation5 + $0x2c] sm:$0xf]
        %v685 = vld [vmem:[#allocation5 + $0x30] sm:$0xf]
        %v686 = vld [vmem:[#allocation5 + $0x34] sm:$0xf]
        %v687 = vld [vmem:[#allocation5 + $0x38] sm:$0xf]
        %v688 = vld [vmem:[#allocation5 + $0x3c] sm:$0xf]
        %v689 = vld [vmem:[#allocation7] sm:$0x1]
        %v691 = vlaneseq
        %v692 = vshrl.u32 %v691, 7
        %v693 = vsub.s32 0, %v692
        %v694 = vrot.slane %v689, %v693
        %v712 = vunpack.c.l.b16 %v673
        %v713 = vunpack.c.l.b16 %v674
        %v714 = vunpack.c.l.b16 %v675
        %v715 = vunpack.c.l.b16 %v676
        %v716 = vunpack.c.l.b16 %v677
        %v717 = vunpack.c.l.b16 %v678
        %v718 = vunpack.c.l.b16 %v679
        %v719 = vunpack.c.l.b16 %v680
        %v720 = vunpack.c.l.b16 %v681
        %v721 = vunpack.c.l.b16 %v682
        %v722 = vunpack.c.l.b16 %v683
        %v723 = vunpack.c.l.b16 %v684
        %v724 = vunpack.c.l.b16 %v685
        %v725 = vunpack.c.l.b16 %v686
        %v726 = vunpack.c.l.b16 %v687
        %v727 = vunpack.c.l.b16 %v688
        %v728 = vpack.c.b16 %v713, %v712
        %v729 = vpack.c.b16 %v715, %v714
        %v730 = vpack.c.b16 %v717, %v716
        %v731 = vpack.c.b16 %v719, %v718
        %v732 = vpack.c.b16 %v721, %v720
        %v733 = vpack.c.b16 %v723, %v722
        %v734 = vpack.c.b16 %v725, %v724
        %v735 = vpack.c.b16 %v727, %v726
        %744 = vmatprep.subr.bf16.mxu0 0
        %745 = vmatpush1.bf16.msra.mxu0 %v728
        %746 = vmatprep.subr.bf16.mxu0 0
        %747 = vmatpush1.bf16.msra.mxu0 %v729
        %748 = vmatprep.subr.bf16.mxu0 0
        %749 = vmatpush1.bf16.msra.mxu0 %v730
        %750 = vmatprep.subr.bf16.mxu0 0
        %751 = vmatpush1.bf16.msra.mxu0 %v731
        %752 = vmatprep.subr.bf16.mxu0 0
        %753 = vmatpush1.bf16.msra.mxu0 %v732
        %754 = vmatprep.subr.bf16.mxu0 0
        %755 = vmatpush1.bf16.msra.mxu0 %v733
        %756 = vmatprep.subr.bf16.mxu0 0
        %757 = vmatpush1.bf16.msra.mxu0 %v734
        %758 = vmatprep.subr.bf16.mxu0 0
        %759 = vmatpush1.bf16.msra.mxu0 %v735
        %760 = vmatprep.subr.bf16.mxu0 0
        %761 = vmatpush1.bf16.msra.mxu0 0
        %762 = vmatprep.subr.bf16.mxu0 0
        %763 = vmatpush1.bf16.msra.mxu0 0
        %764 = vmatprep.subr.bf16.mxu0 0
        %765 = vmatpush1.bf16.msra.mxu0 0
        %766 = vmatprep.subr.bf16.mxu0 0
        %767 = vmatpush1.bf16.msra.mxu0 0
        %768 = vmatprep.subr.bf16.mxu0 0
        %769 = vmatpush1.bf16.msra.mxu0 0
        %770 = vmatprep.subr.bf16.mxu0 0
        %771 = vmatpush1.bf16.msra.mxu0 0
        %772 = vmatprep.subr.bf16.mxu0 0
        %773 = vmatpush1.bf16.msra.mxu0 0
        %774 = vmatprep.subr.bf16.mxu0 0
        %775 = vmatpush1.bf16.msra.mxu0 0
        %776 = vmatprep.mubr.bf16.mxu0 0
        %777 = vmatmul.mubr.bf16.gmra.mrb[0].mxu0 %v669
        %v778 = vpop.f32.mrb[0].mxu0
        %v779 = vadd.f32 %v694, %v778
        %v780 = vpop.f32.mrb[0].mxu0
        %v781 = vpop.f32.mrb[0].mxu0
        %v782 = vadd.f32 %v694, %v781
        %v783 = vpop.f32.mrb[0].mxu0
        %784 = vmatprep.mubr.bf16.mxu0 0
        %785 = vmatmul.mubr.bf16.gmra.mrb[0].mxu0 %v670
        %v786 = vpop.f32.mrb[0].mxu0
        %v787 = vadd.f32 %v694, %v786
        %v788 = vpop.f32.mrb[0].mxu0
        %v789 = vpop.f32.mrb[0].mxu0
        %v790 = vadd.f32 %v694, %v789
        %v791 = vpop.f32.mrb[0].mxu0
        %792 = vmatprep.mubr.bf16.mxu0 0
        %793 = vmatmul.mubr.bf16.gmra.mrb[0].mxu0 %v671
        %v794 = vpop.f32.mrb[0].mxu0
        %v795 = vadd.f32 %v694, %v794
        %v796 = vpop.f32.mrb[0].mxu0
        %v797 = vpop.f32.mrb[0].mxu0
        %v798 = vadd.f32 %v694, %v797
        %v799 = vpop.f32.mrb[0].mxu0
        %800 = vmatprep.mubr.bf16.mxu0 0
        %801 = vmatmul.mubr.bf16.gmra.mrb[0].mxu0 %v672
        %v802 = vpop.f32.mrb[0].mxu0
        %v803 = vadd.f32 %v694, %v802
        %v804 = vpop.f32.mrb[0].mxu0
        %v805 = vpop.f32.mrb[0].mxu0
        %v806 = vadd.f32 %v694, %v805
        %v807 = vpop.f32.mrb[0].mxu0
        %808 = vdwg.mxu0
        %v809 = vmax.f32 %v779, 0.0
        %v810 = vmax.f32 %v782, 0.0
        %v811 = vmax.f32 %v787, 0.0
        %v812 = vmax.f32 %v790, 0.0
        %v813 = vmax.f32 %v795, 0.0
        %v814 = vmax.f32 %v798, 0.0
        %v815 = vmax.f32 %v803, 0.0
        %v816 = vmax.f32 %v806, 0.0
        %v817 = vpack.c.bf16 %v810, %v809
        %v818 = vpack.c.bf16 %v812, %v811
        %v819 = vpack.c.bf16 %v814, %v813
        %v820 = vpack.c.bf16 %v816, %v815
        %v821 = vld [vmem:[#allocation8] sm:$0xf]
        %v822 = vld [vmem:[#allocation8 + $0x4] sm:$0xf]
        %v823 = vld [vmem:[#allocation8 + $0x8] sm:$0xf]
        %v824 = vld [vmem:[#allocation8 + $0xc] sm:$0xf]
        %v825 = vld [vmem:[#allocation8 + $0x10] sm:$0xf]
        %v826 = vld [vmem:[#allocation8 + $0x14] sm:$0xf]
        %v827 = vld [vmem:[#allocation8 + $0x18] sm:$0xf]
        %v828 = vld [vmem:[#allocation8 + $0x1c] sm:$0xf]
        %v829 = vld [vmem:[#allocation8 + $0x20] sm:$0xf]
        %v830 = vld [vmem:[#allocation8 + $0x24] sm:$0xf]
        %v831 = vld [vmem:[#allocation8 + $0x28] sm:$0xf]
        %v832 = vld [vmem:[#allocation8 + $0x2c] sm:$0xf]
        %v833 = vld [vmem:[#allocation8 + $0x30] sm:$0xf]
        %v834 = vld [vmem:[#allocation8 + $0x34] sm:$0xf]
        %v835 = vld [vmem:[#allocation8 + $0x38] sm:$0xf]
        %v836 = vld [vmem:[#allocation8 + $0x3c] sm:$0xf]
        %v837 = vld [vmem:[#allocation10] sm:$0x1]
        %v839 = vlaneseq
        %v840 = vshrl.u32 %v839, 7
        %v841 = vsub.s32 0, %v840
        %v842 = vrot.slane %v837, %v841
        %v860 = vunpack.c.l.b16 %v821
        %v861 = vunpack.c.l.b16 %v822
        %v862 = vunpack.c.l.b16 %v823
        %v863 = vunpack.c.l.b16 %v824
        %v864 = vunpack.c.l.b16 %v825
        %v865 = vunpack.c.l.b16 %v826
        %v866 = vunpack.c.l.b16 %v827
        %v867 = vunpack.c.l.b16 %v828
        %v868 = vunpack.c.l.b16 %v829
        %v869 = vunpack.c.l.b16 %v830
        %v870 = vunpack.c.l.b16 %v831
        %v871 = vunpack.c.l.b16 %v832
        %v872 = vunpack.c.l.b16 %v833
        %v873 = vunpack.c.l.b16 %v834
        %v874 = vunpack.c.l.b16 %v835
        %v875 = vunpack.c.l.b16 %v836
        %v876 = vpack.c.b16 %v861, %v860
        %v877 = vpack.c.b16 %v863, %v862
        %v878 = vpack.c.b16 %v865, %v864
        %v879 = vpack.c.b16 %v867, %v866
        %v880 = vpack.c.b16 %v869, %v868
        %v881 = vpack.c.b16 %v871, %v870
        %v882 = vpack.c.b16 %v873, %v872
        %v883 = vpack.c.b16 %v875, %v874
        %892 = vmatprep.subr.bf16.mxu0 0
        %893 = vmatpush1.bf16.msra.mxu0 %v876
        %894 = vmatprep.subr.bf16.mxu0 0
        %895 = vmatpush1.bf16.msra.mxu0 %v877
        %896 = vmatprep.subr.bf16.mxu0 0
        %897 = vmatpush1.bf16.msra.mxu0 %v878
        %898 = vmatprep.subr.bf16.mxu0 0
        %899 = vmatpush1.bf16.msra.mxu0 %v879
        %900 = vmatprep.subr.bf16.mxu0 0
        %901 = vmatpush1.bf16.msra.mxu0 %v880
        %902 = vmatprep.subr.bf16.mxu0 0
        %903 = vmatpush1.bf16.msra.mxu0 %v881
        %904 = vmatprep.subr.bf16.mxu0 0
        %905 = vmatpush1.bf16.msra.mxu0 %v882
        %906 = vmatprep.subr.bf16.mxu0 0
        %907 = vmatpush1.bf16.msra.mxu0 %v883
        %908 = vmatprep.subr.bf16.mxu0 0
        %909 = vmatpush1.bf16.msra.mxu0 0
        %910 = vmatprep.subr.bf16.mxu0 0
        %911 = vmatpush1.bf16.msra.mxu0 0
        %912 = vmatprep.subr.bf16.mxu0 0
        %913 = vmatpush1.bf16.msra.mxu0 0
        %914 = vmatprep.subr.bf16.mxu0 0
        %915 = vmatpush1.bf16.msra.mxu0 0
        %916 = vmatprep.subr.bf16.mxu0 0
        %917 = vmatpush1.bf16.msra.mxu0 0
        %918 = vmatprep.subr.bf16.mxu0 0
        %919 = vmatpush1.bf16.msra.mxu0 0
        %920 = vmatprep.subr.bf16.mxu0 0
        %921 = vmatpush1.bf16.msra.mxu0 0
        %922 = vmatprep.subr.bf16.mxu0 0
        %923 = vmatpush1.bf16.msra.mxu0 0
        %924 = vmatprep.mubr.bf16.mxu0 0
        %925 = vmatmul.mubr.bf16.gmra.mrb[0].mxu0 %v817
        %v926 = vpop.f32.mrb[0].mxu0
        %v927 = vadd.f32 %v842, %v926
        %v928 = vpop.f32.mrb[0].mxu0
        %v929 = vpop.f32.mrb[0].mxu0
        %v930 = vadd.f32 %v842, %v929
        %v931 = vpop.f32.mrb[0].mxu0
        %932 = vmatprep.mubr.bf16.mxu0 0
        %933 = vmatmul.mubr.bf16.gmra.mrb[0].mxu0 %v818
        %v934 = vpop.f32.mrb[0].mxu0
        %v935 = vadd.f32 %v842, %v934
        %v936 = vpop.f32.mrb[0].mxu0
        %v937 = vpop.f32.mrb[0].mxu0
        %v938 = vadd.f32 %v842, %v937
        %v939 = vpop.f32.mrb[0].mxu0
        %940 = vmatprep.mubr.bf16.mxu0 0
        %941 = vmatmul.mubr.bf16.gmra.mrb[0].mxu0 %v819
        %v942 = vpop.f32.mrb[0].mxu0
        %v943 = vadd.f32 %v842, %v942
        %v944 = vpop.f32.mrb[0].mxu0
        %v945 = vpop.f32.mrb[0].mxu0
        %v946 = vadd.f32 %v842, %v945
        %v947 = vpop.f32.mrb[0].mxu0
        %948 = vmatprep.mubr.bf16.mxu0 0
        %949 = vmatmul.mubr.bf16.gmra.mrb[0].mxu0 %v820
        %v950 = vpop.f32.mrb[0].mxu0
        %v951 = vadd.f32 %v842, %v950
        %v952 = vpop.f32.mrb[0].mxu0
        %v953 = vpop.f32.mrb[0].mxu0
        %v954 = vadd.f32 %v842, %v953
        %v955 = vpop.f32.mrb[0].mxu0
        %956 = vdwg.mxu0
        %v957 = vlaneseq
        %v958 = vshrl.u32 %v957, 7
        %v959 = vadd.s32 %v958, 8
        %v960 = vadd.s32 %v958, 16
        %v961 = vadd.s32 %v958, 24
        %v962 = vadd.s32 %v958, 32
        %v963 = vadd.s32 %v958, 40
        %v964 = vadd.s32 %v958, 48
        %v965 = vadd.s32 %v958, 56
        %vm966 = vcmp.ge.s32.totalorder %v958, 1
        %vm967 = vcmp.ge.s32.totalorder %v959, 1
        %vm968 = vcmp.ge.s32.totalorder %v960, 1
        %vm969 = vcmp.ge.s32.totalorder %v961, 1
        %vm970 = vcmp.ge.s32.totalorder %v962, 1
        %vm971 = vcmp.ge.s32.totalorder %v963, 1
        %vm972 = vcmp.ge.s32.totalorder %v964, 1
        %vm973 = vcmp.ge.s32.totalorder %v965, 1
        %vm974 = vcmp.lt.s32.totalorder %v958, 63
        %vm975 = vcmp.lt.s32.totalorder %v959, 63
        %vm976 = vcmp.lt.s32.totalorder %v960, 63
        %vm977 = vcmp.lt.s32.totalorder %v961, 63
        %vm978 = vcmp.lt.s32.totalorder %v962, 63
        %vm979 = vcmp.lt.s32.totalorder %v963, 63
        %vm980 = vcmp.lt.s32.totalorder %v964, 63
        %vm981 = vcmp.lt.s32.totalorder %v965, 63
        %vm982 = vcmp.ge.s32.totalorder %v958, 3
        %vm983 = vcmp.ge.s32.totalorder %v959, 3
        %vm984 = vcmp.ge.s32.totalorder %v960, 3
        %vm985 = vcmp.ge.s32.totalorder %v961, 3
        %vm986 = vcmp.ge.s32.totalorder %v962, 3
        %vm987 = vcmp.ge.s32.totalorder %v963, 3
        %vm988 = vcmp.ge.s32.totalorder %v964, 3
        %vm989 = vcmp.ge.s32.totalorder %v965, 3
        %vm990 = vcmp.lt.s32.totalorder %v958, 61
        %vm991 = vcmp.lt.s32.totalorder %v959, 61
        %vm992 = vcmp.lt.s32.totalorder %v960, 61
        %vm993 = vcmp.lt.s32.totalorder %v961, 61
        %vm994 = vcmp.lt.s32.totalorder %v962, 61
        %vm995 = vcmp.lt.s32.totalorder %v963, 61
        %vm996 = vcmp.lt.s32.totalorder %v964, 61
        %vm997 = vcmp.lt.s32.totalorder %v965, 61
        %vm998 = vcmp.ge.s32.totalorder %v958, 9
        %vm999 = vcmp.ge.s32.totalorder %v959, 9
        %vm1000 = vcmp.ge.s32.totalorder %v960, 9
        %vm1001 = vcmp.ge.s32.totalorder %v961, 9
        %vm1002 = vcmp.ge.s32.totalorder %v962, 9
        %vm1003 = vcmp.ge.s32.totalorder %v963, 9
        %vm1004 = vcmp.ge.s32.totalorder %v964, 9
        %vm1005 = vcmp.ge.s32.totalorder %v965, 9
        %vm1006 = vcmp.lt.s32.totalorder %v958, 55
        %vm1007 = vcmp.lt.s32.totalorder %v959, 55
        %vm1008 = vcmp.lt.s32.totalorder %v960, 55
        %vm1009 = vcmp.lt.s32.totalorder %v961, 55
        %vm1010 = vcmp.lt.s32.totalorder %v962, 55
        %vm1011 = vcmp.lt.s32.totalorder %v963, 55
        %vm1012 = vcmp.lt.s32.totalorder %v964, 55
        %vm1013 = vcmp.lt.s32.totalorder %v965, 55
        %vm1014 = vcmp.ge.s32.totalorder %v958, 27
        %vm1015 = vcmp.ge.s32.totalorder %v959, 27
        %vm1016 = vcmp.ge.s32.totalorder %v960, 27
        %vm1017 = vcmp.ge.s32.totalorder %v961, 27
        %vm1018 = vcmp.ge.s32.totalorder %v962, 27
        %vm1019 = vcmp.ge.s32.totalorder %v963, 27
        %vm1020 = vcmp.ge.s32.totalorder %v964, 27
        %vm1021 = vcmp.ge.s32.totalorder %v965, 27
        %vm1022 = vcmp.lt.s32.totalorder %v958, 37
        %vm1023 = vcmp.lt.s32.totalorder %v959, 37
        %vm1024 = vcmp.lt.s32.totalorder %v960, 37
        %vm1025 = vcmp.lt.s32.totalorder %v961, 37
        %vm1026 = vcmp.lt.s32.totalorder %v962, 37
        %vm1027 = vcmp.lt.s32.totalorder %v963, 37
        %vm1028 = vcmp.lt.s32.totalorder %v964, 37
        %vm1029 = vcmp.lt.s32.totalorder %v965, 37
        %v1030 = vrot.slane %v927, 7
        %v1031 = vrot.slane %v930, 7
        %v1032 = vrot.slane %v935, 7
        %v1033 = vrot.slane %v938, 7
        %v1034 = vrot.slane %v943, 7
        %v1035 = vrot.slane %v946, 7
        %v1036 = vrot.slane %v951, 7
        %v1037 = vrot.slane %v954, 7
        %vm1038 = vcmp.lt.s32.totalorder %v958, 1
        %v1039 = vsel %vm1038, %v1036, %v1037
        %v1040 = vsel %vm1038, %v1035, %v1036
        %v1041 = vsel %vm1038, %v1034, %v1035
        %v1042 = vsel %vm1038, %v1033, %v1034
        %v1043 = vsel %vm1038, %v1032, %v1033
        %v1044 = vsel %vm1038, %v1031, %v1032
        %v1045 = vsel %vm1038, %v1030, %v1031
        %v1046 = vsel %vm1038, %v1037, %v1030
        %v1047 = vsel %vm966, %v1046, 0.0
        %v1048 = vsel %vm967, %v1045, 0.0
        %v1049 = vsel %vm968, %v1044, 0.0
        %v1050 = vsel %vm969, %v1043, 0.0
        %v1051 = vsel %vm970, %v1042, 0.0
        %v1052 = vsel %vm971, %v1041, 0.0
        %v1053 = vsel %vm972, %v1040, 0.0
        %v1054 = vsel %vm973, %v1039, 0.0
        %v1055 = vrot.slane %v927, 1
        %v1056 = vrot.slane %v930, 1
        %v1057 = vrot.slane %v935, 1
        %v1058 = vrot.slane %v938, 1
        %v1059 = vrot.slane %v943, 1
        %v1060 = vrot.slane %v946, 1
        %v1061 = vrot.slane %v951, 1
        %v1062 = vrot.slane %v954, 1
        %vm1063 = vcmp.lt.s32.totalorder %v958, 7
        %v1064 = vsel %vm1063, %v1061, %v1062
        %v1065 = vsel %vm1063, %v1060, %v1061
        %v1066 = vsel %vm1063, %v1059, %v1060
        %v1067 = vsel %vm1063, %v1058, %v1059
        %v1068 = vsel %vm1063, %v1057, %v1058
        %v1069 = vsel %vm1063, %v1056, %v1057
        %v1070 = vsel %vm1063, %v1055, %v1056
        %v1071 = vsel %vm1063, %v1062, %v1055
        %v1072 = vsel %vm974, %v1070, 0.0
        %v1073 = vsel %vm975, %v1069, 0.0
        %v1074 = vsel %vm976, %v1068, 0.0
        %v1075 = vsel %vm977, %v1067, 0.0
        %v1076 = vsel %vm978, %v1066, 0.0
        %v1077 = vsel %vm979, %v1065, 0.0
        %v1078 = vsel %vm980, %v1064, 0.0
        %v1079 = vsel %vm981, %v1071, 0.0
        %v1080 = vpack.c.bf16 %v1048, %v1047
        %v1081 = vpack.c.bf16 %v930, %v927
        %v1082 = vpack.c.bf16 %v1073, %v1072
        %v1083 = vpack.c.bf16 %v1050, %v1049
        %v1084 = vpack.c.bf16 %v938, %v935
        %v1085 = vpack.c.bf16 %v1075, %v1074
        %v1086 = vpack.c.bf16 %v1052, %v1051
        %v1087 = vpack.c.bf16 %v946, %v943
        %v1088 = vpack.c.bf16 %v1077, %v1076
        %v1089 = vpack.c.bf16 %v1054, %v1053
        %v1090 = vpack.c.bf16 %v954, %v951
        %v1091 = vpack.c.bf16 %v1079, %v1078
        %v1092 = vld [vmem:[#allocation11] sm:$0xff]
        %v1093 = vld [vmem:[#allocation11 + $0x8] sm:$0xff]
        %v1094 = vld [vmem:[#allocation11 + $0x10] sm:$0xff]
        %v1095 = vld [vmem:[#allocation11 + $0x18] sm:$0xff]
        %v1096 = vld [vmem:[#allocation11 + $0x20] sm:$0xff]
        %v1097 = vld [vmem:[#allocation11 + $0x28] sm:$0xff]
        %v1098 = vld [vmem:[#allocation11 + $0x30] sm:$0xff]
        %v1099 = vld [vmem:[#allocation11 + $0x38] sm:$0xff]
        %v1100 = vld [vmem:[#allocation11 + $0x40] sm:$0xff]
        %v1101 = vld [vmem:[#allocation11 + $0x48] sm:$0xff]
        %v1102 = vld [vmem:[#allocation11 + $0x50] sm:$0xff]
        %v1103 = vld [vmem:[#allocation11 + $0x58] sm:$0xff]
        %v1104 = vld [vmem:[#allocation11 + $0x60] sm:$0xff]
        %v1105 = vld [vmem:[#allocation11 + $0x68] sm:$0xff]
        %v1106 = vld [vmem:[#allocation11 + $0x70] sm:$0xff]
        %v1107 = vld [vmem:[#allocation11 + $0x78] sm:$0xff]
        %v1108 = vld [vmem:[#allocation11 + $0x80] sm:$0xff]
        %v1109 = vld [vmem:[#allocation11 + $0x88] sm:$0xff]
        %v1110 = vld [vmem:[#allocation11 + $0x90] sm:$0xff]
        %v1111 = vld [vmem:[#allocation11 + $0x98] sm:$0xff]
        %v1112 = vld [vmem:[#allocation11 + $0xa0] sm:$0xff]
        %v1113 = vld [vmem:[#allocation11 + $0xa8] sm:$0xff]
        %v1114 = vld [vmem:[#allocation11 + $0xb0] sm:$0xff]
        %v1115 = vld [vmem:[#allocation11 + $0xb8] sm:$0xff]
        %v1116 = vld [vmem:[#allocation11 + $0xc0] sm:$0xff]
        %v1117 = vld [vmem:[#allocation11 + $0xc8] sm:$0xff]
        %v1118 = vld [vmem:[#allocation11 + $0xd0] sm:$0xff]
        %v1119 = vld [vmem:[#allocation11 + $0xd8] sm:$0xff]
        %v1120 = vld [vmem:[#allocation11 + $0xe0] sm:$0xff]
        %v1121 = vld [vmem:[#allocation11 + $0xe8] sm:$0xff]
        %v1122 = vld [vmem:[#allocation11 + $0xf0] sm:$0xff]
        %v1123 = vld [vmem:[#allocation11 + $0xf8] sm:$0xff]
        %v1124 = vld [vmem:[#allocation11 + $0x100] sm:$0xff]
        %v1125 = vld [vmem:[#allocation11 + $0x108] sm:$0xff]
        %v1126 = vld [vmem:[#allocation11 + $0x110] sm:$0xff]
        %v1127 = vld [vmem:[#allocation11 + $0x118] sm:$0xff]
        %v1128 = vld [vmem:[#allocation11 + $0x120] sm:$0xff]
        %v1129 = vld [vmem:[#allocation11 + $0x128] sm:$0xff]
        %v1130 = vld [vmem:[#allocation11 + $0x130] sm:$0xff]
        %v1131 = vld [vmem:[#allocation11 + $0x138] sm:$0xff]
        %v1132 = vld [vmem:[#allocation11 + $0x140] sm:$0xff]
        %v1133 = vld [vmem:[#allocation11 + $0x148] sm:$0xff]
        %v1134 = vld [vmem:[#allocation11 + $0x150] sm:$0xff]
        %v1135 = vld [vmem:[#allocation11 + $0x158] sm:$0xff]
        %v1136 = vld [vmem:[#allocation11 + $0x160] sm:$0xff]
        %v1137 = vld [vmem:[#allocation11 + $0x168] sm:$0xff]
        %v1138 = vld [vmem:[#allocation11 + $0x170] sm:$0xff]
        %v1139 = vld [vmem:[#allocation11 + $0x178] sm:$0xff]
        %v1140 = vld [vmem:[#allocation13] sm:$0x3]
        %v1142 = vlaneseq
        %v1143 = vshrl.u32 %v1142, 7
        %v1144 = vsub.s32 0, %v1143
        %v1145 = vrot.slane %v1140, %v1144
        %v1146 = vlaneseq
        %v1147 = vshrl.u32 %v1146, 7
        %v1148 = vsub.s32 1, %v1147
        %v1149 = vrot.slane %v1140, %v1148
        %v1200 = vunpack.c.l.b16 %v1092
        %v1201 = vunpack.c.h.b16 %v1092
        %v1202 = vunpack.c.l.b16 %v1093
        %v1203 = vunpack.c.h.b16 %v1093
        %v1204 = vunpack.c.l.b16 %v1094
        %v1205 = vunpack.c.h.b16 %v1094
        %v1206 = vunpack.c.l.b16 %v1095
        %v1207 = vunpack.c.h.b16 %v1095
        %v1208 = vunpack.c.l.b16 %v1096
        %v1209 = vunpack.c.h.b16 %v1096
        %v1210 = vunpack.c.l.b16 %v1097
        %v1211 = vunpack.c.h.b16 %v1097
        %v1212 = vunpack.c.l.b16 %v1098
        %v1213 = vunpack.c.h.b16 %v1098
        %v1214 = vunpack.c.l.b16 %v1099
        %v1215 = vunpack.c.h.b16 %v1099
        %v1216 = vunpack.c.l.b16 %v1100
        %v1217 = vunpack.c.h.b16 %v1100
        %v1218 = vunpack.c.l.b16 %v1101
        %v1219 = vunpack.c.h.b16 %v1101
        %v1220 = vunpack.c.l.b16 %v1102
        %v1221 = vunpack.c.h.b16 %v1102
        %v1222 = vunpack.c.l.b16 %v1103
        %v1223 = vunpack.c.h.b16 %v1103
        %v1224 = vunpack.c.l.b16 %v1104
        %v1225 = vunpack.c.h.b16 %v1104
        %v1226 = vunpack.c.l.b16 %v1105
        %v1227 = vunpack.c.h.b16 %v1105
        %v1228 = vunpack.c.l.b16 %v1106
        %v1229 = vunpack.c.h.b16 %v1106
        %v1230 = vunpack.c.l.b16 %v1107
        %v1231 = vunpack.c.h.b16 %v1107
        %v1232 = vunpack.c.l.b16 %v1108
        %v1233 = vunpack.c.h.b16 %v1108
        %v1234 = vunpack.c.l.b16 %v1109
        %v1235 = vunpack.c.h.b16 %v1109
        %v1236 = vunpack.c.l.b16 %v1110
        %v1237 = vunpack.c.h.b16 %v1110
        %v1238 = vunpack.c.l.b16 %v1111
        %v1239 = vunpack.c.h.b16 %v1111
        %v1240 = vunpack.c.l.b16 %v1112
        %v1241 = vunpack.c.h.b16 %v1112
        %v1242 = vunpack.c.l.b16 %v1113
        %v1243 = vunpack.c.h.b16 %v1113
        %v1244 = vunpack.c.l.b16 %v1114
        %v1245 = vunpack.c.h.b16 %v1114
        %v1246 = vunpack.c.l.b16 %v1115
        %v1247 = vunpack.c.h.b16 %v1115
        %v1248 = vunpack.c.l.b16 %v1116
        %v1249 = vunpack.c.h.b16 %v1116
        %v1250 = vunpack.c.l.b16 %v1117
        %v1251 = vunpack.c.h.b16 %v1117
        %v1252 = vunpack.c.l.b16 %v1118
        %v1253 = vunpack.c.h.b16 %v1118
        %v1254 = vunpack.c.l.b16 %v1119
        %v1255 = vunpack.c.h.b16 %v1119
        %v1256 = vunpack.c.l.b16 %v1120
        %v1257 = vunpack.c.h.b16 %v1120
        %v1258 = vunpack.c.l.b16 %v1121
        %v1259 = vunpack.c.h.b16 %v1121
        %v1260 = vunpack.c.l.b16 %v1122
        %v1261 = vunpack.c.h.b16 %v1122
        %v1262 = vunpack.c.l.b16 %v1123
        %v1263 = vunpack.c.h.b16 %v1123
        %v1264 = vunpack.c.l.b16 %v1124
        %v1265 = vunpack.c.h.b16 %v1124
        %v1266 = vunpack.c.l.b16 %v1125
        %v1267 = vunpack.c.h.b16 %v1125
        %v1268 = vunpack.c.l.b16 %v1126
        %v1269 = vunpack.c.h.b16 %v1126
        %v1270 = vunpack.c.l.b16 %v1127
        %v1271 = vunpack.c.h.b16 %v1127
        %v1272 = vunpack.c.l.b16 %v1128
        %v1273 = vunpack.c.h.b16 %v1128
        %v1274 = vunpack.c.l.b16 %v1129
        %v1275 = vunpack.c.h.b16 %v1129
        %v1276 = vunpack.c.l.b16 %v1130
        %v1277 = vunpack.c.h.b16 %v1130
        %v1278 = vunpack.c.l.b16 %v1131
        %v1279 = vunpack.c.h.b16 %v1131
        %v1280 = vunpack.c.l.b16 %v1132
        %v1281 = vunpack.c.h.b16 %v1132
        %v1282 = vunpack.c.l.b16 %v1133
        %v1283 = vunpack.c.h.b16 %v1133
        %v1284 = vunpack.c.l.b16 %v1134
        %v1285 = vunpack.c.h.b16 %v1134
        %v1286 = vunpack.c.l.b16 %v1135
        %v1287 = vunpack.c.h.b16 %v1135
        %v1288 = vunpack.c.l.b16 %v1136
        %v1289 = vunpack.c.h.b16 %v1136
        %v1290 = vunpack.c.l.b16 %v1137
        %v1291 = vunpack.c.h.b16 %v1137
        %v1292 = vunpack.c.l.b16 %v1138
        %v1293 = vunpack.c.h.b16 %v1138
        %v1294 = vunpack.c.l.b16 %v1139
        %v1295 = vunpack.c.h.b16 %v1139
        %v1296 = vpack.c.b16 %v1202, %v1200
        %v1297 = vpack.c.b16 %v1203, %v1201
        %v1298 = vpack.c.b16 %v1206, %v1204
        %v1299 = vpack.c.b16 %v1207, %v1205
        %v1300 = vpack.c.b16 %v1210, %v1208
        %v1301 = vpack.c.b16 %v1211, %v1209
        %v1302 = vpack.c.b16 %v1214, %v1212
        %v1303 = vpack.c.b16 %v1215, %v1213
        %v1304 = vpack.c.b16 %v1218, %v1216
        %v1305 = vpack.c.b16 %v1219, %v1217
        %v1306 = vpack.c.b16 %v1222, %v1220
        %v1307 = vpack.c.b16 %v1223, %v1221
        %v1308 = vpack.c.b16 %v1226, %v1224
        %v1309 = vpack.c.b16 %v1227, %v1225
        %v1310 = vpack.c.b16 %v1230, %v1228
        %v1311 = vpack.c.b16 %v1231, %v1229
        %v1312 = vpack.c.b16 %v1234, %v1232
        %v1313 = vpack.c.b16 %v1235, %v1233
        %v1314 = vpack.c.b16 %v1238, %v1236
        %v1315 = vpack.c.b16 %v1239, %v1237
        %v1316 = vpack.c.b16 %v1242, %v1240
        %v1317 = vpack.c.b16 %v1243, %v1241
        %v1318 = vpack.c.b16 %v1246, %v1244
        %v1319 = vpack.c.b16 %v1247, %v1245
        %v1320 = vpack.c.b16 %v1250, %v1248
        %v1321 = vpack.c.b16 %v1251, %v1249
        %v1322 = vpack.c.b16 %v1254, %v1252
        %v1323 = vpack.c.b16 %v1255, %v1253
        %v1324 = vpack.c.b16 %v1258, %v1256
        %v1325 = vpack.c.b16 %v1259, %v1257
        %v1326 = vpack.c.b16 %v1262, %v1260
        %v1327 = vpack.c.b16 %v1263, %v1261
        %v1328 = vpack.c.b16 %v1266, %v1264
        %v1329 = vpack.c.b16 %v1267, %v1265
        %v1330 = vpack.c.b16 %v1270, %v1268
        %v1331 = vpack.c.b16 %v1271, %v1269
        %v1332 = vpack.c.b16 %v1274, %v1272
        %v1333 = vpack.c.b16 %v1275, %v1273
        %v1334 = vpack.c.b16 %v1278, %v1276
        %v1335 = vpack.c.b16 %v1279, %v1277
        %v1336 = vpack.c.b16 %v1282, %v1280
        %v1337 = vpack.c.b16 %v1283, %v1281
        %v1338 = vpack.c.b16 %v1286, %v1284
        %v1339 = vpack.c.b16 %v1287, %v1285
        %v1340 = vpack.c.b16 %v1290, %v1288
        %v1341 = vpack.c.b16 %v1291, %v1289
        %v1342 = vpack.c.b16 %v1294, %v1292
        %v1343 = vpack.c.b16 %v1295, %v1293
        %1392 = vmatprep.subr.bf16.mxu0 %v1297
        %1393 = vmatpush1.bf16.msra.mxu0 %v1296
        %1394 = vmatprep.subr.bf16.mxu0 %v1299
        %1395 = vmatpush1.bf16.msra.mxu0 %v1298
        %1396 = vmatprep.subr.bf16.mxu0 %v1301
        %1397 = vmatpush1.bf16.msra.mxu0 %v1300
        %1398 = vmatprep.subr.bf16.mxu0 %v1303
        %1399 = vmatpush1.bf16.msra.mxu0 %v1302
        %1400 = vmatprep.subr.bf16.mxu0 %v1305
        %1401 = vmatpush1.bf16.msra.mxu0 %v1304
        %1402 = vmatprep.subr.bf16.mxu0 %v1307
        %1403 = vmatpush1.bf16.msra.mxu0 %v1306
        %1404 = vmatprep.subr.bf16.mxu0 %v1309
        %1405 = vmatpush1.bf16.msra.mxu0 %v1308
        %1406 = vmatprep.subr.bf16.mxu0 %v1311
        %1407 = vmatpush1.bf16.msra.mxu0 %v1310
        %1408 = vmatprep.subr.bf16.mxu0 %v1313
        %1409 = vmatpush1.bf16.msra.mxu0 %v1312
        %1410 = vmatprep.subr.bf16.mxu0 %v1315
        %1411 = vmatpush1.bf16.msra.mxu0 %v1314
        %1412 = vmatprep.subr.bf16.mxu0 %v1317
        %1413 = vmatpush1.bf16.msra.mxu0 %v1316
        %1414 = vmatprep.subr.bf16.mxu0 %v1319
        %1415 = vmatpush1.bf16.msra.mxu0 %v1318
        %1416 = vmatprep.subr.bf16.mxu0 %v1321
        %1417 = vmatpush1.bf16.msra.mxu0 %v1320
        %1418 = vmatprep.subr.bf16.mxu0 %v1323
        %1419 = vmatpush1.bf16.msra.mxu0 %v1322
        %1420 = vmatprep.subr.bf16.mxu0 %v1325
        %1421 = vmatpush1.bf16.msra.mxu0 %v1324
        %1422 = vmatprep.subr.bf16.mxu0 %v1327
        %1423 = vmatpush1.bf16.msra.mxu0 %v1326
        %1424 = vmatprep.mubr.bf16.mxu0 %v1081
        %1425 = vmatmul.mubr.bf16.gmra.mrb[0].mxu0 %v1080
        %v1426 = vpop.f32.mrb[0].mxu0
        %v1427 = vadd.f32 %v1145, %v1426
        %v1428 = vpop.f32.mrb[0].mxu0
        %v1429 = vadd.f32 %v1149, %v1428
        %v1430 = vpop.f32.mrb[0].mxu0
        %v1431 = vadd.f32 %v1145, %v1430
        %v1432 = vpop.f32.mrb[0].mxu0
        %v1433 = vadd.f32 %v1149, %v1432
        %1434 = vmatprep.mubr.bf16.mxu0 %v1084
        %1435 = vmatmul.mubr.bf16.gmra.mrb[0].mxu0 %v1083
        %v1436 = vpop.f32.mrb[0].mxu0
        %v1437 = vadd.f32 %v1145, %v1436
        %v1438 = vpop.f32.mrb[0].mxu0
        %v1439 = vadd.f32 %v1149, %v1438
        %v1440 = vpop.f32.mrb[0].mxu0
        %v1441 = vadd.f32 %v1145, %v1440
        %v1442 = vpop.f32.mrb[0].mxu0
        %v1443 = vadd.f32 %v1149, %v1442
        %1444 = vmatprep.mubr.bf16.mxu0 %v1087
        %1445 = vmatmul.mubr.bf16.gmra.mrb[0].mxu0 %v1086
        %v1446 = vpop.f32.mrb[0].mxu0
        %v1447 = vadd.f32 %v1145, %v1446
        %v1448 = vpop.f32.mrb[0].mxu0
        %v1449 = vadd.f32 %v1149, %v1448
        %v1450 = vpop.f32.mrb[0].mxu0
        %v1451 = vadd.f32 %v1145, %v1450
        %v1452 = vpop.f32.mrb[0].mxu0
        %v1453 = vadd.f32 %v1149, %v1452
        %1454 = vmatprep.mubr.bf16.mxu0 %v1090
        %1455 = vmatmul.mubr.bf16.gmra.mrb[0].mxu0 %v1089
        %v1456 = vpop.f32.mrb[0].mxu0
        %v1457 = vadd.f32 %v1145, %v1456
        %v1458 = vpop.f32.mrb[0].mxu0
        %v1459 = vadd.f32 %v1149, %v1458
        %v1460 = vpop.f32.mrb[0].mxu0
        %v1461 = vadd.f32 %v1145, %v1460
        %v1462 = vpop.f32.mrb[0].mxu0
        %v1463 = vadd.f32 %v1149, %v1462
        %1464 = vdwg.mxu0
        %1465 = vmatprep.subr.bf16.mxu0 %v1329
        %1466 = vmatpush1.bf16.msra.mxu0 %v1328
        %1467 = vmatprep.subr.bf16.mxu0 %v1331
        %1468 = vmatpush1.bf16.msra.mxu0 %v1330
        %1469 = vmatprep.subr.bf16.mxu0 %v1333
        %1470 = vmatpush1.bf16.msra.mxu0 %v1332
        %1471 = vmatprep.subr.bf16.mxu0 %v1335
        %1472 = vmatpush1.bf16.msra.mxu0 %v1334
        %1473 = vmatprep.subr.bf16.mxu0 %v1337
        %1474 = vmatpush1.bf16.msra.mxu0 %v1336
        %1475 = vmatprep.subr.bf16.mxu0 %v1339
        %1476 = vmatpush1.bf16.msra.mxu0 %v1338
        %1477 = vmatprep.subr.bf16.mxu0 %v1341
        %1478 = vmatpush1.bf16.msra.mxu0 %v1340
        %1479 = vmatprep.subr.bf16.mxu0 %v1343
        %1480 = vmatpush1.bf16.msra.mxu0 %v1342
        %1481 = vmatprep.subr.bf16.mxu0 0
        %1482 = vmatpush1.bf16.msra.mxu0 0
        %1483 = vmatprep.subr.bf16.mxu0 0
        %1484 = vmatpush1.bf16.msra.mxu0 0
        %1485 = vmatprep.subr.bf16.mxu0 0
        %1486 = vmatpush1.bf16.msra.mxu0 0
        %1487 = vmatprep.subr.bf16.mxu0 0
        %1488 = vmatpush1.bf16.msra.mxu0 0
        %1489 = vmatprep.subr.bf16.mxu0 0
        %1490 = vmatpush1.bf16.msra.mxu0 0
        %1491 = vmatprep.subr.bf16.mxu0 0
        %1492 = vmatpush1.bf16.msra.mxu0 0
        %1493 = vmatprep.subr.bf16.mxu0 0
        %1494 = vmatpush1.bf16.msra.mxu0 0
        %1495 = vmatprep.subr.bf16.mxu0 0
        %1496 = vmatpush1.bf16.msra.mxu0 0
        %1497 = vmatprep.mubr.bf16.mxu0 0
        %1498 = vmatmul.mubr.bf16.gmra.mrb[0].mxu0 %v1082
        %v1499 = vpop.f32.mrb[0].mxu0
        %v1500 = vadd.f32 %v1427, %v1499
        %v1501 = vpop.f32.mrb[0].mxu0
        %v1502 = vadd.f32 %v1429, %v1501
        %v1503 = vpop.f32.mrb[0].mxu0
        %v1504 = vadd.f32 %v1431, %v1503
        %v1505 = vpop.f32.mrb[0].mxu0
        %v1506 = vadd.f32 %v1433, %v1505
        %1507 = vmatprep.mubr.bf16.mxu0 0
        %1508 = vmatmul.mubr.bf16.gmra.mrb[0].mxu0 %v1085
        %v1509 = vpop.f32.mrb[0].mxu0
        %v1510 = vadd.f32 %v1437, %v1509
        %v1511 = vpop.f32.mrb[0].mxu0
        %v1512 = vadd.f32 %v1439, %v1511
        %v1513 = vpop.f32.mrb[0].mxu0
        %v1514 = vadd.f32 %v1441, %v1513
        %v1515 = vpop.f32.mrb[0].mxu0
        %v1516 = vadd.f32 %v1443, %v1515
        %1517 = vmatprep.mubr.bf16.mxu0 0
        %1518 = vmatmul.mubr.bf16.gmra.mrb[0].mxu0 %v1088
        %v1519 = vpop.f32.mrb[0].mxu0
        %v1520 = vadd.f32 %v1447, %v1519
        %v1521 = vpop.f32.mrb[0].mxu0
        %v1522 = vadd.f32 %v1449, %v1521
        %v1523 = vpop.f32.mrb[0].mxu0
        %v1524 = vadd.f32 %v1451, %v1523
        %v1525 = vpop.f32.mrb[0].mxu0
        %v1526 = vadd.f32 %v1453, %v1525
        %1527 = vmatprep.mubr.bf16.mxu0 0
        %1528 = vmatmul.mubr.bf16.gmra.mrb[0].mxu0 %v1091
        %v1529 = vpop.f32.mrb[0].mxu0
        %v1530 = vadd.f32 %v1457, %v1529
        %v1531 = vpop.f32.mrb[0].mxu0
        %v1532 = vadd.f32 %v1459, %v1531
        %v1533 = vpop.f32.mrb[0].mxu0
        %v1534 = vadd.f32 %v1461, %v1533
        %v1535 = vpop.f32.mrb[0].mxu0
        %v1536 = vadd.f32 %v1463, %v1535
        %1537 = vdwg.mxu0
        %v1538 = vmul.f32 %v1500, 0.5
        %v1539 = vmul.f32 %v1504, 0.5
        %v1540 = vmul.f32 %v1510, 0.5
        %v1541 = vmul.f32 %v1514, 0.5
        %v1542 = vmul.f32 %v1520, 0.5
        %v1543 = vmul.f32 %v1524, 0.5
        %v1544 = vmul.f32 %v1530, 0.5
        %v1545 = vmul.f32 %v1534, 0.5
        %v1546 = vtanh.pop %v1538
        %v1547 = vtanh.pop %v1539
        %v1548 = vtanh.pop %v1540
        %v1549 = vtanh.pop %v1541
        %v1550 = vtanh.pop %v1542
        %v1551 = vtanh.pop %v1543
        %v1552 = vtanh.pop %v1544
        %v1553 = vtanh.pop %v1545
        %v1554 = vadd.f32 %v1546, 1.0
        %v1555 = vadd.f32 %v1547, 1.0
        %v1556 = vadd.f32 %v1548, 1.0
        %v1557 = vadd.f32 %v1549, 1.0
        %v1558 = vadd.f32 %v1550, 1.0
        %v1559 = vadd.f32 %v1551, 1.0
        %v1560 = vadd.f32 %v1552, 1.0
        %v1561 = vadd.f32 %v1553, 1.0
        %v1562 = vmul.f32 %v1554, 0.5
        %v1563 = vmul.f32 %v1555, 0.5
        %v1564 = vmul.f32 %v1556, 0.5
        %v1565 = vmul.f32 %v1557, 0.5
        %v1566 = vmul.f32 %v1558, 0.5
        %v1567 = vmul.f32 %v1559, 0.5
        %v1568 = vmul.f32 %v1560, 0.5
        %v1569 = vmul.f32 %v1561, 0.5
        %v1570 = vsub.f32 %v1502, %v927
        %v1571 = vsub.f32 %v1506, %v930
        %v1572 = vsub.f32 %v1512, %v935
        %v1573 = vsub.f32 %v1516, %v938
        %v1574 = vsub.f32 %v1522, %v943
        %v1575 = vsub.f32 %v1526, %v946
        %v1576 = vsub.f32 %v1532, %v951
        %v1577 = vsub.f32 %v1536, %v954
        %v1578 = vmul.f32 %v1562, %v1570
        %v1579 = vmul.f32 %v1563, %v1571
        %v1580 = vmul.f32 %v1564, %v1572
        %v1581 = vmul.f32 %v1565, %v1573
        %v1582 = vmul.f32 %v1566, %v1574
        %v1583 = vmul.f32 %v1567, %v1575
        %v1584 = vmul.f32 %v1568, %v1576
        %v1585 = vmul.f32 %v1569, %v1577
        %v1586 = vadd.f32 %v927, %v1578
        %v1587 = vadd.f32 %v930, %v1579
        %v1588 = vadd.f32 %v935, %v1580
        %v1589 = vadd.f32 %v938, %v1581
        %v1590 = vadd.f32 %v943, %v1582
        %v1591 = vadd.f32 %v946, %v1583
        %v1592 = vadd.f32 %v951, %v1584
        %v1593 = vadd.f32 %v954, %v1585
        %v1594 = vrot.slane %v1586, 5
        %v1595 = vrot.slane %v1587, 5
        %v1596 = vrot.slane %v1588, 5
        %v1597 = vrot.slane %v1589, 5
        %v1598 = vrot.slane %v1590, 5
        %v1599 = vrot.slane %v1591, 5
        %v1600 = vrot.slane %v1592, 5
        %v1601 = vrot.slane %v1593, 5
        %vm1602 = vcmp.lt.s32.totalorder %v958, 3
        %v1603 = vsel %vm1602, %v1600, %v1601
        %v1604 = vsel %vm1602, %v1599, %v1600
        %v1605 = vsel %vm1602, %v1598, %v1599
        %v1606 = vsel %vm1602, %v1597, %v1598
        %v1607 = vsel %vm1602, %v1596, %v1597
        %v1608 = vsel %vm1602, %v1595, %v1596
        %v1609 = vsel %vm1602, %v1594, %v1595
        %v1610 = vsel %vm1602, %v1601, %v1594
        %v1611 = vsel %vm982, %v1610, 0.0
        %v1612 = vsel %vm983, %v1609, 0.0
        %v1613 = vsel %vm984, %v1608, 0.0
        %v1614 = vsel %vm985, %v1607, 0.0
        %v1615 = vsel %vm986, %v1606, 0.0
        %v1616 = vsel %vm987, %v1605, 0.0
        %v1617 = vsel %vm988, %v1604, 0.0
        %v1618 = vsel %vm989, %v1603, 0.0
        %v1619 = vrot.slane %v1586, 3
        %v1620 = vrot.slane %v1587, 3
        %v1621 = vrot.slane %v1588, 3
        %v1622 = vrot.slane %v1589, 3
        %v1623 = vrot.slane %v1590, 3
        %v1624 = vrot.slane %v1591, 3
        %v1625 = vrot.slane %v1592, 3
        %v1626 = vrot.slane %v1593, 3
        %vm1627 = vcmp.lt.s32.totalorder %v958, 5
        %v1628 = vsel %vm1627, %v1625, %v1626
        %v1629 = vsel %vm1627, %v1624, %v1625
        %v1630 = vsel %vm1627, %v1623, %v1624
        %v1631 = vsel %vm1627, %v1622, %v1623
        %v1632 = vsel %vm1627, %v1621, %v1622
        %v1633 = vsel %vm1627, %v1620, %v1621
        %v1634 = vsel %vm1627, %v1619, %v1620
        %v1635 = vsel %vm1627, %v1626, %v1619
        %v1636 = vsel %vm990, %v1634, 0.0
        %v1637 = vsel %vm991, %v1633, 0.0
        %v1638 = vsel %vm992, %v1632, 0.0
        %v1639 = vsel %vm993, %v1631, 0.0
        %v1640 = vsel %vm994, %v1630, 0.0
        %v1641 = vsel %vm995, %v1629, 0.0
        %v1642 = vsel %vm996, %v1628, 0.0
        %v1643 = vsel %vm997, %v1635, 0.0
        %v1644 = vpack.c.bf16 %v1612, %v1611
        %v1645 = vpack.c.bf16 %v1587, %v1586
        %v1646 = vpack.c.bf16 %v1637, %v1636
        %v1647 = vpack.c.bf16 %v1614, %v1613
        %v1648 = vpack.c.bf16 %v1589, %v1588
        %v1649 = vpack.c.bf16 %v1639, %v1638
        %v1650 = vpack.c.bf16 %v1616, %v1615
        %v1651 = vpack.c.bf16 %v1591, %v1590
        %v1652 = vpack.c.bf16 %v1641, %v1640
        %v1653 = vpack.c.bf16 %v1618, %v1617
        %v1654 = vpack.c.bf16 %v1593, %v1592
        %v1655 = vpack.c.bf16 %v1643, %v1642
        %s1656 = scalar_lea.vmem [#allocation11], 384
        %v1657 = vld [vmem:[%s1656] sm:$0xff]
        %v1658 = vld [vmem:[%s1656 + $0x8] sm:$0xff]
        %v1659 = vld [vmem:[%s1656 + $0x10] sm:$0xff]
        %v1660 = vld [vmem:[%s1656 + $0x18] sm:$0xff]
        %v1661 = vld [vmem:[%s1656 + $0x20] sm:$0xff]
        %v1662 = vld [vmem:[%s1656 + $0x28] sm:$0xff]
        %v1663 = vld [vmem:[%s1656 + $0x30] sm:$0xff]
        %v1664 = vld [vmem:[%s1656 + $0x38] sm:$0xff]
        %v1665 = vld [vmem:[%s1656 + $0x40] sm:$0xff]
        %v1666 = vld [vmem:[%s1656 + $0x48] sm:$0xff]
        %v1667 = vld [vmem:[%s1656 + $0x50] sm:$0xff]
        %v1668 = vld [vmem:[%s1656 + $0x58] sm:$0xff]
        %v1669 = vld [vmem:[%s1656 + $0x60] sm:$0xff]
        %v1670 = vld [vmem:[%s1656 + $0x68] sm:$0xff]
        %v1671 = vld [vmem:[%s1656 + $0x70] sm:$0xff]
        %v1672 = vld [vmem:[%s1656 + $0x78] sm:$0xff]
        %v1673 = vld [vmem:[%s1656 + $0x80] sm:$0xff]
        %v1674 = vld [vmem:[%s1656 + $0x88] sm:$0xff]
        %v1675 = vld [vmem:[%s1656 + $0x90] sm:$0xff]
        %v1676 = vld [vmem:[%s1656 + $0x98] sm:$0xff]
        %v1677 = vld [vmem:[%s1656 + $0xa0] sm:$0xff]
        %v1678 = vld [vmem:[%s1656 + $0xa8] sm:$0xff]
        %v1679 = vld [vmem:[%s1656 + $0xb0] sm:$0xff]
        %v1680 = vld [vmem:[%s1656 + $0xb8] sm:$0xff]
        %v1681 = vld [vmem:[%s1656 + $0xc0] sm:$0xff]
        %v1682 = vld [vmem:[%s1656 + $0xc8] sm:$0xff]
        %v1683 = vld [vmem:[%s1656 + $0xd0] sm:$0xff]
        %v1684 = vld [vmem:[%s1656 + $0xd8] sm:$0xff]
        %v1685 = vld [vmem:[%s1656 + $0xe0] sm:$0xff]
        %v1686 = vld [vmem:[%s1656 + $0xe8] sm:$0xff]
        %v1687 = vld [vmem:[%s1656 + $0xf0] sm:$0xff]
        %v1688 = vld [vmem:[%s1656 + $0xf8] sm:$0xff]
        %v1689 = vld [vmem:[%s1656 + $0x100] sm:$0xff]
        %v1690 = vld [vmem:[%s1656 + $0x108] sm:$0xff]
        %v1691 = vld [vmem:[%s1656 + $0x110] sm:$0xff]
        %v1692 = vld [vmem:[%s1656 + $0x118] sm:$0xff]
        %v1693 = vld [vmem:[%s1656 + $0x120] sm:$0xff]
        %v1694 = vld [vmem:[%s1656 + $0x128] sm:$0xff]
        %v1695 = vld [vmem:[%s1656 + $0x130] sm:$0xff]
        %v1696 = vld [vmem:[%s1656 + $0x138] sm:$0xff]
        %v1697 = vld [vmem:[%s1656 + $0x140] sm:$0xff]
        %v1698 = vld [vmem:[%s1656 + $0x148] sm:$0xff]
        %v1699 = vld [vmem:[%s1656 + $0x150] sm:$0xff]
        %v1700 = vld [vmem:[%s1656 + $0x158] sm:$0xff]
        %v1701 = vld [vmem:[%s1656 + $0x160] sm:$0xff]
        %v1702 = vld [vmem:[%s1656 + $0x168] sm:$0xff]
        %v1703 = vld [vmem:[%s1656 + $0x170] sm:$0xff]
        %v1704 = vld [vmem:[%s1656 + $0x178] sm:$0xff]
        %s1705 = scalar_lea.vmem [#allocation13], 2
        %v1706 = vld [vmem:[%s1705] sm:$0x3]
        %v1708 = vlaneseq
        %v1709 = vshrl.u32 %v1708, 7
        %v1710 = vsub.s32 0, %v1709
        %v1711 = vrot.slane %v1706, %v1710
        %v1712 = vlaneseq
        %v1713 = vshrl.u32 %v1712, 7
        %v1714 = vsub.s32 1, %v1713
        %v1715 = vrot.slane %v1706, %v1714
        %v1766 = vunpack.c.l.b16 %v1657
        %v1767 = vunpack.c.h.b16 %v1657
        %v1768 = vunpack.c.l.b16 %v1658
        %v1769 = vunpack.c.h.b16 %v1658
        %v1770 = vunpack.c.l.b16 %v1659
        %v1771 = vunpack.c.h.b16 %v1659
        %v1772 = vunpack.c.l.b16 %v1660
        %v1773 = vunpack.c.h.b16 %v1660
        %v1774 = vunpack.c.l.b16 %v1661
        %v1775 = vunpack.c.h.b16 %v1661
        %v1776 = vunpack.c.l.b16 %v1662
        %v1777 = vunpack.c.h.b16 %v1662
        %v1778 = vunpack.c.l.b16 %v1663
        %v1779 = vunpack.c.h.b16 %v1663
        %v1780 = vunpack.c.l.b16 %v1664
        %v1781 = vunpack.c.h.b16 %v1664
        %v1782 = vunpack.c.l.b16 %v1665
        %v1783 = vunpack.c.h.b16 %v1665
        %v1784 = vunpack.c.l.b16 %v1666
        %v1785 = vunpack.c.h.b16 %v1666
        %v1786 = vunpack.c.l.b16 %v1667
        %v1787 = vunpack.c.h.b16 %v1667
        %v1788 = vunpack.c.l.b16 %v1668
        %v1789 = vunpack.c.h.b16 %v1668
        %v1790 = vunpack.c.l.b16 %v1669
        %v1791 = vunpack.c.h.b16 %v1669
        %v1792 = vunpack.c.l.b16 %v1670
        %v1793 = vunpack.c.h.b16 %v1670
        %v1794 = vunpack.c.l.b16 %v1671
        %v1795 = vunpack.c.h.b16 %v1671
        %v1796 = vunpack.c.l.b16 %v1672
        %v1797 = vunpack.c.h.b16 %v1672
        %v1798 = vunpack.c.l.b16 %v1673
        %v1799 = vunpack.c.h.b16 %v1673
        %v1800 = vunpack.c.l.b16 %v1674
        %v1801 = vunpack.c.h.b16 %v1674
        %v1802 = vunpack.c.l.b16 %v1675
        %v1803 = vunpack.c.h.b16 %v1675
        %v1804 = vunpack.c.l.b16 %v1676
        %v1805 = vunpack.c.h.b16 %v1676
        %v1806 = vunpack.c.l.b16 %v1677
        %v1807 = vunpack.c.h.b16 %v1677
        %v1808 = vunpack.c.l.b16 %v1678
        %v1809 = vunpack.c.h.b16 %v1678
        %v1810 = vunpack.c.l.b16 %v1679
        %v1811 = vunpack.c.h.b16 %v1679
        %v1812 = vunpack.c.l.b16 %v1680
        %v1813 = vunpack.c.h.b16 %v1680
        %v1814 = vunpack.c.l.b16 %v1681
        %v1815 = vunpack.c.h.b16 %v1681
        %v1816 = vunpack.c.l.b16 %v1682
        %v1817 = vunpack.c.h.b16 %v1682
        %v1818 = vunpack.c.l.b16 %v1683
        %v1819 = vunpack.c.h.b16 %v1683
        %v1820 = vunpack.c.l.b16 %v1684
        %v1821 = vunpack.c.h.b16 %v1684
        %v1822 = vunpack.c.l.b16 %v1685
        %v1823 = vunpack.c.h.b16 %v1685
        %v1824 = vunpack.c.l.b16 %v1686
        %v1825 = vunpack.c.h.b16 %v1686
        %v1826 = vunpack.c.l.b16 %v1687
        %v1827 = vunpack.c.h.b16 %v1687
        %v1828 = vunpack.c.l.b16 %v1688
        %v1829 = vunpack.c.h.b16 %v1688
        %v1830 = vunpack.c.l.b16 %v1689
        %v1831 = vunpack.c.h.b16 %v1689
        %v1832 = vunpack.c.l.b16 %v1690
        %v1833 = vunpack.c.h.b16 %v1690
        %v1834 = vunpack.c.l.b16 %v1691
        %v1835 = vunpack.c.h.b16 %v1691
        %v1836 = vunpack.c.l.b16 %v1692
        %v1837 = vunpack.c.h.b16 %v1692
        %v1838 = vunpack.c.l.b16 %v1693
        %v1839 = vunpack.c.h.b16 %v1693
        %v1840 = vunpack.c.l.b16 %v1694
        %v1841 = vunpack.c.h.b16 %v1694
        %v1842 = vunpack.c.l.b16 %v1695
        %v1843 = vunpack.c.h.b16 %v1695
        %v1844 = vunpack.c.l.b16 %v1696
        %v1845 = vunpack.c.h.b16 %v1696
        %v1846 = vunpack.c.l.b16 %v1697
        %v1847 = vunpack.c.h.b16 %v1697
        %v1848 = vunpack.c.l.b16 %v1698
        %v1849 = vunpack.c.h.b16 %v1698
        %v1850 = vunpack.c.l.b16 %v1699
        %v1851 = vunpack.c.h.b16 %v1699
        %v1852 = vunpack.c.l.b16 %v1700
        %v1853 = vunpack.c.h.b16 %v1700
        %v1854 = vunpack.c.l.b16 %v1701
        %v1855 = vunpack.c.h.b16 %v1701
        %v1856 = vunpack.c.l.b16 %v1702
        %v1857 = vunpack.c.h.b16 %v1702
        %v1858 = vunpack.c.l.b16 %v1703
        %v1859 = vunpack.c.h.b16 %v1703
        %v1860 = vunpack.c.l.b16 %v1704
        %v1861 = vunpack.c.h.b16 %v1704
        %v1862 = vpack.c.b16 %v1768, %v1766
        %v1863 = vpack.c.b16 %v1769, %v1767
        %v1864 = vpack.c.b16 %v1772, %v1770
        %v1865 = vpack.c.b16 %v1773, %v1771
        %v1866 = vpack.c.b16 %v1776, %v1774
        %v1867 = vpack.c.b16 %v1777, %v1775
        %v1868 = vpack.c.b16 %v1780, %v1778
        %v1869 = vpack.c.b16 %v1781, %v1779
        %v1870 = vpack.c.b16 %v1784, %v1782
        %v1871 = vpack.c.b16 %v1785, %v1783
        %v1872 = vpack.c.b16 %v1788, %v1786
        %v1873 = vpack.c.b16 %v1789, %v1787
        %v1874 = vpack.c.b16 %v1792, %v1790
        %v1875 = vpack.c.b16 %v1793, %v1791
        %v1876 = vpack.c.b16 %v1796, %v1794
        %v1877 = vpack.c.b16 %v1797, %v1795
        %v1878 = vpack.c.b16 %v1800, %v1798
        %v1879 = vpack.c.b16 %v1801, %v1799
        %v1880 = vpack.c.b16 %v1804, %v1802
        %v1881 = vpack.c.b16 %v1805, %v1803
        %v1882 = vpack.c.b16 %v1808, %v1806
        %v1883 = vpack.c.b16 %v1809, %v1807
        %v1884 = vpack.c.b16 %v1812, %v1810
        %v1885 = vpack.c.b16 %v1813, %v1811
        %v1886 = vpack.c.b16 %v1816, %v1814
        %v1887 = vpack.c.b16 %v1817, %v1815
        %v1888 = vpack.c.b16 %v1820, %v1818
        %v1889 = vpack.c.b16 %v1821, %v1819
        %v1890 = vpack.c.b16 %v1824, %v1822
        %v1891 = vpack.c.b16 %v1825, %v1823
        %v1892 = vpack.c.b16 %v1828, %v1826
        %v1893 = vpack.c.b16 %v1829, %v1827
        %v1894 = vpack.c.b16 %v1832, %v1830
        %v1895 = vpack.c.b16 %v1833, %v1831
        %v1896 = vpack.c.b16 %v1836, %v1834
        %v1897 = vpack.c.b16 %v1837, %v1835
        %v1898 = vpack.c.b16 %v1840, %v1838
        %v1899 = vpack.c.b16 %v1841, %v1839
        %v1900 = vpack.c.b16 %v1844, %v1842
        %v1901 = vpack.c.b16 %v1845, %v1843
        %v1902 = vpack.c.b16 %v1848, %v1846
        %v1903 = vpack.c.b16 %v1849, %v1847
        %v1904 = vpack.c.b16 %v1852, %v1850
        %v1905 = vpack.c.b16 %v1853, %v1851
        %v1906 = vpack.c.b16 %v1856, %v1854
        %v1907 = vpack.c.b16 %v1857, %v1855
        %v1908 = vpack.c.b16 %v1860, %v1858
        %v1909 = vpack.c.b16 %v1861, %v1859
        %1958 = vmatprep.subr.bf16.mxu0 %v1863
        %1959 = vmatpush1.bf16.msra.mxu0 %v1862
        %1960 = vmatprep.subr.bf16.mxu0 %v1865
        %1961 = vmatpush1.bf16.msra.mxu0 %v1864
        %1962 = vmatprep.subr.bf16.mxu0 %v1867
        %1963 = vmatpush1.bf16.msra.mxu0 %v1866
        %1964 = vmatprep.subr.bf16.mxu0 %v1869
        %1965 = vmatpush1.bf16.msra.mxu0 %v1868
        %1966 = vmatprep.subr.bf16.mxu0 %v1871
        %1967 = vmatpush1.bf16.msra.mxu0 %v1870
        %1968 = vmatprep.subr.bf16.mxu0 %v1873
        %1969 = vmatpush1.bf16.msra.mxu0 %v1872
        %1970 = vmatprep.subr.bf16.mxu0 %v1875
        %1971 = vmatpush1.bf16.msra.mxu0 %v1874
        %1972 = vmatprep.subr.bf16.mxu0 %v1877
        %1973 = vmatpush1.bf16.msra.mxu0 %v1876
        %1974 = vmatprep.subr.bf16.mxu0 %v1879
        %1975 = vmatpush1.bf16.msra.mxu0 %v1878
        %1976 = vmatprep.subr.bf16.mxu0 %v1881
        %1977 = vmatpush1.bf16.msra.mxu0 %v1880
        %1978 = vmatprep.subr.bf16.mxu0 %v1883
        %1979 = vmatpush1.bf16.msra.mxu0 %v1882
        %1980 = vmatprep.subr.bf16.mxu0 %v1885
        %1981 = vmatpush1.bf16.msra.mxu0 %v1884
        %1982 = vmatprep.subr.bf16.mxu0 %v1887
        %1983 = vmatpush1.bf16.msra.mxu0 %v1886
        %1984 = vmatprep.subr.bf16.mxu0 %v1889
        %1985 = vmatpush1.bf16.msra.mxu0 %v1888
        %1986 = vmatprep.subr.bf16.mxu0 %v1891
        %1987 = vmatpush1.bf16.msra.mxu0 %v1890
        %1988 = vmatprep.subr.bf16.mxu0 %v1893
        %1989 = vmatpush1.bf16.msra.mxu0 %v1892
        %1990 = vmatprep.mubr.bf16.mxu0 %v1645
        %1991 = vmatmul.mubr.bf16.gmra.mrb[0].mxu0 %v1644
        %v1992 = vpop.f32.mrb[0].mxu0
        %v1993 = vadd.f32 %v1711, %v1992
        %v1994 = vpop.f32.mrb[0].mxu0
        %v1995 = vadd.f32 %v1715, %v1994
        %v1996 = vpop.f32.mrb[0].mxu0
        %v1997 = vadd.f32 %v1711, %v1996
        %v1998 = vpop.f32.mrb[0].mxu0
        %v1999 = vadd.f32 %v1715, %v1998
        %2000 = vmatprep.mubr.bf16.mxu0 %v1648
        %2001 = vmatmul.mubr.bf16.gmra.mrb[0].mxu0 %v1647
        %v2002 = vpop.f32.mrb[0].mxu0
        %v2003 = vadd.f32 %v1711, %v2002
        %v2004 = vpop.f32.mrb[0].mxu0
        %v2005 = vadd.f32 %v1715, %v2004
        %v2006 = vpop.f32.mrb[0].mxu0
        %v2007 = vadd.f32 %v1711, %v2006
        %v2008 = vpop.f32.mrb[0].mxu0
        %v2009 = vadd.f32 %v1715, %v2008
        %2010 = vmatprep.mubr.bf16.mxu0 %v1651
        %2011 = vmatmul.mubr.bf16.gmra.mrb[0].mxu0 %v1650
        %v2012 = vpop.f32.mrb[0].mxu0
        %v2013 = vadd.f32 %v1711, %v2012
        %v2014 = vpop.f32.mrb[0].mxu0
        %v2015 = vadd.f32 %v1715, %v2014
        %v2016 = vpop.f32.mrb[0].mxu0
        %v2017 = vadd.f32 %v1711, %v2016
        %v2018 = vpop.f32.mrb[0].mxu0
        %v2019 = vadd.f32 %v1715, %v2018
        %2020 = vmatprep.mubr.bf16.mxu0 %v1654
        %2021 = vmatmul.mubr.bf16.gmra.mrb[0].mxu0 %v1653
        %v2022 = vpop.f32.mrb[0].mxu0
        %v2023 = vadd.f32 %v1711, %v2022
        %v2024 = vpop.f32.mrb[0].mxu0
        %v2025 = vadd.f32 %v1715, %v2024
        %v2026 = vpop.f32.mrb[0].mxu0
        %v2027 = vadd.f32 %v1711, %v2026
        %v2028 = vpop.f32.mrb[0].mxu0
        %v2029 = vadd.f32 %v1715, %v2028
        %2030 = vdwg.mxu0
        %2031 = vmatprep.subr.bf16.mxu0 %v1895
        %2032 = vmatpush1.bf16.msra.mxu0 %v1894
        %2033 = vmatprep.subr.bf16.mxu0 %v1897
        %2034 = vmatpush1.bf16.msra.mxu0 %v1896
        %2035 = vmatprep.subr.bf16.mxu0 %v1899
        %2036 = vmatpush1.bf16.msra.mxu0 %v1898
        %2037 = vmatprep.subr.bf16.mxu0 %v1901
        %2038 = vmatpush1.bf16.msra.mxu0 %v1900
        %2039 = vmatprep.subr.bf16.mxu0 %v1903
        %2040 = vmatpush1.bf16.msra.mxu0 %v1902
        %2041 = vmatprep.subr.bf16.mxu0 %v1905
        %2042 = vmatpush1.bf16.msra.mxu0 %v1904
        %2043 = vmatprep.subr.bf16.mxu0 %v1907
        %2044 = vmatpush1.bf16.msra.mxu0 %v1906
        %2045 = vmatprep.subr.bf16.mxu0 %v1909
        %2046 = vmatpush1.bf16.msra.mxu0 %v1908
        %2047 = vmatprep.subr.bf16.mxu0 0
        %2048 = vmatpush1.bf16.msra.mxu0 0
        %2049 = vmatprep.subr.bf16.mxu0 0
        %2050 = vmatpush1.bf16.msra.mxu0 0
        %2051 = vmatprep.subr.bf16.mxu0 0
        %2052 = vmatpush1.bf16.msra.mxu0 0
        %2053 = vmatprep.subr.bf16.mxu0 0
        %2054 = vmatpush1.bf16.msra.mxu0 0
        %2055 = vmatprep.subr.bf16.mxu0 0
        %2056 = vmatpush1.bf16.msra.mxu0 0
        %2057 = vmatprep.subr.bf16.mxu0 0
        %2058 = vmatpush1.bf16.msra.mxu0 0
        %2059 = vmatprep.subr.bf16.mxu0 0
        %2060 = vmatpush1.bf16.msra.mxu0 0
        %2061 = vmatprep.subr.bf16.mxu0 0
        %2062 = vmatpush1.bf16.msra.mxu0 0
        %2063 = vmatprep.mubr.bf16.mxu0 0
        %2064 = vmatmul.mubr.bf16.gmra.mrb[0].mxu0 %v1646
        %v2065 = vpop.f32.mrb[0].mxu0
        %v2066 = vadd.f32 %v1993, %v2065
        %v2067 = vpop.f32.mrb[0].mxu0
        %v2068 = vadd.f32 %v1995, %v2067
        %v2069 = vpop.f32.mrb[0].mxu0
        %v2070 = vadd.f32 %v1997, %v2069
        %v2071 = vpop.f32.mrb[0].mxu0
        %v2072 = vadd.f32 %v1999, %v2071
        %2073 = vmatprep.mubr.bf16.mxu0 0
        %2074 = vmatmul.mubr.bf16.gmra.mrb[0].mxu0 %v1649
        %v2075 = vpop.f32.mrb[0].mxu0
        %v2076 = vadd.f32 %v2003, %v2075
        %v2077 = vpop.f32.mrb[0].mxu0
        %v2078 = vadd.f32 %v2005, %v2077
        %v2079 = vpop.f32.mrb[0].mxu0
        %v2080 = vadd.f32 %v2007, %v2079
        %v2081 = vpop.f32.mrb[0].mxu0
        %v2082 = vadd.f32 %v2009, %v2081
        %2083 = vmatprep.mubr.bf16.mxu0 0
        %2084 = vmatmul.mubr.bf16.gmra.mrb[0].mxu0 %v1652
        %v2085 = vpop.f32.mrb[0].mxu0
        %v2086 = vadd.f32 %v2013, %v2085
        %v2087 = vpop.f32.mrb[0].mxu0
        %v2088 = vadd.f32 %v2015, %v2087
        %v2089 = vpop.f32.mrb[0].mxu0
        %v2090 = vadd.f32 %v2017, %v2089
        %v2091 = vpop.f32.mrb[0].mxu0
        %v2092 = vadd.f32 %v2019, %v2091
        %2093 = vmatprep.mubr.bf16.mxu0 0
        %2094 = vmatmul.mubr.bf16.gmra.mrb[0].mxu0 %v1655
        %v2095 = vpop.f32.mrb[0].mxu0
        %v2096 = vadd.f32 %v2023, %v2095
        %v2097 = vpop.f32.mrb[0].mxu0
        %v2098 = vadd.f32 %v2025, %v2097
        %v2099 = vpop.f32.mrb[0].mxu0
        %v2100 = vadd.f32 %v2027, %v2099
        %v2101 = vpop.f32.mrb[0].mxu0
        %v2102 = vadd.f32 %v2029, %v2101
        %2103 = vdwg.mxu0
        %v2104 = vmul.f32 %v2066, 0.5
        %v2105 = vmul.f32 %v2070, 0.5
        %v2106 = vmul.f32 %v2076, 0.5
        %v2107 = vmul.f32 %v2080, 0.5
        %v2108 = vmul.f32 %v2086, 0.5
        %v2109 = vmul.f32 %v2090, 0.5
        %v2110 = vmul.f32 %v2096, 0.5
        %v2111 = vmul.f32 %v2100, 0.5
        %v2112 = vtanh.pop %v2104
        %v2113 = vtanh.pop %v2105
        %v2114 = vtanh.pop %v2106
        %v2115 = vtanh.pop %v2107
        %v2116 = vtanh.pop %v2108
        %v2117 = vtanh.pop %v2109
        %v2118 = vtanh.pop %v2110
        %v2119 = vtanh.pop %v2111
        %v2120 = vadd.f32 %v2112, 1.0
        %v2121 = vadd.f32 %v2113, 1.0
        %v2122 = vadd.f32 %v2114, 1.0
        %v2123 = vadd.f32 %v2115, 1.0
        %v2124 = vadd.f32 %v2116, 1.0
        %v2125 = vadd.f32 %v2117, 1.0
        %v2126 = vadd.f32 %v2118, 1.0
        %v2127 = vadd.f32 %v2119, 1.0
        %v2128 = vmul.f32 %v2120, 0.5
        %v2129 = vmul.f32 %v2121, 0.5
        %v2130 = vmul.f32 %v2122, 0.5
        %v2131 = vmul.f32 %v2123, 0.5
        %v2132 = vmul.f32 %v2124, 0.5
        %v2133 = vmul.f32 %v2125, 0.5
        %v2134 = vmul.f32 %v2126, 0.5
        %v2135 = vmul.f32 %v2127, 0.5
        %v2136 = vsub.f32 %v2068, %v1586
        %v2137 = vsub.f32 %v2072, %v1587
        %v2138 = vsub.f32 %v2078, %v1588
        %v2139 = vsub.f32 %v2082, %v1589
        %v2140 = vsub.f32 %v2088, %v1590
        %v2141 = vsub.f32 %v2092, %v1591
        %v2142 = vsub.f32 %v2098, %v1592
        %v2143 = vsub.f32 %v2102, %v1593
        %v2144 = vmul.f32 %v2128, %v2136
        %v2145 = vmul.f32 %v2129, %v2137
        %v2146 = vmul.f32 %v2130, %v2138
        %v2147 = vmul.f32 %v2131, %v2139
        %v2148 = vmul.f32 %v2132, %v2140
        %v2149 = vmul.f32 %v2133, %v2141
        %v2150 = vmul.f32 %v2134, %v2142
        %v2151 = vmul.f32 %v2135, %v2143
        %v2152 = vadd.f32 %v1586, %v2144
        %v2153 = vadd.f32 %v1587, %v2145
        %v2154 = vadd.f32 %v1588, %v2146
        %v2155 = vadd.f32 %v1589, %v2147
        %v2156 = vadd.f32 %v1590, %v2148
        %v2157 = vadd.f32 %v1591, %v2149
        %v2158 = vadd.f32 %v1592, %v2150
        %v2159 = vadd.f32 %v1593, %v2151
        %v2160 = vrot.slane %v2152, 7
        %v2161 = vrot.slane %v2153, 7
        %v2162 = vrot.slane %v2154, 7
        %v2163 = vrot.slane %v2155, 7
        %v2164 = vrot.slane %v2156, 7
        %v2165 = vrot.slane %v2157, 7
        %v2166 = vrot.slane %v2158, 7
        %v2167 = vrot.slane %v2159, 7
        %v2168 = vsel %vm1038, %v2166, %v2167
        %v2169 = vsel %vm1038, %v2165, %v2166
        %v2170 = vsel %vm1038, %v2164, %v2165
        %v2171 = vsel %vm1038, %v2163, %v2164
        %v2172 = vsel %vm1038, %v2162, %v2163
        %v2173 = vsel %vm1038, %v2161, %v2162
        %v2174 = vsel %vm1038, %v2160, %v2161
        %v2175 = vsel %vm1038, %v2167, %v2160
        %v2176 = vsel %vm998, %v2168, 0.0
        %v2177 = vsel %vm999, %v2175, 0.0
        %v2178 = vsel %vm1000, %v2174, 0.0
        %v2179 = vsel %vm1001, %v2173, 0.0
        %v2180 = vsel %vm1002, %v2172, 0.0
        %v2181 = vsel %vm1003, %v2171, 0.0
        %v2182 = vsel %vm1004, %v2170, 0.0
        %v2183 = vsel %vm1005, %v2169, 0.0
        %v2184 = vrot.slane %v2152, 1
        %v2185 = vrot.slane %v2153, 1
        %v2186 = vrot.slane %v2154, 1
        %v2187 = vrot.slane %v2155, 1
        %v2188 = vrot.slane %v2156, 1
        %v2189 = vrot.slane %v2157, 1
        %v2190 = vrot.slane %v2158, 1
        %v2191 = vrot.slane %v2159, 1
        %v2192 = vsel %vm1063, %v2190, %v2191
        %v2193 = vsel %vm1063, %v2189, %v2190
        %v2194 = vsel %vm1063, %v2188, %v2189
        %v2195 = vsel %vm1063, %v2187, %v2188
        %v2196 = vsel %vm1063, %v2186, %v2187
        %v2197 = vsel %vm1063, %v2185, %v2186
        %v2198 = vsel %vm1063, %v2184, %v2185
        %v2199 = vsel %vm1063, %v2191, %v2184
        %v2200 = vsel %vm1006, %v2197, 0.0
        %v2201 = vsel %vm1007, %v2196, 0.0
        %v2202 = vsel %vm1008, %v2195, 0.0
        %v2203 = vsel %vm1009, %v2194, 0.0
        %v2204 = vsel %vm1010, %v2193, 0.0
        %v2205 = vsel %vm1011, %v2192, 0.0
        %v2206 = vsel %vm1012, %v2199, 0.0
        %v2207 = vsel %vm1013, %v2198, 0.0
        %v2208 = vpack.c.bf16 %v2177, %v2176
        %v2209 = vpack.c.bf16 %v2153, %v2152
        %v2210 = vpack.c.bf16 %v2201, %v2200
        %v2211 = vpack.c.bf16 %v2179, %v2178
        %v2212 = vpack.c.bf16 %v2155, %v2154
        %v2213 = vpack.c.bf16 %v2203, %v2202
        %v2214 = vpack.c.bf16 %v2181, %v2180
        %v2215 = vpack.c.bf16 %v2157, %v2156
        %v2216 = vpack.c.bf16 %v2205, %v2204
        %v2217 = vpack.c.bf16 %v2183, %v2182
        %v2218 = vpack.c.bf16 %v2159, %v2158
        %v2219 = vpack.c.bf16 %v2207, %v2206
        %s2220 = scalar_lea.vmem [#allocation11], 768
        %v2221 = vld [vmem:[%s2220] sm:$0xff]
        %v2222 = vld [vmem:[%s2220 + $0x8] sm:$0xff]
        %v2223 = vld [vmem:[%s2220 + $0x10] sm:$0xff]
        %v2224 = vld [vmem:[%s2220 + $0x18] sm:$0xff]
        %v2225 = vld [vmem:[%s2220 + $0x20] sm:$0xff]
        %v2226 = vld [vmem:[%s2220 + $0x28] sm:$0xff]
        %v2227 = vld [vmem:[%s2220 + $0x30] sm:$0xff]
        %v2228 = vld [vmem:[%s2220 + $0x38] sm:$0xff]
        %v2229 = vld [vmem:[%s2220 + $0x40] sm:$0xff]
        %v2230 = vld [vmem:[%s2220 + $0x48] sm:$0xff]
        %v2231 = vld [vmem:[%s2220 + $0x50] sm:$0xff]
        %v2232 = vld [vmem:[%s2220 + $0x58] sm:$0xff]
        %v2233 = vld [vmem:[%s2220 + $0x60] sm:$0xff]
        %v2234 = vld [vmem:[%s2220 + $0x68] sm:$0xff]
        %v2235 = vld [vmem:[%s2220 + $0x70] sm:$0xff]
        %v2236 = vld [vmem:[%s2220 + $0x78] sm:$0xff]
        %v2237 = vld [vmem:[%s2220 + $0x80] sm:$0xff]
        %v2238 = vld [vmem:[%s2220 + $0x88] sm:$0xff]
        %v2239 = vld [vmem:[%s2220 + $0x90] sm:$0xff]
        %v2240 = vld [vmem:[%s2220 + $0x98] sm:$0xff]
        %v2241 = vld [vmem:[%s2220 + $0xa0] sm:$0xff]
        %v2242 = vld [vmem:[%s2220 + $0xa8] sm:$0xff]
        %v2243 = vld [vmem:[%s2220 + $0xb0] sm:$0xff]
        %v2244 = vld [vmem:[%s2220 + $0xb8] sm:$0xff]
        %v2245 = vld [vmem:[%s2220 + $0xc0] sm:$0xff]
        %v2246 = vld [vmem:[%s2220 + $0xc8] sm:$0xff]
        %v2247 = vld [vmem:[%s2220 + $0xd0] sm:$0xff]
        %v2248 = vld [vmem:[%s2220 + $0xd8] sm:$0xff]
        %v2249 = vld [vmem:[%s2220 + $0xe0] sm:$0xff]
        %v2250 = vld [vmem:[%s2220 + $0xe8] sm:$0xff]
        %v2251 = vld [vmem:[%s2220 + $0xf0] sm:$0xff]
        %v2252 = vld [vmem:[%s2220 + $0xf8] sm:$0xff]
        %v2253 = vld [vmem:[%s2220 + $0x100] sm:$0xff]
        %v2254 = vld [vmem:[%s2220 + $0x108] sm:$0xff]
        %v2255 = vld [vmem:[%s2220 + $0x110] sm:$0xff]
        %v2256 = vld [vmem:[%s2220 + $0x118] sm:$0xff]
        %v2257 = vld [vmem:[%s2220 + $0x120] sm:$0xff]
        %v2258 = vld [vmem:[%s2220 + $0x128] sm:$0xff]
        %v2259 = vld [vmem:[%s2220 + $0x130] sm:$0xff]
        %v2260 = vld [vmem:[%s2220 + $0x138] sm:$0xff]
        %v2261 = vld [vmem:[%s2220 + $0x140] sm:$0xff]
        %v2262 = vld [vmem:[%s2220 + $0x148] sm:$0xff]
        %v2263 = vld [vmem:[%s2220 + $0x150] sm:$0xff]
        %v2264 = vld [vmem:[%s2220 + $0x158] sm:$0xff]
        %v2265 = vld [vmem:[%s2220 + $0x160] sm:$0xff]
        %v2266 = vld [vmem:[%s2220 + $0x168] sm:$0xff]
        %v2267 = vld [vmem:[%s2220 + $0x170] sm:$0xff]
        %v2268 = vld [vmem:[%s2220 + $0x178] sm:$0xff]
        %s2269 = scalar_lea.vmem [#allocation13], 4
        %v2270 = vld [vmem:[%s2269] sm:$0x3]
        %v2272 = vlaneseq
        %v2273 = vshrl.u32 %v2272, 7
        %v2274 = vsub.s32 0, %v2273
        %v2275 = vrot.slane %v2270, %v2274
        %v2276 = vlaneseq
        %v2277 = vshrl.u32 %v2276, 7
        %v2278 = vsub.s32 1, %v2277
        %v2279 = vrot.slane %v2270, %v2278
        %v2330 = vunpack.c.l.b16 %v2221
        %v2331 = vunpack.c.h.b16 %v2221
        %v2332 = vunpack.c.l.b16 %v2222
        %v2333 = vunpack.c.h.b16 %v2222
        %v2334 = vunpack.c.l.b16 %v2223
        %v2335 = vunpack.c.h.b16 %v2223
        %v2336 = vunpack.c.l.b16 %v2224
        %v2337 = vunpack.c.h.b16 %v2224
        %v2338 = vunpack.c.l.b16 %v2225
        %v2339 = vunpack.c.h.b16 %v2225
        %v2340 = vunpack.c.l.b16 %v2226
        %v2341 = vunpack.c.h.b16 %v2226
        %v2342 = vunpack.c.l.b16 %v2227
        %v2343 = vunpack.c.h.b16 %v2227
        %v2344 = vunpack.c.l.b16 %v2228
        %v2345 = vunpack.c.h.b16 %v2228
        %v2346 = vunpack.c.l.b16 %v2229
        %v2347 = vunpack.c.h.b16 %v2229
        %v2348 = vunpack.c.l.b16 %v2230
        %v2349 = vunpack.c.h.b16 %v2230
        %v2350 = vunpack.c.l.b16 %v2231
        %v2351 = vunpack.c.h.b16 %v2231
        %v2352 = vunpack.c.l.b16 %v2232
        %v2353 = vunpack.c.h.b16 %v2232
        %v2354 = vunpack.c.l.b16 %v2233
        %v2355 = vunpack.c.h.b16 %v2233
        %v2356 = vunpack.c.l.b16 %v2234
        %v2357 = vunpack.c.h.b16 %v2234
        %v2358 = vunpack.c.l.b16 %v2235
        %v2359 = vunpack.c.h.b16 %v2235
        %v2360 = vunpack.c.l.b16 %v2236
        %v2361 = vunpack.c.h.b16 %v2236
        %v2362 = vunpack.c.l.b16 %v2237
        %v2363 = vunpack.c.h.b16 %v2237
        %v2364 = vunpack.c.l.b16 %v2238
        %v2365 = vunpack.c.h.b16 %v2238
        %v2366 = vunpack.c.l.b16 %v2239
        %v2367 = vunpack.c.h.b16 %v2239
        %v2368 = vunpack.c.l.b16 %v2240
        %v2369 = vunpack.c.h.b16 %v2240
        %v2370 = vunpack.c.l.b16 %v2241
        %v2371 = vunpack.c.h.b16 %v2241
        %v2372 = vunpack.c.l.b16 %v2242
        %v2373 = vunpack.c.h.b16 %v2242
        %v2374 = vunpack.c.l.b16 %v2243
        %v2375 = vunpack.c.h.b16 %v2243
        %v2376 = vunpack.c.l.b16 %v2244
        %v2377 = vunpack.c.h.b16 %v2244
        %v2378 = vunpack.c.l.b16 %v2245
        %v2379 = vunpack.c.h.b16 %v2245
        %v2380 = vunpack.c.l.b16 %v2246
        %v2381 = vunpack.c.h.b16 %v2246
        %v2382 = vunpack.c.l.b16 %v2247
        %v2383 = vunpack.c.h.b16 %v2247
        %v2384 = vunpack.c.l.b16 %v2248
        %v2385 = vunpack.c.h.b16 %v2248
        %v2386 = vunpack.c.l.b16 %v2249
        %v2387 = vunpack.c.h.b16 %v2249
        %v2388 = vunpack.c.l.b16 %v2250
        %v2389 = vunpack.c.h.b16 %v2250
        %v2390 = vunpack.c.l.b16 %v2251
        %v2391 = vunpack.c.h.b16 %v2251
        %v2392 = vunpack.c.l.b16 %v2252
        %v2393 = vunpack.c.h.b16 %v2252
        %v2394 = vunpack.c.l.b16 %v2253
        %v2395 = vunpack.c.h.b16 %v2253
        %v2396 = vunpack.c.l.b16 %v2254
        %v2397 = vunpack.c.h.b16 %v2254
        %v2398 = vunpack.c.l.b16 %v2255
        %v2399 = vunpack.c.h.b16 %v2255
        %v2400 = vunpack.c.l.b16 %v2256
        %v2401 = vunpack.c.h.b16 %v2256
        %v2402 = vunpack.c.l.b16 %v2257
        %v2403 = vunpack.c.h.b16 %v2257
        %v2404 = vunpack.c.l.b16 %v2258
        %v2405 = vunpack.c.h.b16 %v2258
        %v2406 = vunpack.c.l.b16 %v2259
        %v2407 = vunpack.c.h.b16 %v2259
        %v2408 = vunpack.c.l.b16 %v2260
        %v2409 = vunpack.c.h.b16 %v2260
        %v2410 = vunpack.c.l.b16 %v2261
        %v2411 = vunpack.c.h.b16 %v2261
        %v2412 = vunpack.c.l.b16 %v2262
        %v2413 = vunpack.c.h.b16 %v2262
        %v2414 = vunpack.c.l.b16 %v2263
        %v2415 = vunpack.c.h.b16 %v2263
        %v2416 = vunpack.c.l.b16 %v2264
        %v2417 = vunpack.c.h.b16 %v2264
        %v2418 = vunpack.c.l.b16 %v2265
        %v2419 = vunpack.c.h.b16 %v2265
        %v2420 = vunpack.c.l.b16 %v2266
        %v2421 = vunpack.c.h.b16 %v2266
        %v2422 = vunpack.c.l.b16 %v2267
        %v2423 = vunpack.c.h.b16 %v2267
        %v2424 = vunpack.c.l.b16 %v2268
        %v2425 = vunpack.c.h.b16 %v2268
        %v2426 = vpack.c.b16 %v2332, %v2330
        %v2427 = vpack.c.b16 %v2333, %v2331
        %v2428 = vpack.c.b16 %v2336, %v2334
        %v2429 = vpack.c.b16 %v2337, %v2335
        %v2430 = vpack.c.b16 %v2340, %v2338
        %v2431 = vpack.c.b16 %v2341, %v2339
        %v2432 = vpack.c.b16 %v2344, %v2342
        %v2433 = vpack.c.b16 %v2345, %v2343
        %v2434 = vpack.c.b16 %v2348, %v2346
        %v2435 = vpack.c.b16 %v2349, %v2347
        %v2436 = vpack.c.b16 %v2352, %v2350
        %v2437 = vpack.c.b16 %v2353, %v2351
        %v2438 = vpack.c.b16 %v2356, %v2354
        %v2439 = vpack.c.b16 %v2357, %v2355
        %v2440 = vpack.c.b16 %v2360, %v2358
        %v2441 = vpack.c.b16 %v2361, %v2359
        %v2442 = vpack.c.b16 %v2364, %v2362
        %v2443 = vpack.c.b16 %v2365, %v2363
        %v2444 = vpack.c.b16 %v2368, %v2366
        %v2445 = vpack.c.b16 %v2369, %v2367
        %v2446 = vpack.c.b16 %v2372, %v2370
        %v2447 = vpack.c.b16 %v2373, %v2371
        %v2448 = vpack.c.b16 %v2376, %v2374
        %v2449 = vpack.c.b16 %v2377, %v2375
        %v2450 = vpack.c.b16 %v2380, %v2378
        %v2451 = vpack.c.b16 %v2381, %v2379
        %v2452 = vpack.c.b16 %v2384, %v2382
        %v2453 = vpack.c.b16 %v2385, %v2383
        %v2454 = vpack.c.b16 %v2388, %v2386
        %v2455 = vpack.c.b16 %v2389, %v2387
        %v2456 = vpack.c.b16 %v2392, %v2390
        %v2457 = vpack.c.b16 %v2393, %v2391
        %v2458 = vpack.c.b16 %v2396, %v2394
        %v2459 = vpack.c.b16 %v2397, %v2395
        %v2460 = vpack.c.b16 %v2400, %v2398
        %v2461 = vpack.c.b16 %v2401, %v2399
        %v2462 = vpack.c.b16 %v2404, %v2402
        %v2463 = vpack.c.b16 %v2405, %v2403
        %v2464 = vpack.c.b16 %v2408, %v2406
        %v2465 = vpack.c.b16 %v2409, %v2407
        %v2466 = vpack.c.b16 %v2412, %v2410
        %v2467 = vpack.c.b16 %v2413, %v2411
        %v2468 = vpack.c.b16 %v2416, %v2414
        %v2469 = vpack.c.b16 %v2417, %v2415
        %v2470 = vpack.c.b16 %v2420, %v2418
        %v2471 = vpack.c.b16 %v2421, %v2419
        %v2472 = vpack.c.b16 %v2424, %v2422
        %v2473 = vpack.c.b16 %v2425, %v2423
        %2522 = vmatprep.subr.bf16.mxu0 %v2427
        %2523 = vmatpush1.bf16.msra.mxu0 %v2426
        %2524 = vmatprep.subr.bf16.mxu0 %v2429
        %2525 = vmatpush1.bf16.msra.mxu0 %v2428
        %2526 = vmatprep.subr.bf16.mxu0 %v2431
        %2527 = vmatpush1.bf16.msra.mxu0 %v2430
        %2528 = vmatprep.subr.bf16.mxu0 %v2433
        %2529 = vmatpush1.bf16.msra.mxu0 %v2432
        %2530 = vmatprep.subr.bf16.mxu0 %v2435
        %2531 = vmatpush1.bf16.msra.mxu0 %v2434
        %2532 = vmatprep.subr.bf16.mxu0 %v2437
        %2533 = vmatpush1.bf16.msra.mxu0 %v2436
        %2534 = vmatprep.subr.bf16.mxu0 %v2439
        %2535 = vmatpush1.bf16.msra.mxu0 %v2438
        %2536 = vmatprep.subr.bf16.mxu0 %v2441
        %2537 = vmatpush1.bf16.msra.mxu0 %v2440
        %2538 = vmatprep.subr.bf16.mxu0 %v2443
        %2539 = vmatpush1.bf16.msra.mxu0 %v2442
        %2540 = vmatprep.subr.bf16.mxu0 %v2445
        %2541 = vmatpush1.bf16.msra.mxu0 %v2444
        %2542 = vmatprep.subr.bf16.mxu0 %v2447
        %2543 = vmatpush1.bf16.msra.mxu0 %v2446
        %2544 = vmatprep.subr.bf16.mxu0 %v2449
        %2545 = vmatpush1.bf16.msra.mxu0 %v2448
        %2546 = vmatprep.subr.bf16.mxu0 %v2451
        %2547 = vmatpush1.bf16.msra.mxu0 %v2450
        %2548 = vmatprep.subr.bf16.mxu0 %v2453
        %2549 = vmatpush1.bf16.msra.mxu0 %v2452
        %2550 = vmatprep.subr.bf16.mxu0 %v2455
        %2551 = vmatpush1.bf16.msra.mxu0 %v2454
        %2552 = vmatprep.subr.bf16.mxu0 %v2457
        %2553 = vmatpush1.bf16.msra.mxu0 %v2456
        %2554 = vmatprep.mubr.bf16.mxu0 %v2209
        %2555 = vmatmul.mubr.bf16.gmra.mrb[0].mxu0 %v2208
        %v2556 = vpop.f32.mrb[0].mxu0
        %v2557 = vadd.f32 %v2275, %v2556
        %v2558 = vpop.f32.mrb[0].mxu0
        %v2559 = vadd.f32 %v2279, %v2558
        %v2560 = vpop.f32.mrb[0].mxu0
        %v2561 = vadd.f32 %v2275, %v2560
        %v2562 = vpop.f32.mrb[0].mxu0
        %v2563 = vadd.f32 %v2279, %v2562
        %2564 = vmatprep.mubr.bf16.mxu0 %v2212
        %2565 = vmatmul.mubr.bf16.gmra.mrb[0].mxu0 %v2211
        %v2566 = vpop.f32.mrb[0].mxu0
        %v2567 = vadd.f32 %v2275, %v2566
        %v2568 = vpop.f32.mrb[0].mxu0
        %v2569 = vadd.f32 %v2279, %v2568
        %v2570 = vpop.f32.mrb[0].mxu0
        %v2571 = vadd.f32 %v2275, %v2570
        %v2572 = vpop.f32.mrb[0].mxu0
        %v2573 = vadd.f32 %v2279, %v2572
        %2574 = vmatprep.mubr.bf16.mxu0 %v2215
        %2575 = vmatmul.mubr.bf16.gmra.mrb[0].mxu0 %v2214
        %v2576 = vpop.f32.mrb[0].mxu0
        %v2577 = vadd.f32 %v2275, %v2576
        %v2578 = vpop.f32.mrb[0].mxu0
        %v2579 = vadd.f32 %v2279, %v2578
        %v2580 = vpop.f32.mrb[0].mxu0
        %v2581 = vadd.f32 %v2275, %v2580
        %v2582 = vpop.f32.mrb[0].mxu0
        %v2583 = vadd.f32 %v2279, %v2582
        %2584 = vmatprep.mubr.bf16.mxu0 %v2218
        %2585 = vmatmul.mubr.bf16.gmra.mrb[0].mxu0 %v2217
        %v2586 = vpop.f32.mrb[0].mxu0
        %v2587 = vadd.f32 %v2275, %v2586
        %v2588 = vpop.f32.mrb[0].mxu0
        %v2589 = vadd.f32 %v2279, %v2588
        %v2590 = vpop.f32.mrb[0].mxu0
        %v2591 = vadd.f32 %v2275, %v2590
        %v2592 = vpop.f32.mrb[0].mxu0
        %v2593 = vadd.f32 %v2279, %v2592
        %2594 = vdwg.mxu0
        %2595 = vmatprep.subr.bf16.mxu0 %v2459
        %2596 = vmatpush1.bf16.msra.mxu0 %v2458
        %2597 = vmatprep.subr.bf16.mxu0 %v2461
        %2598 = vmatpush1.bf16.msra.mxu0 %v2460
        %2599 = vmatprep.subr.bf16.mxu0 %v2463
        %2600 = vmatpush1.bf16.msra.mxu0 %v2462
        %2601 = vmatprep.subr.bf16.mxu0 %v2465
        %2602 = vmatpush1.bf16.msra.mxu0 %v2464
        %2603 = vmatprep.subr.bf16.mxu0 %v2467
        %2604 = vmatpush1.bf16.msra.mxu0 %v2466
        %2605 = vmatprep.subr.bf16.mxu0 %v2469
        %2606 = vmatpush1.bf16.msra.mxu0 %v2468
        %2607 = vmatprep.subr.bf16.mxu0 %v2471
        %2608 = vmatpush1.bf16.msra.mxu0 %v2470
        %2609 = vmatprep.subr.bf16.mxu0 %v2473
        %2610 = vmatpush1.bf16.msra.mxu0 %v2472
        %2611 = vmatprep.subr.bf16.mxu0 0
        %2612 = vmatpush1.bf16.msra.mxu0 0
        %2613 = vmatprep.subr.bf16.mxu0 0
        %2614 = vmatpush1.bf16.msra.mxu0 0
        %2615 = vmatprep.subr.bf16.mxu0 0
        %2616 = vmatpush1.bf16.msra.mxu0 0
        %2617 = vmatprep.subr.bf16.mxu0 0
        %2618 = vmatpush1.bf16.msra.mxu0 0
        %2619 = vmatprep.subr.bf16.mxu0 0
        %2620 = vmatpush1.bf16.msra.mxu0 0
        %2621 = vmatprep.subr.bf16.mxu0 0
        %2622 = vmatpush1.bf16.msra.mxu0 0
        %2623 = vmatprep.subr.bf16.mxu0 0
        %2624 = vmatpush1.bf16.msra.mxu0 0
        %2625 = vmatprep.subr.bf16.mxu0 0
        %2626 = vmatpush1.bf16.msra.mxu0 0
        %2627 = vmatprep.mubr.bf16.mxu0 0
        %2628 = vmatmul.mubr.bf16.gmra.mrb[0].mxu0 %v2210
        %v2629 = vpop.f32.mrb[0].mxu0
        %v2630 = vadd.f32 %v2557, %v2629
        %v2631 = vpop.f32.mrb[0].mxu0
        %v2632 = vadd.f32 %v2559, %v2631
        %v2633 = vpop.f32.mrb[0].mxu0
        %v2634 = vadd.f32 %v2561, %v2633
        %v2635 = vpop.f32.mrb[0].mxu0
        %v2636 = vadd.f32 %v2563, %v2635
        %2637 = vmatprep.mubr.bf16.mxu0 0
        %2638 = vmatmul.mubr.bf16.gmra.mrb[0].mxu0 %v2213
        %v2639 = vpop.f32.mrb[0].mxu0
        %v2640 = vadd.f32 %v2567, %v2639
        %v2641 = vpop.f32.mrb[0].mxu0
        %v2642 = vadd.f32 %v2569, %v2641
        %v2643 = vpop.f32.mrb[0].mxu0
        %v2644 = vadd.f32 %v2571, %v2643
        %v2645 = vpop.f32.mrb[0].mxu0
        %v2646 = vadd.f32 %v2573, %v2645
        %2647 = vmatprep.mubr.bf16.mxu0 0
        %2648 = vmatmul.mubr.bf16.gmra.mrb[0].mxu0 %v2216
        %v2649 = vpop.f32.mrb[0].mxu0
        %v2650 = vadd.f32 %v2577, %v2649
        %v2651 = vpop.f32.mrb[0].mxu0
        %v2652 = vadd.f32 %v2579, %v2651
        %v2653 = vpop.f32.mrb[0].mxu0
        %v2654 = vadd.f32 %v2581, %v2653
        %v2655 = vpop.f32.mrb[0].mxu0
        %v2656 = vadd.f32 %v2583, %v2655
        %2657 = vmatprep.mubr.bf16.mxu0 0
        %2658 = vmatmul.mubr.bf16.gmra.mrb[0].mxu0 %v2219
        %v2659 = vpop.f32.mrb[0].mxu0
        %v2660 = vadd.f32 %v2587, %v2659
        %v2661 = vpop.f32.mrb[0].mxu0
        %v2662 = vadd.f32 %v2589, %v2661
        %v2663 = vpop.f32.mrb[0].mxu0
        %v2664 = vadd.f32 %v2591, %v2663
        %v2665 = vpop.f32.mrb[0].mxu0
        %v2666 = vadd.f32 %v2593, %v2665
        %2667 = vdwg.mxu0
        %v2668 = vmul.f32 %v2630, 0.5
        %v2669 = vmul.f32 %v2634, 0.5
        %v2670 = vmul.f32 %v2640, 0.5
        %v2671 = vmul.f32 %v2644, 0.5
        %v2672 = vmul.f32 %v2650, 0.5
        %v2673 = vmul.f32 %v2654, 0.5
        %v2674 = vmul.f32 %v2660, 0.5
        %v2675 = vmul.f32 %v2664, 0.5
        %v2676 = vtanh.pop %v2668
        %v2677 = vtanh.pop %v2669
        %v2678 = vtanh.pop %v2670
        %v2679 = vtanh.pop %v2671
        %v2680 = vtanh.pop %v2672
        %v2681 = vtanh.pop %v2673
        %v2682 = vtanh.pop %v2674
        %v2683 = vtanh.pop %v2675
        %v2684 = vadd.f32 %v2676, 1.0
        %v2685 = vadd.f32 %v2677, 1.0
        %v2686 = vadd.f32 %v2678, 1.0
        %v2687 = vadd.f32 %v2679, 1.0
        %v2688 = vadd.f32 %v2680, 1.0
        %v2689 = vadd.f32 %v2681, 1.0
        %v2690 = vadd.f32 %v2682, 1.0
        %v2691 = vadd.f32 %v2683, 1.0
        %v2692 = vmul.f32 %v2684, 0.5
        %v2693 = vmul.f32 %v2685, 0.5
        %v2694 = vmul.f32 %v2686, 0.5
        %v2695 = vmul.f32 %v2687, 0.5
        %v2696 = vmul.f32 %v2688, 0.5
        %v2697 = vmul.f32 %v2689, 0.5
        %v2698 = vmul.f32 %v2690, 0.5
        %v2699 = vmul.f32 %v2691, 0.5
        %v2700 = vsub.f32 %v2632, %v2152
        %v2701 = vsub.f32 %v2636, %v2153
        %v2702 = vsub.f32 %v2642, %v2154
        %v2703 = vsub.f32 %v2646, %v2155
        %v2704 = vsub.f32 %v2652, %v2156
        %v2705 = vsub.f32 %v2656, %v2157
        %v2706 = vsub.f32 %v2662, %v2158
        %v2707 = vsub.f32 %v2666, %v2159
        %v2708 = vmul.f32 %v2692, %v2700
        %v2709 = vmul.f32 %v2693, %v2701
        %v2710 = vmul.f32 %v2694, %v2702
        %v2711 = vmul.f32 %v2695, %v2703
        %v2712 = vmul.f32 %v2696, %v2704
        %v2713 = vmul.f32 %v2697, %v2705
        %v2714 = vmul.f32 %v2698, %v2706
        %v2715 = vmul.f32 %v2699, %v2707
        %v2716 = vadd.f32 %v2152, %v2708
        %v2717 = vadd.f32 %v2153, %v2709
        %v2718 = vadd.f32 %v2154, %v2710
        %v2719 = vadd.f32 %v2155, %v2711
        %v2720 = vadd.f32 %v2156, %v2712
        %v2721 = vadd.f32 %v2157, %v2713
        %v2722 = vadd.f32 %v2158, %v2714
        %v2723 = vadd.f32 %v2159, %v2715
        %v2724 = vrot.slane %v2716, 5
        %v2725 = vrot.slane %v2717, 5
        %v2726 = vrot.slane %v2718, 5
        %v2727 = vrot.slane %v2719, 5
        %v2728 = vrot.slane %v2720, 5
        %v2729 = vrot.slane %v2721, 5
        %v2730 = vrot.slane %v2722, 5
        %v2731 = vrot.slane %v2723, 5
        %v2732 = vsel %vm1602, %v2730, %v2731
        %v2733 = vsel %vm1602, %v2729, %v2730
        %v2734 = vsel %vm1602, %v2728, %v2729
        %v2735 = vsel %vm1602, %v2727, %v2728
        %v2736 = vsel %vm1602, %v2726, %v2727
        %v2737 = vsel %vm1602, %v2725, %v2726
        %v2738 = vsel %vm1602, %v2724, %v2725
        %v2739 = vsel %vm1602, %v2731, %v2724
        %v2740 = vsel %vm1014, %v2734, 0.0
        %v2741 = vsel %vm1015, %v2733, 0.0
        %v2742 = vsel %vm1016, %v2732, 0.0
        %v2743 = vsel %vm1017, %v2739, 0.0
        %v2744 = vsel %vm1018, %v2738, 0.0
        %v2745 = vsel %vm1019, %v2737, 0.0
        %v2746 = vsel %vm1020, %v2736, 0.0
        %v2747 = vsel %vm1021, %v2735, 0.0
        %v2748 = vrot.slane %v2716, 3
        %v2749 = vrot.slane %v2717, 3
        %v2750 = vrot.slane %v2718, 3
        %v2751 = vrot.slane %v2719, 3
        %v2752 = vrot.slane %v2720, 3
        %v2753 = vrot.slane %v2721, 3
        %v2754 = vrot.slane %v2722, 3
        %v2755 = vrot.slane %v2723, 3
        %v2756 = vsel %vm1627, %v2754, %v2755
        %v2757 = vsel %vm1627, %v2753, %v2754
        %v2758 = vsel %vm1627, %v2752, %v2753
        %v2759 = vsel %vm1627, %v2751, %v2752
        %v2760 = vsel %vm1627, %v2750, %v2751
        %v2761 = vsel %vm1627, %v2749, %v2750
        %v2762 = vsel %vm1627, %v2748, %v2749
        %v2763 = vsel %vm1627, %v2755, %v2748
        %v2764 = vsel %vm1022, %v2759, 0.0
        %v2765 = vsel %vm1023, %v2758, 0.0
        %v2766 = vsel %vm1024, %v2757, 0.0
        %v2767 = vsel %vm1025, %v2756, 0.0
        %v2768 = vsel %vm1026, %v2763, 0.0
        %v2769 = vsel %vm1027, %v2762, 0.0
        %v2770 = vsel %vm1028, %v2761, 0.0
        %v2771 = vsel %vm1029, %v2760, 0.0
        %v2772 = vpack.c.bf16 %v2741, %v2740
        %v2773 = vpack.c.bf16 %v2717, %v2716
        %v2774 = vpack.c.bf16 %v2765, %v2764
        %v2775 = vpack.c.bf16 %v2743, %v2742
        %v2776 = vpack.c.bf16 %v2719, %v2718
        %v2777 = vpack.c.bf16 %v2767, %v2766
        %v2778 = vpack.c.bf16 %v2745, %v2744
        %v2779 = vpack.c.bf16 %v2721, %v2720
        %v2780 = vpack.c.bf16 %v2769, %v2768
        %v2781 = vpack.c.bf16 %v2747, %v2746
        %v2782 = vpack.c.bf16 %v2723, %v2722
        %v2783 = vpack.c.bf16 %v2771, %v2770
        %s2784 = scalar_lea.vmem [#allocation11], 1152
        %v2785 = vld [vmem:[%s2784] sm:$0xff]
        %v2786 = vld [vmem:[%s2784 + $0x8] sm:$0xff]
        %v2787 = vld [vmem:[%s2784 + $0x10] sm:$0xff]
        %v2788 = vld [vmem:[%s2784 + $0x18] sm:$0xff]
        %v2789 = vld [vmem:[%s2784 + $0x20] sm:$0xff]
        %v2790 = vld [vmem:[%s2784 + $0x28] sm:$0xff]
        %v2791 = vld [vmem:[%s2784 + $0x30] sm:$0xff]
        %v2792 = vld [vmem:[%s2784 + $0x38] sm:$0xff]
        %v2793 = vld [vmem:[%s2784 + $0x40] sm:$0xff]
        %v2794 = vld [vmem:[%s2784 + $0x48] sm:$0xff]
        %v2795 = vld [vmem:[%s2784 + $0x50] sm:$0xff]
        %v2796 = vld [vmem:[%s2784 + $0x58] sm:$0xff]
        %v2797 = vld [vmem:[%s2784 + $0x60] sm:$0xff]
        %v2798 = vld [vmem:[%s2784 + $0x68] sm:$0xff]
        %v2799 = vld [vmem:[%s2784 + $0x70] sm:$0xff]
        %v2800 = vld [vmem:[%s2784 + $0x78] sm:$0xff]
        %v2801 = vld [vmem:[%s2784 + $0x80] sm:$0xff]
        %v2802 = vld [vmem:[%s2784 + $0x88] sm:$0xff]
        %v2803 = vld [vmem:[%s2784 + $0x90] sm:$0xff]
        %v2804 = vld [vmem:[%s2784 + $0x98] sm:$0xff]
        %v2805 = vld [vmem:[%s2784 + $0xa0] sm:$0xff]
        %v2806 = vld [vmem:[%s2784 + $0xa8] sm:$0xff]
        %v2807 = vld [vmem:[%s2784 + $0xb0] sm:$0xff]
        %v2808 = vld [vmem:[%s2784 + $0xb8] sm:$0xff]
        %v2809 = vld [vmem:[%s2784 + $0xc0] sm:$0xff]
        %v2810 = vld [vmem:[%s2784 + $0xc8] sm:$0xff]
        %v2811 = vld [vmem:[%s2784 + $0xd0] sm:$0xff]
        %v2812 = vld [vmem:[%s2784 + $0xd8] sm:$0xff]
        %v2813 = vld [vmem:[%s2784 + $0xe0] sm:$0xff]
        %v2814 = vld [vmem:[%s2784 + $0xe8] sm:$0xff]
        %v2815 = vld [vmem:[%s2784 + $0xf0] sm:$0xff]
        %v2816 = vld [vmem:[%s2784 + $0xf8] sm:$0xff]
        %v2817 = vld [vmem:[%s2784 + $0x100] sm:$0xff]
        %v2818 = vld [vmem:[%s2784 + $0x108] sm:$0xff]
        %v2819 = vld [vmem:[%s2784 + $0x110] sm:$0xff]
        %v2820 = vld [vmem:[%s2784 + $0x118] sm:$0xff]
        %v2821 = vld [vmem:[%s2784 + $0x120] sm:$0xff]
        %v2822 = vld [vmem:[%s2784 + $0x128] sm:$0xff]
        %v2823 = vld [vmem:[%s2784 + $0x130] sm:$0xff]
        %v2824 = vld [vmem:[%s2784 + $0x138] sm:$0xff]
        %v2825 = vld [vmem:[%s2784 + $0x140] sm:$0xff]
        %v2826 = vld [vmem:[%s2784 + $0x148] sm:$0xff]
        %v2827 = vld [vmem:[%s2784 + $0x150] sm:$0xff]
        %v2828 = vld [vmem:[%s2784 + $0x158] sm:$0xff]
        %v2829 = vld [vmem:[%s2784 + $0x160] sm:$0xff]
        %v2830 = vld [vmem:[%s2784 + $0x168] sm:$0xff]
        %v2831 = vld [vmem:[%s2784 + $0x170] sm:$0xff]
        %v2832 = vld [vmem:[%s2784 + $0x178] sm:$0xff]
        %s2833 = scalar_lea.vmem [#allocation13], 6
        %v2834 = vld [vmem:[%s2833] sm:$0x3]
        %v2836 = vlaneseq
        %v2837 = vshrl.u32 %v2836, 7
        %v2838 = vsub.s32 0, %v2837
        %v2839 = vrot.slane %v2834, %v2838
        %v2840 = vlaneseq
        %v2841 = vshrl.u32 %v2840, 7
        %v2842 = vsub.s32 1, %v2841
        %v2843 = vrot.slane %v2834, %v2842
        %v2894 = vunpack.c.l.b16 %v2785
        %v2895 = vunpack.c.h.b16 %v2785
        %v2896 = vunpack.c.l.b16 %v2786
        %v2897 = vunpack.c.h.b16 %v2786
        %v2898 = vunpack.c.l.b16 %v2787
        %v2899 = vunpack.c.h.b16 %v2787
        %v2900 = vunpack.c.l.b16 %v2788
        %v2901 = vunpack.c.h.b16 %v2788
        %v2902 = vunpack.c.l.b16 %v2789
        %v2903 = vunpack.c.h.b16 %v2789
        %v2904 = vunpack.c.l.b16 %v2790
        %v2905 = vunpack.c.h.b16 %v2790
        %v2906 = vunpack.c.l.b16 %v2791
        %v2907 = vunpack.c.h.b16 %v2791
        %v2908 = vunpack.c.l.b16 %v2792
        %v2909 = vunpack.c.h.b16 %v2792
        %v2910 = vunpack.c.l.b16 %v2793
        %v2911 = vunpack.c.h.b16 %v2793
        %v2912 = vunpack.c.l.b16 %v2794
        %v2913 = vunpack.c.h.b16 %v2794
        %v2914 = vunpack.c.l.b16 %v2795
        %v2915 = vunpack.c.h.b16 %v2795
        %v2916 = vunpack.c.l.b16 %v2796
        %v2917 = vunpack.c.h.b16 %v2796
        %v2918 = vunpack.c.l.b16 %v2797
        %v2919 = vunpack.c.h.b16 %v2797
        %v2920 = vunpack.c.l.b16 %v2798
        %v2921 = vunpack.c.h.b16 %v2798
        %v2922 = vunpack.c.l.b16 %v2799
        %v2923 = vunpack.c.h.b16 %v2799
        %v2924 = vunpack.c.l.b16 %v2800
        %v2925 = vunpack.c.h.b16 %v2800
        %v2926 = vunpack.c.l.b16 %v2801
        %v2927 = vunpack.c.h.b16 %v2801
        %v2928 = vunpack.c.l.b16 %v2802
        %v2929 = vunpack.c.h.b16 %v2802
        %v2930 = vunpack.c.l.b16 %v2803
        %v2931 = vunpack.c.h.b16 %v2803
        %v2932 = vunpack.c.l.b16 %v2804
        %v2933 = vunpack.c.h.b16 %v2804
        %v2934 = vunpack.c.l.b16 %v2805
        %v2935 = vunpack.c.h.b16 %v2805
        %v2936 = vunpack.c.l.b16 %v2806
        %v2937 = vunpack.c.h.b16 %v2806
        %v2938 = vunpack.c.l.b16 %v2807
        %v2939 = vunpack.c.h.b16 %v2807
        %v2940 = vunpack.c.l.b16 %v2808
        %v2941 = vunpack.c.h.b16 %v2808
        %v2942 = vunpack.c.l.b16 %v2809
        %v2943 = vunpack.c.h.b16 %v2809
        %v2944 = vunpack.c.l.b16 %v2810
        %v2945 = vunpack.c.h.b16 %v2810
        %v2946 = vunpack.c.l.b16 %v2811
        %v2947 = vunpack.c.h.b16 %v2811
        %v2948 = vunpack.c.l.b16 %v2812
        %v2949 = vunpack.c.h.b16 %v2812
        %v2950 = vunpack.c.l.b16 %v2813
        %v2951 = vunpack.c.h.b16 %v2813
        %v2952 = vunpack.c.l.b16 %v2814
        %v2953 = vunpack.c.h.b16 %v2814
        %v2954 = vunpack.c.l.b16 %v2815
        %v2955 = vunpack.c.h.b16 %v2815
        %v2956 = vunpack.c.l.b16 %v2816
        %v2957 = vunpack.c.h.b16 %v2816
        %v2958 = vunpack.c.l.b16 %v2817
        %v2959 = vunpack.c.h.b16 %v2817
        %v2960 = vunpack.c.l.b16 %v2818
        %v2961 = vunpack.c.h.b16 %v2818
        %v2962 = vunpack.c.l.b16 %v2819
        %v2963 = vunpack.c.h.b16 %v2819
        %v2964 = vunpack.c.l.b16 %v2820
        %v2965 = vunpack.c.h.b16 %v2820
        %v2966 = vunpack.c.l.b16 %v2821
        %v2967 = vunpack.c.h.b16 %v2821
        %v2968 = vunpack.c.l.b16 %v2822
        %v2969 = vunpack.c.h.b16 %v2822
        %v2970 = vunpack.c.l.b16 %v2823
        %v2971 = vunpack.c.h.b16 %v2823
        %v2972 = vunpack.c.l.b16 %v2824
        %v2973 = vunpack.c.h.b16 %v2824
        %v2974 = vunpack.c.l.b16 %v2825
        %v2975 = vunpack.c.h.b16 %v2825
        %v2976 = vunpack.c.l.b16 %v2826
        %v2977 = vunpack.c.h.b16 %v2826
        %v2978 = vunpack.c.l.b16 %v2827
        %v2979 = vunpack.c.h.b16 %v2827
        %v2980 = vunpack.c.l.b16 %v2828
        %v2981 = vunpack.c.h.b16 %v2828
        %v2982 = vunpack.c.l.b16 %v2829
        %v2983 = vunpack.c.h.b16 %v2829
        %v2984 = vunpack.c.l.b16 %v2830
        %v2985 = vunpack.c.h.b16 %v2830
        %v2986 = vunpack.c.l.b16 %v2831
        %v2987 = vunpack.c.h.b16 %v2831
        %v2988 = vunpack.c.l.b16 %v2832
        %v2989 = vunpack.c.h.b16 %v2832
        %v2990 = vpack.c.b16 %v2896, %v2894
        %v2991 = vpack.c.b16 %v2897, %v2895
        %v2992 = vpack.c.b16 %v2900, %v2898
        %v2993 = vpack.c.b16 %v2901, %v2899
        %v2994 = vpack.c.b16 %v2904, %v2902
        %v2995 = vpack.c.b16 %v2905, %v2903
        %v2996 = vpack.c.b16 %v2908, %v2906
        %v2997 = vpack.c.b16 %v2909, %v2907
        %v2998 = vpack.c.b16 %v2912, %v2910
        %v2999 = vpack.c.b16 %v2913, %v2911
        %v3000 = vpack.c.b16 %v2916, %v2914
        %v3001 = vpack.c.b16 %v2917, %v2915
        %v3002 = vpack.c.b16 %v2920, %v2918
        %v3003 = vpack.c.b16 %v2921, %v2919
        %v3004 = vpack.c.b16 %v2924, %v2922
        %v3005 = vpack.c.b16 %v2925, %v2923
        %v3006 = vpack.c.b16 %v2928, %v2926
        %v3007 = vpack.c.b16 %v2929, %v2927
        %v3008 = vpack.c.b16 %v2932, %v2930
        %v3009 = vpack.c.b16 %v2933, %v2931
        %v3010 = vpack.c.b16 %v2936, %v2934
        %v3011 = vpack.c.b16 %v2937, %v2935
        %v3012 = vpack.c.b16 %v2940, %v2938
        %v3013 = vpack.c.b16 %v2941, %v2939
        %v3014 = vpack.c.b16 %v2944, %v2942
        %v3015 = vpack.c.b16 %v2945, %v2943
        %v3016 = vpack.c.b16 %v2948, %v2946
        %v3017 = vpack.c.b16 %v2949, %v2947
        %v3018 = vpack.c.b16 %v2952, %v2950
        %v3019 = vpack.c.b16 %v2953, %v2951
        %v3020 = vpack.c.b16 %v2956, %v2954
        %v3021 = vpack.c.b16 %v2957, %v2955
        %v3022 = vpack.c.b16 %v2960, %v2958
        %v3023 = vpack.c.b16 %v2961, %v2959
        %v3024 = vpack.c.b16 %v2964, %v2962
        %v3025 = vpack.c.b16 %v2965, %v2963
        %v3026 = vpack.c.b16 %v2968, %v2966
        %v3027 = vpack.c.b16 %v2969, %v2967
        %v3028 = vpack.c.b16 %v2972, %v2970
        %v3029 = vpack.c.b16 %v2973, %v2971
        %v3030 = vpack.c.b16 %v2976, %v2974
        %v3031 = vpack.c.b16 %v2977, %v2975
        %v3032 = vpack.c.b16 %v2980, %v2978
        %v3033 = vpack.c.b16 %v2981, %v2979
        %v3034 = vpack.c.b16 %v2984, %v2982
        %v3035 = vpack.c.b16 %v2985, %v2983
        %v3036 = vpack.c.b16 %v2988, %v2986
        %v3037 = vpack.c.b16 %v2989, %v2987
        %3086 = vmatprep.subr.bf16.mxu0 %v2991
        %3087 = vmatpush1.bf16.msra.mxu0 %v2990
        %3088 = vmatprep.subr.bf16.mxu0 %v2993
        %3089 = vmatpush1.bf16.msra.mxu0 %v2992
        %3090 = vmatprep.subr.bf16.mxu0 %v2995
        %3091 = vmatpush1.bf16.msra.mxu0 %v2994
        %3092 = vmatprep.subr.bf16.mxu0 %v2997
        %3093 = vmatpush1.bf16.msra.mxu0 %v2996
        %3094 = vmatprep.subr.bf16.mxu0 %v2999
        %3095 = vmatpush1.bf16.msra.mxu0 %v2998
        %3096 = vmatprep.subr.bf16.mxu0 %v3001
        %3097 = vmatpush1.bf16.msra.mxu0 %v3000
        %3098 = vmatprep.subr.bf16.mxu0 %v3003
        %3099 = vmatpush1.bf16.msra.mxu0 %v3002
        %3100 = vmatprep.subr.bf16.mxu0 %v3005
        %3101 = vmatpush1.bf16.msra.mxu0 %v3004
        %3102 = vmatprep.subr.bf16.mxu0 %v3007
        %3103 = vmatpush1.bf16.msra.mxu0 %v3006
        %3104 = vmatprep.subr.bf16.mxu0 %v3009
        %3105 = vmatpush1.bf16.msra.mxu0 %v3008
        %3106 = vmatprep.subr.bf16.mxu0 %v3011
        %3107 = vmatpush1.bf16.msra.mxu0 %v3010
        %3108 = vmatprep.subr.bf16.mxu0 %v3013
        %3109 = vmatpush1.bf16.msra.mxu0 %v3012
        %3110 = vmatprep.subr.bf16.mxu0 %v3015
        %3111 = vmatpush1.bf16.msra.mxu0 %v3014
        %3112 = vmatprep.subr.bf16.mxu0 %v3017
        %3113 = vmatpush1.bf16.msra.mxu0 %v3016
        %3114 = vmatprep.subr.bf16.mxu0 %v3019
        %3115 = vmatpush1.bf16.msra.mxu0 %v3018
        %3116 = vmatprep.subr.bf16.mxu0 %v3021
        %3117 = vmatpush1.bf16.msra.mxu0 %v3020
        %3118 = vmatprep.mubr.bf16.mxu0 %v2773
        %3119 = vmatmul.mubr.bf16.gmra.mrb[0].mxu0 %v2772
        %v3120 = vpop.f32.mrb[0].mxu0
        %v3121 = vadd.f32 %v2839, %v3120
        %v3122 = vpop.f32.mrb[0].mxu0
        %v3123 = vadd.f32 %v2843, %v3122
        %v3124 = vpop.f32.mrb[0].mxu0
        %v3125 = vadd.f32 %v2839, %v3124
        %v3126 = vpop.f32.mrb[0].mxu0
        %v3127 = vadd.f32 %v2843, %v3126
        %3128 = vmatprep.mubr.bf16.mxu0 %v2776
        %3129 = vmatmul.mubr.bf16.gmra.mrb[0].mxu0 %v2775
        %v3130 = vpop.f32.mrb[0].mxu0
        %v3131 = vadd.f32 %v2839, %v3130
        %v3132 = vpop.f32.mrb[0].mxu0
        %v3133 = vadd.f32 %v2843, %v3132
        %v3134 = vpop.f32.mrb[0].mxu0
        %v3135 = vadd.f32 %v2839, %v3134
        %v3136 = vpop.f32.mrb[0].mxu0
        %v3137 = vadd.f32 %v2843, %v3136
        %3138 = vmatprep.mubr.bf16.mxu0 %v2779
        %3139 = vmatmul.mubr.bf16.gmra.mrb[0].mxu0 %v2778
        %v3140 = vpop.f32.mrb[0].mxu0
        %v3141 = vadd.f32 %v2839, %v3140
        %v3142 = vpop.f32.mrb[0].mxu0
        %v3143 = vadd.f32 %v2843, %v3142
        %v3144 = vpop.f32.mrb[0].mxu0
        %v3145 = vadd.f32 %v2839, %v3144
        %v3146 = vpop.f32.mrb[0].mxu0
        %v3147 = vadd.f32 %v2843, %v3146
        %3148 = vmatprep.mubr.bf16.mxu0 %v2782
        %3149 = vmatmul.mubr.bf16.gmra.mrb[0].mxu0 %v2781
        %v3150 = vpop.f32.mrb[0].mxu0
        %v3151 = vadd.f32 %v2839, %v3150
        %v3152 = vpop.f32.mrb[0].mxu0
        %v3153 = vadd.f32 %v2843, %v3152
        %v3154 = vpop.f32.mrb[0].mxu0
        %v3155 = vadd.f32 %v2839, %v3154
        %v3156 = vpop.f32.mrb[0].mxu0
        %v3157 = vadd.f32 %v2843, %v3156
        %3158 = vdwg.mxu0
        %3159 = vmatprep.subr.bf16.mxu0 %v3023
        %3160 = vmatpush1.bf16.msra.mxu0 %v3022
        %3161 = vmatprep.subr.bf16.mxu0 %v3025
        %3162 = vmatpush1.bf16.msra.mxu0 %v3024
        %3163 = vmatprep.subr.bf16.mxu0 %v3027
        %3164 = vmatpush1.bf16.msra.mxu0 %v3026
        %3165 = vmatprep.subr.bf16.mxu0 %v3029
        %3166 = vmatpush1.bf16.msra.mxu0 %v3028
        %3167 = vmatprep.subr.bf16.mxu0 %v3031
        %3168 = vmatpush1.bf16.msra.mxu0 %v3030
        %3169 = vmatprep.subr.bf16.mxu0 %v3033
        %3170 = vmatpush1.bf16.msra.mxu0 %v3032
        %3171 = vmatprep.subr.bf16.mxu0 %v3035
        %3172 = vmatpush1.bf16.msra.mxu0 %v3034
        %3173 = vmatprep.subr.bf16.mxu0 %v3037
        %3174 = vmatpush1.bf16.msra.mxu0 %v3036
        %3175 = vmatprep.subr.bf16.mxu0 0
        %3176 = vmatpush1.bf16.msra.mxu0 0
        %3177 = vmatprep.subr.bf16.mxu0 0
        %3178 = vmatpush1.bf16.msra.mxu0 0
        %3179 = vmatprep.subr.bf16.mxu0 0
        %3180 = vmatpush1.bf16.msra.mxu0 0
        %3181 = vmatprep.subr.bf16.mxu0 0
        %3182 = vmatpush1.bf16.msra.mxu0 0
        %3183 = vmatprep.subr.bf16.mxu0 0
        %3184 = vmatpush1.bf16.msra.mxu0 0
        %3185 = vmatprep.subr.bf16.mxu0 0
        %3186 = vmatpush1.bf16.msra.mxu0 0
        %3187 = vmatprep.subr.bf16.mxu0 0
        %3188 = vmatpush1.bf16.msra.mxu0 0
        %3189 = vmatprep.subr.bf16.mxu0 0
        %3190 = vmatpush1.bf16.msra.mxu0 0
        %3191 = vmatprep.mubr.bf16.mxu0 0
        %3192 = vmatmul.mubr.bf16.gmra.mrb[0].mxu0 %v2774
        %v3193 = vpop.f32.mrb[0].mxu0
        %v3194 = vadd.f32 %v3121, %v3193
        %v3195 = vpop.f32.mrb[0].mxu0
        %v3196 = vadd.f32 %v3123, %v3195
        %v3197 = vpop.f32.mrb[0].mxu0
        %v3198 = vadd.f32 %v3125, %v3197
        %v3199 = vpop.f32.mrb[0].mxu0
        %v3200 = vadd.f32 %v3127, %v3199
        %3201 = vmatprep.mubr.bf16.mxu0 0
        %3202 = vmatmul.mubr.bf16.gmra.mrb[0].mxu0 %v2777
        %v3203 = vpop.f32.mrb[0].mxu0
        %v3204 = vadd.f32 %v3131, %v3203
        %v3205 = vpop.f32.mrb[0].mxu0
        %v3206 = vadd.f32 %v3133, %v3205
        %v3207 = vpop.f32.mrb[0].mxu0
        %v3208 = vadd.f32 %v3135, %v3207
        %v3209 = vpop.f32.mrb[0].mxu0
        %v3210 = vadd.f32 %v3137, %v3209
        %3211 = vmatprep.mubr.bf16.mxu0 0
        %3212 = vmatmul.mubr.bf16.gmra.mrb[0].mxu0 %v2780
        %v3213 = vpop.f32.mrb[0].mxu0
        %v3214 = vadd.f32 %v3141, %v3213
        %v3215 = vpop.f32.mrb[0].mxu0
        %v3216 = vadd.f32 %v3143, %v3215
        %v3217 = vpop.f32.mrb[0].mxu0
        %v3218 = vadd.f32 %v3145, %v3217
        %v3219 = vpop.f32.mrb[0].mxu0
        %v3220 = vadd.f32 %v3147, %v3219
        %3221 = vmatprep.mubr.bf16.mxu0 0
        %3222 = vmatmul.mubr.bf16.gmra.mrb[0].mxu0 %v2783
        %v3223 = vpop.f32.mrb[0].mxu0
        %v3224 = vadd.f32 %v3151, %v3223
        %v3225 = vpop.f32.mrb[0].mxu0
        %v3226 = vadd.f32 %v3153, %v3225
        %v3227 = vpop.f32.mrb[0].mxu0
        %v3228 = vadd.f32 %v3155, %v3227
        %v3229 = vpop.f32.mrb[0].mxu0
        %v3230 = vadd.f32 %v3157, %v3229
        %3231 = vdwg.mxu0
        %v3232 = vmul.f32 %v3194, 0.5
        %v3233 = vmul.f32 %v3198, 0.5
        %v3234 = vmul.f32 %v3204, 0.5
        %v3235 = vmul.f32 %v3208, 0.5
        %v3236 = vmul.f32 %v3214, 0.5
        %v3237 = vmul.f32 %v3218, 0.5
        %v3238 = vmul.f32 %v3224, 0.5
        %v3239 = vmul.f32 %v3228, 0.5
        %v3240 = vtanh.pop %v3232
        %v3241 = vtanh.pop %v3233
        %v3242 = vtanh.pop %v3234
        %v3243 = vtanh.pop %v3235
        %v3244 = vtanh.pop %v3236
        %v3245 = vtanh.pop %v3237
        %v3246 = vtanh.pop %v3238
        %v3247 = vtanh.pop %v3239
        %v3248 = vadd.f32 %v3240, 1.0
        %v3249 = vadd.f32 %v3241, 1.0
        %v3250 = vadd.f32 %v3242, 1.0
        %v3251 = vadd.f32 %v3243, 1.0
        %v3252 = vadd.f32 %v3244, 1.0
        %v3253 = vadd.f32 %v3245, 1.0
        %v3254 = vadd.f32 %v3246, 1.0
        %v3255 = vadd.f32 %v3247, 1.0
        %v3256 = vmul.f32 %v3248, 0.5
        %v3257 = vmul.f32 %v3249, 0.5
        %v3258 = vmul.f32 %v3250, 0.5
        %v3259 = vmul.f32 %v3251, 0.5
        %v3260 = vmul.f32 %v3252, 0.5
        %v3261 = vmul.f32 %v3253, 0.5
        %v3262 = vmul.f32 %v3254, 0.5
        %v3263 = vmul.f32 %v3255, 0.5
        %v3264 = vsub.f32 %v3196, %v2716
        %v3265 = vsub.f32 %v3200, %v2717
        %v3266 = vsub.f32 %v3206, %v2718
        %v3267 = vsub.f32 %v3210, %v2719
        %v3268 = vsub.f32 %v3216, %v2720
        %v3269 = vsub.f32 %v3220, %v2721
        %v3270 = vsub.f32 %v3226, %v2722
        %v3271 = vsub.f32 %v3230, %v2723
        %v3272 = vmul.f32 %v3256, %v3264
        %v3273 = vmul.f32 %v3257, %v3265
        %v3274 = vmul.f32 %v3258, %v3266
        %v3275 = vmul.f32 %v3259, %v3267
        %v3276 = vmul.f32 %v3260, %v3268
        %v3277 = vmul.f32 %v3261, %v3269
        %v3278 = vmul.f32 %v3262, %v3270
        %v3279 = vmul.f32 %v3263, %v3271
        %v3280 = vadd.f32 %v2716, %v3272
        %v3281 = vadd.f32 %v2717, %v3273
        %v3282 = vadd.f32 %v2718, %v3274
        %v3283 = vadd.f32 %v2719, %v3275
        %v3284 = vadd.f32 %v2720, %v3276
        %v3285 = vadd.f32 %v2721, %v3277
        %v3286 = vadd.f32 %v2722, %v3278
        %v3287 = vadd.f32 %v2723, %v3279
        %v3288 = vrot.slane %v3280, 7
        %v3289 = vrot.slane %v3281, 7
        %v3290 = vrot.slane %v3282, 7
        %v3291 = vrot.slane %v3283, 7
        %v3292 = vrot.slane %v3284, 7
        %v3293 = vrot.slane %v3285, 7
        %v3294 = vrot.slane %v3286, 7
        %v3295 = vrot.slane %v3287, 7
        %v3296 = vsel %vm1038, %v3294, %v3295
        %v3297 = vsel %vm1038, %v3293, %v3294
        %v3298 = vsel %vm1038, %v3292, %v3293
        %v3299 = vsel %vm1038, %v3291, %v3292
        %v3300 = vsel %vm1038, %v3290, %v3291
        %v3301 = vsel %vm1038, %v3289, %v3290
        %v3302 = vsel %vm1038, %v3288, %v3289
        %v3303 = vsel %vm1038, %v3295, %v3288
        %v3304 = vsel %vm966, %v3303, 0.0
        %v3305 = vsel %vm967, %v3302, 0.0
        %v3306 = vsel %vm968, %v3301, 0.0
        %v3307 = vsel %vm969, %v3300, 0.0
        %v3308 = vsel %vm970, %v3299, 0.0
        %v3309 = vsel %vm971, %v3298, 0.0
        %v3310 = vsel %vm972, %v3297, 0.0
        %v3311 = vsel %vm973, %v3296, 0.0
        %v3312 = vrot.slane %v3280, 1
        %v3313 = vrot.slane %v3281, 1
        %v3314 = vrot.slane %v3282, 1
        %v3315 = vrot.slane %v3283, 1
        %v3316 = vrot.slane %v3284, 1
        %v3317 = vrot.slane %v3285, 1
        %v3318 = vrot.slane %v3286, 1
        %v3319 = vrot.slane %v3287, 1
        %v3320 = vsel %vm1063, %v3318, %v3319
        %v3321 = vsel %vm1063, %v3317, %v3318
        %v3322 = vsel %vm1063, %v3316, %v3317
        %v3323 = vsel %vm1063, %v3315, %v3316
        %v3324 = vsel %vm1063, %v3314, %v3315
        %v3325 = vsel %vm1063, %v3313, %v3314
        %v3326 = vsel %vm1063, %v3312, %v3313
        %v3327 = vsel %vm1063, %v3319, %v3312
        %v3328 = vsel %vm974, %v3326, 0.0
        %v3329 = vsel %vm975, %v3325, 0.0
        %v3330 = vsel %vm976, %v3324, 0.0
        %v3331 = vsel %vm977, %v3323, 0.0
        %v3332 = vsel %vm978, %v3322, 0.0
        %v3333 = vsel %vm979, %v3321, 0.0
        %v3334 = vsel %vm980, %v3320, 0.0
        %v3335 = vsel %vm981, %v3327, 0.0
        %v3336 = vpack.c.bf16 %v3305, %v3304
        %v3337 = vpack.c.bf16 %v3281, %v3280
        %v3338 = vpack.c.bf16 %v3329, %v3328
        %v3339 = vpack.c.bf16 %v3307, %v3306
        %v3340 = vpack.c.bf16 %v3283, %v3282
        %v3341 = vpack.c.bf16 %v3331, %v3330
        %v3342 = vpack.c.bf16 %v3309, %v3308
        %v3343 = vpack.c.bf16 %v3285, %v3284
        %v3344 = vpack.c.bf16 %v3333, %v3332
        %v3345 = vpack.c.bf16 %v3311, %v3310
        %v3346 = vpack.c.bf16 %v3287, %v3286
        %v3347 = vpack.c.bf16 %v3335, %v3334
        %s3348 = scalar_lea.vmem [#allocation11], 1536
        %v3349 = vld [vmem:[%s3348] sm:$0xff]
        %v3350 = vld [vmem:[%s3348 + $0x8] sm:$0xff]
        %v3351 = vld [vmem:[%s3348 + $0x10] sm:$0xff]
        %v3352 = vld [vmem:[%s3348 + $0x18] sm:$0xff]
        %v3353 = vld [vmem:[%s3348 + $0x20] sm:$0xff]
        %v3354 = vld [vmem:[%s3348 + $0x28] sm:$0xff]
        %v3355 = vld [vmem:[%s3348 + $0x30] sm:$0xff]
        %v3356 = vld [vmem:[%s3348 + $0x38] sm:$0xff]
        %v3357 = vld [vmem:[%s3348 + $0x40] sm:$0xff]
        %v3358 = vld [vmem:[%s3348 + $0x48] sm:$0xff]
        %v3359 = vld [vmem:[%s3348 + $0x50] sm:$0xff]
        %v3360 = vld [vmem:[%s3348 + $0x58] sm:$0xff]
        %v3361 = vld [vmem:[%s3348 + $0x60] sm:$0xff]
        %v3362 = vld [vmem:[%s3348 + $0x68] sm:$0xff]
        %v3363 = vld [vmem:[%s3348 + $0x70] sm:$0xff]
        %v3364 = vld [vmem:[%s3348 + $0x78] sm:$0xff]
        %v3365 = vld [vmem:[%s3348 + $0x80] sm:$0xff]
        %v3366 = vld [vmem:[%s3348 + $0x88] sm:$0xff]
        %v3367 = vld [vmem:[%s3348 + $0x90] sm:$0xff]
        %v3368 = vld [vmem:[%s3348 + $0x98] sm:$0xff]
        %v3369 = vld [vmem:[%s3348 + $0xa0] sm:$0xff]
        %v3370 = vld [vmem:[%s3348 + $0xa8] sm:$0xff]
        %v3371 = vld [vmem:[%s3348 + $0xb0] sm:$0xff]
        %v3372 = vld [vmem:[%s3348 + $0xb8] sm:$0xff]
        %v3373 = vld [vmem:[%s3348 + $0xc0] sm:$0xff]
        %v3374 = vld [vmem:[%s3348 + $0xc8] sm:$0xff]
        %v3375 = vld [vmem:[%s3348 + $0xd0] sm:$0xff]
        %v3376 = vld [vmem:[%s3348 + $0xd8] sm:$0xff]
        %v3377 = vld [vmem:[%s3348 + $0xe0] sm:$0xff]
        %v3378 = vld [vmem:[%s3348 + $0xe8] sm:$0xff]
        %v3379 = vld [vmem:[%s3348 + $0xf0] sm:$0xff]
        %v3380 = vld [vmem:[%s3348 + $0xf8] sm:$0xff]
        %v3381 = vld [vmem:[%s3348 + $0x100] sm:$0xff]
        %v3382 = vld [vmem:[%s3348 + $0x108] sm:$0xff]
        %v3383 = vld [vmem:[%s3348 + $0x110] sm:$0xff]
        %v3384 = vld [vmem:[%s3348 + $0x118] sm:$0xff]
        %v3385 = vld [vmem:[%s3348 + $0x120] sm:$0xff]
        %v3386 = vld [vmem:[%s3348 + $0x128] sm:$0xff]
        %v3387 = vld [vmem:[%s3348 + $0x130] sm:$0xff]
        %v3388 = vld [vmem:[%s3348 + $0x138] sm:$0xff]
        %v3389 = vld [vmem:[%s3348 + $0x140] sm:$0xff]
        %v3390 = vld [vmem:[%s3348 + $0x148] sm:$0xff]
        %v3391 = vld [vmem:[%s3348 + $0x150] sm:$0xff]
        %v3392 = vld [vmem:[%s3348 + $0x158] sm:$0xff]
        %v3393 = vld [vmem:[%s3348 + $0x160] sm:$0xff]
        %v3394 = vld [vmem:[%s3348 + $0x168] sm:$0xff]
        %v3395 = vld [vmem:[%s3348 + $0x170] sm:$0xff]
        %v3396 = vld [vmem:[%s3348 + $0x178] sm:$0xff]
        %s3397 = scalar_lea.vmem [#allocation13], 8
        %v3398 = vld [vmem:[%s3397] sm:$0x3]
        %v3400 = vlaneseq
        %v3401 = vshrl.u32 %v3400, 7
        %v3402 = vsub.s32 0, %v3401
        %v3403 = vrot.slane %v3398, %v3402
        %v3404 = vlaneseq
        %v3405 = vshrl.u32 %v3404, 7
        %v3406 = vsub.s32 1, %v3405
        %v3407 = vrot.slane %v3398, %v3406
        %v3458 = vunpack.c.l.b16 %v3349
        %v3459 = vunpack.c.h.b16 %v3349
        %v3460 = vunpack.c.l.b16 %v3350
        %v3461 = vunpack.c.h.b16 %v3350
        %v3462 = vunpack.c.l.b16 %v3351
        %v3463 = vunpack.c.h.b16 %v3351
        %v3464 = vunpack.c.l.b16 %v3352
        %v3465 = vunpack.c.h.b16 %v3352
        %v3466 = vunpack.c.l.b16 %v3353
        %v3467 = vunpack.c.h.b16 %v3353
        %v3468 = vunpack.c.l.b16 %v3354
        %v3469 = vunpack.c.h.b16 %v3354
        %v3470 = vunpack.c.l.b16 %v3355
        %v3471 = vunpack.c.h.b16 %v3355
        %v3472 = vunpack.c.l.b16 %v3356
        %v3473 = vunpack.c.h.b16 %v3356
        %v3474 = vunpack.c.l.b16 %v3357
        %v3475 = vunpack.c.h.b16 %v3357
        %v3476 = vunpack.c.l.b16 %v3358
        %v3477 = vunpack.c.h.b16 %v3358
        %v3478 = vunpack.c.l.b16 %v3359
        %v3479 = vunpack.c.h.b16 %v3359
        %v3480 = vunpack.c.l.b16 %v3360
        %v3481 = vunpack.c.h.b16 %v3360
        %v3482 = vunpack.c.l.b16 %v3361
        %v3483 = vunpack.c.h.b16 %v3361
        %v3484 = vunpack.c.l.b16 %v3362
        %v3485 = vunpack.c.h.b16 %v3362
        %v3486 = vunpack.c.l.b16 %v3363
        %v3487 = vunpack.c.h.b16 %v3363
        %v3488 = vunpack.c.l.b16 %v3364
        %v3489 = vunpack.c.h.b16 %v3364
        %v3490 = vunpack.c.l.b16 %v3365
        %v3491 = vunpack.c.h.b16 %v3365
        %v3492 = vunpack.c.l.b16 %v3366
        %v3493 = vunpack.c.h.b16 %v3366
        %v3494 = vunpack.c.l.b16 %v3367
        %v3495 = vunpack.c.h.b16 %v3367
        %v3496 = vunpack.c.l.b16 %v3368
        %v3497 = vunpack.c.h.b16 %v3368
        %v3498 = vunpack.c.l.b16 %v3369
        %v3499 = vunpack.c.h.b16 %v3369
        %v3500 = vunpack.c.l.b16 %v3370
        %v3501 = vunpack.c.h.b16 %v3370
        %v3502 = vunpack.c.l.b16 %v3371
        %v3503 = vunpack.c.h.b16 %v3371
        %v3504 = vunpack.c.l.b16 %v3372
        %v3505 = vunpack.c.h.b16 %v3372
        %v3506 = vunpack.c.l.b16 %v3373
        %v3507 = vunpack.c.h.b16 %v3373
        %v3508 = vunpack.c.l.b16 %v3374
        %v3509 = vunpack.c.h.b16 %v3374
        %v3510 = vunpack.c.l.b16 %v3375
        %v3511 = vunpack.c.h.b16 %v3375
        %v3512 = vunpack.c.l.b16 %v3376
        %v3513 = vunpack.c.h.b16 %v3376
        %v3514 = vunpack.c.l.b16 %v3377
        %v3515 = vunpack.c.h.b16 %v3377
        %v3516 = vunpack.c.l.b16 %v3378
        %v3517 = vunpack.c.h.b16 %v3378
        %v3518 = vunpack.c.l.b16 %v3379
        %v3519 = vunpack.c.h.b16 %v3379
        %v3520 = vunpack.c.l.b16 %v3380
        %v3521 = vunpack.c.h.b16 %v3380
        %v3522 = vunpack.c.l.b16 %v3381
        %v3523 = vunpack.c.h.b16 %v3381
        %v3524 = vunpack.c.l.b16 %v3382
        %v3525 = vunpack.c.h.b16 %v3382
        %v3526 = vunpack.c.l.b16 %v3383
        %v3527 = vunpack.c.h.b16 %v3383
        %v3528 = vunpack.c.l.b16 %v3384
        %v3529 = vunpack.c.h.b16 %v3384
        %v3530 = vunpack.c.l.b16 %v3385
        %v3531 = vunpack.c.h.b16 %v3385
        %v3532 = vunpack.c.l.b16 %v3386
        %v3533 = vunpack.c.h.b16 %v3386
        %v3534 = vunpack.c.l.b16 %v3387
        %v3535 = vunpack.c.h.b16 %v3387
        %v3536 = vunpack.c.l.b16 %v3388
        %v3537 = vunpack.c.h.b16 %v3388
        %v3538 = vunpack.c.l.b16 %v3389
        %v3539 = vunpack.c.h.b16 %v3389
        %v3540 = vunpack.c.l.b16 %v3390
        %v3541 = vunpack.c.h.b16 %v3390
        %v3542 = vunpack.c.l.b16 %v3391
        %v3543 = vunpack.c.h.b16 %v3391
        %v3544 = vunpack.c.l.b16 %v3392
        %v3545 = vunpack.c.h.b16 %v3392
        %v3546 = vunpack.c.l.b16 %v3393
        %v3547 = vunpack.c.h.b16 %v3393
        %v3548 = vunpack.c.l.b16 %v3394
        %v3549 = vunpack.c.h.b16 %v3394
        %v3550 = vunpack.c.l.b16 %v3395
        %v3551 = vunpack.c.h.b16 %v3395
        %v3552 = vunpack.c.l.b16 %v3396
        %v3553 = vunpack.c.h.b16 %v3396
        %v3554 = vpack.c.b16 %v3460, %v3458
        %v3555 = vpack.c.b16 %v3461, %v3459
        %v3556 = vpack.c.b16 %v3464, %v3462
        %v3557 = vpack.c.b16 %v3465, %v3463
        %v3558 = vpack.c.b16 %v3468, %v3466
        %v3559 = vpack.c.b16 %v3469, %v3467
        %v3560 = vpack.c.b16 %v3472, %v3470
        %v3561 = vpack.c.b16 %v3473, %v3471
        %v3562 = vpack.c.b16 %v3476, %v3474
        %v3563 = vpack.c.b16 %v3477, %v3475
        %v3564 = vpack.c.b16 %v3480, %v3478
        %v3565 = vpack.c.b16 %v3481, %v3479
        %v3566 = vpack.c.b16 %v3484, %v3482
        %v3567 = vpack.c.b16 %v3485, %v3483
        %v3568 = vpack.c.b16 %v3488, %v3486
        %v3569 = vpack.c.b16 %v3489, %v3487
        %v3570 = vpack.c.b16 %v3492, %v3490
        %v3571 = vpack.c.b16 %v3493, %v3491
        %v3572 = vpack.c.b16 %v3496, %v3494
        %v3573 = vpack.c.b16 %v3497, %v3495
        %v3574 = vpack.c.b16 %v3500, %v3498
        %v3575 = vpack.c.b16 %v3501, %v3499
        %v3576 = vpack.c.b16 %v3504, %v3502
        %v3577 = vpack.c.b16 %v3505, %v3503
        %v3578 = vpack.c.b16 %v3508, %v3506
        %v3579 = vpack.c.b16 %v3509, %v3507
        %v3580 = vpack.c.b16 %v3512, %v3510
        %v3581 = vpack.c.b16 %v3513, %v3511
        %v3582 = vpack.c.b16 %v3516, %v3514
        %v3583 = vpack.c.b16 %v3517, %v3515
        %v3584 = vpack.c.b16 %v3520, %v3518
        %v3585 = vpack.c.b16 %v3521, %v3519
        %v3586 = vpack.c.b16 %v3524, %v3522
        %v3587 = vpack.c.b16 %v3525, %v3523
        %v3588 = vpack.c.b16 %v3528, %v3526
        %v3589 = vpack.c.b16 %v3529, %v3527
        %v3590 = vpack.c.b16 %v3532, %v3530
        %v3591 = vpack.c.b16 %v3533, %v3531
        %v3592 = vpack.c.b16 %v3536, %v3534
        %v3593 = vpack.c.b16 %v3537, %v3535
        %v3594 = vpack.c.b16 %v3540, %v3538
        %v3595 = vpack.c.b16 %v3541, %v3539
        %v3596 = vpack.c.b16 %v3544, %v3542
        %v3597 = vpack.c.b16 %v3545, %v3543
        %v3598 = vpack.c.b16 %v3548, %v3546
        %v3599 = vpack.c.b16 %v3549, %v3547
        %v3600 = vpack.c.b16 %v3552, %v3550
        %v3601 = vpack.c.b16 %v3553, %v3551
        %3650 = vmatprep.subr.bf16.mxu0 %v3555
        %3651 = vmatpush1.bf16.msra.mxu0 %v3554
        %3652 = vmatprep.subr.bf16.mxu0 %v3557
        %3653 = vmatpush1.bf16.msra.mxu0 %v3556
        %3654 = vmatprep.subr.bf16.mxu0 %v3559
        %3655 = vmatpush1.bf16.msra.mxu0 %v3558
        %3656 = vmatprep.subr.bf16.mxu0 %v3561
        %3657 = vmatpush1.bf16.msra.mxu0 %v3560
        %3658 = vmatprep.subr.bf16.mxu0 %v3563
        %3659 = vmatpush1.bf16.msra.mxu0 %v3562
        %3660 = vmatprep.subr.bf16.mxu0 %v3565
        %3661 = vmatpush1.bf16.msra.mxu0 %v3564
        %3662 = vmatprep.subr.bf16.mxu0 %v3567
        %3663 = vmatpush1.bf16.msra.mxu0 %v3566
        %3664 = vmatprep.subr.bf16.mxu0 %v3569
        %3665 = vmatpush1.bf16.msra.mxu0 %v3568
        %3666 = vmatprep.subr.bf16.mxu0 %v3571
        %3667 = vmatpush1.bf16.msra.mxu0 %v3570
        %3668 = vmatprep.subr.bf16.mxu0 %v3573
        %3669 = vmatpush1.bf16.msra.mxu0 %v3572
        %3670 = vmatprep.subr.bf16.mxu0 %v3575
        %3671 = vmatpush1.bf16.msra.mxu0 %v3574
        %3672 = vmatprep.subr.bf16.mxu0 %v3577
        %3673 = vmatpush1.bf16.msra.mxu0 %v3576
        %3674 = vmatprep.subr.bf16.mxu0 %v3579
        %3675 = vmatpush1.bf16.msra.mxu0 %v3578
        %3676 = vmatprep.subr.bf16.mxu0 %v3581
        %3677 = vmatpush1.bf16.msra.mxu0 %v3580
        %3678 = vmatprep.subr.bf16.mxu0 %v3583
        %3679 = vmatpush1.bf16.msra.mxu0 %v3582
        %3680 = vmatprep.subr.bf16.mxu0 %v3585
        %3681 = vmatpush1.bf16.msra.mxu0 %v3584
        %3682 = vmatprep.mubr.bf16.mxu0 %v3337
        %3683 = vmatmul.mubr.bf16.gmra.mrb[0].mxu0 %v3336
        %v3684 = vpop.f32.mrb[0].mxu0
        %v3685 = vadd.f32 %v3403, %v3684
        %v3686 = vpop.f32.mrb[0].mxu0
        %v3687 = vadd.f32 %v3407, %v3686
        %v3688 = vpop.f32.mrb[0].mxu0
        %v3689 = vadd.f32 %v3403, %v3688
        %v3690 = vpop.f32.mrb[0].mxu0
        %v3691 = vadd.f32 %v3407, %v3690
        %3692 = vmatprep.mubr.bf16.mxu0 %v3340
        %3693 = vmatmul.mubr.bf16.gmra.mrb[0].mxu0 %v3339
        %v3694 = vpop.f32.mrb[0].mxu0
        %v3695 = vadd.f32 %v3403, %v3694
        %v3696 = vpop.f32.mrb[0].mxu0
        %v3697 = vadd.f32 %v3407, %v3696
        %v3698 = vpop.f32.mrb[0].mxu0
        %v3699 = vadd.f32 %v3403, %v3698
        %v3700 = vpop.f32.mrb[0].mxu0
        %v3701 = vadd.f32 %v3407, %v3700
        %3702 = vmatprep.mubr.bf16.mxu0 %v3343
        %3703 = vmatmul.mubr.bf16.gmra.mrb[0].mxu0 %v3342
        %v3704 = vpop.f32.mrb[0].mxu0
        %v3705 = vadd.f32 %v3403, %v3704
        %v3706 = vpop.f32.mrb[0].mxu0
        %v3707 = vadd.f32 %v3407, %v3706
        %v3708 = vpop.f32.mrb[0].mxu0
        %v3709 = vadd.f32 %v3403, %v3708
        %v3710 = vpop.f32.mrb[0].mxu0
        %v3711 = vadd.f32 %v3407, %v3710
        %3712 = vmatprep.mubr.bf16.mxu0 %v3346
        %3713 = vmatmul.mubr.bf16.gmra.mrb[0].mxu0 %v3345
        %v3714 = vpop.f32.mrb[0].mxu0
        %v3715 = vadd.f32 %v3403, %v3714
        %v3716 = vpop.f32.mrb[0].mxu0
        %v3717 = vadd.f32 %v3407, %v3716
        %v3718 = vpop.f32.mrb[0].mxu0
        %v3719 = vadd.f32 %v3403, %v3718
        %v3720 = vpop.f32.mrb[0].mxu0
        %v3721 = vadd.f32 %v3407, %v3720
        %3722 = vdwg.mxu0
        %3723 = vmatprep.subr.bf16.mxu0 %v3587
        %3724 = vmatpush1.bf16.msra.mxu0 %v3586
        %3725 = vmatprep.subr.bf16.mxu0 %v3589
        %3726 = vmatpush1.bf16.msra.mxu0 %v3588
        %3727 = vmatprep.subr.bf16.mxu0 %v3591
        %3728 = vmatpush1.bf16.msra.mxu0 %v3590
        %3729 = vmatprep.subr.bf16.mxu0 %v3593
        %3730 = vmatpush1.bf16.msra.mxu0 %v3592
        %3731 = vmatprep.subr.bf16.mxu0 %v3595
        %3732 = vmatpush1.bf16.msra.mxu0 %v3594
        %3733 = vmatprep.subr.bf16.mxu0 %v3597
        %3734 = vmatpush1.bf16.msra.mxu0 %v3596
        %3735 = vmatprep.subr.bf16.mxu0 %v3599
        %3736 = vmatpush1.bf16.msra.mxu0 %v3598
        %3737 = vmatprep.subr.bf16.mxu0 %v3601
        %3738 = vmatpush1.bf16.msra.mxu0 %v3600
        %3739 = vmatprep.subr.bf16.mxu0 0
        %3740 = vmatpush1.bf16.msra.mxu0 0
        %3741 = vmatprep.subr.bf16.mxu0 0
        %3742 = vmatpush1.bf16.msra.mxu0 0
        %3743 = vmatprep.subr.bf16.mxu0 0
        %3744 = vmatpush1.bf16.msra.mxu0 0
        %3745 = vmatprep.subr.bf16.mxu0 0
        %3746 = vmatpush1.bf16.msra.mxu0 0
        %3747 = vmatprep.subr.bf16.mxu0 0
        %3748 = vmatpush1.bf16.msra.mxu0 0
        %3749 = vmatprep.subr.bf16.mxu0 0
        %3750 = vmatpush1.bf16.msra.mxu0 0
        %3751 = vmatprep.subr.bf16.mxu0 0
        %3752 = vmatpush1.bf16.msra.mxu0 0
        %3753 = vmatprep.subr.bf16.mxu0 0
        %3754 = vmatpush1.bf16.msra.mxu0 0
        %3755 = vmatprep.mubr.bf16.mxu0 0
        %3756 = vmatmul.mubr.bf16.gmra.mrb[0].mxu0 %v3338
        %v3757 = vpop.f32.mrb[0].mxu0
        %v3758 = vadd.f32 %v3685, %v3757
        %v3759 = vpop.f32.mrb[0].mxu0
        %v3760 = vadd.f32 %v3687, %v3759
        %v3761 = vpop.f32.mrb[0].mxu0
        %v3762 = vadd.f32 %v3689, %v3761
        %v3763 = vpop.f32.mrb[0].mxu0
        %v3764 = vadd.f32 %v3691, %v3763
        %3765 = vmatprep.mubr.bf16.mxu0 0
        %3766 = vmatmul.mubr.bf16.gmra.mrb[0].mxu0 %v3341
        %v3767 = vpop.f32.mrb[0].mxu0
        %v3768 = vadd.f32 %v3695, %v3767
        %v3769 = vpop.f32.mrb[0].mxu0
        %v3770 = vadd.f32 %v3697, %v3769
        %v3771 = vpop.f32.mrb[0].mxu0
        %v3772 = vadd.f32 %v3699, %v3771
        %v3773 = vpop.f32.mrb[0].mxu0
        %v3774 = vadd.f32 %v3701, %v3773
        %3775 = vmatprep.mubr.bf16.mxu0 0
        %3776 = vmatmul.mubr.bf16.gmra.mrb[0].mxu0 %v3344
        %v3777 = vpop.f32.mrb[0].mxu0
        %v3778 = vadd.f32 %v3705, %v3777
        %v3779 = vpop.f32.mrb[0].mxu0
        %v3780 = vadd.f32 %v3707, %v3779
        %v3781 = vpop.f32.mrb[0].mxu0
        %v3782 = vadd.f32 %v3709, %v3781
        %v3783 = vpop.f32.mrb[0].mxu0
        %v3784 = vadd.f32 %v3711, %v3783
        %3785 = vmatprep.mubr.bf16.mxu0 0
        %3786 = vmatmul.mubr.bf16.gmra.mrb[0].mxu0 %v3347
        %v3787 = vpop.f32.mrb[0].mxu0
        %v3788 = vadd.f32 %v3715, %v3787
        %v3789 = vpop.f32.mrb[0].mxu0
        %v3790 = vadd.f32 %v3717, %v3789
        %v3791 = vpop.f32.mrb[0].mxu0
        %v3792 = vadd.f32 %v3719, %v3791
        %v3793 = vpop.f32.mrb[0].mxu0
        %v3794 = vadd.f32 %v3721, %v3793
        %3795 = vdwg.mxu0
        %v3796 = vmul.f32 %v3758, 0.5
        %v3797 = vmul.f32 %v3762, 0.5
        %v3798 = vmul.f32 %v3768, 0.5
        %v3799 = vmul.f32 %v3772, 0.5
        %v3800 = vmul.f32 %v3778, 0.5
        %v3801 = vmul.f32 %v3782, 0.5
        %v3802 = vmul.f32 %v3788, 0.5
        %v3803 = vmul.f32 %v3792, 0.5
        %v3804 = vtanh.pop %v3796
        %v3805 = vtanh.pop %v3797
        %v3806 = vtanh.pop %v3798
        %v3807 = vtanh.pop %v3799
        %v3808 = vtanh.pop %v3800
        %v3809 = vtanh.pop %v3801
        %v3810 = vtanh.pop %v3802
        %v3811 = vtanh.pop %v3803
        %v3812 = vadd.f32 %v3804, 1.0
        %v3813 = vadd.f32 %v3805, 1.0
        %v3814 = vadd.f32 %v3806, 1.0
        %v3815 = vadd.f32 %v3807, 1.0
        %v3816 = vadd.f32 %v3808, 1.0
        %v3817 = vadd.f32 %v3809, 1.0
        %v3818 = vadd.f32 %v3810, 1.0
        %v3819 = vadd.f32 %v3811, 1.0
        %v3820 = vmul.f32 %v3812, 0.5
        %v3821 = vmul.f32 %v3813, 0.5
        %v3822 = vmul.f32 %v3814, 0.5
        %v3823 = vmul.f32 %v3815, 0.5
        %v3824 = vmul.f32 %v3816, 0.5
        %v3825 = vmul.f32 %v3817, 0.5
        %v3826 = vmul.f32 %v3818, 0.5
        %v3827 = vmul.f32 %v3819, 0.5
        %v3828 = vsub.f32 %v3760, %v3280
        %v3829 = vsub.f32 %v3764, %v3281
        %v3830 = vsub.f32 %v3770, %v3282
        %v3831 = vsub.f32 %v3774, %v3283
        %v3832 = vsub.f32 %v3780, %v3284
        %v3833 = vsub.f32 %v3784, %v3285
        %v3834 = vsub.f32 %v3790, %v3286
        %v3835 = vsub.f32 %v3794, %v3287
        %v3836 = vmul.f32 %v3820, %v3828
        %v3837 = vmul.f32 %v3821, %v3829
        %v3838 = vmul.f32 %v3822, %v3830
        %v3839 = vmul.f32 %v3823, %v3831
        %v3840 = vmul.f32 %v3824, %v3832
        %v3841 = vmul.f32 %v3825, %v3833
        %v3842 = vmul.f32 %v3826, %v3834
        %v3843 = vmul.f32 %v3827, %v3835
        %v3844 = vadd.f32 %v3280, %v3836
        %v3845 = vadd.f32 %v3281, %v3837
        %v3846 = vadd.f32 %v3282, %v3838
        %v3847 = vadd.f32 %v3283, %v3839
        %v3848 = vadd.f32 %v3284, %v3840
        %v3849 = vadd.f32 %v3285, %v3841
        %v3850 = vadd.f32 %v3286, %v3842
        %v3851 = vadd.f32 %v3287, %v3843
        %v3852 = vrot.slane %v3844, 5
        %v3853 = vrot.slane %v3845, 5
        %v3854 = vrot.slane %v3846, 5
        %v3855 = vrot.slane %v3847, 5
        %v3856 = vrot.slane %v3848, 5
        %v3857 = vrot.slane %v3849, 5
        %v3858 = vrot.slane %v3850, 5
        %v3859 = vrot.slane %v3851, 5
        %v3860 = vsel %vm1602, %v3858, %v3859
        %v3861 = vsel %vm1602, %v3857, %v3858
        %v3862 = vsel %vm1602, %v3856, %v3857
        %v3863 = vsel %vm1602, %v3855, %v3856
        %v3864 = vsel %vm1602, %v3854, %v3855
        %v3865 = vsel %vm1602, %v3853, %v3854
        %v3866 = vsel %vm1602, %v3852, %v3853
        %v3867 = vsel %vm1602, %v3859, %v3852
        %v3868 = vsel %vm982, %v3867, 0.0
        %v3869 = vsel %vm983, %v3866, 0.0
        %v3870 = vsel %vm984, %v3865, 0.0
        %v3871 = vsel %vm985, %v3864, 0.0
        %v3872 = vsel %vm986, %v3863, 0.0
        %v3873 = vsel %vm987, %v3862, 0.0
        %v3874 = vsel %vm988, %v3861, 0.0
        %v3875 = vsel %vm989, %v3860, 0.0
        %v3876 = vrot.slane %v3844, 3
        %v3877 = vrot.slane %v3845, 3
        %v3878 = vrot.slane %v3846, 3
        %v3879 = vrot.slane %v3847, 3
        %v3880 = vrot.slane %v3848, 3
        %v3881 = vrot.slane %v3849, 3
        %v3882 = vrot.slane %v3850, 3
        %v3883 = vrot.slane %v3851, 3
        %v3884 = vsel %vm1627, %v3882, %v3883
        %v3885 = vsel %vm1627, %v3881, %v3882
        %v3886 = vsel %vm1627, %v3880, %v3881
        %v3887 = vsel %vm1627, %v3879, %v3880
        %v3888 = vsel %vm1627, %v3878, %v3879
        %v3889 = vsel %vm1627, %v3877, %v3878
        %v3890 = vsel %vm1627, %v3876, %v3877
        %v3891 = vsel %vm1627, %v3883, %v3876
        %v3892 = vsel %vm990, %v3890, 0.0
        %v3893 = vsel %vm991, %v3889, 0.0
        %v3894 = vsel %vm992, %v3888, 0.0
        %v3895 = vsel %vm993, %v3887, 0.0
        %v3896 = vsel %vm994, %v3886, 0.0
        %v3897 = vsel %vm995, %v3885, 0.0
        %v3898 = vsel %vm996, %v3884, 0.0
        %v3899 = vsel %vm997, %v3891, 0.0
        %v3900 = vpack.c.bf16 %v3869, %v3868
        %v3901 = vpack.c.bf16 %v3845, %v3844
        %v3902 = vpack.c.bf16 %v3893, %v3892
        %v3903 = vpack.c.bf16 %v3871, %v3870
        %v3904 = vpack.c.bf16 %v3847, %v3846
        %v3905 = vpack.c.bf16 %v3895, %v3894
        %v3906 = vpack.c.bf16 %v3873, %v3872
        %v3907 = vpack.c.bf16 %v3849, %v3848
        %v3908 = vpack.c.bf16 %v3897, %v3896
        %v3909 = vpack.c.bf16 %v3875, %v3874
        %v3910 = vpack.c.bf16 %v3851, %v3850
        %v3911 = vpack.c.bf16 %v3899, %v3898
        %s3912 = scalar_lea.vmem [#allocation11], 1920
        %v3913 = vld [vmem:[%s3912] sm:$0xff]
        %v3914 = vld [vmem:[%s3912 + $0x8] sm:$0xff]
        %v3915 = vld [vmem:[%s3912 + $0x10] sm:$0xff]
        %v3916 = vld [vmem:[%s3912 + $0x18] sm:$0xff]
        %v3917 = vld [vmem:[%s3912 + $0x20] sm:$0xff]
        %v3918 = vld [vmem:[%s3912 + $0x28] sm:$0xff]
        %v3919 = vld [vmem:[%s3912 + $0x30] sm:$0xff]
        %v3920 = vld [vmem:[%s3912 + $0x38] sm:$0xff]
        %v3921 = vld [vmem:[%s3912 + $0x40] sm:$0xff]
        %v3922 = vld [vmem:[%s3912 + $0x48] sm:$0xff]
        %v3923 = vld [vmem:[%s3912 + $0x50] sm:$0xff]
        %v3924 = vld [vmem:[%s3912 + $0x58] sm:$0xff]
        %v3925 = vld [vmem:[%s3912 + $0x60] sm:$0xff]
        %v3926 = vld [vmem:[%s3912 + $0x68] sm:$0xff]
        %v3927 = vld [vmem:[%s3912 + $0x70] sm:$0xff]
        %v3928 = vld [vmem:[%s3912 + $0x78] sm:$0xff]
        %v3929 = vld [vmem:[%s3912 + $0x80] sm:$0xff]
        %v3930 = vld [vmem:[%s3912 + $0x88] sm:$0xff]
        %v3931 = vld [vmem:[%s3912 + $0x90] sm:$0xff]
        %v3932 = vld [vmem:[%s3912 + $0x98] sm:$0xff]
        %v3933 = vld [vmem:[%s3912 + $0xa0] sm:$0xff]
        %v3934 = vld [vmem:[%s3912 + $0xa8] sm:$0xff]
        %v3935 = vld [vmem:[%s3912 + $0xb0] sm:$0xff]
        %v3936 = vld [vmem:[%s3912 + $0xb8] sm:$0xff]
        %v3937 = vld [vmem:[%s3912 + $0xc0] sm:$0xff]
        %v3938 = vld [vmem:[%s3912 + $0xc8] sm:$0xff]
        %v3939 = vld [vmem:[%s3912 + $0xd0] sm:$0xff]
        %v3940 = vld [vmem:[%s3912 + $0xd8] sm:$0xff]
        %v3941 = vld [vmem:[%s3912 + $0xe0] sm:$0xff]
        %v3942 = vld [vmem:[%s3912 + $0xe8] sm:$0xff]
        %v3943 = vld [vmem:[%s3912 + $0xf0] sm:$0xff]
        %v3944 = vld [vmem:[%s3912 + $0xf8] sm:$0xff]
        %v3945 = vld [vmem:[%s3912 + $0x100] sm:$0xff]
        %v3946 = vld [vmem:[%s3912 + $0x108] sm:$0xff]
        %v3947 = vld [vmem:[%s3912 + $0x110] sm:$0xff]
        %v3948 = vld [vmem:[%s3912 + $0x118] sm:$0xff]
        %v3949 = vld [vmem:[%s3912 + $0x120] sm:$0xff]
        %v3950 = vld [vmem:[%s3912 + $0x128] sm:$0xff]
        %v3951 = vld [vmem:[%s3912 + $0x130] sm:$0xff]
        %v3952 = vld [vmem:[%s3912 + $0x138] sm:$0xff]
        %v3953 = vld [vmem:[%s3912 + $0x140] sm:$0xff]
        %v3954 = vld [vmem:[%s3912 + $0x148] sm:$0xff]
        %v3955 = vld [vmem:[%s3912 + $0x150] sm:$0xff]
        %v3956 = vld [vmem:[%s3912 + $0x158] sm:$0xff]
        %v3957 = vld [vmem:[%s3912 + $0x160] sm:$0xff]
        %v3958 = vld [vmem:[%s3912 + $0x168] sm:$0xff]
        %v3959 = vld [vmem:[%s3912 + $0x170] sm:$0xff]
        %v3960 = vld [vmem:[%s3912 + $0x178] sm:$0xff]
        %s3961 = scalar_lea.vmem [#allocation13], 10
        %v3962 = vld [vmem:[%s3961] sm:$0x3]
        %v3964 = vlaneseq
        %v3965 = vshrl.u32 %v3964, 7
        %v3966 = vsub.s32 0, %v3965
        %v3967 = vrot.slane %v3962, %v3966
        %v3968 = vlaneseq
        %v3969 = vshrl.u32 %v3968, 7
        %v3970 = vsub.s32 1, %v3969
        %v3971 = vrot.slane %v3962, %v3970
        %v4022 = vunpack.c.l.b16 %v3913
        %v4023 = vunpack.c.h.b16 %v3913
        %v4024 = vunpack.c.l.b16 %v3914
        %v4025 = vunpack.c.h.b16 %v3914
        %v4026 = vunpack.c.l.b16 %v3915
        %v4027 = vunpack.c.h.b16 %v3915
        %v4028 = vunpack.c.l.b16 %v3916
        %v4029 = vunpack.c.h.b16 %v3916
        %v4030 = vunpack.c.l.b16 %v3917
        %v4031 = vunpack.c.h.b16 %v3917
        %v4032 = vunpack.c.l.b16 %v3918
        %v4033 = vunpack.c.h.b16 %v3918
        %v4034 = vunpack.c.l.b16 %v3919
        %v4035 = vunpack.c.h.b16 %v3919
        %v4036 = vunpack.c.l.b16 %v3920
        %v4037 = vunpack.c.h.b16 %v3920
        %v4038 = vunpack.c.l.b16 %v3921
        %v4039 = vunpack.c.h.b16 %v3921
        %v4040 = vunpack.c.l.b16 %v3922
        %v4041 = vunpack.c.h.b16 %v3922
        %v4042 = vunpack.c.l.b16 %v3923
        %v4043 = vunpack.c.h.b16 %v3923
        %v4044 = vunpack.c.l.b16 %v3924
        %v4045 = vunpack.c.h.b16 %v3924
        %v4046 = vunpack.c.l.b16 %v3925
        %v4047 = vunpack.c.h.b16 %v3925
        %v4048 = vunpack.c.l.b16 %v3926
        %v4049 = vunpack.c.h.b16 %v3926
        %v4050 = vunpack.c.l.b16 %v3927
        %v4051 = vunpack.c.h.b16 %v3927
        %v4052 = vunpack.c.l.b16 %v3928
        %v4053 = vunpack.c.h.b16 %v3928
        %v4054 = vunpack.c.l.b16 %v3929
        %v4055 = vunpack.c.h.b16 %v3929
        %v4056 = vunpack.c.l.b16 %v3930
        %v4057 = vunpack.c.h.b16 %v3930
        %v4058 = vunpack.c.l.b16 %v3931
        %v4059 = vunpack.c.h.b16 %v3931
        %v4060 = vunpack.c.l.b16 %v3932
        %v4061 = vunpack.c.h.b16 %v3932
        %v4062 = vunpack.c.l.b16 %v3933
        %v4063 = vunpack.c.h.b16 %v3933
        %v4064 = vunpack.c.l.b16 %v3934
        %v4065 = vunpack.c.h.b16 %v3934
        %v4066 = vunpack.c.l.b16 %v3935
        %v4067 = vunpack.c.h.b16 %v3935
        %v4068 = vunpack.c.l.b16 %v3936
        %v4069 = vunpack.c.h.b16 %v3936
        %v4070 = vunpack.c.l.b16 %v3937
        %v4071 = vunpack.c.h.b16 %v3937
        %v4072 = vunpack.c.l.b16 %v3938
        %v4073 = vunpack.c.h.b16 %v3938
        %v4074 = vunpack.c.l.b16 %v3939
        %v4075 = vunpack.c.h.b16 %v3939
        %v4076 = vunpack.c.l.b16 %v3940
        %v4077 = vunpack.c.h.b16 %v3940
        %v4078 = vunpack.c.l.b16 %v3941
        %v4079 = vunpack.c.h.b16 %v3941
        %v4080 = vunpack.c.l.b16 %v3942
        %v4081 = vunpack.c.h.b16 %v3942
        %v4082 = vunpack.c.l.b16 %v3943
        %v4083 = vunpack.c.h.b16 %v3943
        %v4084 = vunpack.c.l.b16 %v3944
        %v4085 = vunpack.c.h.b16 %v3944
        %v4086 = vunpack.c.l.b16 %v3945
        %v4087 = vunpack.c.h.b16 %v3945
        %v4088 = vunpack.c.l.b16 %v3946
        %v4089 = vunpack.c.h.b16 %v3946
        %v4090 = vunpack.c.l.b16 %v3947
        %v4091 = vunpack.c.h.b16 %v3947
        %v4092 = vunpack.c.l.b16 %v3948
        %v4093 = vunpack.c.h.b16 %v3948
        %v4094 = vunpack.c.l.b16 %v3949
        %v4095 = vunpack.c.h.b16 %v3949
        %v4096 = vunpack.c.l.b16 %v3950
        %v4097 = vunpack.c.h.b16 %v3950
        %v4098 = vunpack.c.l.b16 %v3951
        %v4099 = vunpack.c.h.b16 %v3951
        %v4100 = vunpack.c.l.b16 %v3952
        %v4101 = vunpack.c.h.b16 %v3952
        %v4102 = vunpack.c.l.b16 %v3953
        %v4103 = vunpack.c.h.b16 %v3953
        %v4104 = vunpack.c.l.b16 %v3954
        %v4105 = vunpack.c.h.b16 %v3954
        %v4106 = vunpack.c.l.b16 %v3955
        %v4107 = vunpack.c.h.b16 %v3955
        %v4108 = vunpack.c.l.b16 %v3956
        %v4109 = vunpack.c.h.b16 %v3956
        %v4110 = vunpack.c.l.b16 %v3957
        %v4111 = vunpack.c.h.b16 %v3957
        %v4112 = vunpack.c.l.b16 %v3958
        %v4113 = vunpack.c.h.b16 %v3958
        %v4114 = vunpack.c.l.b16 %v3959
        %v4115 = vunpack.c.h.b16 %v3959
        %v4116 = vunpack.c.l.b16 %v3960
        %v4117 = vunpack.c.h.b16 %v3960
        %v4118 = vpack.c.b16 %v4024, %v4022
        %v4119 = vpack.c.b16 %v4025, %v4023
        %v4120 = vpack.c.b16 %v4028, %v4026
        %v4121 = vpack.c.b16 %v4029, %v4027
        %v4122 = vpack.c.b16 %v4032, %v4030
        %v4123 = vpack.c.b16 %v4033, %v4031
        %v4124 = vpack.c.b16 %v4036, %v4034
        %v4125 = vpack.c.b16 %v4037, %v4035
        %v4126 = vpack.c.b16 %v4040, %v4038
        %v4127 = vpack.c.b16 %v4041, %v4039
        %v4128 = vpack.c.b16 %v4044, %v4042
        %v4129 = vpack.c.b16 %v4045, %v4043
        %v4130 = vpack.c.b16 %v4048, %v4046
        %v4131 = vpack.c.b16 %v4049, %v4047
        %v4132 = vpack.c.b16 %v4052, %v4050
        %v4133 = vpack.c.b16 %v4053, %v4051
        %v4134 = vpack.c.b16 %v4056, %v4054
        %v4135 = vpack.c.b16 %v4057, %v4055
        %v4136 = vpack.c.b16 %v4060, %v4058
        %v4137 = vpack.c.b16 %v4061, %v4059
        %v4138 = vpack.c.b16 %v4064, %v4062
        %v4139 = vpack.c.b16 %v4065, %v4063
        %v4140 = vpack.c.b16 %v4068, %v4066
        %v4141 = vpack.c.b16 %v4069, %v4067
        %v4142 = vpack.c.b16 %v4072, %v4070
        %v4143 = vpack.c.b16 %v4073, %v4071
        %v4144 = vpack.c.b16 %v4076, %v4074
        %v4145 = vpack.c.b16 %v4077, %v4075
        %v4146 = vpack.c.b16 %v4080, %v4078
        %v4147 = vpack.c.b16 %v4081, %v4079
        %v4148 = vpack.c.b16 %v4084, %v4082
        %v4149 = vpack.c.b16 %v4085, %v4083
        %v4150 = vpack.c.b16 %v4088, %v4086
        %v4151 = vpack.c.b16 %v4089, %v4087
        %v4152 = vpack.c.b16 %v4092, %v4090
        %v4153 = vpack.c.b16 %v4093, %v4091
        %v4154 = vpack.c.b16 %v4096, %v4094
        %v4155 = vpack.c.b16 %v4097, %v4095
        %v4156 = vpack.c.b16 %v4100, %v4098
        %v4157 = vpack.c.b16 %v4101, %v4099
        %v4158 = vpack.c.b16 %v4104, %v4102
        %v4159 = vpack.c.b16 %v4105, %v4103
        %v4160 = vpack.c.b16 %v4108, %v4106
        %v4161 = vpack.c.b16 %v4109, %v4107
        %v4162 = vpack.c.b16 %v4112, %v4110
        %v4163 = vpack.c.b16 %v4113, %v4111
        %v4164 = vpack.c.b16 %v4116, %v4114
        %v4165 = vpack.c.b16 %v4117, %v4115
        %4214 = vmatprep.subr.bf16.mxu0 %v4119
        %4215 = vmatpush1.bf16.msra.mxu0 %v4118
        %4216 = vmatprep.subr.bf16.mxu0 %v4121
        %4217 = vmatpush1.bf16.msra.mxu0 %v4120
        %4218 = vmatprep.subr.bf16.mxu0 %v4123
        %4219 = vmatpush1.bf16.msra.mxu0 %v4122
        %4220 = vmatprep.subr.bf16.mxu0 %v4125
        %4221 = vmatpush1.bf16.msra.mxu0 %v4124
        %4222 = vmatprep.subr.bf16.mxu0 %v4127
        %4223 = vmatpush1.bf16.msra.mxu0 %v4126
        %4224 = vmatprep.subr.bf16.mxu0 %v4129
        %4225 = vmatpush1.bf16.msra.mxu0 %v4128
        %4226 = vmatprep.subr.bf16.mxu0 %v4131
        %4227 = vmatpush1.bf16.msra.mxu0 %v4130
        %4228 = vmatprep.subr.bf16.mxu0 %v4133
        %4229 = vmatpush1.bf16.msra.mxu0 %v4132
        %4230 = vmatprep.subr.bf16.mxu0 %v4135
        %4231 = vmatpush1.bf16.msra.mxu0 %v4134
        %4232 = vmatprep.subr.bf16.mxu0 %v4137
        %4233 = vmatpush1.bf16.msra.mxu0 %v4136
        %4234 = vmatprep.subr.bf16.mxu0 %v4139
        %4235 = vmatpush1.bf16.msra.mxu0 %v4138
        %4236 = vmatprep.subr.bf16.mxu0 %v4141
        %4237 = vmatpush1.bf16.msra.mxu0 %v4140
        %4238 = vmatprep.subr.bf16.mxu0 %v4143
        %4239 = vmatpush1.bf16.msra.mxu0 %v4142
        %4240 = vmatprep.subr.bf16.mxu0 %v4145
        %4241 = vmatpush1.bf16.msra.mxu0 %v4144
        %4242 = vmatprep.subr.bf16.mxu0 %v4147
        %4243 = vmatpush1.bf16.msra.mxu0 %v4146
        %4244 = vmatprep.subr.bf16.mxu0 %v4149
        %4245 = vmatpush1.bf16.msra.mxu0 %v4148
        %4246 = vmatprep.mubr.bf16.mxu0 %v3901
        %4247 = vmatmul.mubr.bf16.gmra.mrb[0].mxu0 %v3900
        %v4248 = vpop.f32.mrb[0].mxu0
        %v4249 = vadd.f32 %v3967, %v4248
        %v4250 = vpop.f32.mrb[0].mxu0
        %v4251 = vadd.f32 %v3971, %v4250
        %v4252 = vpop.f32.mrb[0].mxu0
        %v4253 = vadd.f32 %v3967, %v4252
        %v4254 = vpop.f32.mrb[0].mxu0
        %v4255 = vadd.f32 %v3971, %v4254
        %4256 = vmatprep.mubr.bf16.mxu0 %v3904
        %4257 = vmatmul.mubr.bf16.gmra.mrb[0].mxu0 %v3903
        %v4258 = vpop.f32.mrb[0].mxu0
        %v4259 = vadd.f32 %v3967, %v4258
        %v4260 = vpop.f32.mrb[0].mxu0
        %v4261 = vadd.f32 %v3971, %v4260
        %v4262 = vpop.f32.mrb[0].mxu0
        %v4263 = vadd.f32 %v3967, %v4262
        %v4264 = vpop.f32.mrb[0].mxu0
        %v4265 = vadd.f32 %v3971, %v4264
        %4266 = vmatprep.mubr.bf16.mxu0 %v3907
        %4267 = vmatmul.mubr.bf16.gmra.mrb[0].mxu0 %v3906
        %v4268 = vpop.f32.mrb[0].mxu0
        %v4269 = vadd.f32 %v3967, %v4268
        %v4270 = vpop.f32.mrb[0].mxu0
        %v4271 = vadd.f32 %v3971, %v4270
        %v4272 = vpop.f32.mrb[0].mxu0
        %v4273 = vadd.f32 %v3967, %v4272
        %v4274 = vpop.f32.mrb[0].mxu0
        %v4275 = vadd.f32 %v3971, %v4274
        %4276 = vmatprep.mubr.bf16.mxu0 %v3910
        %4277 = vmatmul.mubr.bf16.gmra.mrb[0].mxu0 %v3909
        %v4278 = vpop.f32.mrb[0].mxu0
        %v4279 = vadd.f32 %v3967, %v4278
        %v4280 = vpop.f32.mrb[0].mxu0
        %v4281 = vadd.f32 %v3971, %v4280
        %v4282 = vpop.f32.mrb[0].mxu0
        %v4283 = vadd.f32 %v3967, %v4282
        %v4284 = vpop.f32.mrb[0].mxu0
        %v4285 = vadd.f32 %v3971, %v4284
        %4286 = vdwg.mxu0
        %4287 = vmatprep.subr.bf16.mxu0 %v4151
        %4288 = vmatpush1.bf16.msra.mxu0 %v4150
        %4289 = vmatprep.subr.bf16.mxu0 %v4153
        %4290 = vmatpush1.bf16.msra.mxu0 %v4152
        %4291 = vmatprep.subr.bf16.mxu0 %v4155
        %4292 = vmatpush1.bf16.msra.mxu0 %v4154
        %4293 = vmatprep.subr.bf16.mxu0 %v4157
        %4294 = vmatpush1.bf16.msra.mxu0 %v4156
        %4295 = vmatprep.subr.bf16.mxu0 %v4159
        %4296 = vmatpush1.bf16.msra.mxu0 %v4158
        %4297 = vmatprep.subr.bf16.mxu0 %v4161
        %4298 = vmatpush1.bf16.msra.mxu0 %v4160
        %4299 = vmatprep.subr.bf16.mxu0 %v4163
        %4300 = vmatpush1.bf16.msra.mxu0 %v4162
        %4301 = vmatprep.subr.bf16.mxu0 %v4165
        %4302 = vmatpush1.bf16.msra.mxu0 %v4164
        %4303 = vmatprep.subr.bf16.mxu0 0
        %4304 = vmatpush1.bf16.msra.mxu0 0
        %4305 = vmatprep.subr.bf16.mxu0 0
        %4306 = vmatpush1.bf16.msra.mxu0 0
        %4307 = vmatprep.subr.bf16.mxu0 0
        %4308 = vmatpush1.bf16.msra.mxu0 0
        %4309 = vmatprep.subr.bf16.mxu0 0
        %4310 = vmatpush1.bf16.msra.mxu0 0
        %4311 = vmatprep.subr.bf16.mxu0 0
        %4312 = vmatpush1.bf16.msra.mxu0 0
        %4313 = vmatprep.subr.bf16.mxu0 0
        %4314 = vmatpush1.bf16.msra.mxu0 0
        %4315 = vmatprep.subr.bf16.mxu0 0
        %4316 = vmatpush1.bf16.msra.mxu0 0
        %4317 = vmatprep.subr.bf16.mxu0 0
        %4318 = vmatpush1.bf16.msra.mxu0 0
        %4319 = vmatprep.mubr.bf16.mxu0 0
        %4320 = vmatmul.mubr.bf16.gmra.mrb[0].mxu0 %v3902
        %v4321 = vpop.f32.mrb[0].mxu0
        %v4322 = vadd.f32 %v4249, %v4321
        %v4323 = vpop.f32.mrb[0].mxu0
        %v4324 = vadd.f32 %v4251, %v4323
        %v4325 = vpop.f32.mrb[0].mxu0
        %v4326 = vadd.f32 %v4253, %v4325
        %v4327 = vpop.f32.mrb[0].mxu0
        %v4328 = vadd.f32 %v4255, %v4327
        %4329 = vmatprep.mubr.bf16.mxu0 0
        %4330 = vmatmul.mubr.bf16.gmra.mrb[0].mxu0 %v3905
        %v4331 = vpop.f32.mrb[0].mxu0
        %v4332 = vadd.f32 %v4259, %v4331
        %v4333 = vpop.f32.mrb[0].mxu0
        %v4334 = vadd.f32 %v4261, %v4333
        %v4335 = vpop.f32.mrb[0].mxu0
        %v4336 = vadd.f32 %v4263, %v4335
        %v4337 = vpop.f32.mrb[0].mxu0
        %v4338 = vadd.f32 %v4265, %v4337
        %4339 = vmatprep.mubr.bf16.mxu0 0
        %4340 = vmatmul.mubr.bf16.gmra.mrb[0].mxu0 %v3908
        %v4341 = vpop.f32.mrb[0].mxu0
        %v4342 = vadd.f32 %v4269, %v4341
        %v4343 = vpop.f32.mrb[0].mxu0
        %v4344 = vadd.f32 %v4271, %v4343
        %v4345 = vpop.f32.mrb[0].mxu0
        %v4346 = vadd.f32 %v4273, %v4345
        %v4347 = vpop.f32.mrb[0].mxu0
        %v4348 = vadd.f32 %v4275, %v4347
        %4349 = vmatprep.mubr.bf16.mxu0 0
        %4350 = vmatmul.mubr.bf16.gmra.mrb[0].mxu0 %v3911
        %v4351 = vpop.f32.mrb[0].mxu0
        %v4352 = vadd.f32 %v4279, %v4351
        %v4353 = vpop.f32.mrb[0].mxu0
        %v4354 = vadd.f32 %v4281, %v4353
        %v4355 = vpop.f32.mrb[0].mxu0
        %v4356 = vadd.f32 %v4283, %v4355
        %v4357 = vpop.f32.mrb[0].mxu0
        %v4358 = vadd.f32 %v4285, %v4357
        %4359 = vdwg.mxu0
        %v4360 = vmul.f32 %v4322, 0.5
        %v4361 = vmul.f32 %v4326, 0.5
        %v4362 = vmul.f32 %v4332, 0.5
        %v4363 = vmul.f32 %v4336, 0.5
        %v4364 = vmul.f32 %v4342, 0.5
        %v4365 = vmul.f32 %v4346, 0.5
        %v4366 = vmul.f32 %v4352, 0.5
        %v4367 = vmul.f32 %v4356, 0.5
        %v4368 = vtanh.pop %v4360
        %v4369 = vtanh.pop %v4361
        %v4370 = vtanh.pop %v4362
        %v4371 = vtanh.pop %v4363
        %v4372 = vtanh.pop %v4364
        %v4373 = vtanh.pop %v4365
        %v4374 = vtanh.pop %v4366
        %v4375 = vtanh.pop %v4367
        %v4376 = vadd.f32 %v4368, 1.0
        %v4377 = vadd.f32 %v4369, 1.0
        %v4378 = vadd.f32 %v4370, 1.0
        %v4379 = vadd.f32 %v4371, 1.0
        %v4380 = vadd.f32 %v4372, 1.0
        %v4381 = vadd.f32 %v4373, 1.0
        %v4382 = vadd.f32 %v4374, 1.0
        %v4383 = vadd.f32 %v4375, 1.0
        %v4384 = vmul.f32 %v4376, 0.5
        %v4385 = vmul.f32 %v4377, 0.5
        %v4386 = vmul.f32 %v4378, 0.5
        %v4387 = vmul.f32 %v4379, 0.5
        %v4388 = vmul.f32 %v4380, 0.5
        %v4389 = vmul.f32 %v4381, 0.5
        %v4390 = vmul.f32 %v4382, 0.5
        %v4391 = vmul.f32 %v4383, 0.5
        %v4392 = vsub.f32 %v4324, %v3844
        %v4393 = vsub.f32 %v4328, %v3845
        %v4394 = vsub.f32 %v4334, %v3846
        %v4395 = vsub.f32 %v4338, %v3847
        %v4396 = vsub.f32 %v4344, %v3848
        %v4397 = vsub.f32 %v4348, %v3849
        %v4398 = vsub.f32 %v4354, %v3850
        %v4399 = vsub.f32 %v4358, %v3851
        %v4400 = vmul.f32 %v4384, %v4392
        %v4401 = vmul.f32 %v4385, %v4393
        %v4402 = vmul.f32 %v4386, %v4394
        %v4403 = vmul.f32 %v4387, %v4395
        %v4404 = vmul.f32 %v4388, %v4396
        %v4405 = vmul.f32 %v4389, %v4397
        %v4406 = vmul.f32 %v4390, %v4398
        %v4407 = vmul.f32 %v4391, %v4399
        %v4408 = vadd.f32 %v3844, %v4400
        %v4409 = vadd.f32 %v3845, %v4401
        %v4410 = vadd.f32 %v3846, %v4402
        %v4411 = vadd.f32 %v3847, %v4403
        %v4412 = vadd.f32 %v3848, %v4404
        %v4413 = vadd.f32 %v3849, %v4405
        %v4414 = vadd.f32 %v3850, %v4406
        %v4415 = vadd.f32 %v3851, %v4407
        %v4416 = vrot.slane %v4408, 7
        %v4417 = vrot.slane %v4409, 7
        %v4418 = vrot.slane %v4410, 7
        %v4419 = vrot.slane %v4411, 7
        %v4420 = vrot.slane %v4412, 7
        %v4421 = vrot.slane %v4413, 7
        %v4422 = vrot.slane %v4414, 7
        %v4423 = vrot.slane %v4415, 7
        %v4424 = vsel %vm1038, %v4422, %v4423
        %v4425 = vsel %vm1038, %v4421, %v4422
        %v4426 = vsel %vm1038, %v4420, %v4421
        %v4427 = vsel %vm1038, %v4419, %v4420
        %v4428 = vsel %vm1038, %v4418, %v4419
        %v4429 = vsel %vm1038, %v4417, %v4418
        %v4430 = vsel %vm1038, %v4416, %v4417
        %v4431 = vsel %vm1038, %v4423, %v4416
        %v4432 = vsel %vm998, %v4424, 0.0
        %v4433 = vsel %vm999, %v4431, 0.0
        %v4434 = vsel %vm1000, %v4430, 0.0
        %v4435 = vsel %vm1001, %v4429, 0.0
        %v4436 = vsel %vm1002, %v4428, 0.0
        %v4437 = vsel %vm1003, %v4427, 0.0
        %v4438 = vsel %vm1004, %v4426, 0.0
        %v4439 = vsel %vm1005, %v4425, 0.0
        %v4440 = vrot.slane %v4408, 1
        %v4441 = vrot.slane %v4409, 1
        %v4442 = vrot.slane %v4410, 1
        %v4443 = vrot.slane %v4411, 1
        %v4444 = vrot.slane %v4412, 1
        %v4445 = vrot.slane %v4413, 1
        %v4446 = vrot.slane %v4414, 1
        %v4447 = vrot.slane %v4415, 1
        %v4448 = vsel %vm1063, %v4446, %v4447
        %v4449 = vsel %vm1063, %v4445, %v4446
        %v4450 = vsel %vm1063, %v4444, %v4445
        %v4451 = vsel %vm1063, %v4443, %v4444
        %v4452 = vsel %vm1063, %v4442, %v4443
        %v4453 = vsel %vm1063, %v4441, %v4442
        %v4454 = vsel %vm1063, %v4440, %v4441
        %v4455 = vsel %vm1063, %v4447, %v4440
        %v4456 = vsel %vm1006, %v4453, 0.0
        %v4457 = vsel %vm1007, %v4452, 0.0
        %v4458 = vsel %vm1008, %v4451, 0.0
        %v4459 = vsel %vm1009, %v4450, 0.0
        %v4460 = vsel %vm1010, %v4449, 0.0
        %v4461 = vsel %vm1011, %v4448, 0.0
        %v4462 = vsel %vm1012, %v4455, 0.0
        %v4463 = vsel %vm1013, %v4454, 0.0
        %v4464 = vpack.c.bf16 %v4433, %v4432
        %v4465 = vpack.c.bf16 %v4409, %v4408
        %v4466 = vpack.c.bf16 %v4457, %v4456
        %v4467 = vpack.c.bf16 %v4435, %v4434
        %v4468 = vpack.c.bf16 %v4411, %v4410
        %v4469 = vpack.c.bf16 %v4459, %v4458
        %v4470 = vpack.c.bf16 %v4437, %v4436
        %v4471 = vpack.c.bf16 %v4413, %v4412
        %v4472 = vpack.c.bf16 %v4461, %v4460
        %v4473 = vpack.c.bf16 %v4439, %v4438
        %v4474 = vpack.c.bf16 %v4415, %v4414
        %v4475 = vpack.c.bf16 %v4463, %v4462
        %s4476 = scalar_lea.vmem [#allocation11], 2304
        %v4477 = vld [vmem:[%s4476] sm:$0xff]
        %v4478 = vld [vmem:[%s4476 + $0x8] sm:$0xff]
        %v4479 = vld [vmem:[%s4476 + $0x10] sm:$0xff]
        %v4480 = vld [vmem:[%s4476 + $0x18] sm:$0xff]
        %v4481 = vld [vmem:[%s4476 + $0x20] sm:$0xff]
        %v4482 = vld [vmem:[%s4476 + $0x28] sm:$0xff]
        %v4483 = vld [vmem:[%s4476 + $0x30] sm:$0xff]
        %v4484 = vld [vmem:[%s4476 + $0x38] sm:$0xff]
        %v4485 = vld [vmem:[%s4476 + $0x40] sm:$0xff]
        %v4486 = vld [vmem:[%s4476 + $0x48] sm:$0xff]
        %v4487 = vld [vmem:[%s4476 + $0x50] sm:$0xff]
        %v4488 = vld [vmem:[%s4476 + $0x58] sm:$0xff]
        %v4489 = vld [vmem:[%s4476 + $0x60] sm:$0xff]
        %v4490 = vld [vmem:[%s4476 + $0x68] sm:$0xff]
        %v4491 = vld [vmem:[%s4476 + $0x70] sm:$0xff]
        %v4492 = vld [vmem:[%s4476 + $0x78] sm:$0xff]
        %v4493 = vld [vmem:[%s4476 + $0x80] sm:$0xff]
        %v4494 = vld [vmem:[%s4476 + $0x88] sm:$0xff]
        %v4495 = vld [vmem:[%s4476 + $0x90] sm:$0xff]
        %v4496 = vld [vmem:[%s4476 + $0x98] sm:$0xff]
        %v4497 = vld [vmem:[%s4476 + $0xa0] sm:$0xff]
        %v4498 = vld [vmem:[%s4476 + $0xa8] sm:$0xff]
        %v4499 = vld [vmem:[%s4476 + $0xb0] sm:$0xff]
        %v4500 = vld [vmem:[%s4476 + $0xb8] sm:$0xff]
        %v4501 = vld [vmem:[%s4476 + $0xc0] sm:$0xff]
        %v4502 = vld [vmem:[%s4476 + $0xc8] sm:$0xff]
        %v4503 = vld [vmem:[%s4476 + $0xd0] sm:$0xff]
        %v4504 = vld [vmem:[%s4476 + $0xd8] sm:$0xff]
        %v4505 = vld [vmem:[%s4476 + $0xe0] sm:$0xff]
        %v4506 = vld [vmem:[%s4476 + $0xe8] sm:$0xff]
        %v4507 = vld [vmem:[%s4476 + $0xf0] sm:$0xff]
        %v4508 = vld [vmem:[%s4476 + $0xf8] sm:$0xff]
        %v4509 = vld [vmem:[%s4476 + $0x100] sm:$0xff]
        %v4510 = vld [vmem:[%s4476 + $0x108] sm:$0xff]
        %v4511 = vld [vmem:[%s4476 + $0x110] sm:$0xff]
        %v4512 = vld [vmem:[%s4476 + $0x118] sm:$0xff]
        %v4513 = vld [vmem:[%s4476 + $0x120] sm:$0xff]
        %v4514 = vld [vmem:[%s4476 + $0x128] sm:$0xff]
        %v4515 = vld [vmem:[%s4476 + $0x130] sm:$0xff]
        %v4516 = vld [vmem:[%s4476 + $0x138] sm:$0xff]
        %v4517 = vld [vmem:[%s4476 + $0x140] sm:$0xff]
        %v4518 = vld [vmem:[%s4476 + $0x148] sm:$0xff]
        %v4519 = vld [vmem:[%s4476 + $0x150] sm:$0xff]
        %v4520 = vld [vmem:[%s4476 + $0x158] sm:$0xff]
        %v4521 = vld [vmem:[%s4476 + $0x160] sm:$0xff]
        %v4522 = vld [vmem:[%s4476 + $0x168] sm:$0xff]
        %v4523 = vld [vmem:[%s4476 + $0x170] sm:$0xff]
        %v4524 = vld [vmem:[%s4476 + $0x178] sm:$0xff]
        %s4525 = scalar_lea.vmem [#allocation13], 12
        %v4526 = vld [vmem:[%s4525] sm:$0x3]
        %v4528 = vlaneseq
        %v4529 = vshrl.u32 %v4528, 7
        %v4530 = vsub.s32 0, %v4529
        %v4531 = vrot.slane %v4526, %v4530
        %v4532 = vlaneseq
        %v4533 = vshrl.u32 %v4532, 7
        %v4534 = vsub.s32 1, %v4533
        %v4535 = vrot.slane %v4526, %v4534
        %v4586 = vunpack.c.l.b16 %v4477
        %v4587 = vunpack.c.h.b16 %v4477
        %v4588 = vunpack.c.l.b16 %v4478
        %v4589 = vunpack.c.h.b16 %v4478
        %v4590 = vunpack.c.l.b16 %v4479
        %v4591 = vunpack.c.h.b16 %v4479
        %v4592 = vunpack.c.l.b16 %v4480
        %v4593 = vunpack.c.h.b16 %v4480
        %v4594 = vunpack.c.l.b16 %v4481
        %v4595 = vunpack.c.h.b16 %v4481
        %v4596 = vunpack.c.l.b16 %v4482
        %v4597 = vunpack.c.h.b16 %v4482
        %v4598 = vunpack.c.l.b16 %v4483
        %v4599 = vunpack.c.h.b16 %v4483
        %v4600 = vunpack.c.l.b16 %v4484
        %v4601 = vunpack.c.h.b16 %v4484
        %v4602 = vunpack.c.l.b16 %v4485
        %v4603 = vunpack.c.h.b16 %v4485
        %v4604 = vunpack.c.l.b16 %v4486
        %v4605 = vunpack.c.h.b16 %v4486
        %v4606 = vunpack.c.l.b16 %v4487
        %v4607 = vunpack.c.h.b16 %v4487
        %v4608 = vunpack.c.l.b16 %v4488
        %v4609 = vunpack.c.h.b16 %v4488
        %v4610 = vunpack.c.l.b16 %v4489
        %v4611 = vunpack.c.h.b16 %v4489
        %v4612 = vunpack.c.l.b16 %v4490
        %v4613 = vunpack.c.h.b16 %v4490
        %v4614 = vunpack.c.l.b16 %v4491
        %v4615 = vunpack.c.h.b16 %v4491
        %v4616 = vunpack.c.l.b16 %v4492
        %v4617 = vunpack.c.h.b16 %v4492
        %v4618 = vunpack.c.l.b16 %v4493
        %v4619 = vunpack.c.h.b16 %v4493
        %v4620 = vunpack.c.l.b16 %v4494
        %v4621 = vunpack.c.h.b16 %v4494
        %v4622 = vunpack.c.l.b16 %v4495
        %v4623 = vunpack.c.h.b16 %v4495
        %v4624 = vunpack.c.l.b16 %v4496
        %v4625 = vunpack.c.h.b16 %v4496
        %v4626 = vunpack.c.l.b16 %v4497
        %v4627 = vunpack.c.h.b16 %v4497
        %v4628 = vunpack.c.l.b16 %v4498
        %v4629 = vunpack.c.h.b16 %v4498
        %v4630 = vunpack.c.l.b16 %v4499
        %v4631 = vunpack.c.h.b16 %v4499
        %v4632 = vunpack.c.l.b16 %v4500
        %v4633 = vunpack.c.h.b16 %v4500
        %v4634 = vunpack.c.l.b16 %v4501
        %v4635 = vunpack.c.h.b16 %v4501
        %v4636 = vunpack.c.l.b16 %v4502
        %v4637 = vunpack.c.h.b16 %v4502
        %v4638 = vunpack.c.l.b16 %v4503
        %v4639 = vunpack.c.h.b16 %v4503
        %v4640 = vunpack.c.l.b16 %v4504
        %v4641 = vunpack.c.h.b16 %v4504
        %v4642 = vunpack.c.l.b16 %v4505
        %v4643 = vunpack.c.h.b16 %v4505
        %v4644 = vunpack.c.l.b16 %v4506
        %v4645 = vunpack.c.h.b16 %v4506
        %v4646 = vunpack.c.l.b16 %v4507
        %v4647 = vunpack.c.h.b16 %v4507
        %v4648 = vunpack.c.l.b16 %v4508
        %v4649 = vunpack.c.h.b16 %v4508
        %v4650 = vunpack.c.l.b16 %v4509
        %v4651 = vunpack.c.h.b16 %v4509
        %v4652 = vunpack.c.l.b16 %v4510
        %v4653 = vunpack.c.h.b16 %v4510
        %v4654 = vunpack.c.l.b16 %v4511
        %v4655 = vunpack.c.h.b16 %v4511
        %v4656 = vunpack.c.l.b16 %v4512
        %v4657 = vunpack.c.h.b16 %v4512
        %v4658 = vunpack.c.l.b16 %v4513
        %v4659 = vunpack.c.h.b16 %v4513
        %v4660 = vunpack.c.l.b16 %v4514
        %v4661 = vunpack.c.h.b16 %v4514
        %v4662 = vunpack.c.l.b16 %v4515
        %v4663 = vunpack.c.h.b16 %v4515
        %v4664 = vunpack.c.l.b16 %v4516
        %v4665 = vunpack.c.h.b16 %v4516
        %v4666 = vunpack.c.l.b16 %v4517
        %v4667 = vunpack.c.h.b16 %v4517
        %v4668 = vunpack.c.l.b16 %v4518
        %v4669 = vunpack.c.h.b16 %v4518
        %v4670 = vunpack.c.l.b16 %v4519
        %v4671 = vunpack.c.h.b16 %v4519
        %v4672 = vunpack.c.l.b16 %v4520
        %v4673 = vunpack.c.h.b16 %v4520
        %v4674 = vunpack.c.l.b16 %v4521
        %v4675 = vunpack.c.h.b16 %v4521
        %v4676 = vunpack.c.l.b16 %v4522
        %v4677 = vunpack.c.h.b16 %v4522
        %v4678 = vunpack.c.l.b16 %v4523
        %v4679 = vunpack.c.h.b16 %v4523
        %v4680 = vunpack.c.l.b16 %v4524
        %v4681 = vunpack.c.h.b16 %v4524
        %v4682 = vpack.c.b16 %v4588, %v4586
        %v4683 = vpack.c.b16 %v4589, %v4587
        %v4684 = vpack.c.b16 %v4592, %v4590
        %v4685 = vpack.c.b16 %v4593, %v4591
        %v4686 = vpack.c.b16 %v4596, %v4594
        %v4687 = vpack.c.b16 %v4597, %v4595
        %v4688 = vpack.c.b16 %v4600, %v4598
        %v4689 = vpack.c.b16 %v4601, %v4599
        %v4690 = vpack.c.b16 %v4604, %v4602
        %v4691 = vpack.c.b16 %v4605, %v4603
        %v4692 = vpack.c.b16 %v4608, %v4606
        %v4693 = vpack.c.b16 %v4609, %v4607
        %v4694 = vpack.c.b16 %v4612, %v4610
        %v4695 = vpack.c.b16 %v4613, %v4611
        %v4696 = vpack.c.b16 %v4616, %v4614
        %v4697 = vpack.c.b16 %v4617, %v4615
        %v4698 = vpack.c.b16 %v4620, %v4618
        %v4699 = vpack.c.b16 %v4621, %v4619
        %v4700 = vpack.c.b16 %v4624, %v4622
        %v4701 = vpack.c.b16 %v4625, %v4623
        %v4702 = vpack.c.b16 %v4628, %v4626
        %v4703 = vpack.c.b16 %v4629, %v4627
        %v4704 = vpack.c.b16 %v4632, %v4630
        %v4705 = vpack.c.b16 %v4633, %v4631
        %v4706 = vpack.c.b16 %v4636, %v4634
        %v4707 = vpack.c.b16 %v4637, %v4635
        %v4708 = vpack.c.b16 %v4640, %v4638
        %v4709 = vpack.c.b16 %v4641, %v4639
        %v4710 = vpack.c.b16 %v4644, %v4642
        %v4711 = vpack.c.b16 %v4645, %v4643
        %v4712 = vpack.c.b16 %v4648, %v4646
        %v4713 = vpack.c.b16 %v4649, %v4647
        %v4714 = vpack.c.b16 %v4652, %v4650
        %v4715 = vpack.c.b16 %v4653, %v4651
        %v4716 = vpack.c.b16 %v4656, %v4654
        %v4717 = vpack.c.b16 %v4657, %v4655
        %v4718 = vpack.c.b16 %v4660, %v4658
        %v4719 = vpack.c.b16 %v4661, %v4659
        %v4720 = vpack.c.b16 %v4664, %v4662
        %v4721 = vpack.c.b16 %v4665, %v4663
        %v4722 = vpack.c.b16 %v4668, %v4666
        %v4723 = vpack.c.b16 %v4669, %v4667
        %v4724 = vpack.c.b16 %v4672, %v4670
        %v4725 = vpack.c.b16 %v4673, %v4671
        %v4726 = vpack.c.b16 %v4676, %v4674
        %v4727 = vpack.c.b16 %v4677, %v4675
        %v4728 = vpack.c.b16 %v4680, %v4678
        %v4729 = vpack.c.b16 %v4681, %v4679
        %4778 = vmatprep.subr.bf16.mxu0 %v4683
        %4779 = vmatpush1.bf16.msra.mxu0 %v4682
        %4780 = vmatprep.subr.bf16.mxu0 %v4685
        %4781 = vmatpush1.bf16.msra.mxu0 %v4684
        %4782 = vmatprep.subr.bf16.mxu0 %v4687
        %4783 = vmatpush1.bf16.msra.mxu0 %v4686
        %4784 = vmatprep.subr.bf16.mxu0 %v4689
        %4785 = vmatpush1.bf16.msra.mxu0 %v4688
        %4786 = vmatprep.subr.bf16.mxu0 %v4691
        %4787 = vmatpush1.bf16.msra.mxu0 %v4690
        %4788 = vmatprep.subr.bf16.mxu0 %v4693
        %4789 = vmatpush1.bf16.msra.mxu0 %v4692
        %4790 = vmatprep.subr.bf16.mxu0 %v4695
        %4791 = vmatpush1.bf16.msra.mxu0 %v4694
        %4792 = vmatprep.subr.bf16.mxu0 %v4697
        %4793 = vmatpush1.bf16.msra.mxu0 %v4696
        %4794 = vmatprep.subr.bf16.mxu0 %v4699
        %4795 = vmatpush1.bf16.msra.mxu0 %v4698
        %4796 = vmatprep.subr.bf16.mxu0 %v4701
        %4797 = vmatpush1.bf16.msra.mxu0 %v4700
        %4798 = vmatprep.subr.bf16.mxu0 %v4703
        %4799 = vmatpush1.bf16.msra.mxu0 %v4702
        %4800 = vmatprep.subr.bf16.mxu0 %v4705
        %4801 = vmatpush1.bf16.msra.mxu0 %v4704
        %4802 = vmatprep.subr.bf16.mxu0 %v4707
        %4803 = vmatpush1.bf16.msra.mxu0 %v4706
        %4804 = vmatprep.subr.bf16.mxu0 %v4709
        %4805 = vmatpush1.bf16.msra.mxu0 %v4708
        %4806 = vmatprep.subr.bf16.mxu0 %v4711
        %4807 = vmatpush1.bf16.msra.mxu0 %v4710
        %4808 = vmatprep.subr.bf16.mxu0 %v4713
        %4809 = vmatpush1.bf16.msra.mxu0 %v4712
        %4810 = vmatprep.mubr.bf16.mxu0 %v4465
        %4811 = vmatmul.mubr.bf16.gmra.mrb[0].mxu0 %v4464
        %v4812 = vpop.f32.mrb[0].mxu0
        %v4813 = vadd.f32 %v4531, %v4812
        %v4814 = vpop.f32.mrb[0].mxu0
        %v4815 = vadd.f32 %v4535, %v4814
        %v4816 = vpop.f32.mrb[0].mxu0
        %v4817 = vadd.f32 %v4531, %v4816
        %v4818 = vpop.f32.mrb[0].mxu0
        %v4819 = vadd.f32 %v4535, %v4818
        %4820 = vmatprep.mubr.bf16.mxu0 %v4468
        %4821 = vmatmul.mubr.bf16.gmra.mrb[0].mxu0 %v4467
        %v4822 = vpop.f32.mrb[0].mxu0
        %v4823 = vadd.f32 %v4531, %v4822
        %v4824 = vpop.f32.mrb[0].mxu0
        %v4825 = vadd.f32 %v4535, %v4824
        %v4826 = vpop.f32.mrb[0].mxu0
        %v4827 = vadd.f32 %v4531, %v4826
        %v4828 = vpop.f32.mrb[0].mxu0
        %v4829 = vadd.f32 %v4535, %v4828
        %4830 = vmatprep.mubr.bf16.mxu0 %v4471
        %4831 = vmatmul.mubr.bf16.gmra.mrb[0].mxu0 %v4470
        %v4832 = vpop.f32.mrb[0].mxu0
        %v4833 = vadd.f32 %v4531, %v4832
        %v4834 = vpop.f32.mrb[0].mxu0
        %v4835 = vadd.f32 %v4535, %v4834
        %v4836 = vpop.f32.mrb[0].mxu0
        %v4837 = vadd.f32 %v4531, %v4836
        %v4838 = vpop.f32.mrb[0].mxu0
        %v4839 = vadd.f32 %v4535, %v4838
        %4840 = vmatprep.mubr.bf16.mxu0 %v4474
        %4841 = vmatmul.mubr.bf16.gmra.mrb[0].mxu0 %v4473
        %v4842 = vpop.f32.mrb[0].mxu0
        %v4843 = vadd.f32 %v4531, %v4842
        %v4844 = vpop.f32.mrb[0].mxu0
        %v4845 = vadd.f32 %v4535, %v4844
        %v4846 = vpop.f32.mrb[0].mxu0
        %v4847 = vadd.f32 %v4531, %v4846
        %v4848 = vpop.f32.mrb[0].mxu0
        %v4849 = vadd.f32 %v4535, %v4848
        %4850 = vdwg.mxu0
        %4851 = vmatprep.subr.bf16.mxu0 %v4715
        %4852 = vmatpush1.bf16.msra.mxu0 %v4714
        %4853 = vmatprep.subr.bf16.mxu0 %v4717
        %4854 = vmatpush1.bf16.msra.mxu0 %v4716
        %4855 = vmatprep.subr.bf16.mxu0 %v4719
        %4856 = vmatpush1.bf16.msra.mxu0 %v4718
        %4857 = vmatprep.subr.bf16.mxu0 %v4721
        %4858 = vmatpush1.bf16.msra.mxu0 %v4720
        %4859 = vmatprep.subr.bf16.mxu0 %v4723
        %4860 = vmatpush1.bf16.msra.mxu0 %v4722
        %4861 = vmatprep.subr.bf16.mxu0 %v4725
        %4862 = vmatpush1.bf16.msra.mxu0 %v4724
        %4863 = vmatprep.subr.bf16.mxu0 %v4727
        %4864 = vmatpush1.bf16.msra.mxu0 %v4726
        %4865 = vmatprep.subr.bf16.mxu0 %v4729
        %4866 = vmatpush1.bf16.msra.mxu0 %v4728
        %4867 = vmatprep.subr.bf16.mxu0 0
        %4868 = vmatpush1.bf16.msra.mxu0 0
        %4869 = vmatprep.subr.bf16.mxu0 0
        %4870 = vmatpush1.bf16.msra.mxu0 0
        %4871 = vmatprep.subr.bf16.mxu0 0
        %4872 = vmatpush1.bf16.msra.mxu0 0
        %4873 = vmatprep.subr.bf16.mxu0 0
        %4874 = vmatpush1.bf16.msra.mxu0 0
        %4875 = vmatprep.subr.bf16.mxu0 0
        %4876 = vmatpush1.bf16.msra.mxu0 0
        %4877 = vmatprep.subr.bf16.mxu0 0
        %4878 = vmatpush1.bf16.msra.mxu0 0
        %4879 = vmatprep.subr.bf16.mxu0 0
        %4880 = vmatpush1.bf16.msra.mxu0 0
        %4881 = vmatprep.subr.bf16.mxu0 0
        %4882 = vmatpush1.bf16.msra.mxu0 0
        %4883 = vmatprep.mubr.bf16.mxu0 0
        %4884 = vmatmul.mubr.bf16.gmra.mrb[0].mxu0 %v4466
        %v4885 = vpop.f32.mrb[0].mxu0
        %v4886 = vadd.f32 %v4813, %v4885
        %v4887 = vpop.f32.mrb[0].mxu0
        %v4888 = vadd.f32 %v4815, %v4887
        %v4889 = vpop.f32.mrb[0].mxu0
        %v4890 = vadd.f32 %v4817, %v4889
        %v4891 = vpop.f32.mrb[0].mxu0
        %v4892 = vadd.f32 %v4819, %v4891
        %4893 = vmatprep.mubr.bf16.mxu0 0
        %4894 = vmatmul.mubr.bf16.gmra.mrb[0].mxu0 %v4469
        %v4895 = vpop.f32.mrb[0].mxu0
        %v4896 = vadd.f32 %v4823, %v4895
        %v4897 = vpop.f32.mrb[0].mxu0
        %v4898 = vadd.f32 %v4825, %v4897
        %v4899 = vpop.f32.mrb[0].mxu0
        %v4900 = vadd.f32 %v4827, %v4899
        %v4901 = vpop.f32.mrb[0].mxu0
        %v4902 = vadd.f32 %v4829, %v4901
        %4903 = vmatprep.mubr.bf16.mxu0 0
        %4904 = vmatmul.mubr.bf16.gmra.mrb[0].mxu0 %v4472
        %v4905 = vpop.f32.mrb[0].mxu0
        %v4906 = vadd.f32 %v4833, %v4905
        %v4907 = vpop.f32.mrb[0].mxu0
        %v4908 = vadd.f32 %v4835, %v4907
        %v4909 = vpop.f32.mrb[0].mxu0
        %v4910 = vadd.f32 %v4837, %v4909
        %v4911 = vpop.f32.mrb[0].mxu0
        %v4912 = vadd.f32 %v4839, %v4911
        %4913 = vmatprep.mubr.bf16.mxu0 0
        %4914 = vmatmul.mubr.bf16.gmra.mrb[0].mxu0 %v4475
        %v4915 = vpop.f32.mrb[0].mxu0
        %v4916 = vadd.f32 %v4843, %v4915
        %v4917 = vpop.f32.mrb[0].mxu0
        %v4918 = vadd.f32 %v4845, %v4917
        %v4919 = vpop.f32.mrb[0].mxu0
        %v4920 = vadd.f32 %v4847, %v4919
        %v4921 = vpop.f32.mrb[0].mxu0
        %v4922 = vadd.f32 %v4849, %v4921
        %4923 = vdwg.mxu0
        %v4924 = vmul.f32 %v4886, 0.5
        %v4925 = vmul.f32 %v4890, 0.5
        %v4926 = vmul.f32 %v4896, 0.5
        %v4927 = vmul.f32 %v4900, 0.5
        %v4928 = vmul.f32 %v4906, 0.5
        %v4929 = vmul.f32 %v4910, 0.5
        %v4930 = vmul.f32 %v4916, 0.5
        %v4931 = vmul.f32 %v4920, 0.5
        %v4932 = vtanh.pop %v4924
        %v4933 = vtanh.pop %v4925
        %v4934 = vtanh.pop %v4926
        %v4935 = vtanh.pop %v4927
        %v4936 = vtanh.pop %v4928
        %v4937 = vtanh.pop %v4929
        %v4938 = vtanh.pop %v4930
        %v4939 = vtanh.pop %v4931
        %v4940 = vadd.f32 %v4932, 1.0
        %v4941 = vadd.f32 %v4933, 1.0
        %v4942 = vadd.f32 %v4934, 1.0
        %v4943 = vadd.f32 %v4935, 1.0
        %v4944 = vadd.f32 %v4936, 1.0
        %v4945 = vadd.f32 %v4937, 1.0
        %v4946 = vadd.f32 %v4938, 1.0
        %v4947 = vadd.f32 %v4939, 1.0
        %v4948 = vmul.f32 %v4940, 0.5
        %v4949 = vmul.f32 %v4941, 0.5
        %v4950 = vmul.f32 %v4942, 0.5
        %v4951 = vmul.f32 %v4943, 0.5
        %v4952 = vmul.f32 %v4944, 0.5
        %v4953 = vmul.f32 %v4945, 0.5
        %v4954 = vmul.f32 %v4946, 0.5
        %v4955 = vmul.f32 %v4947, 0.5
        %v4956 = vsub.f32 %v4888, %v4408
        %v4957 = vsub.f32 %v4892, %v4409
        %v4958 = vsub.f32 %v4898, %v4410
        %v4959 = vsub.f32 %v4902, %v4411
        %v4960 = vsub.f32 %v4908, %v4412
        %v4961 = vsub.f32 %v4912, %v4413
        %v4962 = vsub.f32 %v4918, %v4414
        %v4963 = vsub.f32 %v4922, %v4415
        %v4964 = vmul.f32 %v4948, %v4956
        %v4965 = vmul.f32 %v4949, %v4957
        %v4966 = vmul.f32 %v4950, %v4958
        %v4967 = vmul.f32 %v4951, %v4959
        %v4968 = vmul.f32 %v4952, %v4960
        %v4969 = vmul.f32 %v4953, %v4961
        %v4970 = vmul.f32 %v4954, %v4962
        %v4971 = vmul.f32 %v4955, %v4963
        %v4972 = vadd.f32 %v4408, %v4964
        %v4973 = vadd.f32 %v4409, %v4965
        %v4974 = vadd.f32 %v4410, %v4966
        %v4975 = vadd.f32 %v4411, %v4967
        %v4976 = vadd.f32 %v4412, %v4968
        %v4977 = vadd.f32 %v4413, %v4969
        %v4978 = vadd.f32 %v4414, %v4970
        %v4979 = vadd.f32 %v4415, %v4971
        %v4980 = vrot.slane %v4972, 5
        %v4981 = vrot.slane %v4973, 5
        %v4982 = vrot.slane %v4974, 5
        %v4983 = vrot.slane %v4975, 5
        %v4984 = vrot.slane %v4976, 5
        %v4985 = vrot.slane %v4977, 5
        %v4986 = vrot.slane %v4978, 5
        %v4987 = vrot.slane %v4979, 5
        %v4988 = vsel %vm1602, %v4986, %v4987
        %v4989 = vsel %vm1602, %v4985, %v4986
        %v4990 = vsel %vm1602, %v4984, %v4985
        %v4991 = vsel %vm1602, %v4983, %v4984
        %v4992 = vsel %vm1602, %v4982, %v4983
        %v4993 = vsel %vm1602, %v4981, %v4982
        %v4994 = vsel %vm1602, %v4980, %v4981
        %v4995 = vsel %vm1602, %v4987, %v4980
        %v4996 = vsel %vm1014, %v4990, 0.0
        %v4997 = vsel %vm1015, %v4989, 0.0
        %v4998 = vsel %vm1016, %v4988, 0.0
        %v4999 = vsel %vm1017, %v4995, 0.0
        %v5000 = vsel %vm1018, %v4994, 0.0
        %v5001 = vsel %vm1019, %v4993, 0.0
        %v5002 = vsel %vm1020, %v4992, 0.0
        %v5003 = vsel %vm1021, %v4991, 0.0
        %v5004 = vrot.slane %v4972, 3
        %v5005 = vrot.slane %v4973, 3
        %v5006 = vrot.slane %v4974, 3
        %v5007 = vrot.slane %v4975, 3
        %v5008 = vrot.slane %v4976, 3
        %v5009 = vrot.slane %v4977, 3
        %v5010 = vrot.slane %v4978, 3
        %v5011 = vrot.slane %v4979, 3
        %v5012 = vsel %vm1627, %v5010, %v5011
        %v5013 = vsel %vm1627, %v5009, %v5010
        %v5014 = vsel %vm1627, %v5008, %v5009
        %v5015 = vsel %vm1627, %v5007, %v5008
        %v5016 = vsel %vm1627, %v5006, %v5007
        %v5017 = vsel %vm1627, %v5005, %v5006
        %v5018 = vsel %vm1627, %v5004, %v5005
        %v5019 = vsel %vm1627, %v5011, %v5004
        %v5020 = vsel %vm1022, %v5015, 0.0
        %v5021 = vsel %vm1023, %v5014, 0.0
        %v5022 = vsel %vm1024, %v5013, 0.0
        %v5023 = vsel %vm1025, %v5012, 0.0
        %v5024 = vsel %vm1026, %v5019, 0.0
        %v5025 = vsel %vm1027, %v5018, 0.0
        %v5026 = vsel %vm1028, %v5017, 0.0
        %v5027 = vsel %vm1029, %v5016, 0.0
        %v5028 = vpack.c.bf16 %v4997, %v4996
        %v5029 = vpack.c.bf16 %v4973, %v4972
        %v5030 = vpack.c.bf16 %v5021, %v5020
        %v5031 = vpack.c.bf16 %v4999, %v4998
        %v5032 = vpack.c.bf16 %v4975, %v4974
        %v5033 = vpack.c.bf16 %v5023, %v5022
        %v5034 = vpack.c.bf16 %v5001, %v5000
        %v5035 = vpack.c.bf16 %v4977, %v4976
        %v5036 = vpack.c.bf16 %v5025, %v5024
        %v5037 = vpack.c.bf16 %v5003, %v5002
        %v5038 = vpack.c.bf16 %v4979, %v4978
        %v5039 = vpack.c.bf16 %v5027, %v5026
        %s5040 = scalar_lea.vmem [#allocation11], 2688
        %v5041 = vld [vmem:[%s5040] sm:$0xff]
        %v5042 = vld [vmem:[%s5040 + $0x8] sm:$0xff]
        %v5043 = vld [vmem:[%s5040 + $0x10] sm:$0xff]
        %v5044 = vld [vmem:[%s5040 + $0x18] sm:$0xff]
        %v5045 = vld [vmem:[%s5040 + $0x20] sm:$0xff]
        %v5046 = vld [vmem:[%s5040 + $0x28] sm:$0xff]
        %v5047 = vld [vmem:[%s5040 + $0x30] sm:$0xff]
        %v5048 = vld [vmem:[%s5040 + $0x38] sm:$0xff]
        %v5049 = vld [vmem:[%s5040 + $0x40] sm:$0xff]
        %v5050 = vld [vmem:[%s5040 + $0x48] sm:$0xff]
        %v5051 = vld [vmem:[%s5040 + $0x50] sm:$0xff]
        %v5052 = vld [vmem:[%s5040 + $0x58] sm:$0xff]
        %v5053 = vld [vmem:[%s5040 + $0x60] sm:$0xff]
        %v5054 = vld [vmem:[%s5040 + $0x68] sm:$0xff]
        %v5055 = vld [vmem:[%s5040 + $0x70] sm:$0xff]
        %v5056 = vld [vmem:[%s5040 + $0x78] sm:$0xff]
        %v5057 = vld [vmem:[%s5040 + $0x80] sm:$0xff]
        %v5058 = vld [vmem:[%s5040 + $0x88] sm:$0xff]
        %v5059 = vld [vmem:[%s5040 + $0x90] sm:$0xff]
        %v5060 = vld [vmem:[%s5040 + $0x98] sm:$0xff]
        %v5061 = vld [vmem:[%s5040 + $0xa0] sm:$0xff]
        %v5062 = vld [vmem:[%s5040 + $0xa8] sm:$0xff]
        %v5063 = vld [vmem:[%s5040 + $0xb0] sm:$0xff]
        %v5064 = vld [vmem:[%s5040 + $0xb8] sm:$0xff]
        %v5065 = vld [vmem:[%s5040 + $0xc0] sm:$0xff]
        %v5066 = vld [vmem:[%s5040 + $0xc8] sm:$0xff]
        %v5067 = vld [vmem:[%s5040 + $0xd0] sm:$0xff]
        %v5068 = vld [vmem:[%s5040 + $0xd8] sm:$0xff]
        %v5069 = vld [vmem:[%s5040 + $0xe0] sm:$0xff]
        %v5070 = vld [vmem:[%s5040 + $0xe8] sm:$0xff]
        %v5071 = vld [vmem:[%s5040 + $0xf0] sm:$0xff]
        %v5072 = vld [vmem:[%s5040 + $0xf8] sm:$0xff]
        %v5073 = vld [vmem:[%s5040 + $0x100] sm:$0xff]
        %v5074 = vld [vmem:[%s5040 + $0x108] sm:$0xff]
        %v5075 = vld [vmem:[%s5040 + $0x110] sm:$0xff]
        %v5076 = vld [vmem:[%s5040 + $0x118] sm:$0xff]
        %v5077 = vld [vmem:[%s5040 + $0x120] sm:$0xff]
        %v5078 = vld [vmem:[%s5040 + $0x128] sm:$0xff]
        %v5079 = vld [vmem:[%s5040 + $0x130] sm:$0xff]
        %v5080 = vld [vmem:[%s5040 + $0x138] sm:$0xff]
        %v5081 = vld [vmem:[%s5040 + $0x140] sm:$0xff]
        %v5082 = vld [vmem:[%s5040 + $0x148] sm:$0xff]
        %v5083 = vld [vmem:[%s5040 + $0x150] sm:$0xff]
        %v5084 = vld [vmem:[%s5040 + $0x158] sm:$0xff]
        %v5085 = vld [vmem:[%s5040 + $0x160] sm:$0xff]
        %v5086 = vld [vmem:[%s5040 + $0x168] sm:$0xff]
        %v5087 = vld [vmem:[%s5040 + $0x170] sm:$0xff]
        %v5088 = vld [vmem:[%s5040 + $0x178] sm:$0xff]
        %s5089 = scalar_lea.vmem [#allocation13], 14
        %v5090 = vld [vmem:[%s5089] sm:$0x3]
        %v5092 = vlaneseq
        %v5093 = vshrl.u32 %v5092, 7
        %v5094 = vsub.s32 0, %v5093
        %v5095 = vrot.slane %v5090, %v5094
        %v5096 = vlaneseq
        %v5097 = vshrl.u32 %v5096, 7
        %v5098 = vsub.s32 1, %v5097
        %v5099 = vrot.slane %v5090, %v5098
        %v5150 = vunpack.c.l.b16 %v5041
        %v5151 = vunpack.c.h.b16 %v5041
        %v5152 = vunpack.c.l.b16 %v5042
        %v5153 = vunpack.c.h.b16 %v5042
        %v5154 = vunpack.c.l.b16 %v5043
        %v5155 = vunpack.c.h.b16 %v5043
        %v5156 = vunpack.c.l.b16 %v5044
        %v5157 = vunpack.c.h.b16 %v5044
        %v5158 = vunpack.c.l.b16 %v5045
        %v5159 = vunpack.c.h.b16 %v5045
        %v5160 = vunpack.c.l.b16 %v5046
        %v5161 = vunpack.c.h.b16 %v5046
        %v5162 = vunpack.c.l.b16 %v5047
        %v5163 = vunpack.c.h.b16 %v5047
        %v5164 = vunpack.c.l.b16 %v5048
        %v5165 = vunpack.c.h.b16 %v5048
        %v5166 = vunpack.c.l.b16 %v5049
        %v5167 = vunpack.c.h.b16 %v5049
        %v5168 = vunpack.c.l.b16 %v5050
        %v5169 = vunpack.c.h.b16 %v5050
        %v5170 = vunpack.c.l.b16 %v5051
        %v5171 = vunpack.c.h.b16 %v5051
        %v5172 = vunpack.c.l.b16 %v5052
        %v5173 = vunpack.c.h.b16 %v5052
        %v5174 = vunpack.c.l.b16 %v5053
        %v5175 = vunpack.c.h.b16 %v5053
        %v5176 = vunpack.c.l.b16 %v5054
        %v5177 = vunpack.c.h.b16 %v5054
        %v5178 = vunpack.c.l.b16 %v5055
        %v5179 = vunpack.c.h.b16 %v5055
        %v5180 = vunpack.c.l.b16 %v5056
        %v5181 = vunpack.c.h.b16 %v5056
        %v5182 = vunpack.c.l.b16 %v5057
        %v5183 = vunpack.c.h.b16 %v5057
        %v5184 = vunpack.c.l.b16 %v5058
        %v5185 = vunpack.c.h.b16 %v5058
        %v5186 = vunpack.c.l.b16 %v5059
        %v5187 = vunpack.c.h.b16 %v5059
        %v5188 = vunpack.c.l.b16 %v5060
        %v5189 = vunpack.c.h.b16 %v5060
        %v5190 = vunpack.c.l.b16 %v5061
        %v5191 = vunpack.c.h.b16 %v5061
        %v5192 = vunpack.c.l.b16 %v5062
        %v5193 = vunpack.c.h.b16 %v5062
        %v5194 = vunpack.c.l.b16 %v5063
        %v5195 = vunpack.c.h.b16 %v5063
        %v5196 = vunpack.c.l.b16 %v5064
        %v5197 = vunpack.c.h.b16 %v5064
        %v5198 = vunpack.c.l.b16 %v5065
        %v5199 = vunpack.c.h.b16 %v5065
        %v5200 = vunpack.c.l.b16 %v5066
        %v5201 = vunpack.c.h.b16 %v5066
        %v5202 = vunpack.c.l.b16 %v5067
        %v5203 = vunpack.c.h.b16 %v5067
        %v5204 = vunpack.c.l.b16 %v5068
        %v5205 = vunpack.c.h.b16 %v5068
        %v5206 = vunpack.c.l.b16 %v5069
        %v5207 = vunpack.c.h.b16 %v5069
        %v5208 = vunpack.c.l.b16 %v5070
        %v5209 = vunpack.c.h.b16 %v5070
        %v5210 = vunpack.c.l.b16 %v5071
        %v5211 = vunpack.c.h.b16 %v5071
        %v5212 = vunpack.c.l.b16 %v5072
        %v5213 = vunpack.c.h.b16 %v5072
        %v5214 = vunpack.c.l.b16 %v5073
        %v5215 = vunpack.c.h.b16 %v5073
        %v5216 = vunpack.c.l.b16 %v5074
        %v5217 = vunpack.c.h.b16 %v5074
        %v5218 = vunpack.c.l.b16 %v5075
        %v5219 = vunpack.c.h.b16 %v5075
        %v5220 = vunpack.c.l.b16 %v5076
        %v5221 = vunpack.c.h.b16 %v5076
        %v5222 = vunpack.c.l.b16 %v5077
        %v5223 = vunpack.c.h.b16 %v5077
        %v5224 = vunpack.c.l.b16 %v5078
        %v5225 = vunpack.c.h.b16 %v5078
        %v5226 = vunpack.c.l.b16 %v5079
        %v5227 = vunpack.c.h.b16 %v5079
        %v5228 = vunpack.c.l.b16 %v5080
        %v5229 = vunpack.c.h.b16 %v5080
        %v5230 = vunpack.c.l.b16 %v5081
        %v5231 = vunpack.c.h.b16 %v5081
        %v5232 = vunpack.c.l.b16 %v5082
        %v5233 = vunpack.c.h.b16 %v5082
        %v5234 = vunpack.c.l.b16 %v5083
        %v5235 = vunpack.c.h.b16 %v5083
        %v5236 = vunpack.c.l.b16 %v5084
        %v5237 = vunpack.c.h.b16 %v5084
        %v5238 = vunpack.c.l.b16 %v5085
        %v5239 = vunpack.c.h.b16 %v5085
        %v5240 = vunpack.c.l.b16 %v5086
        %v5241 = vunpack.c.h.b16 %v5086
        %v5242 = vunpack.c.l.b16 %v5087
        %v5243 = vunpack.c.h.b16 %v5087
        %v5244 = vunpack.c.l.b16 %v5088
        %v5245 = vunpack.c.h.b16 %v5088
        %v5246 = vpack.c.b16 %v5152, %v5150
        %v5247 = vpack.c.b16 %v5153, %v5151
        %v5248 = vpack.c.b16 %v5156, %v5154
        %v5249 = vpack.c.b16 %v5157, %v5155
        %v5250 = vpack.c.b16 %v5160, %v5158
        %v5251 = vpack.c.b16 %v5161, %v5159
        %v5252 = vpack.c.b16 %v5164, %v5162
        %v5253 = vpack.c.b16 %v5165, %v5163
        %v5254 = vpack.c.b16 %v5168, %v5166
        %v5255 = vpack.c.b16 %v5169, %v5167
        %v5256 = vpack.c.b16 %v5172, %v5170
        %v5257 = vpack.c.b16 %v5173, %v5171
        %v5258 = vpack.c.b16 %v5176, %v5174
        %v5259 = vpack.c.b16 %v5177, %v5175
        %v5260 = vpack.c.b16 %v5180, %v5178
        %v5261 = vpack.c.b16 %v5181, %v5179
        %v5262 = vpack.c.b16 %v5184, %v5182
        %v5263 = vpack.c.b16 %v5185, %v5183
        %v5264 = vpack.c.b16 %v5188, %v5186
        %v5265 = vpack.c.b16 %v5189, %v5187
        %v5266 = vpack.c.b16 %v5192, %v5190
        %v5267 = vpack.c.b16 %v5193, %v5191
        %v5268 = vpack.c.b16 %v5196, %v5194
        %v5269 = vpack.c.b16 %v5197, %v5195
        %v5270 = vpack.c.b16 %v5200, %v5198
        %v5271 = vpack.c.b16 %v5201, %v5199
        %v5272 = vpack.c.b16 %v5204, %v5202
        %v5273 = vpack.c.b16 %v5205, %v5203
        %v5274 = vpack.c.b16 %v5208, %v5206
        %v5275 = vpack.c.b16 %v5209, %v5207
        %v5276 = vpack.c.b16 %v5212, %v5210
        %v5277 = vpack.c.b16 %v5213, %v5211
        %v5278 = vpack.c.b16 %v5216, %v5214
        %v5279 = vpack.c.b16 %v5217, %v5215
        %v5280 = vpack.c.b16 %v5220, %v5218
        %v5281 = vpack.c.b16 %v5221, %v5219
        %v5282 = vpack.c.b16 %v5224, %v5222
        %v5283 = vpack.c.b16 %v5225, %v5223
        %v5284 = vpack.c.b16 %v5228, %v5226
        %v5285 = vpack.c.b16 %v5229, %v5227
        %v5286 = vpack.c.b16 %v5232, %v5230
        %v5287 = vpack.c.b16 %v5233, %v5231
        %v5288 = vpack.c.b16 %v5236, %v5234
        %v5289 = vpack.c.b16 %v5237, %v5235
        %v5290 = vpack.c.b16 %v5240, %v5238
        %v5291 = vpack.c.b16 %v5241, %v5239
        %v5292 = vpack.c.b16 %v5244, %v5242
        %v5293 = vpack.c.b16 %v5245, %v5243
        %5342 = vmatprep.subr.bf16.mxu0 %v5247
        %5343 = vmatpush1.bf16.msra.mxu0 %v5246
        %5344 = vmatprep.subr.bf16.mxu0 %v5249
        %5345 = vmatpush1.bf16.msra.mxu0 %v5248
        %5346 = vmatprep.subr.bf16.mxu0 %v5251
        %5347 = vmatpush1.bf16.msra.mxu0 %v5250
        %5348 = vmatprep.subr.bf16.mxu0 %v5253
        %5349 = vmatpush1.bf16.msra.mxu0 %v5252
        %5350 = vmatprep.subr.bf16.mxu0 %v5255
        %5351 = vmatpush1.bf16.msra.mxu0 %v5254
        %5352 = vmatprep.subr.bf16.mxu0 %v5257
        %5353 = vmatpush1.bf16.msra.mxu0 %v5256
        %5354 = vmatprep.subr.bf16.mxu0 %v5259
        %5355 = vmatpush1.bf16.msra.mxu0 %v5258
        %5356 = vmatprep.subr.bf16.mxu0 %v5261
        %5357 = vmatpush1.bf16.msra.mxu0 %v5260
        %5358 = vmatprep.subr.bf16.mxu0 %v5263
        %5359 = vmatpush1.bf16.msra.mxu0 %v5262
        %5360 = vmatprep.subr.bf16.mxu0 %v5265
        %5361 = vmatpush1.bf16.msra.mxu0 %v5264
        %5362 = vmatprep.subr.bf16.mxu0 %v5267
        %5363 = vmatpush1.bf16.msra.mxu0 %v5266
        %5364 = vmatprep.subr.bf16.mxu0 %v5269
        %5365 = vmatpush1.bf16.msra.mxu0 %v5268
        %5366 = vmatprep.subr.bf16.mxu0 %v5271
        %5367 = vmatpush1.bf16.msra.mxu0 %v5270
        %5368 = vmatprep.subr.bf16.mxu0 %v5273
        %5369 = vmatpush1.bf16.msra.mxu0 %v5272
        %5370 = vmatprep.subr.bf16.mxu0 %v5275
        %5371 = vmatpush1.bf16.msra.mxu0 %v5274
        %5372 = vmatprep.subr.bf16.mxu0 %v5277
        %5373 = vmatpush1.bf16.msra.mxu0 %v5276
        %5374 = vmatprep.mubr.bf16.mxu0 %v5029
        %5375 = vmatmul.mubr.bf16.gmra.mrb[0].mxu0 %v5028
        %v5376 = vpop.f32.mrb[0].mxu0
        %v5377 = vadd.f32 %v5095, %v5376
        %v5378 = vpop.f32.mrb[0].mxu0
        %v5379 = vadd.f32 %v5099, %v5378
        %v5380 = vpop.f32.mrb[0].mxu0
        %v5381 = vadd.f32 %v5095, %v5380
        %v5382 = vpop.f32.mrb[0].mxu0
        %v5383 = vadd.f32 %v5099, %v5382
        %5384 = vmatprep.mubr.bf16.mxu0 %v5032
        %5385 = vmatmul.mubr.bf16.gmra.mrb[0].mxu0 %v5031
        %v5386 = vpop.f32.mrb[0].mxu0
        %v5387 = vadd.f32 %v5095, %v5386
        %v5388 = vpop.f32.mrb[0].mxu0
        %v5389 = vadd.f32 %v5099, %v5388
        %v5390 = vpop.f32.mrb[0].mxu0
        %v5391 = vadd.f32 %v5095, %v5390
        %v5392 = vpop.f32.mrb[0].mxu0
        %v5393 = vadd.f32 %v5099, %v5392
        %5394 = vmatprep.mubr.bf16.mxu0 %v5035
        %5395 = vmatmul.mubr.bf16.gmra.mrb[0].mxu0 %v5034
        %v5396 = vpop.f32.mrb[0].mxu0
        %v5397 = vadd.f32 %v5095, %v5396
        %v5398 = vpop.f32.mrb[0].mxu0
        %v5399 = vadd.f32 %v5099, %v5398
        %v5400 = vpop.f32.mrb[0].mxu0
        %v5401 = vadd.f32 %v5095, %v5400
        %v5402 = vpop.f32.mrb[0].mxu0
        %v5403 = vadd.f32 %v5099, %v5402
        %5404 = vmatprep.mubr.bf16.mxu0 %v5038
        %5405 = vmatmul.mubr.bf16.gmra.mrb[0].mxu0 %v5037
        %v5406 = vpop.f32.mrb[0].mxu0
        %v5407 = vadd.f32 %v5095, %v5406
        %v5408 = vpop.f32.mrb[0].mxu0
        %v5409 = vadd.f32 %v5099, %v5408
        %v5410 = vpop.f32.mrb[0].mxu0
        %v5411 = vadd.f32 %v5095, %v5410
        %v5412 = vpop.f32.mrb[0].mxu0
        %v5413 = vadd.f32 %v5099, %v5412
        %5414 = vdwg.mxu0
        %5415 = vmatprep.subr.bf16.mxu0 %v5279
        %5416 = vmatpush1.bf16.msra.mxu0 %v5278
        %5417 = vmatprep.subr.bf16.mxu0 %v5281
        %5418 = vmatpush1.bf16.msra.mxu0 %v5280
        %5419 = vmatprep.subr.bf16.mxu0 %v5283
        %5420 = vmatpush1.bf16.msra.mxu0 %v5282
        %5421 = vmatprep.subr.bf16.mxu0 %v5285
        %5422 = vmatpush1.bf16.msra.mxu0 %v5284
        %5423 = vmatprep.subr.bf16.mxu0 %v5287
        %5424 = vmatpush1.bf16.msra.mxu0 %v5286
        %5425 = vmatprep.subr.bf16.mxu0 %v5289
        %5426 = vmatpush1.bf16.msra.mxu0 %v5288
        %5427 = vmatprep.subr.bf16.mxu0 %v5291
        %5428 = vmatpush1.bf16.msra.mxu0 %v5290
        %5429 = vmatprep.subr.bf16.mxu0 %v5293
        %5430 = vmatpush1.bf16.msra.mxu0 %v5292
        %5431 = vmatprep.subr.bf16.mxu0 0
        %5432 = vmatpush1.bf16.msra.mxu0 0
        %5433 = vmatprep.subr.bf16.mxu0 0
        %5434 = vmatpush1.bf16.msra.mxu0 0
        %5435 = vmatprep.subr.bf16.mxu0 0
        %5436 = vmatpush1.bf16.msra.mxu0 0
        %5437 = vmatprep.subr.bf16.mxu0 0
        %5438 = vmatpush1.bf16.msra.mxu0 0
        %5439 = vmatprep.subr.bf16.mxu0 0
        %5440 = vmatpush1.bf16.msra.mxu0 0
        %5441 = vmatprep.subr.bf16.mxu0 0
        %5442 = vmatpush1.bf16.msra.mxu0 0
        %5443 = vmatprep.subr.bf16.mxu0 0
        %5444 = vmatpush1.bf16.msra.mxu0 0
        %5445 = vmatprep.subr.bf16.mxu0 0
        %5446 = vmatpush1.bf16.msra.mxu0 0
        %5447 = vmatprep.mubr.bf16.mxu0 0
        %5448 = vmatmul.mubr.bf16.gmra.mrb[0].mxu0 %v5030
        %v5449 = vpop.f32.mrb[0].mxu0
        %v5450 = vadd.f32 %v5377, %v5449
        %v5451 = vpop.f32.mrb[0].mxu0
        %v5452 = vadd.f32 %v5379, %v5451
        %v5453 = vpop.f32.mrb[0].mxu0
        %v5454 = vadd.f32 %v5381, %v5453
        %v5455 = vpop.f32.mrb[0].mxu0
        %v5456 = vadd.f32 %v5383, %v5455
        %5457 = vmatprep.mubr.bf16.mxu0 0
        %5458 = vmatmul.mubr.bf16.gmra.mrb[0].mxu0 %v5033
        %v5459 = vpop.f32.mrb[0].mxu0
        %v5460 = vadd.f32 %v5387, %v5459
        %v5461 = vpop.f32.mrb[0].mxu0
        %v5462 = vadd.f32 %v5389, %v5461
        %v5463 = vpop.f32.mrb[0].mxu0
        %v5464 = vadd.f32 %v5391, %v5463
        %v5465 = vpop.f32.mrb[0].mxu0
        %v5466 = vadd.f32 %v5393, %v5465
        %5467 = vmatprep.mubr.bf16.mxu0 0
        %5468 = vmatmul.mubr.bf16.gmra.mrb[0].mxu0 %v5036
        %v5469 = vpop.f32.mrb[0].mxu0
        %v5470 = vadd.f32 %v5397, %v5469
        %v5471 = vpop.f32.mrb[0].mxu0
        %v5472 = vadd.f32 %v5399, %v5471
        %v5473 = vpop.f32.mrb[0].mxu0
        %v5474 = vadd.f32 %v5401, %v5473
        %v5475 = vpop.f32.mrb[0].mxu0
        %v5476 = vadd.f32 %v5403, %v5475
        %5477 = vmatprep.mubr.bf16.mxu0 0
        %5478 = vmatmul.mubr.bf16.gmra.mrb[0].mxu0 %v5039
        %v5479 = vpop.f32.mrb[0].mxu0
        %v5480 = vadd.f32 %v5407, %v5479
        %v5481 = vpop.f32.mrb[0].mxu0
        %v5482 = vadd.f32 %v5409, %v5481
        %v5483 = vpop.f32.mrb[0].mxu0
        %v5484 = vadd.f32 %v5411, %v5483
        %v5485 = vpop.f32.mrb[0].mxu0
        %v5486 = vadd.f32 %v5413, %v5485
        %5487 = vdwg.mxu0
        %v5488 = vmul.f32 %v5450, 0.5
        %v5489 = vmul.f32 %v5454, 0.5
        %v5490 = vmul.f32 %v5460, 0.5
        %v5491 = vmul.f32 %v5464, 0.5
        %v5492 = vmul.f32 %v5470, 0.5
        %v5493 = vmul.f32 %v5474, 0.5
        %v5494 = vmul.f32 %v5480, 0.5
        %v5495 = vmul.f32 %v5484, 0.5
        %v5496 = vtanh.pop %v5488
        %v5497 = vtanh.pop %v5489
        %v5498 = vtanh.pop %v5490
        %v5499 = vtanh.pop %v5491
        %v5500 = vtanh.pop %v5492
        %v5501 = vtanh.pop %v5493
        %v5502 = vtanh.pop %v5494
        %v5503 = vtanh.pop %v5495
        %v5504 = vadd.f32 %v5496, 1.0
        %v5505 = vadd.f32 %v5497, 1.0
        %v5506 = vadd.f32 %v5498, 1.0
        %v5507 = vadd.f32 %v5499, 1.0
        %v5508 = vadd.f32 %v5500, 1.0
        %v5509 = vadd.f32 %v5501, 1.0
        %v5510 = vadd.f32 %v5502, 1.0
        %v5511 = vadd.f32 %v5503, 1.0
        %v5512 = vmul.f32 %v5504, 0.5
        %v5513 = vmul.f32 %v5505, 0.5
        %v5514 = vmul.f32 %v5506, 0.5
        %v5515 = vmul.f32 %v5507, 0.5
        %v5516 = vmul.f32 %v5508, 0.5
        %v5517 = vmul.f32 %v5509, 0.5
        %v5518 = vmul.f32 %v5510, 0.5
        %v5519 = vmul.f32 %v5511, 0.5
        %v5520 = vsub.f32 %v5452, %v4972
        %v5521 = vsub.f32 %v5456, %v4973
        %v5522 = vsub.f32 %v5462, %v4974
        %v5523 = vsub.f32 %v5466, %v4975
        %v5524 = vsub.f32 %v5472, %v4976
        %v5525 = vsub.f32 %v5476, %v4977
        %v5526 = vsub.f32 %v5482, %v4978
        %v5527 = vsub.f32 %v5486, %v4979
        %v5528 = vmul.f32 %v5512, %v5520
        %v5529 = vmul.f32 %v5513, %v5521
        %v5530 = vmul.f32 %v5514, %v5522
        %v5531 = vmul.f32 %v5515, %v5523
        %v5532 = vmul.f32 %v5516, %v5524
        %v5533 = vmul.f32 %v5517, %v5525
        %v5534 = vmul.f32 %v5518, %v5526
        %v5535 = vmul.f32 %v5519, %v5527
        %v5536 = vadd.f32 %v4972, %v5528
        %v5537 = vadd.f32 %v4973, %v5529
        %v5538 = vadd.f32 %v4974, %v5530
        %v5539 = vadd.f32 %v4975, %v5531
        %v5540 = vadd.f32 %v4976, %v5532
        %v5541 = vadd.f32 %v4977, %v5533
        %v5542 = vadd.f32 %v4978, %v5534
        %v5543 = vadd.f32 %v4979, %v5535
        %v5544 = vrot.slane %v5536, 7
        %v5545 = vrot.slane %v5537, 7
        %v5546 = vrot.slane %v5538, 7
        %v5547 = vrot.slane %v5539, 7
        %v5548 = vrot.slane %v5540, 7
        %v5549 = vrot.slane %v5541, 7
        %v5550 = vrot.slane %v5542, 7
        %v5551 = vrot.slane %v5543, 7
        %v5552 = vsel %vm1038, %v5550, %v5551
        %v5553 = vsel %vm1038, %v5549, %v5550
        %v5554 = vsel %vm1038, %v5548, %v5549
        %v5555 = vsel %vm1038, %v5547, %v5548
        %v5556 = vsel %vm1038, %v5546, %v5547
        %v5557 = vsel %vm1038, %v5545, %v5546
        %v5558 = vsel %vm1038, %v5544, %v5545
        %v5559 = vsel %vm1038, %v5551, %v5544
        %v5560 = vsel %vm966, %v5559, 0.0
        %v5561 = vsel %vm967, %v5558, 0.0
        %v5562 = vsel %vm968, %v5557, 0.0
        %v5563 = vsel %vm969, %v5556, 0.0
        %v5564 = vsel %vm970, %v5555, 0.0
        %v5565 = vsel %vm971, %v5554, 0.0
        %v5566 = vsel %vm972, %v5553, 0.0
        %v5567 = vsel %vm973, %v5552, 0.0
        %v5568 = vrot.slane %v5536, 1
        %v5569 = vrot.slane %v5537, 1
        %v5570 = vrot.slane %v5538, 1
        %v5571 = vrot.slane %v5539, 1
        %v5572 = vrot.slane %v5540, 1
        %v5573 = vrot.slane %v5541, 1
        %v5574 = vrot.slane %v5542, 1
        %v5575 = vrot.slane %v5543, 1
        %v5576 = vsel %vm1063, %v5574, %v5575
        %v5577 = vsel %vm1063, %v5573, %v5574
        %v5578 = vsel %vm1063, %v5572, %v5573
        %v5579 = vsel %vm1063, %v5571, %v5572
        %v5580 = vsel %vm1063, %v5570, %v5571
        %v5581 = vsel %vm1063, %v5569, %v5570
        %v5582 = vsel %vm1063, %v5568, %v5569
        %v5583 = vsel %vm1063, %v5575, %v5568
        %v5584 = vsel %vm974, %v5582, 0.0
        %v5585 = vsel %vm975, %v5581, 0.0
        %v5586 = vsel %vm976, %v5580, 0.0
        %v5587 = vsel %vm977, %v5579, 0.0
        %v5588 = vsel %vm978, %v5578, 0.0
        %v5589 = vsel %vm979, %v5577, 0.0
        %v5590 = vsel %vm980, %v5576, 0.0
        %v5591 = vsel %vm981, %v5583, 0.0
        %v5592 = vpack.c.bf16 %v5561, %v5560
        %v5593 = vpack.c.bf16 %v5537, %v5536
        %v5594 = vpack.c.bf16 %v5585, %v5584
        %v5595 = vpack.c.bf16 %v5563, %v5562
        %v5596 = vpack.c.bf16 %v5539, %v5538
        %v5597 = vpack.c.bf16 %v5587, %v5586
        %v5598 = vpack.c.bf16 %v5565, %v5564
        %v5599 = vpack.c.bf16 %v5541, %v5540
        %v5600 = vpack.c.bf16 %v5589, %v5588
        %v5601 = vpack.c.bf16 %v5567, %v5566
        %v5602 = vpack.c.bf16 %v5543, %v5542
        %v5603 = vpack.c.bf16 %v5591, %v5590
        %s5604 = scalar_lea.vmem [#allocation11], 3072
        %v5605 = vld [vmem:[%s5604] sm:$0xff]
        %v5606 = vld [vmem:[%s5604 + $0x8] sm:$0xff]
        %v5607 = vld [vmem:[%s5604 + $0x10] sm:$0xff]
        %v5608 = vld [vmem:[%s5604 + $0x18] sm:$0xff]
        %v5609 = vld [vmem:[%s5604 + $0x20] sm:$0xff]
        %v5610 = vld [vmem:[%s5604 + $0x28] sm:$0xff]
        %v5611 = vld [vmem:[%s5604 + $0x30] sm:$0xff]
        %v5612 = vld [vmem:[%s5604 + $0x38] sm:$0xff]
        %v5613 = vld [vmem:[%s5604 + $0x40] sm:$0xff]
        %v5614 = vld [vmem:[%s5604 + $0x48] sm:$0xff]
        %v5615 = vld [vmem:[%s5604 + $0x50] sm:$0xff]
        %v5616 = vld [vmem:[%s5604 + $0x58] sm:$0xff]
        %v5617 = vld [vmem:[%s5604 + $0x60] sm:$0xff]
        %v5618 = vld [vmem:[%s5604 + $0x68] sm:$0xff]
        %v5619 = vld [vmem:[%s5604 + $0x70] sm:$0xff]
        %v5620 = vld [vmem:[%s5604 + $0x78] sm:$0xff]
        %v5621 = vld [vmem:[%s5604 + $0x80] sm:$0xff]
        %v5622 = vld [vmem:[%s5604 + $0x88] sm:$0xff]
        %v5623 = vld [vmem:[%s5604 + $0x90] sm:$0xff]
        %v5624 = vld [vmem:[%s5604 + $0x98] sm:$0xff]
        %v5625 = vld [vmem:[%s5604 + $0xa0] sm:$0xff]
        %v5626 = vld [vmem:[%s5604 + $0xa8] sm:$0xff]
        %v5627 = vld [vmem:[%s5604 + $0xb0] sm:$0xff]
        %v5628 = vld [vmem:[%s5604 + $0xb8] sm:$0xff]
        %v5629 = vld [vmem:[%s5604 + $0xc0] sm:$0xff]
        %v5630 = vld [vmem:[%s5604 + $0xc8] sm:$0xff]
        %v5631 = vld [vmem:[%s5604 + $0xd0] sm:$0xff]
        %v5632 = vld [vmem:[%s5604 + $0xd8] sm:$0xff]
        %v5633 = vld [vmem:[%s5604 + $0xe0] sm:$0xff]
        %v5634 = vld [vmem:[%s5604 + $0xe8] sm:$0xff]
        %v5635 = vld [vmem:[%s5604 + $0xf0] sm:$0xff]
        %v5636 = vld [vmem:[%s5604 + $0xf8] sm:$0xff]
        %v5637 = vld [vmem:[%s5604 + $0x100] sm:$0xff]
        %v5638 = vld [vmem:[%s5604 + $0x108] sm:$0xff]
        %v5639 = vld [vmem:[%s5604 + $0x110] sm:$0xff]
        %v5640 = vld [vmem:[%s5604 + $0x118] sm:$0xff]
        %v5641 = vld [vmem:[%s5604 + $0x120] sm:$0xff]
        %v5642 = vld [vmem:[%s5604 + $0x128] sm:$0xff]
        %v5643 = vld [vmem:[%s5604 + $0x130] sm:$0xff]
        %v5644 = vld [vmem:[%s5604 + $0x138] sm:$0xff]
        %v5645 = vld [vmem:[%s5604 + $0x140] sm:$0xff]
        %v5646 = vld [vmem:[%s5604 + $0x148] sm:$0xff]
        %v5647 = vld [vmem:[%s5604 + $0x150] sm:$0xff]
        %v5648 = vld [vmem:[%s5604 + $0x158] sm:$0xff]
        %v5649 = vld [vmem:[%s5604 + $0x160] sm:$0xff]
        %v5650 = vld [vmem:[%s5604 + $0x168] sm:$0xff]
        %v5651 = vld [vmem:[%s5604 + $0x170] sm:$0xff]
        %v5652 = vld [vmem:[%s5604 + $0x178] sm:$0xff]
        %s5653 = scalar_lea.vmem [#allocation13], 16
        %v5654 = vld [vmem:[%s5653] sm:$0x3]
        %v5656 = vlaneseq
        %v5657 = vshrl.u32 %v5656, 7
        %v5658 = vsub.s32 0, %v5657
        %v5659 = vrot.slane %v5654, %v5658
        %v5660 = vlaneseq
        %v5661 = vshrl.u32 %v5660, 7
        %v5662 = vsub.s32 1, %v5661
        %v5663 = vrot.slane %v5654, %v5662
        %v5714 = vunpack.c.l.b16 %v5605
        %v5715 = vunpack.c.h.b16 %v5605
        %v5716 = vunpack.c.l.b16 %v5606
        %v5717 = vunpack.c.h.b16 %v5606
        %v5718 = vunpack.c.l.b16 %v5607
        %v5719 = vunpack.c.h.b16 %v5607
        %v5720 = vunpack.c.l.b16 %v5608
        %v5721 = vunpack.c.h.b16 %v5608
        %v5722 = vunpack.c.l.b16 %v5609
        %v5723 = vunpack.c.h.b16 %v5609
        %v5724 = vunpack.c.l.b16 %v5610
        %v5725 = vunpack.c.h.b16 %v5610
        %v5726 = vunpack.c.l.b16 %v5611
        %v5727 = vunpack.c.h.b16 %v5611
        %v5728 = vunpack.c.l.b16 %v5612
        %v5729 = vunpack.c.h.b16 %v5612
        %v5730 = vunpack.c.l.b16 %v5613
        %v5731 = vunpack.c.h.b16 %v5613
        %v5732 = vunpack.c.l.b16 %v5614
        %v5733 = vunpack.c.h.b16 %v5614
        %v5734 = vunpack.c.l.b16 %v5615
        %v5735 = vunpack.c.h.b16 %v5615
        %v5736 = vunpack.c.l.b16 %v5616
        %v5737 = vunpack.c.h.b16 %v5616
        %v5738 = vunpack.c.l.b16 %v5617
        %v5739 = vunpack.c.h.b16 %v5617
        %v5740 = vunpack.c.l.b16 %v5618
        %v5741 = vunpack.c.h.b16 %v5618
        %v5742 = vunpack.c.l.b16 %v5619
        %v5743 = vunpack.c.h.b16 %v5619
        %v5744 = vunpack.c.l.b16 %v5620
        %v5745 = vunpack.c.h.b16 %v5620
        %v5746 = vunpack.c.l.b16 %v5621
        %v5747 = vunpack.c.h.b16 %v5621
        %v5748 = vunpack.c.l.b16 %v5622
        %v5749 = vunpack.c.h.b16 %v5622
        %v5750 = vunpack.c.l.b16 %v5623
        %v5751 = vunpack.c.h.b16 %v5623
        %v5752 = vunpack.c.l.b16 %v5624
        %v5753 = vunpack.c.h.b16 %v5624
        %v5754 = vunpack.c.l.b16 %v5625
        %v5755 = vunpack.c.h.b16 %v5625
        %v5756 = vunpack.c.l.b16 %v5626
        %v5757 = vunpack.c.h.b16 %v5626
        %v5758 = vunpack.c.l.b16 %v5627
        %v5759 = vunpack.c.h.b16 %v5627
        %v5760 = vunpack.c.l.b16 %v5628
        %v5761 = vunpack.c.h.b16 %v5628
        %v5762 = vunpack.c.l.b16 %v5629
        %v5763 = vunpack.c.h.b16 %v5629
        %v5764 = vunpack.c.l.b16 %v5630
        %v5765 = vunpack.c.h.b16 %v5630
        %v5766 = vunpack.c.l.b16 %v5631
        %v5767 = vunpack.c.h.b16 %v5631
        %v5768 = vunpack.c.l.b16 %v5632
        %v5769 = vunpack.c.h.b16 %v5632
        %v5770 = vunpack.c.l.b16 %v5633
        %v5771 = vunpack.c.h.b16 %v5633
        %v5772 = vunpack.c.l.b16 %v5634
        %v5773 = vunpack.c.h.b16 %v5634
        %v5774 = vunpack.c.l.b16 %v5635
        %v5775 = vunpack.c.h.b16 %v5635
        %v5776 = vunpack.c.l.b16 %v5636
        %v5777 = vunpack.c.h.b16 %v5636
        %v5778 = vunpack.c.l.b16 %v5637
        %v5779 = vunpack.c.h.b16 %v5637
        %v5780 = vunpack.c.l.b16 %v5638
        %v5781 = vunpack.c.h.b16 %v5638
        %v5782 = vunpack.c.l.b16 %v5639
        %v5783 = vunpack.c.h.b16 %v5639
        %v5784 = vunpack.c.l.b16 %v5640
        %v5785 = vunpack.c.h.b16 %v5640
        %v5786 = vunpack.c.l.b16 %v5641
        %v5787 = vunpack.c.h.b16 %v5641
        %v5788 = vunpack.c.l.b16 %v5642
        %v5789 = vunpack.c.h.b16 %v5642
        %v5790 = vunpack.c.l.b16 %v5643
        %v5791 = vunpack.c.h.b16 %v5643
        %v5792 = vunpack.c.l.b16 %v5644
        %v5793 = vunpack.c.h.b16 %v5644
        %v5794 = vunpack.c.l.b16 %v5645
        %v5795 = vunpack.c.h.b16 %v5645
        %v5796 = vunpack.c.l.b16 %v5646
        %v5797 = vunpack.c.h.b16 %v5646
        %v5798 = vunpack.c.l.b16 %v5647
        %v5799 = vunpack.c.h.b16 %v5647
        %v5800 = vunpack.c.l.b16 %v5648
        %v5801 = vunpack.c.h.b16 %v5648
        %v5802 = vunpack.c.l.b16 %v5649
        %v5803 = vunpack.c.h.b16 %v5649
        %v5804 = vunpack.c.l.b16 %v5650
        %v5805 = vunpack.c.h.b16 %v5650
        %v5806 = vunpack.c.l.b16 %v5651
        %v5807 = vunpack.c.h.b16 %v5651
        %v5808 = vunpack.c.l.b16 %v5652
        %v5809 = vunpack.c.h.b16 %v5652
        %v5810 = vpack.c.b16 %v5716, %v5714
        %v5811 = vpack.c.b16 %v5717, %v5715
        %v5812 = vpack.c.b16 %v5720, %v5718
        %v5813 = vpack.c.b16 %v5721, %v5719
        %v5814 = vpack.c.b16 %v5724, %v5722
        %v5815 = vpack.c.b16 %v5725, %v5723
        %v5816 = vpack.c.b16 %v5728, %v5726
        %v5817 = vpack.c.b16 %v5729, %v5727
        %v5818 = vpack.c.b16 %v5732, %v5730
        %v5819 = vpack.c.b16 %v5733, %v5731
        %v5820 = vpack.c.b16 %v5736, %v5734
        %v5821 = vpack.c.b16 %v5737, %v5735
        %v5822 = vpack.c.b16 %v5740, %v5738
        %v5823 = vpack.c.b16 %v5741, %v5739
        %v5824 = vpack.c.b16 %v5744, %v5742
        %v5825 = vpack.c.b16 %v5745, %v5743
        %v5826 = vpack.c.b16 %v5748, %v5746
        %v5827 = vpack.c.b16 %v5749, %v5747
        %v5828 = vpack.c.b16 %v5752, %v5750
        %v5829 = vpack.c.b16 %v5753, %v5751
        %v5830 = vpack.c.b16 %v5756, %v5754
        %v5831 = vpack.c.b16 %v5757, %v5755
        %v5832 = vpack.c.b16 %v5760, %v5758
        %v5833 = vpack.c.b16 %v5761, %v5759
        %v5834 = vpack.c.b16 %v5764, %v5762
        %v5835 = vpack.c.b16 %v5765, %v5763
        %v5836 = vpack.c.b16 %v5768, %v5766
        %v5837 = vpack.c.b16 %v5769, %v5767
        %v5838 = vpack.c.b16 %v5772, %v5770
        %v5839 = vpack.c.b16 %v5773, %v5771
        %v5840 = vpack.c.b16 %v5776, %v5774
        %v5841 = vpack.c.b16 %v5777, %v5775
        %v5842 = vpack.c.b16 %v5780, %v5778
        %v5843 = vpack.c.b16 %v5781, %v5779
        %v5844 = vpack.c.b16 %v5784, %v5782
        %v5845 = vpack.c.b16 %v5785, %v5783
        %v5846 = vpack.c.b16 %v5788, %v5786
        %v5847 = vpack.c.b16 %v5789, %v5787
        %v5848 = vpack.c.b16 %v5792, %v5790
        %v5849 = vpack.c.b16 %v5793, %v5791
        %v5850 = vpack.c.b16 %v5796, %v5794
        %v5851 = vpack.c.b16 %v5797, %v5795
        %v5852 = vpack.c.b16 %v5800, %v5798
        %v5853 = vpack.c.b16 %v5801, %v5799
        %v5854 = vpack.c.b16 %v5804, %v5802
        %v5855 = vpack.c.b16 %v5805, %v5803
        %v5856 = vpack.c.b16 %v5808, %v5806
        %v5857 = vpack.c.b16 %v5809, %v5807
        %5906 = vmatprep.subr.bf16.mxu0 %v5811
        %5907 = vmatpush1.bf16.msra.mxu0 %v5810
        %5908 = vmatprep.subr.bf16.mxu0 %v5813
        %5909 = vmatpush1.bf16.msra.mxu0 %v5812
        %5910 = vmatprep.subr.bf16.mxu0 %v5815
        %5911 = vmatpush1.bf16.msra.mxu0 %v5814
        %5912 = vmatprep.subr.bf16.mxu0 %v5817
        %5913 = vmatpush1.bf16.msra.mxu0 %v5816
        %5914 = vmatprep.subr.bf16.mxu0 %v5819
        %5915 = vmatpush1.bf16.msra.mxu0 %v5818
        %5916 = vmatprep.subr.bf16.mxu0 %v5821
        %5917 = vmatpush1.bf16.msra.mxu0 %v5820
        %5918 = vmatprep.subr.bf16.mxu0 %v5823
        %5919 = vmatpush1.bf16.msra.mxu0 %v5822
        %5920 = vmatprep.subr.bf16.mxu0 %v5825
        %5921 = vmatpush1.bf16.msra.mxu0 %v5824
        %5922 = vmatprep.subr.bf16.mxu0 %v5827
        %5923 = vmatpush1.bf16.msra.mxu0 %v5826
        %5924 = vmatprep.subr.bf16.mxu0 %v5829
        %5925 = vmatpush1.bf16.msra.mxu0 %v5828
        %5926 = vmatprep.subr.bf16.mxu0 %v5831
        %5927 = vmatpush1.bf16.msra.mxu0 %v5830
        %5928 = vmatprep.subr.bf16.mxu0 %v5833
        %5929 = vmatpush1.bf16.msra.mxu0 %v5832
        %5930 = vmatprep.subr.bf16.mxu0 %v5835
        %5931 = vmatpush1.bf16.msra.mxu0 %v5834
        %5932 = vmatprep.subr.bf16.mxu0 %v5837
        %5933 = vmatpush1.bf16.msra.mxu0 %v5836
        %5934 = vmatprep.subr.bf16.mxu0 %v5839
        %5935 = vmatpush1.bf16.msra.mxu0 %v5838
        %5936 = vmatprep.subr.bf16.mxu0 %v5841
        %5937 = vmatpush1.bf16.msra.mxu0 %v5840
        %5938 = vmatprep.mubr.bf16.mxu0 %v5593
        %5939 = vmatmul.mubr.bf16.gmra.mrb[0].mxu0 %v5592
        %v5940 = vpop.f32.mrb[0].mxu0
        %v5941 = vadd.f32 %v5659, %v5940
        %v5942 = vpop.f32.mrb[0].mxu0
        %v5943 = vadd.f32 %v5663, %v5942
        %v5944 = vpop.f32.mrb[0].mxu0
        %v5945 = vadd.f32 %v5659, %v5944
        %v5946 = vpop.f32.mrb[0].mxu0
        %v5947 = vadd.f32 %v5663, %v5946
        %5948 = vmatprep.mubr.bf16.mxu0 %v5596
        %5949 = vmatmul.mubr.bf16.gmra.mrb[0].mxu0 %v5595
        %v5950 = vpop.f32.mrb[0].mxu0
        %v5951 = vadd.f32 %v5659, %v5950
        %v5952 = vpop.f32.mrb[0].mxu0
        %v5953 = vadd.f32 %v5663, %v5952
        %v5954 = vpop.f32.mrb[0].mxu0
        %v5955 = vadd.f32 %v5659, %v5954
        %v5956 = vpop.f32.mrb[0].mxu0
        %v5957 = vadd.f32 %v5663, %v5956
        %5958 = vmatprep.mubr.bf16.mxu0 %v5599
        %5959 = vmatmul.mubr.bf16.gmra.mrb[0].mxu0 %v5598
        %v5960 = vpop.f32.mrb[0].mxu0
        %v5961 = vadd.f32 %v5659, %v5960
        %v5962 = vpop.f32.mrb[0].mxu0
        %v5963 = vadd.f32 %v5663, %v5962
        %v5964 = vpop.f32.mrb[0].mxu0
        %v5965 = vadd.f32 %v5659, %v5964
        %v5966 = vpop.f32.mrb[0].mxu0
        %v5967 = vadd.f32 %v5663, %v5966
        %5968 = vmatprep.mubr.bf16.mxu0 %v5602
        %5969 = vmatmul.mubr.bf16.gmra.mrb[0].mxu0 %v5601
        %v5970 = vpop.f32.mrb[0].mxu0
        %v5971 = vadd.f32 %v5659, %v5970
        %v5972 = vpop.f32.mrb[0].mxu0
        %v5973 = vadd.f32 %v5663, %v5972
        %v5974 = vpop.f32.mrb[0].mxu0
        %v5975 = vadd.f32 %v5659, %v5974
        %v5976 = vpop.f32.mrb[0].mxu0
        %v5977 = vadd.f32 %v5663, %v5976
        %5978 = vdwg.mxu0
        %5979 = vmatprep.subr.bf16.mxu0 %v5843
        %5980 = vmatpush1.bf16.msra.mxu0 %v5842
        %5981 = vmatprep.subr.bf16.mxu0 %v5845
        %5982 = vmatpush1.bf16.msra.mxu0 %v5844
        %5983 = vmatprep.subr.bf16.mxu0 %v5847
        %5984 = vmatpush1.bf16.msra.mxu0 %v5846
        %5985 = vmatprep.subr.bf16.mxu0 %v5849
        %5986 = vmatpush1.bf16.msra.mxu0 %v5848
        %5987 = vmatprep.subr.bf16.mxu0 %v5851
        %5988 = vmatpush1.bf16.msra.mxu0 %v5850
        %5989 = vmatprep.subr.bf16.mxu0 %v5853
        %5990 = vmatpush1.bf16.msra.mxu0 %v5852
        %5991 = vmatprep.subr.bf16.mxu0 %v5855
        %5992 = vmatpush1.bf16.msra.mxu0 %v5854
        %5993 = vmatprep.subr.bf16.mxu0 %v5857
        %5994 = vmatpush1.bf16.msra.mxu0 %v5856
        %5995 = vmatprep.subr.bf16.mxu0 0
        %5996 = vmatpush1.bf16.msra.mxu0 0
        %5997 = vmatprep.subr.bf16.mxu0 0
        %5998 = vmatpush1.bf16.msra.mxu0 0
        %5999 = vmatprep.subr.bf16.mxu0 0
        %6000 = vmatpush1.bf16.msra.mxu0 0
        %6001 = vmatprep.subr.bf16.mxu0 0
        %6002 = vmatpush1.bf16.msra.mxu0 0
        %6003 = vmatprep.subr.bf16.mxu0 0
        %6004 = vmatpush1.bf16.msra.mxu0 0
        %6005 = vmatprep.subr.bf16.mxu0 0
        %6006 = vmatpush1.bf16.msra.mxu0 0
        %6007 = vmatprep.subr.bf16.mxu0 0
        %6008 = vmatpush1.bf16.msra.mxu0 0
        %6009 = vmatprep.subr.bf16.mxu0 0
        %6010 = vmatpush1.bf16.msra.mxu0 0
        %6011 = vmatprep.mubr.bf16.mxu0 0
        %6012 = vmatmul.mubr.bf16.gmra.mrb[0].mxu0 %v5594
        %v6013 = vpop.f32.mrb[0].mxu0
        %v6014 = vadd.f32 %v5941, %v6013
        %v6015 = vpop.f32.mrb[0].mxu0
        %v6016 = vadd.f32 %v5943, %v6015
        %v6017 = vpop.f32.mrb[0].mxu0
        %v6018 = vadd.f32 %v5945, %v6017
        %v6019 = vpop.f32.mrb[0].mxu0
        %v6020 = vadd.f32 %v5947, %v6019
        %6021 = vmatprep.mubr.bf16.mxu0 0
        %6022 = vmatmul.mubr.bf16.gmra.mrb[0].mxu0 %v5597
        %v6023 = vpop.f32.mrb[0].mxu0
        %v6024 = vadd.f32 %v5951, %v6023
        %v6025 = vpop.f32.mrb[0].mxu0
        %v6026 = vadd.f32 %v5953, %v6025
        %v6027 = vpop.f32.mrb[0].mxu0
        %v6028 = vadd.f32 %v5955, %v6027
        %v6029 = vpop.f32.mrb[0].mxu0
        %v6030 = vadd.f32 %v5957, %v6029
        %6031 = vmatprep.mubr.bf16.mxu0 0
        %6032 = vmatmul.mubr.bf16.gmra.mrb[0].mxu0 %v5600
        %v6033 = vpop.f32.mrb[0].mxu0
        %v6034 = vadd.f32 %v5961, %v6033
        %v6035 = vpop.f32.mrb[0].mxu0
        %v6036 = vadd.f32 %v5963, %v6035
        %v6037 = vpop.f32.mrb[0].mxu0
        %v6038 = vadd.f32 %v5965, %v6037
        %v6039 = vpop.f32.mrb[0].mxu0
        %v6040 = vadd.f32 %v5967, %v6039
        %6041 = vmatprep.mubr.bf16.mxu0 0
        %6042 = vmatmul.mubr.bf16.gmra.mrb[0].mxu0 %v5603
        %v6043 = vpop.f32.mrb[0].mxu0
        %v6044 = vadd.f32 %v5971, %v6043
        %v6045 = vpop.f32.mrb[0].mxu0
        %v6046 = vadd.f32 %v5973, %v6045
        %v6047 = vpop.f32.mrb[0].mxu0
        %v6048 = vadd.f32 %v5975, %v6047
        %v6049 = vpop.f32.mrb[0].mxu0
        %v6050 = vadd.f32 %v5977, %v6049
        %6051 = vdwg.mxu0
        %v6052 = vmul.f32 %v6014, 0.5
        %v6053 = vmul.f32 %v6018, 0.5
        %v6054 = vmul.f32 %v6024, 0.5
        %v6055 = vmul.f32 %v6028, 0.5
        %v6056 = vmul.f32 %v6034, 0.5
        %v6057 = vmul.f32 %v6038, 0.5
        %v6058 = vmul.f32 %v6044, 0.5
        %v6059 = vmul.f32 %v6048, 0.5
        %v6060 = vtanh.pop %v6052
        %v6061 = vtanh.pop %v6053
        %v6062 = vtanh.pop %v6054
        %v6063 = vtanh.pop %v6055
        %v6064 = vtanh.pop %v6056
        %v6065 = vtanh.pop %v6057
        %v6066 = vtanh.pop %v6058
        %v6067 = vtanh.pop %v6059
        %v6068 = vadd.f32 %v6060, 1.0
        %v6069 = vadd.f32 %v6061, 1.0
        %v6070 = vadd.f32 %v6062, 1.0
        %v6071 = vadd.f32 %v6063, 1.0
        %v6072 = vadd.f32 %v6064, 1.0
        %v6073 = vadd.f32 %v6065, 1.0
        %v6074 = vadd.f32 %v6066, 1.0
        %v6075 = vadd.f32 %v6067, 1.0
        %v6076 = vmul.f32 %v6068, 0.5
        %v6077 = vmul.f32 %v6069, 0.5
        %v6078 = vmul.f32 %v6070, 0.5
        %v6079 = vmul.f32 %v6071, 0.5
        %v6080 = vmul.f32 %v6072, 0.5
        %v6081 = vmul.f32 %v6073, 0.5
        %v6082 = vmul.f32 %v6074, 0.5
        %v6083 = vmul.f32 %v6075, 0.5
        %v6084 = vsub.f32 %v6016, %v5536
        %v6085 = vsub.f32 %v6020, %v5537
        %v6086 = vsub.f32 %v6026, %v5538
        %v6087 = vsub.f32 %v6030, %v5539
        %v6088 = vsub.f32 %v6036, %v5540
        %v6089 = vsub.f32 %v6040, %v5541
        %v6090 = vsub.f32 %v6046, %v5542
        %v6091 = vsub.f32 %v6050, %v5543
        %v6092 = vmul.f32 %v6076, %v6084
        %v6093 = vmul.f32 %v6077, %v6085
        %v6094 = vmul.f32 %v6078, %v6086
        %v6095 = vmul.f32 %v6079, %v6087
        %v6096 = vmul.f32 %v6080, %v6088
        %v6097 = vmul.f32 %v6081, %v6089
        %v6098 = vmul.f32 %v6082, %v6090
        %v6099 = vmul.f32 %v6083, %v6091
        %v6100 = vadd.f32 %v5536, %v6092
        %v6101 = vadd.f32 %v5537, %v6093
        %v6102 = vadd.f32 %v5538, %v6094
        %v6103 = vadd.f32 %v5539, %v6095
        %v6104 = vadd.f32 %v5540, %v6096
        %v6105 = vadd.f32 %v5541, %v6097
        %v6106 = vadd.f32 %v5542, %v6098
        %v6107 = vadd.f32 %v5543, %v6099
        %v6108 = vrot.slane %v6100, 7
        %v6109 = vrot.slane %v6101, 7
        %v6110 = vrot.slane %v6102, 7
        %v6111 = vrot.slane %v6103, 7
        %v6112 = vrot.slane %v6104, 7
        %v6113 = vrot.slane %v6105, 7
        %v6114 = vrot.slane %v6106, 7
        %v6115 = vrot.slane %v6107, 7
        %v6116 = vsel %vm1038, %v6114, %v6115
        %v6117 = vsel %vm1038, %v6113, %v6114
        %v6118 = vsel %vm1038, %v6112, %v6113
        %v6119 = vsel %vm1038, %v6111, %v6112
        %v6120 = vsel %vm1038, %v6110, %v6111
        %v6121 = vsel %vm1038, %v6109, %v6110
        %v6122 = vsel %vm1038, %v6108, %v6109
        %v6123 = vsel %vm1038, %v6115, %v6108
        %v6124 = vsel %vm966, %v6123, 0.0
        %v6125 = vsel %vm967, %v6122, 0.0
        %v6126 = vsel %vm968, %v6121, 0.0
        %v6127 = vsel %vm969, %v6120, 0.0
        %v6128 = vsel %vm970, %v6119, 0.0
        %v6129 = vsel %vm971, %v6118, 0.0
        %v6130 = vsel %vm972, %v6117, 0.0
        %v6131 = vsel %vm973, %v6116, 0.0
        %v6132 = vrot.slane %v6100, 1
        %v6133 = vrot.slane %v6101, 1
        %v6134 = vrot.slane %v6102, 1
        %v6135 = vrot.slane %v6103, 1
        %v6136 = vrot.slane %v6104, 1
        %v6137 = vrot.slane %v6105, 1
        %v6138 = vrot.slane %v6106, 1
        %v6139 = vrot.slane %v6107, 1
        %v6140 = vsel %vm1063, %v6138, %v6139
        %v6141 = vsel %vm1063, %v6137, %v6138
        %v6142 = vsel %vm1063, %v6136, %v6137
        %v6143 = vsel %vm1063, %v6135, %v6136
        %v6144 = vsel %vm1063, %v6134, %v6135
        %v6145 = vsel %vm1063, %v6133, %v6134
        %v6146 = vsel %vm1063, %v6132, %v6133
        %v6147 = vsel %vm1063, %v6139, %v6132
        %v6148 = vsel %vm974, %v6146, 0.0
        %v6149 = vsel %vm975, %v6145, 0.0
        %v6150 = vsel %vm976, %v6144, 0.0
        %v6151 = vsel %vm977, %v6143, 0.0
        %v6152 = vsel %vm978, %v6142, 0.0
        %v6153 = vsel %vm979, %v6141, 0.0
        %v6154 = vsel %vm980, %v6140, 0.0
        %v6155 = vsel %vm981, %v6147, 0.0
        %v6156 = vpack.c.bf16 %v6125, %v6124
        %v6157 = vpack.c.bf16 %v6101, %v6100
        %v6158 = vpack.c.bf16 %v6149, %v6148
        %v6159 = vpack.c.bf16 %v6127, %v6126
        %v6160 = vpack.c.bf16 %v6103, %v6102
        %v6161 = vpack.c.bf16 %v6151, %v6150
        %v6162 = vpack.c.bf16 %v6129, %v6128
        %v6163 = vpack.c.bf16 %v6105, %v6104
        %v6164 = vpack.c.bf16 %v6153, %v6152
        %v6165 = vpack.c.bf16 %v6131, %v6130
        %v6166 = vpack.c.bf16 %v6107, %v6106
        %v6167 = vpack.c.bf16 %v6155, %v6154
        %s6168 = scalar_lea.vmem [#allocation11], 3456
        %v6169 = vld [vmem:[%s6168] sm:$0xff]
        %v6170 = vld [vmem:[%s6168 + $0x8] sm:$0xff]
        %v6171 = vld [vmem:[%s6168 + $0x10] sm:$0xff]
        %v6172 = vld [vmem:[%s6168 + $0x18] sm:$0xff]
        %v6173 = vld [vmem:[%s6168 + $0x20] sm:$0xff]
        %v6174 = vld [vmem:[%s6168 + $0x28] sm:$0xff]
        %v6175 = vld [vmem:[%s6168 + $0x30] sm:$0xff]
        %v6176 = vld [vmem:[%s6168 + $0x38] sm:$0xff]
        %v6177 = vld [vmem:[%s6168 + $0x40] sm:$0xff]
        %v6178 = vld [vmem:[%s6168 + $0x48] sm:$0xff]
        %v6179 = vld [vmem:[%s6168 + $0x50] sm:$0xff]
        %v6180 = vld [vmem:[%s6168 + $0x58] sm:$0xff]
        %v6181 = vld [vmem:[%s6168 + $0x60] sm:$0xff]
        %v6182 = vld [vmem:[%s6168 + $0x68] sm:$0xff]
        %v6183 = vld [vmem:[%s6168 + $0x70] sm:$0xff]
        %v6184 = vld [vmem:[%s6168 + $0x78] sm:$0xff]
        %v6185 = vld [vmem:[%s6168 + $0x80] sm:$0xff]
        %v6186 = vld [vmem:[%s6168 + $0x88] sm:$0xff]
        %v6187 = vld [vmem:[%s6168 + $0x90] sm:$0xff]
        %v6188 = vld [vmem:[%s6168 + $0x98] sm:$0xff]
        %v6189 = vld [vmem:[%s6168 + $0xa0] sm:$0xff]
        %v6190 = vld [vmem:[%s6168 + $0xa8] sm:$0xff]
        %v6191 = vld [vmem:[%s6168 + $0xb0] sm:$0xff]
        %v6192 = vld [vmem:[%s6168 + $0xb8] sm:$0xff]
        %v6193 = vld [vmem:[%s6168 + $0xc0] sm:$0xff]
        %v6194 = vld [vmem:[%s6168 + $0xc8] sm:$0xff]
        %v6195 = vld [vmem:[%s6168 + $0xd0] sm:$0xff]
        %v6196 = vld [vmem:[%s6168 + $0xd8] sm:$0xff]
        %v6197 = vld [vmem:[%s6168 + $0xe0] sm:$0xff]
        %v6198 = vld [vmem:[%s6168 + $0xe8] sm:$0xff]
        %v6199 = vld [vmem:[%s6168 + $0xf0] sm:$0xff]
        %v6200 = vld [vmem:[%s6168 + $0xf8] sm:$0xff]
        %v6201 = vld [vmem:[%s6168 + $0x100] sm:$0xff]
        %v6202 = vld [vmem:[%s6168 + $0x108] sm:$0xff]
        %v6203 = vld [vmem:[%s6168 + $0x110] sm:$0xff]
        %v6204 = vld [vmem:[%s6168 + $0x118] sm:$0xff]
        %v6205 = vld [vmem:[%s6168 + $0x120] sm:$0xff]
        %v6206 = vld [vmem:[%s6168 + $0x128] sm:$0xff]
        %v6207 = vld [vmem:[%s6168 + $0x130] sm:$0xff]
        %v6208 = vld [vmem:[%s6168 + $0x138] sm:$0xff]
        %v6209 = vld [vmem:[%s6168 + $0x140] sm:$0xff]
        %v6210 = vld [vmem:[%s6168 + $0x148] sm:$0xff]
        %v6211 = vld [vmem:[%s6168 + $0x150] sm:$0xff]
        %v6212 = vld [vmem:[%s6168 + $0x158] sm:$0xff]
        %v6213 = vld [vmem:[%s6168 + $0x160] sm:$0xff]
        %v6214 = vld [vmem:[%s6168 + $0x168] sm:$0xff]
        %v6215 = vld [vmem:[%s6168 + $0x170] sm:$0xff]
        %v6216 = vld [vmem:[%s6168 + $0x178] sm:$0xff]
        %s6217 = scalar_lea.vmem [#allocation13], 18
        %v6218 = vld [vmem:[%s6217] sm:$0x3]
        %v6220 = vlaneseq
        %v6221 = vshrl.u32 %v6220, 7
        %v6222 = vsub.s32 0, %v6221
        %v6223 = vrot.slane %v6218, %v6222
        %v6224 = vlaneseq
        %v6225 = vshrl.u32 %v6224, 7
        %v6226 = vsub.s32 1, %v6225
        %v6227 = vrot.slane %v6218, %v6226
        %v6278 = vunpack.c.l.b16 %v6169
        %v6279 = vunpack.c.h.b16 %v6169
        %v6280 = vunpack.c.l.b16 %v6170
        %v6281 = vunpack.c.h.b16 %v6170
        %v6282 = vunpack.c.l.b16 %v6171
        %v6283 = vunpack.c.h.b16 %v6171
        %v6284 = vunpack.c.l.b16 %v6172
        %v6285 = vunpack.c.h.b16 %v6172
        %v6286 = vunpack.c.l.b16 %v6173
        %v6287 = vunpack.c.h.b16 %v6173
        %v6288 = vunpack.c.l.b16 %v6174
        %v6289 = vunpack.c.h.b16 %v6174
        %v6290 = vunpack.c.l.b16 %v6175
        %v6291 = vunpack.c.h.b16 %v6175
        %v6292 = vunpack.c.l.b16 %v6176
        %v6293 = vunpack.c.h.b16 %v6176
        %v6294 = vunpack.c.l.b16 %v6177
        %v6295 = vunpack.c.h.b16 %v6177
        %v6296 = vunpack.c.l.b16 %v6178
        %v6297 = vunpack.c.h.b16 %v6178
        %v6298 = vunpack.c.l.b16 %v6179
        %v6299 = vunpack.c.h.b16 %v6179
        %v6300 = vunpack.c.l.b16 %v6180
        %v6301 = vunpack.c.h.b16 %v6180
        %v6302 = vunpack.c.l.b16 %v6181
        %v6303 = vunpack.c.h.b16 %v6181
        %v6304 = vunpack.c.l.b16 %v6182
        %v6305 = vunpack.c.h.b16 %v6182
        %v6306 = vunpack.c.l.b16 %v6183
        %v6307 = vunpack.c.h.b16 %v6183
        %v6308 = vunpack.c.l.b16 %v6184
        %v6309 = vunpack.c.h.b16 %v6184
        %v6310 = vunpack.c.l.b16 %v6185
        %v6311 = vunpack.c.h.b16 %v6185
        %v6312 = vunpack.c.l.b16 %v6186
        %v6313 = vunpack.c.h.b16 %v6186
        %v6314 = vunpack.c.l.b16 %v6187
        %v6315 = vunpack.c.h.b16 %v6187
        %v6316 = vunpack.c.l.b16 %v6188
        %v6317 = vunpack.c.h.b16 %v6188
        %v6318 = vunpack.c.l.b16 %v6189
        %v6319 = vunpack.c.h.b16 %v6189
        %v6320 = vunpack.c.l.b16 %v6190
        %v6321 = vunpack.c.h.b16 %v6190
        %v6322 = vunpack.c.l.b16 %v6191
        %v6323 = vunpack.c.h.b16 %v6191
        %v6324 = vunpack.c.l.b16 %v6192
        %v6325 = vunpack.c.h.b16 %v6192
        %v6326 = vunpack.c.l.b16 %v6193
        %v6327 = vunpack.c.h.b16 %v6193
        %v6328 = vunpack.c.l.b16 %v6194
        %v6329 = vunpack.c.h.b16 %v6194
        %v6330 = vunpack.c.l.b16 %v6195
        %v6331 = vunpack.c.h.b16 %v6195
        %v6332 = vunpack.c.l.b16 %v6196
        %v6333 = vunpack.c.h.b16 %v6196
        %v6334 = vunpack.c.l.b16 %v6197
        %v6335 = vunpack.c.h.b16 %v6197
        %v6336 = vunpack.c.l.b16 %v6198
        %v6337 = vunpack.c.h.b16 %v6198
        %v6338 = vunpack.c.l.b16 %v6199
        %v6339 = vunpack.c.h.b16 %v6199
        %v6340 = vunpack.c.l.b16 %v6200
        %v6341 = vunpack.c.h.b16 %v6200
        %v6342 = vunpack.c.l.b16 %v6201
        %v6343 = vunpack.c.h.b16 %v6201
        %v6344 = vunpack.c.l.b16 %v6202
        %v6345 = vunpack.c.h.b16 %v6202
        %v6346 = vunpack.c.l.b16 %v6203
        %v6347 = vunpack.c.h.b16 %v6203
        %v6348 = vunpack.c.l.b16 %v6204
        %v6349 = vunpack.c.h.b16 %v6204
        %v6350 = vunpack.c.l.b16 %v6205
        %v6351 = vunpack.c.h.b16 %v6205
        %v6352 = vunpack.c.l.b16 %v6206
        %v6353 = vunpack.c.h.b16 %v6206
        %v6354 = vunpack.c.l.b16 %v6207
        %v6355 = vunpack.c.h.b16 %v6207
        %v6356 = vunpack.c.l.b16 %v6208
        %v6357 = vunpack.c.h.b16 %v6208
        %v6358 = vunpack.c.l.b16 %v6209
        %v6359 = vunpack.c.h.b16 %v6209
        %v6360 = vunpack.c.l.b16 %v6210
        %v6361 = vunpack.c.h.b16 %v6210
        %v6362 = vunpack.c.l.b16 %v6211
        %v6363 = vunpack.c.h.b16 %v6211
        %v6364 = vunpack.c.l.b16 %v6212
        %v6365 = vunpack.c.h.b16 %v6212
        %v6366 = vunpack.c.l.b16 %v6213
        %v6367 = vunpack.c.h.b16 %v6213
        %v6368 = vunpack.c.l.b16 %v6214
        %v6369 = vunpack.c.h.b16 %v6214
        %v6370 = vunpack.c.l.b16 %v6215
        %v6371 = vunpack.c.h.b16 %v6215
        %v6372 = vunpack.c.l.b16 %v6216
        %v6373 = vunpack.c.h.b16 %v6216
        %v6374 = vpack.c.b16 %v6280, %v6278
        %v6375 = vpack.c.b16 %v6281, %v6279
        %v6376 = vpack.c.b16 %v6284, %v6282
        %v6377 = vpack.c.b16 %v6285, %v6283
        %v6378 = vpack.c.b16 %v6288, %v6286
        %v6379 = vpack.c.b16 %v6289, %v6287
        %v6380 = vpack.c.b16 %v6292, %v6290
        %v6381 = vpack.c.b16 %v6293, %v6291
        %v6382 = vpack.c.b16 %v6296, %v6294
        %v6383 = vpack.c.b16 %v6297, %v6295
        %v6384 = vpack.c.b16 %v6300, %v6298
        %v6385 = vpack.c.b16 %v6301, %v6299
        %v6386 = vpack.c.b16 %v6304, %v6302
        %v6387 = vpack.c.b16 %v6305, %v6303
        %v6388 = vpack.c.b16 %v6308, %v6306
        %v6389 = vpack.c.b16 %v6309, %v6307
        %v6390 = vpack.c.b16 %v6312, %v6310
        %v6391 = vpack.c.b16 %v6313, %v6311
        %v6392 = vpack.c.b16 %v6316, %v6314
        %v6393 = vpack.c.b16 %v6317, %v6315
        %v6394 = vpack.c.b16 %v6320, %v6318
        %v6395 = vpack.c.b16 %v6321, %v6319
        %v6396 = vpack.c.b16 %v6324, %v6322
        %v6397 = vpack.c.b16 %v6325, %v6323
        %v6398 = vpack.c.b16 %v6328, %v6326
        %v6399 = vpack.c.b16 %v6329, %v6327
        %v6400 = vpack.c.b16 %v6332, %v6330
        %v6401 = vpack.c.b16 %v6333, %v6331
        %v6402 = vpack.c.b16 %v6336, %v6334
        %v6403 = vpack.c.b16 %v6337, %v6335
        %v6404 = vpack.c.b16 %v6340, %v6338
        %v6405 = vpack.c.b16 %v6341, %v6339
        %v6406 = vpack.c.b16 %v6344, %v6342
        %v6407 = vpack.c.b16 %v6345, %v6343
        %v6408 = vpack.c.b16 %v6348, %v6346
        %v6409 = vpack.c.b16 %v6349, %v6347
        %v6410 = vpack.c.b16 %v6352, %v6350
        %v6411 = vpack.c.b16 %v6353, %v6351
        %v6412 = vpack.c.b16 %v6356, %v6354
        %v6413 = vpack.c.b16 %v6357, %v6355
        %v6414 = vpack.c.b16 %v6360, %v6358
        %v6415 = vpack.c.b16 %v6361, %v6359
        %v6416 = vpack.c.b16 %v6364, %v6362
        %v6417 = vpack.c.b16 %v6365, %v6363
        %v6418 = vpack.c.b16 %v6368, %v6366
        %v6419 = vpack.c.b16 %v6369, %v6367
        %v6420 = vpack.c.b16 %v6372, %v6370
        %v6421 = vpack.c.b16 %v6373, %v6371
        %6470 = vmatprep.subr.bf16.mxu0 %v6375
        %6471 = vmatpush1.bf16.msra.mxu0 %v6374
        %6472 = vmatprep.subr.bf16.mxu0 %v6377
        %6473 = vmatpush1.bf16.msra.mxu0 %v6376
        %6474 = vmatprep.subr.bf16.mxu0 %v6379
        %6475 = vmatpush1.bf16.msra.mxu0 %v6378
        %6476 = vmatprep.subr.bf16.mxu0 %v6381
        %6477 = vmatpush1.bf16.msra.mxu0 %v6380
        %6478 = vmatprep.subr.bf16.mxu0 %v6383
        %6479 = vmatpush1.bf16.msra.mxu0 %v6382
        %6480 = vmatprep.subr.bf16.mxu0 %v6385
        %6481 = vmatpush1.bf16.msra.mxu0 %v6384
        %6482 = vmatprep.subr.bf16.mxu0 %v6387
        %6483 = vmatpush1.bf16.msra.mxu0 %v6386
        %6484 = vmatprep.subr.bf16.mxu0 %v6389
        %6485 = vmatpush1.bf16.msra.mxu0 %v6388
        %6486 = vmatprep.subr.bf16.mxu0 %v6391
        %6487 = vmatpush1.bf16.msra.mxu0 %v6390
        %6488 = vmatprep.subr.bf16.mxu0 %v6393
        %6489 = vmatpush1.bf16.msra.mxu0 %v6392
        %6490 = vmatprep.subr.bf16.mxu0 %v6395
        %6491 = vmatpush1.bf16.msra.mxu0 %v6394
        %6492 = vmatprep.subr.bf16.mxu0 %v6397
        %6493 = vmatpush1.bf16.msra.mxu0 %v6396
        %6494 = vmatprep.subr.bf16.mxu0 %v6399
        %6495 = vmatpush1.bf16.msra.mxu0 %v6398
        %6496 = vmatprep.subr.bf16.mxu0 %v6401
        %6497 = vmatpush1.bf16.msra.mxu0 %v6400
        %6498 = vmatprep.subr.bf16.mxu0 %v6403
        %6499 = vmatpush1.bf16.msra.mxu0 %v6402
        %6500 = vmatprep.subr.bf16.mxu0 %v6405
        %6501 = vmatpush1.bf16.msra.mxu0 %v6404
        %6502 = vmatprep.mubr.bf16.mxu0 %v6157
        %6503 = vmatmul.mubr.bf16.gmra.mrb[0].mxu0 %v6156
        %v6504 = vpop.f32.mrb[0].mxu0
        %v6505 = vadd.f32 %v6223, %v6504
        %v6506 = vpop.f32.mrb[0].mxu0
        %v6507 = vadd.f32 %v6227, %v6506
        %v6508 = vpop.f32.mrb[0].mxu0
        %v6509 = vadd.f32 %v6223, %v6508
        %v6510 = vpop.f32.mrb[0].mxu0
        %v6511 = vadd.f32 %v6227, %v6510
        %6512 = vmatprep.mubr.bf16.mxu0 %v6160
        %6513 = vmatmul.mubr.bf16.gmra.mrb[0].mxu0 %v6159
        %v6514 = vpop.f32.mrb[0].mxu0
        %v6515 = vadd.f32 %v6223, %v6514
        %v6516 = vpop.f32.mrb[0].mxu0
        %v6517 = vadd.f32 %v6227, %v6516
        %v6518 = vpop.f32.mrb[0].mxu0
        %v6519 = vadd.f32 %v6223, %v6518
        %v6520 = vpop.f32.mrb[0].mxu0
        %v6521 = vadd.f32 %v6227, %v6520
        %6522 = vmatprep.mubr.bf16.mxu0 %v6163
        %6523 = vmatmul.mubr.bf16.gmra.mrb[0].mxu0 %v6162
        %v6524 = vpop.f32.mrb[0].mxu0
        %v6525 = vadd.f32 %v6223, %v6524
        %v6526 = vpop.f32.mrb[0].mxu0
        %v6527 = vadd.f32 %v6227, %v6526
        %v6528 = vpop.f32.mrb[0].mxu0
        %v6529 = vadd.f32 %v6223, %v6528
        %v6530 = vpop.f32.mrb[0].mxu0
        %v6531 = vadd.f32 %v6227, %v6530
        %6532 = vmatprep.mubr.bf16.mxu0 %v6166
        %6533 = vmatmul.mubr.bf16.gmra.mrb[0].mxu0 %v6165
        %v6534 = vpop.f32.mrb[0].mxu0
        %v6535 = vadd.f32 %v6223, %v6534
        %v6536 = vpop.f32.mrb[0].mxu0
        %v6537 = vadd.f32 %v6227, %v6536
        %v6538 = vpop.f32.mrb[0].mxu0
        %v6539 = vadd.f32 %v6223, %v6538
        %v6540 = vpop.f32.mrb[0].mxu0
        %v6541 = vadd.f32 %v6227, %v6540
        %6542 = vdwg.mxu0
        %6543 = vmatprep.subr.bf16.mxu0 %v6407
        %6544 = vmatpush1.bf16.msra.mxu0 %v6406
        %6545 = vmatprep.subr.bf16.mxu0 %v6409
        %6546 = vmatpush1.bf16.msra.mxu0 %v6408
        %6547 = vmatprep.subr.bf16.mxu0 %v6411
        %6548 = vmatpush1.bf16.msra.mxu0 %v6410
        %6549 = vmatprep.subr.bf16.mxu0 %v6413
        %6550 = vmatpush1.bf16.msra.mxu0 %v6412
        %6551 = vmatprep.subr.bf16.mxu0 %v6415
        %6552 = vmatpush1.bf16.msra.mxu0 %v6414
        %6553 = vmatprep.subr.bf16.mxu0 %v6417
        %6554 = vmatpush1.bf16.msra.mxu0 %v6416
        %6555 = vmatprep.subr.bf16.mxu0 %v6419
        %6556 = vmatpush1.bf16.msra.mxu0 %v6418
        %6557 = vmatprep.subr.bf16.mxu0 %v6421
        %6558 = vmatpush1.bf16.msra.mxu0 %v6420
        %6559 = vmatprep.subr.bf16.mxu0 0
        %6560 = vmatpush1.bf16.msra.mxu0 0
        %6561 = vmatprep.subr.bf16.mxu0 0
        %6562 = vmatpush1.bf16.msra.mxu0 0
        %6563 = vmatprep.subr.bf16.mxu0 0
        %6564 = vmatpush1.bf16.msra.mxu0 0
        %6565 = vmatprep.subr.bf16.mxu0 0
        %6566 = vmatpush1.bf16.msra.mxu0 0
        %6567 = vmatprep.subr.bf16.mxu0 0
        %6568 = vmatpush1.bf16.msra.mxu0 0
        %6569 = vmatprep.subr.bf16.mxu0 0
        %6570 = vmatpush1.bf16.msra.mxu0 0
        %6571 = vmatprep.subr.bf16.mxu0 0
        %6572 = vmatpush1.bf16.msra.mxu0 0
        %6573 = vmatprep.subr.bf16.mxu0 0
        %6574 = vmatpush1.bf16.msra.mxu0 0
        %6575 = vmatprep.mubr.bf16.mxu0 0
        %6576 = vmatmul.mubr.bf16.gmra.mrb[0].mxu0 %v6158
        %v6577 = vpop.f32.mrb[0].mxu0
        %v6578 = vadd.f32 %v6505, %v6577
        %v6579 = vpop.f32.mrb[0].mxu0
        %v6580 = vadd.f32 %v6507, %v6579
        %v6581 = vpop.f32.mrb[0].mxu0
        %v6582 = vadd.f32 %v6509, %v6581
        %v6583 = vpop.f32.mrb[0].mxu0
        %v6584 = vadd.f32 %v6511, %v6583
        %6585 = vmatprep.mubr.bf16.mxu0 0
        %6586 = vmatmul.mubr.bf16.gmra.mrb[0].mxu0 %v6161
        %v6587 = vpop.f32.mrb[0].mxu0
        %v6588 = vadd.f32 %v6515, %v6587
        %v6589 = vpop.f32.mrb[0].mxu0
        %v6590 = vadd.f32 %v6517, %v6589
        %v6591 = vpop.f32.mrb[0].mxu0
        %v6592 = vadd.f32 %v6519, %v6591
        %v6593 = vpop.f32.mrb[0].mxu0
        %v6594 = vadd.f32 %v6521, %v6593
        %6595 = vmatprep.mubr.bf16.mxu0 0
        %6596 = vmatmul.mubr.bf16.gmra.mrb[0].mxu0 %v6164
        %v6597 = vpop.f32.mrb[0].mxu0
        %v6598 = vadd.f32 %v6525, %v6597
        %v6599 = vpop.f32.mrb[0].mxu0
        %v6600 = vadd.f32 %v6527, %v6599
        %v6601 = vpop.f32.mrb[0].mxu0
        %v6602 = vadd.f32 %v6529, %v6601
        %v6603 = vpop.f32.mrb[0].mxu0
        %v6604 = vadd.f32 %v6531, %v6603
        %6605 = vmatprep.mubr.bf16.mxu0 0
        %6606 = vmatmul.mubr.bf16.gmra.mrb[0].mxu0 %v6167
        %v6607 = vpop.f32.mrb[0].mxu0
        %v6608 = vadd.f32 %v6535, %v6607
        %v6609 = vpop.f32.mrb[0].mxu0
        %v6610 = vadd.f32 %v6537, %v6609
        %v6611 = vpop.f32.mrb[0].mxu0
        %v6612 = vadd.f32 %v6539, %v6611
        %v6613 = vpop.f32.mrb[0].mxu0
        %v6614 = vadd.f32 %v6541, %v6613
        %6615 = vdwg.mxu0
        %v6616 = vmul.f32 %v6578, 0.5
        %v6617 = vmul.f32 %v6582, 0.5
        %v6618 = vmul.f32 %v6588, 0.5
        %v6619 = vmul.f32 %v6592, 0.5
        %v6620 = vmul.f32 %v6598, 0.5
        %v6621 = vmul.f32 %v6602, 0.5
        %v6622 = vmul.f32 %v6608, 0.5
        %v6623 = vmul.f32 %v6612, 0.5
        %v6624 = vtanh.pop %v6616
        %v6625 = vtanh.pop %v6617
        %v6626 = vtanh.pop %v6618
        %v6627 = vtanh.pop %v6619
        %v6628 = vtanh.pop %v6620
        %v6629 = vtanh.pop %v6621
        %v6630 = vtanh.pop %v6622
        %v6631 = vtanh.pop %v6623
        %v6632 = vadd.f32 %v6624, 1.0
        %v6633 = vadd.f32 %v6625, 1.0
        %v6634 = vadd.f32 %v6626, 1.0
        %v6635 = vadd.f32 %v6627, 1.0
        %v6636 = vadd.f32 %v6628, 1.0
        %v6637 = vadd.f32 %v6629, 1.0
        %v6638 = vadd.f32 %v6630, 1.0
        %v6639 = vadd.f32 %v6631, 1.0
        %v6640 = vmul.f32 %v6632, 0.5
        %v6641 = vmul.f32 %v6633, 0.5
        %v6642 = vmul.f32 %v6634, 0.5
        %v6643 = vmul.f32 %v6635, 0.5
        %v6644 = vmul.f32 %v6636, 0.5
        %v6645 = vmul.f32 %v6637, 0.5
        %v6646 = vmul.f32 %v6638, 0.5
        %v6647 = vmul.f32 %v6639, 0.5
        %v6648 = vsub.f32 %v6580, %v6100
        %v6649 = vsub.f32 %v6584, %v6101
        %v6650 = vsub.f32 %v6590, %v6102
        %v6651 = vsub.f32 %v6594, %v6103
        %v6652 = vsub.f32 %v6600, %v6104
        %v6653 = vsub.f32 %v6604, %v6105
        %v6654 = vsub.f32 %v6610, %v6106
        %v6655 = vsub.f32 %v6614, %v6107
        %v6656 = vmul.f32 %v6640, %v6648
        %v6657 = vmul.f32 %v6641, %v6649
        %v6658 = vmul.f32 %v6642, %v6650
        %v6659 = vmul.f32 %v6643, %v6651
        %v6660 = vmul.f32 %v6644, %v6652
        %v6661 = vmul.f32 %v6645, %v6653
        %v6662 = vmul.f32 %v6646, %v6654
        %v6663 = vmul.f32 %v6647, %v6655
        %v6664 = vadd.f32 %v6100, %v6656
        %v6665 = vadd.f32 %v6101, %v6657
        %v6666 = vadd.f32 %v6102, %v6658
        %v6667 = vadd.f32 %v6103, %v6659
        %v6668 = vadd.f32 %v6104, %v6660
        %v6669 = vadd.f32 %v6105, %v6661
        %v6670 = vadd.f32 %v6106, %v6662
        %v6671 = vadd.f32 %v6107, %v6663
        %v6672 = vpack.c.bf16 %v6665, %v6664
        %v6673 = vpack.c.bf16 %v6667, %v6666
        %v6674 = vpack.c.bf16 %v6669, %v6668
        %v6675 = vpack.c.bf16 %v6671, %v6670
        %v6676 = vld [vmem:[#allocation14] sm:$0xff]
        %v6677 = vld [vmem:[#allocation14 + $0x8] sm:$0xff]
        %v6678 = vld [vmem:[#allocation14 + $0x10] sm:$0xff]
        %v6679 = vld [vmem:[#allocation14 + $0x18] sm:$0xff]
        %v6680 = vld [vmem:[#allocation14 + $0x20] sm:$0xff]
        %v6681 = vld [vmem:[#allocation14 + $0x28] sm:$0xff]
        %v6682 = vld [vmem:[#allocation14 + $0x30] sm:$0xff]
        %v6683 = vld [vmem:[#allocation14 + $0x38] sm:$0xff]
        %v6684 = vld [vmem:[#allocation14 + $0x40] sm:$0xff]
        %v6685 = vld [vmem:[#allocation14 + $0x48] sm:$0xff]
        %v6686 = vld [vmem:[#allocation14 + $0x50] sm:$0xff]
        %v6687 = vld [vmem:[#allocation14 + $0x58] sm:$0xff]
        %v6688 = vld [vmem:[#allocation14 + $0x60] sm:$0xff]
        %v6689 = vld [vmem:[#allocation14 + $0x68] sm:$0xff]
        %v6690 = vld [vmem:[#allocation14 + $0x70] sm:$0xff]
        %v6691 = vld [vmem:[#allocation14 + $0x78] sm:$0xff]
        %v6692 = vld [vmem:[#allocation16] sm:$0x3]
        %v6694 = vlaneseq
        %v6695 = vshrl.u32 %v6694, 7
        %v6696 = vsub.s32 0, %v6695
        %v6697 = vrot.slane %v6692, %v6696
        %v6698 = vlaneseq
        %v6699 = vshrl.u32 %v6698, 7
        %v6700 = vsub.s32 1, %v6699
        %v6701 = vrot.slane %v6692, %v6700
        %v6720 = vunpack.c.l.b16 %v6676
        %v6721 = vunpack.c.h.b16 %v6676
        %v6722 = vunpack.c.l.b16 %v6677
        %v6723 = vunpack.c.h.b16 %v6677
        %v6724 = vunpack.c.l.b16 %v6678
        %v6725 = vunpack.c.h.b16 %v6678
        %v6726 = vunpack.c.l.b16 %v6679
        %v6727 = vunpack.c.h.b16 %v6679
        %v6728 = vunpack.c.l.b16 %v6680
        %v6729 = vunpack.c.h.b16 %v6680
        %v6730 = vunpack.c.l.b16 %v6681
        %v6731 = vunpack.c.h.b16 %v6681
        %v6732 = vunpack.c.l.b16 %v6682
        %v6733 = vunpack.c.h.b16 %v6682
        %v6734 = vunpack.c.l.b16 %v6683
        %v6735 = vunpack.c.h.b16 %v6683
        %v6736 = vunpack.c.l.b16 %v6684
        %v6737 = vunpack.c.h.b16 %v6684
        %v6738 = vunpack.c.l.b16 %v6685
        %v6739 = vunpack.c.h.b16 %v6685
        %v6740 = vunpack.c.l.b16 %v6686
        %v6741 = vunpack.c.h.b16 %v6686
        %v6742 = vunpack.c.l.b16 %v6687
        %v6743 = vunpack.c.h.b16 %v6687
        %v6744 = vunpack.c.l.b16 %v6688
        %v6745 = vunpack.c.h.b16 %v6688
        %v6746 = vunpack.c.l.b16 %v6689
        %v6747 = vunpack.c.h.b16 %v6689
        %v6748 = vunpack.c.l.b16 %v6690
        %v6749 = vunpack.c.h.b16 %v6690
        %v6750 = vunpack.c.l.b16 %v6691
        %v6751 = vunpack.c.h.b16 %v6691
        %v6752 = vpack.c.b16 %v6722, %v6720
        %v6753 = vpack.c.b16 %v6723, %v6721
        %v6754 = vpack.c.b16 %v6726, %v6724
        %v6755 = vpack.c.b16 %v6727, %v6725
        %v6756 = vpack.c.b16 %v6730, %v6728
        %v6757 = vpack.c.b16 %v6731, %v6729
        %v6758 = vpack.c.b16 %v6734, %v6732
        %v6759 = vpack.c.b16 %v6735, %v6733
        %v6760 = vpack.c.b16 %v6738, %v6736
        %v6761 = vpack.c.b16 %v6739, %v6737
        %v6762 = vpack.c.b16 %v6742, %v6740
        %v6763 = vpack.c.b16 %v6743, %v6741
        %v6764 = vpack.c.b16 %v6746, %v6744
        %v6765 = vpack.c.b16 %v6747, %v6745
        %v6766 = vpack.c.b16 %v6750, %v6748
        %v6767 = vpack.c.b16 %v6751, %v6749
        %6784 = vmatprep.subr.bf16.mxu0 %v6753
        %6785 = vmatpush1.bf16.msra.mxu0 %v6752
        %6786 = vmatprep.subr.bf16.mxu0 %v6755
        %6787 = vmatpush1.bf16.msra.mxu0 %v6754
        %6788 = vmatprep.subr.bf16.mxu0 %v6757
        %6789 = vmatpush1.bf16.msra.mxu0 %v6756
        %6790 = vmatprep.subr.bf16.mxu0 %v6759
        %6791 = vmatpush1.bf16.msra.mxu0 %v6758
        %6792 = vmatprep.subr.bf16.mxu0 %v6761
        %6793 = vmatpush1.bf16.msra.mxu0 %v6760
        %6794 = vmatprep.subr.bf16.mxu0 %v6763
        %6795 = vmatpush1.bf16.msra.mxu0 %v6762
        %6796 = vmatprep.subr.bf16.mxu0 %v6765
        %6797 = vmatpush1.bf16.msra.mxu0 %v6764
        %6798 = vmatprep.subr.bf16.mxu0 %v6767
        %6799 = vmatpush1.bf16.msra.mxu0 %v6766
        %6800 = vmatprep.subr.bf16.mxu0 0
        %6801 = vmatpush1.bf16.msra.mxu0 0
        %6802 = vmatprep.subr.bf16.mxu0 0
        %6803 = vmatpush1.bf16.msra.mxu0 0
        %6804 = vmatprep.subr.bf16.mxu0 0
        %6805 = vmatpush1.bf16.msra.mxu0 0
        %6806 = vmatprep.subr.bf16.mxu0 0
        %6807 = vmatpush1.bf16.msra.mxu0 0
        %6808 = vmatprep.subr.bf16.mxu0 0
        %6809 = vmatpush1.bf16.msra.mxu0 0
        %6810 = vmatprep.subr.bf16.mxu0 0
        %6811 = vmatpush1.bf16.msra.mxu0 0
        %6812 = vmatprep.subr.bf16.mxu0 0
        %6813 = vmatpush1.bf16.msra.mxu0 0
        %6814 = vmatprep.subr.bf16.mxu0 0
        %6815 = vmatpush1.bf16.msra.mxu0 0
        %6816 = vmatprep.mubr.bf16.mxu0 0
        %6817 = vmatmul.mubr.bf16.gmra.mrb[0].mxu0 %v6672
        %v6818 = vpop.f32.mrb[0].mxu0
        %v6819 = vadd.f32 %v6697, %v6818
        %v6820 = vpop.f32.mrb[0].mxu0
        %v6821 = vadd.f32 %v6701, %v6820
        %v6822 = vpop.f32.mrb[0].mxu0
        %v6823 = vadd.f32 %v6697, %v6822
        %v6824 = vpop.f32.mrb[0].mxu0
        %v6825 = vadd.f32 %v6701, %v6824
        %6826 = vmatprep.mubr.bf16.mxu0 0
        %6827 = vmatmul.mubr.bf16.gmra.mrb[0].mxu0 %v6673
        %v6828 = vpop.f32.mrb[0].mxu0
        %v6829 = vadd.f32 %v6697, %v6828
        %v6830 = vpop.f32.mrb[0].mxu0
        %v6831 = vadd.f32 %v6701, %v6830
        %v6832 = vpop.f32.mrb[0].mxu0
        %v6833 = vadd.f32 %v6697, %v6832
        %v6834 = vpop.f32.mrb[0].mxu0
        %v6835 = vadd.f32 %v6701, %v6834
        %6836 = vmatprep.mubr.bf16.mxu0 0
        %6837 = vmatmul.mubr.bf16.gmra.mrb[0].mxu0 %v6674
        %v6838 = vpop.f32.mrb[0].mxu0
        %v6839 = vadd.f32 %v6697, %v6838
        %v6840 = vpop.f32.mrb[0].mxu0
        %v6841 = vadd.f32 %v6701, %v6840
        %v6842 = vpop.f32.mrb[0].mxu0
        %v6843 = vadd.f32 %v6697, %v6842
        %v6844 = vpop.f32.mrb[0].mxu0
        %v6845 = vadd.f32 %v6701, %v6844
        %6846 = vmatprep.mubr.bf16.mxu0 0
        %6847 = vmatmul.mubr.bf16.gmra.mrb[0].mxu0 %v6675
        %v6848 = vpop.f32.mrb[0].mxu0
        %v6849 = vadd.f32 %v6697, %v6848
        %v6850 = vpop.f32.mrb[0].mxu0
        %v6851 = vadd.f32 %v6701, %v6850
        %v6852 = vpop.f32.mrb[0].mxu0
        %v6853 = vadd.f32 %v6697, %v6852
        %v6854 = vpop.f32.mrb[0].mxu0
        %v6855 = vadd.f32 %v6701, %v6854
        %6856 = vdwg.mxu0
        %v6857 = vmul.f32 %v6819, 0.5
        %v6858 = vmul.f32 %v6823, 0.5
        %v6859 = vmul.f32 %v6829, 0.5
        %v6860 = vmul.f32 %v6833, 0.5
        %v6861 = vmul.f32 %v6839, 0.5
        %v6862 = vmul.f32 %v6843, 0.5
        %v6863 = vmul.f32 %v6849, 0.5
        %v6864 = vmul.f32 %v6853, 0.5
        %v6865 = vtanh.pop %v6857
        %v6866 = vtanh.pop %v6858
        %v6867 = vtanh.pop %v6859
        %v6868 = vtanh.pop %v6860
        %v6869 = vtanh.pop %v6861
        %v6870 = vtanh.pop %v6862
        %v6871 = vtanh.pop %v6863
        %v6872 = vtanh.pop %v6864
        %v6873 = vadd.f32 %v6865, 1.0
        %v6874 = vadd.f32 %v6866, 1.0
        %v6875 = vadd.f32 %v6867, 1.0
        %v6876 = vadd.f32 %v6868, 1.0
        %v6877 = vadd.f32 %v6869, 1.0
        %v6878 = vadd.f32 %v6870, 1.0
        %v6879 = vadd.f32 %v6871, 1.0
        %v6880 = vadd.f32 %v6872, 1.0
        %v6881 = vmul.f32 %v6873, 0.5
        %v6882 = vmul.f32 %v6874, 0.5
        %v6883 = vmul.f32 %v6875, 0.5
        %v6884 = vmul.f32 %v6876, 0.5
        %v6885 = vmul.f32 %v6877, 0.5
        %v6886 = vmul.f32 %v6878, 0.5
        %v6887 = vmul.f32 %v6879, 0.5
        %v6888 = vmul.f32 %v6880, 0.5
        %v6889 = vsub.f32 %v6821, %v6664
        %v6890 = vsub.f32 %v6825, %v6665
        %v6891 = vsub.f32 %v6831, %v6666
        %v6892 = vsub.f32 %v6835, %v6667
        %v6893 = vsub.f32 %v6841, %v6668
        %v6894 = vsub.f32 %v6845, %v6669
        %v6895 = vsub.f32 %v6851, %v6670
        %v6896 = vsub.f32 %v6855, %v6671
        %v6897 = vmul.f32 %v6881, %v6889
        %v6898 = vmul.f32 %v6882, %v6890
        %v6899 = vmul.f32 %v6883, %v6891
        %v6900 = vmul.f32 %v6884, %v6892
        %v6901 = vmul.f32 %v6885, %v6893
        %v6902 = vmul.f32 %v6886, %v6894
        %v6903 = vmul.f32 %v6887, %v6895
        %v6904 = vmul.f32 %v6888, %v6896
        %v6905 = vadd.f32 %v6664, %v6897
        %v6906 = vadd.f32 %v6665, %v6898
        %v6907 = vadd.f32 %v6666, %v6899
        %v6908 = vadd.f32 %v6667, %v6900
        %v6909 = vadd.f32 %v6668, %v6901
        %v6910 = vadd.f32 %v6669, %v6902
        %v6911 = vadd.f32 %v6670, %v6903
        %v6912 = vadd.f32 %v6671, %v6904
        %v6913 = vpack.c.bf16 %v6906, %v6905
        %v6914 = vpack.c.bf16 %v6908, %v6907
        %v6915 = vpack.c.bf16 %v6910, %v6909
        %v6916 = vpack.c.bf16 %v6912, %v6911
        %s6917 = scalar_lea.vmem [#allocation14], 128
        %v6918 = vld [vmem:[%s6917] sm:$0xff]
        %v6919 = vld [vmem:[%s6917 + $0x8] sm:$0xff]
        %v6920 = vld [vmem:[%s6917 + $0x10] sm:$0xff]
        %v6921 = vld [vmem:[%s6917 + $0x18] sm:$0xff]
        %v6922 = vld [vmem:[%s6917 + $0x20] sm:$0xff]
        %v6923 = vld [vmem:[%s6917 + $0x28] sm:$0xff]
        %v6924 = vld [vmem:[%s6917 + $0x30] sm:$0xff]
        %v6925 = vld [vmem:[%s6917 + $0x38] sm:$0xff]
        %v6926 = vld [vmem:[%s6917 + $0x40] sm:$0xff]
        %v6927 = vld [vmem:[%s6917 + $0x48] sm:$0xff]
        %v6928 = vld [vmem:[%s6917 + $0x50] sm:$0xff]
        %v6929 = vld [vmem:[%s6917 + $0x58] sm:$0xff]
        %v6930 = vld [vmem:[%s6917 + $0x60] sm:$0xff]
        %v6931 = vld [vmem:[%s6917 + $0x68] sm:$0xff]
        %v6932 = vld [vmem:[%s6917 + $0x70] sm:$0xff]
        %v6933 = vld [vmem:[%s6917 + $0x78] sm:$0xff]
        %s6934 = scalar_lea.vmem [#allocation16], 2
        %v6935 = vld [vmem:[%s6934] sm:$0x3]
        %v6937 = vlaneseq
        %v6938 = vshrl.u32 %v6937, 7
        %v6939 = vsub.s32 0, %v6938
        %v6940 = vrot.slane %v6935, %v6939
        %v6941 = vlaneseq
        %v6942 = vshrl.u32 %v6941, 7
        %v6943 = vsub.s32 1, %v6942
        %v6944 = vrot.slane %v6935, %v6943
        %v6963 = vunpack.c.l.b16 %v6918
        %v6964 = vunpack.c.h.b16 %v6918
        %v6965 = vunpack.c.l.b16 %v6919
        %v6966 = vunpack.c.h.b16 %v6919
        %v6967 = vunpack.c.l.b16 %v6920
        %v6968 = vunpack.c.h.b16 %v6920
        %v6969 = vunpack.c.l.b16 %v6921
        %v6970 = vunpack.c.h.b16 %v6921
        %v6971 = vunpack.c.l.b16 %v6922
        %v6972 = vunpack.c.h.b16 %v6922
        %v6973 = vunpack.c.l.b16 %v6923
        %v6974 = vunpack.c.h.b16 %v6923
        %v6975 = vunpack.c.l.b16 %v6924
        %v6976 = vunpack.c.h.b16 %v6924
        %v6977 = vunpack.c.l.b16 %v6925
        %v6978 = vunpack.c.h.b16 %v6925
        %v6979 = vunpack.c.l.b16 %v6926
        %v6980 = vunpack.c.h.b16 %v6926
        %v6981 = vunpack.c.l.b16 %v6927
        %v6982 = vunpack.c.h.b16 %v6927
        %v6983 = vunpack.c.l.b16 %v6928
        %v6984 = vunpack.c.h.b16 %v6928
        %v6985 = vunpack.c.l.b16 %v6929
        %v6986 = vunpack.c.h.b16 %v6929
        %v6987 = vunpack.c.l.b16 %v6930
        %v6988 = vunpack.c.h.b16 %v6930
        %v6989 = vunpack.c.l.b16 %v6931
        %v6990 = vunpack.c.h.b16 %v6931
        %v6991 = vunpack.c.l.b16 %v6932
        %v6992 = vunpack.c.h.b16 %v6932
        %v6993 = vunpack.c.l.b16 %v6933
        %v6994 = vunpack.c.h.b16 %v6933
        %v6995 = vpack.c.b16 %v6965, %v6963
        %v6996 = vpack.c.b16 %v6966, %v6964
        %v6997 = vpack.c.b16 %v6969, %v6967
        %v6998 = vpack.c.b16 %v6970, %v6968
        %v6999 = vpack.c.b16 %v6973, %v6971
        %v7000 = vpack.c.b16 %v6974, %v6972
        %v7001 = vpack.c.b16 %v6977, %v6975
        %v7002 = vpack.c.b16 %v6978, %v6976
        %v7003 = vpack.c.b16 %v6981, %v6979
        %v7004 = vpack.c.b16 %v6982, %v6980
        %v7005 = vpack.c.b16 %v6985, %v6983
        %v7006 = vpack.c.b16 %v6986, %v6984
        %v7007 = vpack.c.b16 %v6989, %v6987
        %v7008 = vpack.c.b16 %v6990, %v6988
        %v7009 = vpack.c.b16 %v6993, %v6991
        %v7010 = vpack.c.b16 %v6994, %v6992
        %7027 = vmatprep.subr.bf16.mxu0 %v6996
        %7028 = vmatpush1.bf16.msra.mxu0 %v6995
        %7029 = vmatprep.subr.bf16.mxu0 %v6998
        %7030 = vmatpush1.bf16.msra.mxu0 %v6997
        %7031 = vmatprep.subr.bf16.mxu0 %v7000
        %7032 = vmatpush1.bf16.msra.mxu0 %v6999
        %7033 = vmatprep.subr.bf16.mxu0 %v7002
        %7034 = vmatpush1.bf16.msra.mxu0 %v7001
        %7035 = vmatprep.subr.bf16.mxu0 %v7004
        %7036 = vmatpush1.bf16.msra.mxu0 %v7003
        %7037 = vmatprep.subr.bf16.mxu0 %v7006
        %7038 = vmatpush1.bf16.msra.mxu0 %v7005
        %7039 = vmatprep.subr.bf16.mxu0 %v7008
        %7040 = vmatpush1.bf16.msra.mxu0 %v7007
        %7041 = vmatprep.subr.bf16.mxu0 %v7010
        %7042 = vmatpush1.bf16.msra.mxu0 %v7009
        %7043 = vmatprep.subr.bf16.mxu0 0
        %7044 = vmatpush1.bf16.msra.mxu0 0
        %7045 = vmatprep.subr.bf16.mxu0 0
        %7046 = vmatpush1.bf16.msra.mxu0 0
        %7047 = vmatprep.subr.bf16.mxu0 0
        %7048 = vmatpush1.bf16.msra.mxu0 0
        %7049 = vmatprep.subr.bf16.mxu0 0
        %7050 = vmatpush1.bf16.msra.mxu0 0
        %7051 = vmatprep.subr.bf16.mxu0 0
        %7052 = vmatpush1.bf16.msra.mxu0 0
        %7053 = vmatprep.subr.bf16.mxu0 0
        %7054 = vmatpush1.bf16.msra.mxu0 0
        %7055 = vmatprep.subr.bf16.mxu0 0
        %7056 = vmatpush1.bf16.msra.mxu0 0
        %7057 = vmatprep.subr.bf16.mxu0 0
        %7058 = vmatpush1.bf16.msra.mxu0 0
        %7059 = vmatprep.mubr.bf16.mxu0 0
        %7060 = vmatmul.mubr.bf16.gmra.mrb[0].mxu0 %v6913
        %v7061 = vpop.f32.mrb[0].mxu0
        %v7062 = vadd.f32 %v6940, %v7061
        %v7063 = vpop.f32.mrb[0].mxu0
        %v7064 = vadd.f32 %v6944, %v7063
        %v7065 = vpop.f32.mrb[0].mxu0
        %v7066 = vadd.f32 %v6940, %v7065
        %v7067 = vpop.f32.mrb[0].mxu0
        %v7068 = vadd.f32 %v6944, %v7067
        %7069 = vmatprep.mubr.bf16.mxu0 0
        %7070 = vmatmul.mubr.bf16.gmra.mrb[0].mxu0 %v6914
        %v7071 = vpop.f32.mrb[0].mxu0
        %v7072 = vadd.f32 %v6940, %v7071
        %v7073 = vpop.f32.mrb[0].mxu0
        %v7074 = vadd.f32 %v6944, %v7073
        %v7075 = vpop.f32.mrb[0].mxu0
        %v7076 = vadd.f32 %v6940, %v7075
        %v7077 = vpop.f32.mrb[0].mxu0
        %v7078 = vadd.f32 %v6944, %v7077
        %7079 = vmatprep.mubr.bf16.mxu0 0
        %7080 = vmatmul.mubr.bf16.gmra.mrb[0].mxu0 %v6915
        %v7081 = vpop.f32.mrb[0].mxu0
        %v7082 = vadd.f32 %v6940, %v7081
        %v7083 = vpop.f32.mrb[0].mxu0
        %v7084 = vadd.f32 %v6944, %v7083
        %v7085 = vpop.f32.mrb[0].mxu0
        %v7086 = vadd.f32 %v6940, %v7085
        %v7087 = vpop.f32.mrb[0].mxu0
        %v7088 = vadd.f32 %v6944, %v7087
        %7089 = vmatprep.mubr.bf16.mxu0 0
        %7090 = vmatmul.mubr.bf16.gmra.mrb[0].mxu0 %v6916
        %v7091 = vpop.f32.mrb[0].mxu0
        %v7092 = vadd.f32 %v6940, %v7091
        %v7093 = vpop.f32.mrb[0].mxu0
        %v7094 = vadd.f32 %v6944, %v7093
        %v7095 = vpop.f32.mrb[0].mxu0
        %v7096 = vadd.f32 %v6940, %v7095
        %v7097 = vpop.f32.mrb[0].mxu0
        %v7098 = vadd.f32 %v6944, %v7097
        %7099 = vdwg.mxu0
        %v7100 = vmul.f32 %v7062, 0.5
        %v7101 = vmul.f32 %v7066, 0.5
        %v7102 = vmul.f32 %v7072, 0.5
        %v7103 = vmul.f32 %v7076, 0.5
        %v7104 = vmul.f32 %v7082, 0.5
        %v7105 = vmul.f32 %v7086, 0.5
        %v7106 = vmul.f32 %v7092, 0.5
        %v7107 = vmul.f32 %v7096, 0.5
        %v7108 = vtanh.pop %v7100
        %v7109 = vtanh.pop %v7101
        %v7110 = vtanh.pop %v7102
        %v7111 = vtanh.pop %v7103
        %v7112 = vtanh.pop %v7104
        %v7113 = vtanh.pop %v7105
        %v7114 = vtanh.pop %v7106
        %v7115 = vtanh.pop %v7107
        %v7116 = vadd.f32 %v7108, 1.0
        %v7117 = vadd.f32 %v7109, 1.0
        %v7118 = vadd.f32 %v7110, 1.0
        %v7119 = vadd.f32 %v7111, 1.0
        %v7120 = vadd.f32 %v7112, 1.0
        %v7121 = vadd.f32 %v7113, 1.0
        %v7122 = vadd.f32 %v7114, 1.0
        %v7123 = vadd.f32 %v7115, 1.0
        %v7124 = vmul.f32 %v7116, 0.5
        %v7125 = vmul.f32 %v7117, 0.5
        %v7126 = vmul.f32 %v7118, 0.5
        %v7127 = vmul.f32 %v7119, 0.5
        %v7128 = vmul.f32 %v7120, 0.5
        %v7129 = vmul.f32 %v7121, 0.5
        %v7130 = vmul.f32 %v7122, 0.5
        %v7131 = vmul.f32 %v7123, 0.5
        %v7132 = vsub.f32 %v7064, %v6905
        %v7133 = vsub.f32 %v7068, %v6906
        %v7134 = vsub.f32 %v7074, %v6907
        %v7135 = vsub.f32 %v7078, %v6908
        %v7136 = vsub.f32 %v7084, %v6909
        %v7137 = vsub.f32 %v7088, %v6910
        %v7138 = vsub.f32 %v7094, %v6911
        %v7139 = vsub.f32 %v7098, %v6912
        %v7140 = vmul.f32 %v7124, %v7132
        %v7141 = vmul.f32 %v7125, %v7133
        %v7142 = vmul.f32 %v7126, %v7134
        %v7143 = vmul.f32 %v7127, %v7135
        %v7144 = vmul.f32 %v7128, %v7136
        %v7145 = vmul.f32 %v7129, %v7137
        %v7146 = vmul.f32 %v7130, %v7138
        %v7147 = vmul.f32 %v7131, %v7139
        %v7148 = vadd.f32 %v6905, %v7140
        %v7149 = vadd.f32 %v6906, %v7141
        %v7150 = vadd.f32 %v6907, %v7142
        %v7151 = vadd.f32 %v6908, %v7143
        %v7152 = vadd.f32 %v6909, %v7144
        %v7153 = vadd.f32 %v6910, %v7145
        %v7154 = vadd.f32 %v6911, %v7146
        %v7155 = vadd.f32 %v6912, %v7147
        %7156 = vst [vmem:[%s479] sm:$0xff] %v7148
        %7157 = vst [vmem:[%s479 + $0x8] sm:$0xff] %v7149
        %7158 = vst [vmem:[%s479 + $0x10] sm:$0xff] %v7150
        %7159 = vst [vmem:[%s479 + $0x18] sm:$0xff] %v7151
        %7160 = vst [vmem:[%s479 + $0x20] sm:$0xff] %v7152
        %7161 = vst [vmem:[%s479 + $0x28] sm:$0xff] %v7153
        %7162 = vst [vmem:[%s479 + $0x30] sm:$0xff] %v7154
        %7163 = vst [vmem:[%s479 + $0x38] sm:$0xff] %v7155
        %s7164 = sand.u32 %s252, 1
        %s7165 = scalar_lea.sflag [#allocation4], %s7164
        %s7166 = sand.u32 %s252, 1
        %s7167 = smul.addr %s7166, 64
        %s7168 = scalar_lea.vmem [#allocation17], %s7167
        // Predicated region
        $region97: #{tpu_custom_call.1} parent=59 // pred_check
          %p7169 = pneg %p262
        $region98: #{tpu_custom_call.1} parent=59 // pred_check_branch
          %7171 = sbr.rel (%p7169) target = $region100
        $region99: #{tpu_custom_call.1} parent=59 // pred_region
          %s7173 = ssub.s32 1024, 1024
          %7174 = vsyncadd %s7165, %s7173
          %s7175 = smul.addr %s29, 8
          %s7176 = smul.addr %s7175, 128
          %s7177 = scalar_lea.hbm %s10, %s7176
          %s7178 = sshll.u32 %s7168, 4
          %s7179 = int_to_ptr.vmem [resolvable:$true] %s7178
          %7184 = dma.vmem_to_hbm [thread:$0]  %s7179, 1024, %s7177, %s7165, 128, 128, 8
        $region100: #{tpu_custom_call.1} parent=59 // pred_fallthru
          _
      $region60: #{tpu_custom_call.1} parent=5 // pred_fallthru
        _
      %p7185 = scmp.le.s32.totalorder 2, %s24
      // Predicated region
      $region101: #{tpu_custom_call.1} parent=5 // pred_check
        %p7186 = pneg %p7185
      $region102: #{tpu_custom_call.1} parent=5 // pred_check_branch
        %7188 = sbr.rel (%p7186) target = $region104
      $region103: #{tpu_custom_call.1} parent=5 // pred_region
        %s7189 = ssub.s32 %s24, 2
        // Predicated region
        $region105: #{tpu_custom_call.1} parent=103 // pred_check
          %p7190 = pneg %p268
        $region106: #{tpu_custom_call.1} parent=103 // pred_check_branch
          %7192 = sbr.rel (%p7190) target = $region108
        $region107: #{tpu_custom_call.1} parent=103 // pred_region
          %s7193 = sand.u32 %s253, 1
          %s7194 = scalar_lea.sflag [#allocation4], %s7193
          %s7195 = sand.u32 %s253, 1
          %s7196 = smul.addr %s7195, 64
          %s7197 = scalar_lea.vmem [#allocation17], %s7196
          %7198 = dma.done %s7194, 1024
        $region108: #{tpu_custom_call.1} parent=103 // pred_fallthru
          _
      $region104: #{tpu_custom_call.1} parent=5 // pred_fallthru
        _
    $region6: #{tpu_custom_call.1} parent=1 // loop_footer
      %s28 = sadd.s32 1, %s24
    $region7: #{tpu_custom_call.1} parent=1 // loop_footer_branch
      %23 = sbr.rel target = $region3
    $region8: #{tpu_custom_call.1} parent=1 // loop_exit
      _
    %7199 = vsyncpa [#allocation3], 1
    %s7200 = scalar_lea.sflag [#allocation3], 1
    %7201 = vsyncpa %s7200, 1
    %7202 = vsyncpa [#allocation6], 1
    %7203 = vsyncpa [#allocation9], 1
    %7204 = vsyncpa [#allocation12], 1
    %7205 = vsyncpa [#allocation15], 1
    %7206 = vsyncpa [#allocation4], 1
    %s7207 = scalar_lea.sflag [#allocation4], 1
    %7208 = vsyncpa %s7207, 1

</llo_original>
